<compile_context>
chip_gen: v7x
topology: tpu7x:2x2x1
jax: 0.10.0
libtpu: 0.0.40
codegen_flags: <defaults>
</compile_context>

<pallas_src>
import functools

import jax
import jax.numpy as jnp
from jax.experimental import pallas as pl
from jax.experimental.pallas import tpu as pltpu

VMEM = pl.BlockSpec(memory_space=pltpu.MemorySpace.VMEM)


# --------------------------- fused episode kernel ----------------------------
def _episode_kernel(
    x_ref,        # (T*B, E)  time-major flattened facts (row = t*B + b)
    fpool_ref,    # (B, E)    mean over T of facts
    q_ref,        # (B, E)    question
    m0_ref,       # (Lq, E)   initial memory (MHA batch of 1 squeezed)
    wih_ref,      # (3, E, E) GRU input weights, gate order [r, z, n], transposed
    whh_ref,      # (3, E, E) GRU hidden weights
    bih_ref,      # (3, 1, E)
    bhh_ref,      # (3, 1, E)
    wq_ref,       # (H, E, hd) per-head query projection
    wk_ref,       # (H, E, hd)
    wv_ref,       # (H, E, hd)
    bq_ref,       # (H, 1, hd)
    bk_ref,       # (H, 1, hd)
    bv_ref,       # (H, 1, hd)
    wo_ref,       # (H, hd, E) per-head slice of the output projection
    bo_ref,       # (1, E)
    w1_ref,       # (4, E, middle)  gate MLP layer 1, per feature block
    b1_ref,       # (1, middle)
    w2_ref,       # (middle, 1)
    b2_ref,       # (1, 1)
    m_out_ref,    # (Lq, E)   output memory
    *, num_iterations,
):
    B, E = q_ref.shape
    TB = x_ref.shape[0]
    T = TB // B
    Lq = m0_ref.shape[0]
    H = wq_ref.shape[0]
    hd = wq_ref.shape[2]
    scale = 1.0 / float(hd) ** 0.5

    x = x_ref[...]                          # (T*B, E)
    f = fpool_ref[...]                      # (B, E)
    qn = q_ref[...]                         # (B, E)

    # ---- hoisted GRU input projections (facts constant across iterations) ----
    wih_r, wih_z, wih_n = wih_ref[0], wih_ref[1], wih_ref[2]
    bih_r, bih_z, bih_n = bih_ref[0], bih_ref[1], bih_ref[2]
    gi_r = jnp.dot(x, wih_r, preferred_element_type=jnp.float32) + bih_r   # (T*B, E)
    gi_z = jnp.dot(x, wih_z, preferred_element_type=jnp.float32) + bih_z
    gi_n = jnp.dot(x, wih_n, preferred_element_type=jnp.float32) + bih_n

    # GRU hidden-path weights (loaded once)
    whh_r, whh_z, whh_n = whh_ref[0], whh_ref[1], whh_ref[2]
    bhh_r, bhh_z, bhh_n = bhh_ref[0], bhh_ref[1], bhh_ref[2]

    # gate MLP weights (4 lane-aligned blocks instead of a 4E concat)
    w1a, w1b, w1c, w1d = w1_ref[0], w1_ref[1], w1_ref[2], w1_ref[3]
    b1 = b1_ref[...]
    w2 = w2_ref[...]
    b2 = b2_ref[...]
    bo = bo_ref[...]

    # per-head MHA weights, loaded ONCE (outside the iteration loop)
    wq_h = [wq_ref[hh] for hh in range(H)]
    wk_h = [wk_ref[hh] for hh in range(H)]
    wv_h = [wv_ref[hh] for hh in range(H)]
    bq_h = [bq_ref[hh] for hh in range(H)]
    bk_h = [bk_ref[hh] for hh in range(H)]
    bv_h = [bv_ref[hh] for hh in range(H)]
    wo_h = [wo_ref[hh] for hh in range(H)]

    # mean over the Lq memory rows, done on the MXU (avoids sublane reduce)
    ones_lq = jnp.full((1, Lq), 1.0 / float(Lq), dtype=jnp.float32)
    zeros_be = jnp.zeros((B, E), jnp.float32)

    m = m0_ref[...]                         # (Lq, E)
    h = None                                # mirrors torch's `isinstance(h, int)` branch

    for i in range(num_iterations):
        # ------------------------- gate g (B, 1) -------------------------
        m_pool = jnp.dot(ones_lq, m, preferred_element_type=jnp.float32)   # (1, E)
        za = f * qn
        zb = f * m_pool
        zc = jnp.abs(f - qn)
        zd = jnp.abs(f - m_pool)
        hid = jnp.tanh(
            jnp.dot(za, w1a, preferred_element_type=jnp.float32)
            + jnp.dot(zb, w1b, preferred_element_type=jnp.float32)
            + jnp.dot(zc, w1c, preferred_element_type=jnp.float32)
            + jnp.dot(zd, w1d, preferred_element_type=jnp.float32)
            + b1)
        g = jax.nn.sigmoid(
            jnp.dot(hid, w2, preferred_element_type=jnp.float32) + b2)     # (B, 1)

        # ----------- GRU recurrence (only h-projections on the serial path) ----
        hcur = zeros_be if h is None else h
        for t in range(T):
            lo = t * B
            gir = gi_r[lo:lo + B, :]
            giz = gi_z[lo:lo + B, :]
            gin = gi_n[lo:lo + B, :]
            ghr = jnp.dot(hcur, whh_r, preferred_element_type=jnp.float32) + bhh_r
            ghz = jnp.dot(hcur, whh_z, preferred_element_type=jnp.float32) + bhh_z
            ghn = jnp.dot(hcur, whh_n, preferred_element_type=jnp.float32) + bhh_n
            r = jax.nn.sigmoid(gir + ghr)
            z = jax.nn.sigmoid(giz + ghz)
            n = jnp.tanh(gin + r * ghn)
            hcur = (1.0 - z) * n + z * hcur

        if h is None:
            h = g * hcur                    # (1 - g) * zeros == 0
        else:
            h = g * hcur + (1.0 - g) * h
        e = h                               # (B, E) key/value "sequence"

        # ------------- MHA: m (Lq,E) attends over e (B,E), H heads -------------
        acc = jnp.zeros((Lq, E), jnp.float32)
        for hh in range(H):
            qh = jnp.dot(m, wq_h[hh], preferred_element_type=jnp.float32) + bq_h[hh]
            kh = jnp.dot(e, wk_h[hh], preferred_element_type=jnp.float32) + bk_h[hh]
            vh = jnp.dot(e, wv_h[hh], preferred_element_type=jnp.float32) + bv_h[hh]
            s = jax.lax.dot_general(                       # qh @ kh^T without explicit .T
                qh, kh, dimension_numbers=(((1,), (1,)), ((), ())),
                preferred_element_type=jnp.float32) * scale          # (Lq, B)
            s = s - jnp.max(s, axis=-1, keepdims=True)
            p = jnp.exp(s)
            p = p * pl.reciprocal(jnp.sum(p, axis=-1, keepdims=True), approx=True)
            oh = jnp.dot(p, vh, preferred_element_type=jnp.float32)             # (Lq, hd)
            acc = acc + jnp.dot(oh, wo_h[hh], preferred_element_type=jnp.float32)
        m = acc + bo

    m_out_ref[...] = m


# ------------------------------- forward -------------------------------------
@functools.partial(jax.jit, static_argnums=(4, 5))
def episode_forward(params, m0, facts, question, num_iterations, num_heads):
    """m0: (1, Lq, E)  facts: (B, T, E)  question: (B, E)  ->  (1, Lq, E)."""
    del num_heads  # derived in-kernel from the stacked per-head weights
    B, T, E = facts.shape
    Lq = m0.shape[1]

    # one-time glue (outside the iteration loop): time-major flatten + fact pooling
    x_flat = jnp.transpose(facts, (1, 0, 2)).reshape(T * B, E)
    f_pool = jnp.mean(facts, axis=1)                       # (B, E)
    m0_2d = m0[0]                                          # (Lq, E)

    p = params
    kernel = functools.partial(_episode_kernel, num_iterations=num_iterations)
    m_out = pl.pallas_call(
        kernel,
        out_shape=jax.ShapeDtypeStruct((Lq, E), jnp.float32),
        in_specs=[VMEM] * 20,
        out_specs=VMEM,
    )(x_flat, f_pool, question, m0_2d,
      p["gru"]["w_ih"], p["gru"]["w_hh"], p["gru"]["b_ih"], p["gru"]["b_hh"],
      p["mha"]["wq"], p["mha"]["wk"], p["mha"]["wv"],
      p["mha"]["bq"], p["mha"]["bk"], p["mha"]["bv"],
      p["mha"]["wo"], p["mha"]["bo"],
      p["gate"]["w1"], p["gate"]["b1"], p["gate"]["w2"], p["gate"]["b2"])
    return m_out[None]                                     # (1, Lq, E)


# ------------------------------ param init -----------------------------------
def init_params(key, E, middle, num_heads):
    hd = E // num_heads
    ks = jax.random.split(key, 16)
    s = 0.1

    def w(k, shape):
        return jax.random.normal(k, shape, jnp.float32) * s

    gru = dict(                                  # gate order [r, z, n], pre-transposed
        w_ih=w(ks[0], (3, E, E)),
        w_hh=w(ks[1], (3, E, E)),
        b_ih=w(ks[2], (3, 1, E)),
        b_hh=w(ks[3], (3, 1, E)),
    )
    mha = dict(                                  # per-head lane-aligned blocks
        wq=w(ks[4], (num_heads, E, hd)),
        wk=w(ks[5], (num_heads, E, hd)),
        wv=w(ks[6], (num_heads, E, hd)),
        bq=w(ks[7], (num_heads, 1, hd)),
        bk=w(ks[8], (num_heads, 1, hd)),
        bv=w(ks[9], (num_heads, 1, hd)),
        wo=w(ks[10], (num_heads, hd, E)),
        bo=w(ks[11], (1, E)),
    )
    gate = dict(                                 # layer-1 split into the 4 feature blocks
        w1=w(ks[12], (4, E, middle)),
        b1=w(ks[13], (1, middle)),
        w2=w(ks[14], (middle, 1)),
        b2=w(ks[15], (1, 1)),
    )
    return dict(gru=gru, mha=mha, gate=gate)


if __name__ == "__main__":
    E = 20            # embedding_size (must be divisible by num_heads=5)
    MIDDLE = 16       # middle_number
    NUM_ITERS = 2     # num_iterations
    NUM_HEADS = 5
    B, T, Lq = 2, 8, 4

    key = jax.random.PRNGKey(0)
    kp, k1, k2, k3 = jax.random.split(key, 4)
    params = init_params(kp, E, MIDDLE, NUM_HEADS)

    m0 = jax.random.normal(k1, (1, Lq, E), jnp.float32)       # memory (MHA batch=1, seq=Lq)
    facts = jax.random.normal(k2, (B, T, E), jnp.float32)     # batch_first GRU input
    question = jax.random.normal(k3, (B, E), jnp.float32)

    out = episode_forward(params, m0, facts, question, NUM_ITERS, NUM_HEADS)
    out = jax.block_until_ready(out)

    assert out.shape == (1, Lq, E), out.shape
    assert bool(jnp.all(jnp.isfinite(out)))
    print("KERNEL_OK")
</pallas_src>

<mosaic_0001>
module attributes {stable_mosaic.version = 11 : i64} {
  func.func @_episode_kernel(%arg0: memref<16x20xf32, #tpu.memory_space<vmem>>, %arg1: memref<2x20xf32, #tpu.memory_space<vmem>>, %arg2: memref<2x20xf32, #tpu.memory_space<vmem>>, %arg3: memref<4x20xf32, #tpu.memory_space<vmem>>, %arg4: memref<3x20x20xf32, #tpu.memory_space<vmem>>, %arg5: memref<3x20x20xf32, #tpu.memory_space<vmem>>, %arg6: memref<3x1x20xf32, #tpu.memory_space<vmem>>, %arg7: memref<3x1x20xf32, #tpu.memory_space<vmem>>, %arg8: memref<5x20x4xf32, #tpu.memory_space<vmem>>, %arg9: memref<5x20x4xf32, #tpu.memory_space<vmem>>, %arg10: memref<5x20x4xf32, #tpu.memory_space<vmem>>, %arg11: memref<5x1x4xf32, #tpu.memory_space<vmem>>, %arg12: memref<5x1x4xf32, #tpu.memory_space<vmem>>, %arg13: memref<5x1x4xf32, #tpu.memory_space<vmem>>, %arg14: memref<5x4x20xf32, #tpu.memory_space<vmem>>, %arg15: memref<1x20xf32, #tpu.memory_space<vmem>>, %arg16: memref<4x20x16xf32, #tpu.memory_space<vmem>>, %arg17: memref<1x16xf32, #tpu.memory_space<vmem>>, %arg18: memref<16x1xf32, #tpu.memory_space<vmem>>, %arg19: memref<1x1xf32, #tpu.memory_space<vmem>>, %arg20: memref<4x20xf32, #tpu.memory_space<vmem>>) attributes {dimension_semantics = [], scalar_prefetch = 0 : i64, scratch_operands = 0 : i64, tpu.core_type = #tpu.core_type<tc>} {
    %c0 = arith.constant 0 : index
    %c0_0 = arith.constant 0 : index
    %0 = vector.load %arg0[%c0, %c0_0] : memref<16x20xf32, #tpu.memory_space<vmem>>, vector<16x20xf32>
    %c0_1 = arith.constant 0 : index
    %c0_2 = arith.constant 0 : index
    %1 = vector.load %arg1[%c0_1, %c0_2] : memref<2x20xf32, #tpu.memory_space<vmem>>, vector<2x20xf32>
    %c0_3 = arith.constant 0 : index
    %c0_4 = arith.constant 0 : index
    %2 = vector.load %arg2[%c0_3, %c0_4] : memref<2x20xf32, #tpu.memory_space<vmem>>, vector<2x20xf32>
    %c0_5 = arith.constant 0 : index
    %c0_6 = arith.constant 0 : index
    %c0_7 = arith.constant 0 : index
    %3 = vector.load %arg4[%c0_5, %c0_6, %c0_7] : memref<3x20x20xf32, #tpu.memory_space<vmem>>, vector<1x20x20xf32>
    %4 = vector.shape_cast %3 : vector<1x20x20xf32> to vector<20x20xf32>
    %c1 = arith.constant 1 : index
    %c0_8 = arith.constant 0 : index
    %c0_9 = arith.constant 0 : index
    %5 = vector.load %arg4[%c1, %c0_8, %c0_9] : memref<3x20x20xf32, #tpu.memory_space<vmem>>, vector<1x20x20xf32>
    %6 = vector.shape_cast %5 : vector<1x20x20xf32> to vector<20x20xf32>
    %c2 = arith.constant 2 : index
    %c0_10 = arith.constant 0 : index
    %c0_11 = arith.constant 0 : index
    %7 = vector.load %arg4[%c2, %c0_10, %c0_11] : memref<3x20x20xf32, #tpu.memory_space<vmem>>, vector<1x20x20xf32>
    %8 = vector.shape_cast %7 : vector<1x20x20xf32> to vector<20x20xf32>
    %c0_12 = arith.constant 0 : index
    %c0_13 = arith.constant 0 : index
    %c0_14 = arith.constant 0 : index
    %9 = vector.load %arg6[%c0_12, %c0_13, %c0_14] : memref<3x1x20xf32, #tpu.memory_space<vmem>>, vector<1x1x20xf32>
    %10 = vector.shape_cast %9 : vector<1x1x20xf32> to vector<1x20xf32>
    %c1_15 = arith.constant 1 : index
    %c0_16 = arith.constant 0 : index
    %c0_17 = arith.constant 0 : index
    %11 = vector.load %arg6[%c1_15, %c0_16, %c0_17] : memref<3x1x20xf32, #tpu.memory_space<vmem>>, vector<1x1x20xf32>
    %12 = vector.shape_cast %11 : vector<1x1x20xf32> to vector<1x20xf32>
    %c2_18 = arith.constant 2 : index
    %c0_19 = arith.constant 0 : index
    %c0_20 = arith.constant 0 : index
    %13 = vector.load %arg6[%c2_18, %c0_19, %c0_20] : memref<3x1x20xf32, #tpu.memory_space<vmem>>, vector<1x1x20xf32>
    %14 = vector.shape_cast %13 : vector<1x1x20xf32> to vector<1x20xf32>
    %cst = arith.constant dense<0.000000e+00> : vector<16x20xf32>
    %15 = tpu.matmul %0, %4, %cst {dimension_numbers = #tpu.dot_dimension_numbers<[1], [0], [0], [1], [0, 0, 1, 1], [], []>} : vector<16x20xf32>, vector<20x20xf32>, vector<16x20xf32> -> vector<16x20xf32>
    %16 = vector.broadcast %10 : vector<1x20xf32> to vector<16x20xf32>
    %17 = arith.addf %15, %16 : vector<16x20xf32>
    %cst_21 = arith.constant dense<0.000000e+00> : vector<16x20xf32>
    %18 = tpu.matmul %0, %6, %cst_21 {dimension_numbers = #tpu.dot_dimension_numbers<[1], [0], [0], [1], [0, 0, 1, 1], [], []>} : vector<16x20xf32>, vector<20x20xf32>, vector<16x20xf32> -> vector<16x20xf32>
    %19 = vector.broadcast %12 : vector<1x20xf32> to vector<16x20xf32>
    %20 = arith.addf %18, %19 : vector<16x20xf32>
    %cst_22 = arith.constant dense<0.000000e+00> : vector<16x20xf32>
    %21 = tpu.matmul %0, %8, %cst_22 {dimension_numbers = #tpu.dot_dimension_numbers<[1], [0], [0], [1], [0, 0, 1, 1], [], []>} : vector<16x20xf32>, vector<20x20xf32>, vector<16x20xf32> -> vector<16x20xf32>
    %22 = vector.broadcast %14 : vector<1x20xf32> to vector<16x20xf32>
    %23 = arith.addf %21, %22 : vector<16x20xf32>
    %c0_23 = arith.constant 0 : index
    %c0_24 = arith.constant 0 : index
    %c0_25 = arith.constant 0 : index
    %24 = vector.load %arg5[%c0_23, %c0_24, %c0_25] : memref<3x20x20xf32, #tpu.memory_space<vmem>>, vector<1x20x20xf32>
    %25 = vector.shape_cast %24 : vector<1x20x20xf32> to vector<20x20xf32>
    %c1_26 = arith.constant 1 : index
    %c0_27 = arith.constant 0 : index
    %c0_28 = arith.constant 0 : index
    %26 = vector.load %arg5[%c1_26, %c0_27, %c0_28] : memref<3x20x20xf32, #tpu.memory_space<vmem>>, vector<1x20x20xf32>
    %27 = vector.shape_cast %26 : vector<1x20x20xf32> to vector<20x20xf32>
    %c2_29 = arith.constant 2 : index
    %c0_30 = arith.constant 0 : index
    %c0_31 = arith.constant 0 : index
    %28 = vector.load %arg5[%c2_29, %c0_30, %c0_31] : memref<3x20x20xf32, #tpu.memory_space<vmem>>, vector<1x20x20xf32>
    %29 = vector.shape_cast %28 : vector<1x20x20xf32> to vector<20x20xf32>
    %c0_32 = arith.constant 0 : index
    %c0_33 = arith.constant 0 : index
    %c0_34 = arith.constant 0 : index
    %30 = vector.load %arg7[%c0_32, %c0_33, %c0_34] : memref<3x1x20xf32, #tpu.memory_space<vmem>>, vector<1x1x20xf32>
    %31 = vector.shape_cast %30 : vector<1x1x20xf32> to vector<1x20xf32>
    %c1_35 = arith.constant 1 : index
    %c0_36 = arith.constant 0 : index
    %c0_37 = arith.constant 0 : index
    %32 = vector.load %arg7[%c1_35, %c0_36, %c0_37] : memref<3x1x20xf32, #tpu.memory_space<vmem>>, vector<1x1x20xf32>
    %33 = vector.shape_cast %32 : vector<1x1x20xf32> to vector<1x20xf32>
    %c2_38 = arith.constant 2 : index
    %c0_39 = arith.constant 0 : index
    %c0_40 = arith.constant 0 : index
    %34 = vector.load %arg7[%c2_38, %c0_39, %c0_40] : memref<3x1x20xf32, #tpu.memory_space<vmem>>, vector<1x1x20xf32>
    %35 = vector.shape_cast %34 : vector<1x1x20xf32> to vector<1x20xf32>
    %c0_41 = arith.constant 0 : index
    %c0_42 = arith.constant 0 : index
    %c0_43 = arith.constant 0 : index
    %36 = vector.load %arg16[%c0_41, %c0_42, %c0_43] : memref<4x20x16xf32, #tpu.memory_space<vmem>>, vector<1x20x16xf32>
    %37 = vector.shape_cast %36 : vector<1x20x16xf32> to vector<20x16xf32>
    %c1_44 = arith.constant 1 : index
    %c0_45 = arith.constant 0 : index
    %c0_46 = arith.constant 0 : index
    %38 = vector.load %arg16[%c1_44, %c0_45, %c0_46] : memref<4x20x16xf32, #tpu.memory_space<vmem>>, vector<1x20x16xf32>
    %39 = vector.shape_cast %38 : vector<1x20x16xf32> to vector<20x16xf32>
    %c2_47 = arith.constant 2 : index
    %c0_48 = arith.constant 0 : index
    %c0_49 = arith.constant 0 : index
    %40 = vector.load %arg16[%c2_47, %c0_48, %c0_49] : memref<4x20x16xf32, #tpu.memory_space<vmem>>, vector<1x20x16xf32>
    %41 = vector.shape_cast %40 : vector<1x20x16xf32> to vector<20x16xf32>
    %c3 = arith.constant 3 : index
    %c0_50 = arith.constant 0 : index
    %c0_51 = arith.constant 0 : index
    %42 = vector.load %arg16[%c3, %c0_50, %c0_51] : memref<4x20x16xf32, #tpu.memory_space<vmem>>, vector<1x20x16xf32>
    %43 = vector.shape_cast %42 : vector<1x20x16xf32> to vector<20x16xf32>
    %c0_52 = arith.constant 0 : index
    %c0_53 = arith.constant 0 : index
    %44 = vector.load %arg17[%c0_52, %c0_53] : memref<1x16xf32, #tpu.memory_space<vmem>>, vector<1x16xf32>
    %c0_54 = arith.constant 0 : index
    %c0_55 = arith.constant 0 : index
    %45 = vector.load %arg18[%c0_54, %c0_55] : memref<16x1xf32, #tpu.memory_space<vmem>>, vector<16x1xf32>
    %c0_56 = arith.constant 0 : index
    %c0_57 = arith.constant 0 : index
    %46 = vector.load %arg19[%c0_56, %c0_57] : memref<1x1xf32, #tpu.memory_space<vmem>>, vector<1x1xf32>
    %c0_58 = arith.constant 0 : index
    %c0_59 = arith.constant 0 : index
    %47 = vector.load %arg15[%c0_58, %c0_59] : memref<1x20xf32, #tpu.memory_space<vmem>>, vector<1x20xf32>
    %c0_60 = arith.constant 0 : index
    %c0_61 = arith.constant 0 : index
    %c0_62 = arith.constant 0 : index
    %48 = vector.load %arg8[%c0_60, %c0_61, %c0_62] : memref<5x20x4xf32, #tpu.memory_space<vmem>>, vector<1x20x4xf32>
    %49 = vector.shape_cast %48 : vector<1x20x4xf32> to vector<20x4xf32>
    %c1_63 = arith.constant 1 : index
    %c0_64 = arith.constant 0 : index
    %c0_65 = arith.constant 0 : index
    %50 = vector.load %arg8[%c1_63, %c0_64, %c0_65] : memref<5x20x4xf32, #tpu.memory_space<vmem>>, vector<1x20x4xf32>
    %51 = vector.shape_cast %50 : vector<1x20x4xf32> to vector<20x4xf32>
    %c2_66 = arith.constant 2 : index
    %c0_67 = arith.constant 0 : index
    %c0_68 = arith.constant 0 : index
    %52 = vector.load %arg8[%c2_66, %c0_67, %c0_68] : memref<5x20x4xf32, #tpu.memory_space<vmem>>, vector<1x20x4xf32>
    %53 = vector.shape_cast %52 : vector<1x20x4xf32> to vector<20x4xf32>
    %c3_69 = arith.constant 3 : index
    %c0_70 = arith.constant 0 : index
    %c0_71 = arith.constant 0 : index
    %54 = vector.load %arg8[%c3_69, %c0_70, %c0_71] : memref<5x20x4xf32, #tpu.memory_space<vmem>>, vector<1x20x4xf32>
    %55 = vector.shape_cast %54 : vector<1x20x4xf32> to vector<20x4xf32>
    %c4 = arith.constant 4 : index
    %c0_72 = arith.constant 0 : index
    %c0_73 = arith.constant 0 : index
    %56 = vector.load %arg8[%c4, %c0_72, %c0_73] : memref<5x20x4xf32, #tpu.memory_space<vmem>>, vector<1x20x4xf32>
    %57 = vector.shape_cast %56 : vector<1x20x4xf32> to vector<20x4xf32>
    %c0_74 = arith.constant 0 : index
    %c0_75 = arith.constant 0 : index
    %c0_76 = arith.constant 0 : index
    %58 = vector.load %arg9[%c0_74, %c0_75, %c0_76] : memref<5x20x4xf32, #tpu.memory_space<vmem>>, vector<1x20x4xf32>
    %59 = vector.shape_cast %58 : vector<1x20x4xf32> to vector<20x4xf32>
    %c1_77 = arith.constant 1 : index
    %c0_78 = arith.constant 0 : index
    %c0_79 = arith.constant 0 : index
    %60 = vector.load %arg9[%c1_77, %c0_78, %c0_79] : memref<5x20x4xf32, #tpu.memory_space<vmem>>, vector<1x20x4xf32>
    %61 = vector.shape_cast %60 : vector<1x20x4xf32> to vector<20x4xf32>
    %c2_80 = arith.constant 2 : index
    %c0_81 = arith.constant 0 : index
    %c0_82 = arith.constant 0 : index
    %62 = vector.load %arg9[%c2_80, %c0_81, %c0_82] : memref<5x20x4xf32, #tpu.memory_space<vmem>>, vector<1x20x4xf32>
    %63 = vector.shape_cast %62 : vector<1x20x4xf32> to vector<20x4xf32>
    %c3_83 = arith.constant 3 : index
    %c0_84 = arith.constant 0 : index
    %c0_85 = arith.constant 0 : index
    %64 = vector.load %arg9[%c3_83, %c0_84, %c0_85] : memref<5x20x4xf32, #tpu.memory_space<vmem>>, vector<1x20x4xf32>
    %65 = vector.shape_cast %64 : vector<1x20x4xf32> to vector<20x4xf32>
    %c4_86 = arith.constant 4 : index
    %c0_87 = arith.constant 0 : index
    %c0_88 = arith.constant 0 : index
    %66 = vector.load %arg9[%c4_86, %c0_87, %c0_88] : memref<5x20x4xf32, #tpu.memory_space<vmem>>, vector<1x20x4xf32>
    %67 = vector.shape_cast %66 : vector<1x20x4xf32> to vector<20x4xf32>
    %c0_89 = arith.constant 0 : index
    %c0_90 = arith.constant 0 : index
    %c0_91 = arith.constant 0 : index
    %68 = vector.load %arg10[%c0_89, %c0_90, %c0_91] : memref<5x20x4xf32, #tpu.memory_space<vmem>>, vector<1x20x4xf32>
    %69 = vector.shape_cast %68 : vector<1x20x4xf32> to vector<20x4xf32>
    %c1_92 = arith.constant 1 : index
    %c0_93 = arith.constant 0 : index
    %c0_94 = arith.constant 0 : index
    %70 = vector.load %arg10[%c1_92, %c0_93, %c0_94] : memref<5x20x4xf32, #tpu.memory_space<vmem>>, vector<1x20x4xf32>
    %71 = vector.shape_cast %70 : vector<1x20x4xf32> to vector<20x4xf32>
    %c2_95 = arith.constant 2 : index
    %c0_96 = arith.constant 0 : index
    %c0_97 = arith.constant 0 : index
    %72 = vector.load %arg10[%c2_95, %c0_96, %c0_97] : memref<5x20x4xf32, #tpu.memory_space<vmem>>, vector<1x20x4xf32>
    %73 = vector.shape_cast %72 : vector<1x20x4xf32> to vector<20x4xf32>
    %c3_98 = arith.constant 3 : index
    %c0_99 = arith.constant 0 : index
    %c0_100 = arith.constant 0 : index
    %74 = vector.load %arg10[%c3_98, %c0_99, %c0_100] : memref<5x20x4xf32, #tpu.memory_space<vmem>>, vector<1x20x4xf32>
    %75 = vector.shape_cast %74 : vector<1x20x4xf32> to vector<20x4xf32>
    %c4_101 = arith.constant 4 : index
    %c0_102 = arith.constant 0 : index
    %c0_103 = arith.constant 0 : index
    %76 = vector.load %arg10[%c4_101, %c0_102, %c0_103] : memref<5x20x4xf32, #tpu.memory_space<vmem>>, vector<1x20x4xf32>
    %77 = vector.shape_cast %76 : vector<1x20x4xf32> to vector<20x4xf32>
    %c0_104 = arith.constant 0 : index
    %c0_105 = arith.constant 0 : index
    %c0_106 = arith.constant 0 : index
    %78 = vector.load %arg11[%c0_104, %c0_105, %c0_106] : memref<5x1x4xf32, #tpu.memory_space<vmem>>, vector<1x1x4xf32>
    %79 = vector.shape_cast %78 : vector<1x1x4xf32> to vector<1x4xf32>
    %c1_107 = arith.constant 1 : index
    %c0_108 = arith.constant 0 : index
    %c0_109 = arith.constant 0 : index
    %80 = vector.load %arg11[%c1_107, %c0_108, %c0_109] : memref<5x1x4xf32, #tpu.memory_space<vmem>>, vector<1x1x4xf32>
    %81 = vector.shape_cast %80 : vector<1x1x4xf32> to vector<1x4xf32>
    %c2_110 = arith.constant 2 : index
    %c0_111 = arith.constant 0 : index
    %c0_112 = arith.constant 0 : index
    %82 = vector.load %arg11[%c2_110, %c0_111, %c0_112] : memref<5x1x4xf32, #tpu.memory_space<vmem>>, vector<1x1x4xf32>
    %83 = vector.shape_cast %82 : vector<1x1x4xf32> to vector<1x4xf32>
    %c3_113 = arith.constant 3 : index
    %c0_114 = arith.constant 0 : index
    %c0_115 = arith.constant 0 : index
    %84 = vector.load %arg11[%c3_113, %c0_114, %c0_115] : memref<5x1x4xf32, #tpu.memory_space<vmem>>, vector<1x1x4xf32>
    %85 = vector.shape_cast %84 : vector<1x1x4xf32> to vector<1x4xf32>
    %c4_116 = arith.constant 4 : index
    %c0_117 = arith.constant 0 : index
    %c0_118 = arith.constant 0 : index
    %86 = vector.load %arg11[%c4_116, %c0_117, %c0_118] : memref<5x1x4xf32, #tpu.memory_space<vmem>>, vector<1x1x4xf32>
    %87 = vector.shape_cast %86 : vector<1x1x4xf32> to vector<1x4xf32>
    %c0_119 = arith.constant 0 : index
    %c0_120 = arith.constant 0 : index
    %c0_121 = arith.constant 0 : index
    %88 = vector.load %arg12[%c0_119, %c0_120, %c0_121] : memref<5x1x4xf32, #tpu.memory_space<vmem>>, vector<1x1x4xf32>
    %89 = vector.shape_cast %88 : vector<1x1x4xf32> to vector<1x4xf32>
    %c1_122 = arith.constant 1 : index
    %c0_123 = arith.constant 0 : index
    %c0_124 = arith.constant 0 : index
    %90 = vector.load %arg12[%c1_122, %c0_123, %c0_124] : memref<5x1x4xf32, #tpu.memory_space<vmem>>, vector<1x1x4xf32>
    %91 = vector.shape_cast %90 : vector<1x1x4xf32> to vector<1x4xf32>
    %c2_125 = arith.constant 2 : index
    %c0_126 = arith.constant 0 : index
    %c0_127 = arith.constant 0 : index
    %92 = vector.load %arg12[%c2_125, %c0_126, %c0_127] : memref<5x1x4xf32, #tpu.memory_space<vmem>>, vector<1x1x4xf32>
    %93 = vector.shape_cast %92 : vector<1x1x4xf32> to vector<1x4xf32>
    %c3_128 = arith.constant 3 : index
    %c0_129 = arith.constant 0 : index
    %c0_130 = arith.constant 0 : index
    %94 = vector.load %arg12[%c3_128, %c0_129, %c0_130] : memref<5x1x4xf32, #tpu.memory_space<vmem>>, vector<1x1x4xf32>
    %95 = vector.shape_cast %94 : vector<1x1x4xf32> to vector<1x4xf32>
    %c4_131 = arith.constant 4 : index
    %c0_132 = arith.constant 0 : index
    %c0_133 = arith.constant 0 : index
    %96 = vector.load %arg12[%c4_131, %c0_132, %c0_133] : memref<5x1x4xf32, #tpu.memory_space<vmem>>, vector<1x1x4xf32>
    %97 = vector.shape_cast %96 : vector<1x1x4xf32> to vector<1x4xf32>
    %c0_134 = arith.constant 0 : index
    %c0_135 = arith.constant 0 : index
    %c0_136 = arith.constant 0 : index
    %98 = vector.load %arg13[%c0_134, %c0_135, %c0_136] : memref<5x1x4xf32, #tpu.memory_space<vmem>>, vector<1x1x4xf32>
    %99 = vector.shape_cast %98 : vector<1x1x4xf32> to vector<1x4xf32>
    %c1_137 = arith.constant 1 : index
    %c0_138 = arith.constant 0 : index
    %c0_139 = arith.constant 0 : index
    %100 = vector.load %arg13[%c1_137, %c0_138, %c0_139] : memref<5x1x4xf32, #tpu.memory_space<vmem>>, vector<1x1x4xf32>
    %101 = vector.shape_cast %100 : vector<1x1x4xf32> to vector<1x4xf32>
    %c2_140 = arith.constant 2 : index
    %c0_141 = arith.constant 0 : index
    %c0_142 = arith.constant 0 : index
    %102 = vector.load %arg13[%c2_140, %c0_141, %c0_142] : memref<5x1x4xf32, #tpu.memory_space<vmem>>, vector<1x1x4xf32>
    %103 = vector.shape_cast %102 : vector<1x1x4xf32> to vector<1x4xf32>
    %c3_143 = arith.constant 3 : index
    %c0_144 = arith.constant 0 : index
    %c0_145 = arith.constant 0 : index
    %104 = vector.load %arg13[%c3_143, %c0_144, %c0_145] : memref<5x1x4xf32, #tpu.memory_space<vmem>>, vector<1x1x4xf32>
    %105 = vector.shape_cast %104 : vector<1x1x4xf32> to vector<1x4xf32>
    %c4_146 = arith.constant 4 : index
    %c0_147 = arith.constant 0 : index
    %c0_148 = arith.constant 0 : index
    %106 = vector.load %arg13[%c4_146, %c0_147, %c0_148] : memref<5x1x4xf32, #tpu.memory_space<vmem>>, vector<1x1x4xf32>
    %107 = vector.shape_cast %106 : vector<1x1x4xf32> to vector<1x4xf32>
    %c0_149 = arith.constant 0 : index
    %c0_150 = arith.constant 0 : index
    %c0_151 = arith.constant 0 : index
    %108 = vector.load %arg14[%c0_149, %c0_150, %c0_151] : memref<5x4x20xf32, #tpu.memory_space<vmem>>, vector<1x4x20xf32>
    %109 = vector.shape_cast %108 : vector<1x4x20xf32> to vector<4x20xf32>
    %c1_152 = arith.constant 1 : index
    %c0_153 = arith.constant 0 : index
    %c0_154 = arith.constant 0 : index
    %110 = vector.load %arg14[%c1_152, %c0_153, %c0_154] : memref<5x4x20xf32, #tpu.memory_space<vmem>>, vector<1x4x20xf32>
    %111 = vector.shape_cast %110 : vector<1x4x20xf32> to vector<4x20xf32>
    %c2_155 = arith.constant 2 : index
    %c0_156 = arith.constant 0 : index
    %c0_157 = arith.constant 0 : index
    %112 = vector.load %arg14[%c2_155, %c0_156, %c0_157] : memref<5x4x20xf32, #tpu.memory_space<vmem>>, vector<1x4x20xf32>
    %113 = vector.shape_cast %112 : vector<1x4x20xf32> to vector<4x20xf32>
    %c3_158 = arith.constant 3 : index
    %c0_159 = arith.constant 0 : index
    %c0_160 = arith.constant 0 : index
    %114 = vector.load %arg14[%c3_158, %c0_159, %c0_160] : memref<5x4x20xf32, #tpu.memory_space<vmem>>, vector<1x4x20xf32>
    %115 = vector.shape_cast %114 : vector<1x4x20xf32> to vector<4x20xf32>
    %c4_161 = arith.constant 4 : index
    %c0_162 = arith.constant 0 : index
    %c0_163 = arith.constant 0 : index
    %116 = vector.load %arg14[%c4_161, %c0_162, %c0_163] : memref<5x4x20xf32, #tpu.memory_space<vmem>>, vector<1x4x20xf32>
    %117 = vector.shape_cast %116 : vector<1x4x20xf32> to vector<4x20xf32>
    %cst_164 = arith.constant 2.500000e-01 : f32
    %118 = vector.broadcast %cst_164 : f32 to vector<1x4xf32>
    %cst_165 = arith.constant 0.000000e+00 : f32
    %119 = vector.broadcast %cst_165 : f32 to vector<2x20xf32>
    %c0_166 = arith.constant 0 : index
    %c0_167 = arith.constant 0 : index
    %120 = vector.load %arg3[%c0_166, %c0_167] : memref<4x20xf32, #tpu.memory_space<vmem>>, vector<4x20xf32>
    %cst_168 = arith.constant dense<0.000000e+00> : vector<1x20xf32>
    %121 = tpu.matmul %118, %120, %cst_168 {dimension_numbers = #tpu.dot_dimension_numbers<[1], [0], [0], [1], [0, 0, 1, 1], [], []>} : vector<1x4xf32>, vector<4x20xf32>, vector<1x20xf32> -> vector<1x20xf32>
    %122 = arith.mulf %1, %2 : vector<2x20xf32>
    %123 = vector.broadcast %121 : vector<1x20xf32> to vector<2x20xf32>
    %124 = arith.mulf %1, %123 : vector<2x20xf32>
    %125 = arith.subf %1, %2 : vector<2x20xf32>
    %126 = math.absf %125 : vector<2x20xf32>
    %127 = vector.broadcast %121 : vector<1x20xf32> to vector<2x20xf32>
    %128 = arith.subf %1, %127 : vector<2x20xf32>
    %129 = math.absf %128 : vector<2x20xf32>
    %cst_169 = arith.constant dense<0.000000e+00> : vector<2x16xf32>
    %130 = tpu.matmul %122, %37, %cst_169 {dimension_numbers = #tpu.dot_dimension_numbers<[1], [0], [0], [1], [0, 0, 1, 1], [], []>} : vector<2x20xf32>, vector<20x16xf32>, vector<2x16xf32> -> vector<2x16xf32>
    %cst_170 = arith.constant dense<0.000000e+00> : vector<2x16xf32>
    %131 = tpu.matmul %124, %39, %cst_170 {dimension_numbers = #tpu.dot_dimension_numbers<[1], [0], [0], [1], [0, 0, 1, 1], [], []>} : vector<2x20xf32>, vector<20x16xf32>, vector<2x16xf32> -> vector<2x16xf32>
    %132 = arith.addf %130, %131 : vector<2x16xf32>
    %cst_171 = arith.constant dense<0.000000e+00> : vector<2x16xf32>
    %133 = tpu.matmul %126, %41, %cst_171 {dimension_numbers = #tpu.dot_dimension_numbers<[1], [0], [0], [1], [0, 0, 1, 1], [], []>} : vector<2x20xf32>, vector<20x16xf32>, vector<2x16xf32> -> vector<2x16xf32>
    %134 = arith.addf %132, %133 : vector<2x16xf32>
    %cst_172 = arith.constant dense<0.000000e+00> : vector<2x16xf32>
    %135 = tpu.matmul %129, %43, %cst_172 {dimension_numbers = #tpu.dot_dimension_numbers<[1], [0], [0], [1], [0, 0, 1, 1], [], []>} : vector<2x20xf32>, vector<20x16xf32>, vector<2x16xf32> -> vector<2x16xf32>
    %136 = arith.addf %134, %135 : vector<2x16xf32>
    %137 = vector.broadcast %44 : vector<1x16xf32> to vector<2x16xf32>
    %138 = arith.addf %136, %137 : vector<2x16xf32>
    %139 = math.tanh %138 : vector<2x16xf32>
    %cst_173 = arith.constant dense<0.000000e+00> : vector<2x1xf32>
    %140 = tpu.matmul %139, %45, %cst_173 {dimension_numbers = #tpu.dot_dimension_numbers<[1], [0], [0], [1], [0, 0, 1, 1], [], []>} : vector<2x16xf32>, vector<16x1xf32>, vector<2x1xf32> -> vector<2x1xf32>
    %141 = vector.broadcast %46 : vector<1x1xf32> to vector<2x1xf32>
    %142 = arith.addf %140, %141 : vector<2x1xf32>
    %143 = arith.negf %142 : vector<2x1xf32>
    %144 = math.exp %143 : vector<2x1xf32>
    %cst_174 = arith.constant 1.000000e+00 : f32
    %145 = vector.broadcast %cst_174 : f32 to vector<2x1xf32>
    %146 = arith.addf %145, %144 : vector<2x1xf32>
    %147 = arith.divf %145, %146 : vector<2x1xf32>
    %148 = vector.extract_strided_slice %17 {offsets = [0, 0], sizes = [2, 20], strides = [1, 1]} : vector<16x20xf32> to vector<2x20xf32>
    %149 = vector.extract_strided_slice %20 {offsets = [0, 0], sizes = [2, 20], strides = [1, 1]} : vector<16x20xf32> to vector<2x20xf32>
    %150 = vector.extract_strided_slice %23 {offsets = [0, 0], sizes = [2, 20], strides = [1, 1]} : vector<16x20xf32> to vector<2x20xf32>
    %cst_175 = arith.constant dense<0.000000e+00> : vector<2x20xf32>
    %151 = tpu.matmul %119, %25, %cst_175 {dimension_numbers = #tpu.dot_dimension_numbers<[1], [0], [0], [1], [0, 0, 1, 1], [], []>} : vector<2x20xf32>, vector<20x20xf32>, vector<2x20xf32> -> vector<2x20xf32>
    %152 = vector.broadcast %31 : vector<1x20xf32> to vector<2x20xf32>
    %153 = arith.addf %151, %152 : vector<2x20xf32>
    %cst_176 = arith.constant dense<0.000000e+00> : vector<2x20xf32>
    %154 = tpu.matmul %119, %27, %cst_176 {dimension_numbers = #tpu.dot_dimension_numbers<[1], [0], [0], [1], [0, 0, 1, 1], [], []>} : vector<2x20xf32>, vector<20x20xf32>, vector<2x20xf32> -> vector<2x20xf32>
    %155 = vector.broadcast %33 : vector<1x20xf32> to vector<2x20xf32>
    %156 = arith.addf %154, %155 : vector<2x20xf32>
    %cst_177 = arith.constant dense<0.000000e+00> : vector<2x20xf32>
    %157 = tpu.matmul %119, %29, %cst_177 {dimension_numbers = #tpu.dot_dimension_numbers<[1], [0], [0], [1], [0, 0, 1, 1], [], []>} : vector<2x20xf32>, vector<20x20xf32>, vector<2x20xf32> -> vector<2x20xf32>
    %158 = vector.broadcast %35 : vector<1x20xf32> to vector<2x20xf32>
    %159 = arith.addf %157, %158 : vector<2x20xf32>
    %160 = arith.addf %148, %153 : vector<2x20xf32>
    %161 = arith.negf %160 : vector<2x20xf32>
    %162 = math.exp %161 : vector<2x20xf32>
    %cst_178 = arith.constant 1.000000e+00 : f32
    %163 = vector.broadcast %cst_178 : f32 to vector<2x20xf32>
    %164 = arith.addf %163, %162 : vector<2x20xf32>
    %165 = arith.divf %163, %164 : vector<2x20xf32>
    %166 = arith.addf %149, %156 : vector<2x20xf32>
    %167 = arith.negf %166 : vector<2x20xf32>
    %168 = math.exp %167 : vector<2x20xf32>
    %cst_179 = arith.constant 1.000000e+00 : f32
    %169 = vector.broadcast %cst_179 : f32 to vector<2x20xf32>
    %170 = arith.addf %169, %168 : vector<2x20xf32>
    %171 = arith.divf %169, %170 : vector<2x20xf32>
    %172 = arith.mulf %165, %159 : vector<2x20xf32>
    %173 = arith.addf %150, %172 : vector<2x20xf32>
    %174 = math.tanh %173 : vector<2x20xf32>
    %cst_180 = arith.constant 1.000000e+00 : f32
    %175 = vector.broadcast %cst_180 : f32 to vector<2x20xf32>
    %176 = arith.subf %175, %171 : vector<2x20xf32>
    %177 = arith.mulf %176, %174 : vector<2x20xf32>
    %178 = arith.mulf %171, %119 : vector<2x20xf32>
    %179 = arith.addf %177, %178 : vector<2x20xf32>
    %180 = vector.extract_strided_slice %17 {offsets = [2, 0], sizes = [2, 20], strides = [1, 1]} : vector<16x20xf32> to vector<2x20xf32>
    %181 = vector.extract_strided_slice %20 {offsets = [2, 0], sizes = [2, 20], strides = [1, 1]} : vector<16x20xf32> to vector<2x20xf32>
    %182 = vector.extract_strided_slice %23 {offsets = [2, 0], sizes = [2, 20], strides = [1, 1]} : vector<16x20xf32> to vector<2x20xf32>
    %cst_181 = arith.constant dense<0.000000e+00> : vector<2x20xf32>
    %183 = tpu.matmul %179, %25, %cst_181 {dimension_numbers = #tpu.dot_dimension_numbers<[1], [0], [0], [1], [0, 0, 1, 1], [], []>} : vector<2x20xf32>, vector<20x20xf32>, vector<2x20xf32> -> vector<2x20xf32>
    %184 = vector.broadcast %31 : vector<1x20xf32> to vector<2x20xf32>
    %185 = arith.addf %183, %184 : vector<2x20xf32>
    %cst_182 = arith.constant dense<0.000000e+00> : vector<2x20xf32>
    %186 = tpu.matmul %179, %27, %cst_182 {dimension_numbers = #tpu.dot_dimension_numbers<[1], [0], [0], [1], [0, 0, 1, 1], [], []>} : vector<2x20xf32>, vector<20x20xf32>, vector<2x20xf32> -> vector<2x20xf32>
    %187 = vector.broadcast %33 : vector<1x20xf32> to vector<2x20xf32>
    %188 = arith.addf %186, %187 : vector<2x20xf32>
    %cst_183 = arith.constant dense<0.000000e+00> : vector<2x20xf32>
    %189 = tpu.matmul %179, %29, %cst_183 {dimension_numbers = #tpu.dot_dimension_numbers<[1], [0], [0], [1], [0, 0, 1, 1], [], []>} : vector<2x20xf32>, vector<20x20xf32>, vector<2x20xf32> -> vector<2x20xf32>
    %190 = vector.broadcast %35 : vector<1x20xf32> to vector<2x20xf32>
    %191 = arith.addf %189, %190 : vector<2x20xf32>
    %192 = arith.addf %180, %185 : vector<2x20xf32>
    %193 = arith.negf %192 : vector<2x20xf32>
    %194 = math.exp %193 : vector<2x20xf32>
    %cst_184 = arith.constant 1.000000e+00 : f32
    %195 = vector.broadcast %cst_184 : f32 to vector<2x20xf32>
    %196 = arith.addf %195, %194 : vector<2x20xf32>
    %197 = arith.divf %195, %196 : vector<2x20xf32>
    %198 = arith.addf %181, %188 : vector<2x20xf32>
    %199 = arith.negf %198 : vector<2x20xf32>
    %200 = math.exp %199 : vector<2x20xf32>
    %cst_185 = arith.constant 1.000000e+00 : f32
    %201 = vector.broadcast %cst_185 : f32 to vector<2x20xf32>
    %202 = arith.addf %201, %200 : vector<2x20xf32>
    %203 = arith.divf %201, %202 : vector<2x20xf32>
    %204 = arith.mulf %197, %191 : vector<2x20xf32>
    %205 = arith.addf %182, %204 : vector<2x20xf32>
    %206 = math.tanh %205 : vector<2x20xf32>
    %cst_186 = arith.constant 1.000000e+00 : f32
    %207 = vector.broadcast %cst_186 : f32 to vector<2x20xf32>
    %208 = arith.subf %207, %203 : vector<2x20xf32>
    %209 = arith.mulf %208, %206 : vector<2x20xf32>
    %210 = arith.mulf %203, %179 : vector<2x20xf32>
    %211 = arith.addf %209, %210 : vector<2x20xf32>
    %212 = vector.extract_strided_slice %17 {offsets = [4, 0], sizes = [2, 20], strides = [1, 1]} : vector<16x20xf32> to vector<2x20xf32>
    %213 = vector.extract_strided_slice %20 {offsets = [4, 0], sizes = [2, 20], strides = [1, 1]} : vector<16x20xf32> to vector<2x20xf32>
    %214 = vector.extract_strided_slice %23 {offsets = [4, 0], sizes = [2, 20], strides = [1, 1]} : vector<16x20xf32> to vector<2x20xf32>
    %cst_187 = arith.constant dense<0.000000e+00> : vector<2x20xf32>
    %215 = tpu.matmul %211, %25, %cst_187 {dimension_numbers = #tpu.dot_dimension_numbers<[1], [0], [0], [1], [0, 0, 1, 1], [], []>} : vector<2x20xf32>, vector<20x20xf32>, vector<2x20xf32> -> vector<2x20xf32>
    %216 = vector.broadcast %31 : vector<1x20xf32> to vector<2x20xf32>
    %217 = arith.addf %215, %216 : vector<2x20xf32>
    %cst_188 = arith.constant dense<0.000000e+00> : vector<2x20xf32>
    %218 = tpu.matmul %211, %27, %cst_188 {dimension_numbers = #tpu.dot_dimension_numbers<[1], [0], [0], [1], [0, 0, 1, 1], [], []>} : vector<2x20xf32>, vector<20x20xf32>, vector<2x20xf32> -> vector<2x20xf32>
    %219 = vector.broadcast %33 : vector<1x20xf32> to vector<2x20xf32>
    %220 = arith.addf %218, %219 : vector<2x20xf32>
    %cst_189 = arith.constant dense<0.000000e+00> : vector<2x20xf32>
    %221 = tpu.matmul %211, %29, %cst_189 {dimension_numbers = #tpu.dot_dimension_numbers<[1], [0], [0], [1], [0, 0, 1, 1], [], []>} : vector<2x20xf32>, vector<20x20xf32>, vector<2x20xf32> -> vector<2x20xf32>
    %222 = vector.broadcast %35 : vector<1x20xf32> to vector<2x20xf32>
    %223 = arith.addf %221, %222 : vector<2x20xf32>
    %224 = arith.addf %212, %217 : vector<2x20xf32>
    %225 = arith.negf %224 : vector<2x20xf32>
    %226 = math.exp %225 : vector<2x20xf32>
    %cst_190 = arith.constant 1.000000e+00 : f32
    %227 = vector.broadcast %cst_190 : f32 to vector<2x20xf32>
    %228 = arith.addf %227, %226 : vector<2x20xf32>
    %229 = arith.divf %227, %228 : vector<2x20xf32>
    %230 = arith.addf %213, %220 : vector<2x20xf32>
    %231 = arith.negf %230 : vector<2x20xf32>
    %232 = math.exp %231 : vector<2x20xf32>
    %cst_191 = arith.constant 1.000000e+00 : f32
    %233 = vector.broadcast %cst_191 : f32 to vector<2x20xf32>
    %234 = arith.addf %233, %232 : vector<2x20xf32>
    %235 = arith.divf %233, %234 : vector<2x20xf32>
    %236 = arith.mulf %229, %223 : vector<2x20xf32>
    %237 = arith.addf %214, %236 : vector<2x20xf32>
    %238 = math.tanh %237 : vector<2x20xf32>
    %cst_192 = arith.constant 1.000000e+00 : f32
    %239 = vector.broadcast %cst_192 : f32 to vector<2x20xf32>
    %240 = arith.subf %239, %235 : vector<2x20xf32>
    %241 = arith.mulf %240, %238 : vector<2x20xf32>
    %242 = arith.mulf %235, %211 : vector<2x20xf32>
    %243 = arith.addf %241, %242 : vector<2x20xf32>
    %244 = vector.extract_strided_slice %17 {offsets = [6, 0], sizes = [2, 20], strides = [1, 1]} : vector<16x20xf32> to vector<2x20xf32>
    %245 = vector.extract_strided_slice %20 {offsets = [6, 0], sizes = [2, 20], strides = [1, 1]} : vector<16x20xf32> to vector<2x20xf32>
    %246 = vector.extract_strided_slice %23 {offsets = [6, 0], sizes = [2, 20], strides = [1, 1]} : vector<16x20xf32> to vector<2x20xf32>
    %cst_193 = arith.constant dense<0.000000e+00> : vector<2x20xf32>
    %247 = tpu.matmul %243, %25, %cst_193 {dimension_numbers = #tpu.dot_dimension_numbers<[1], [0], [0], [1], [0, 0, 1, 1], [], []>} : vector<2x20xf32>, vector<20x20xf32>, vector<2x20xf32> -> vector<2x20xf32>
    %248 = vector.broadcast %31 : vector<1x20xf32> to vector<2x20xf32>
    %249 = arith.addf %247, %248 : vector<2x20xf32>
    %cst_194 = arith.constant dense<0.000000e+00> : vector<2x20xf32>
    %250 = tpu.matmul %243, %27, %cst_194 {dimension_numbers = #tpu.dot_dimension_numbers<[1], [0], [0], [1], [0, 0, 1, 1], [], []>} : vector<2x20xf32>, vector<20x20xf32>, vector<2x20xf32> -> vector<2x20xf32>
    %251 = vector.broadcast %33 : vector<1x20xf32> to vector<2x20xf32>
    %252 = arith.addf %250, %251 : vector<2x20xf32>
    %cst_195 = arith.constant dense<0.000000e+00> : vector<2x20xf32>
    %253 = tpu.matmul %243, %29, %cst_195 {dimension_numbers = #tpu.dot_dimension_numbers<[1], [0], [0], [1], [0, 0, 1, 1], [], []>} : vector<2x20xf32>, vector<20x20xf32>, vector<2x20xf32> -> vector<2x20xf32>
    %254 = vector.broadcast %35 : vector<1x20xf32> to vector<2x20xf32>
    %255 = arith.addf %253, %254 : vector<2x20xf32>
    %256 = arith.addf %244, %249 : vector<2x20xf32>
    %257 = arith.negf %256 : vector<2x20xf32>
    %258 = math.exp %257 : vector<2x20xf32>
    %cst_196 = arith.constant 1.000000e+00 : f32
    %259 = vector.broadcast %cst_196 : f32 to vector<2x20xf32>
    %260 = arith.addf %259, %258 : vector<2x20xf32>
    %261 = arith.divf %259, %260 : vector<2x20xf32>
    %262 = arith.addf %245, %252 : vector<2x20xf32>
    %263 = arith.negf %262 : vector<2x20xf32>
    %264 = math.exp %263 : vector<2x20xf32>
    %cst_197 = arith.constant 1.000000e+00 : f32
    %265 = vector.broadcast %cst_197 : f32 to vector<2x20xf32>
    %266 = arith.addf %265, %264 : vector<2x20xf32>
    %267 = arith.divf %265, %266 : vector<2x20xf32>
    %268 = arith.mulf %261, %255 : vector<2x20xf32>
    %269 = arith.addf %246, %268 : vector<2x20xf32>
    %270 = math.tanh %269 : vector<2x20xf32>
    %cst_198 = arith.constant 1.000000e+00 : f32
    %271 = vector.broadcast %cst_198 : f32 to vector<2x20xf32>
    %272 = arith.subf %271, %267 : vector<2x20xf32>
    %273 = arith.mulf %272, %270 : vector<2x20xf32>
    %274 = arith.mulf %267, %243 : vector<2x20xf32>
    %275 = arith.addf %273, %274 : vector<2x20xf32>
    %276 = vector.extract_strided_slice %17 {offsets = [8, 0], sizes = [2, 20], strides = [1, 1]} : vector<16x20xf32> to vector<2x20xf32>
    %277 = vector.extract_strided_slice %20 {offsets = [8, 0], sizes = [2, 20], strides = [1, 1]} : vector<16x20xf32> to vector<2x20xf32>
    %278 = vector.extract_strided_slice %23 {offsets = [8, 0], sizes = [2, 20], strides = [1, 1]} : vector<16x20xf32> to vector<2x20xf32>
    %cst_199 = arith.constant dense<0.000000e+00> : vector<2x20xf32>
    %279 = tpu.matmul %275, %25, %cst_199 {dimension_numbers = #tpu.dot_dimension_numbers<[1], [0], [0], [1], [0, 0, 1, 1], [], []>} : vector<2x20xf32>, vector<20x20xf32>, vector<2x20xf32> -> vector<2x20xf32>
    %280 = vector.broadcast %31 : vector<1x20xf32> to vector<2x20xf32>
    %281 = arith.addf %279, %280 : vector<2x20xf32>
    %cst_200 = arith.constant dense<0.000000e+00> : vector<2x20xf32>
    %282 = tpu.matmul %275, %27, %cst_200 {dimension_numbers = #tpu.dot_dimension_numbers<[1], [0], [0], [1], [0, 0, 1, 1], [], []>} : vector<2x20xf32>, vector<20x20xf32>, vector<2x20xf32> -> vector<2x20xf32>
    %283 = vector.broadcast %33 : vector<1x20xf32> to vector<2x20xf32>
    %284 = arith.addf %282, %283 : vector<2x20xf32>
    %cst_201 = arith.constant dense<0.000000e+00> : vector<2x20xf32>
    %285 = tpu.matmul %275, %29, %cst_201 {dimension_numbers = #tpu.dot_dimension_numbers<[1], [0], [0], [1], [0, 0, 1, 1], [], []>} : vector<2x20xf32>, vector<20x20xf32>, vector<2x20xf32> -> vector<2x20xf32>
    %286 = vector.broadcast %35 : vector<1x20xf32> to vector<2x20xf32>
    %287 = arith.addf %285, %286 : vector<2x20xf32>
    %288 = arith.addf %276, %281 : vector<2x20xf32>
    %289 = arith.negf %288 : vector<2x20xf32>
    %290 = math.exp %289 : vector<2x20xf32>
    %cst_202 = arith.constant 1.000000e+00 : f32
    %291 = vector.broadcast %cst_202 : f32 to vector<2x20xf32>
    %292 = arith.addf %291, %290 : vector<2x20xf32>
    %293 = arith.divf %291, %292 : vector<2x20xf32>
    %294 = arith.addf %277, %284 : vector<2x20xf32>
    %295 = arith.negf %294 : vector<2x20xf32>
    %296 = math.exp %295 : vector<2x20xf32>
    %cst_203 = arith.constant 1.000000e+00 : f32
    %297 = vector.broadcast %cst_203 : f32 to vector<2x20xf32>
    %298 = arith.addf %297, %296 : vector<2x20xf32>
    %299 = arith.divf %297, %298 : vector<2x20xf32>
    %300 = arith.mulf %293, %287 : vector<2x20xf32>
    %301 = arith.addf %278, %300 : vector<2x20xf32>
    %302 = math.tanh %301 : vector<2x20xf32>
    %cst_204 = arith.constant 1.000000e+00 : f32
    %303 = vector.broadcast %cst_204 : f32 to vector<2x20xf32>
    %304 = arith.subf %303, %299 : vector<2x20xf32>
    %305 = arith.mulf %304, %302 : vector<2x20xf32>
    %306 = arith.mulf %299, %275 : vector<2x20xf32>
    %307 = arith.addf %305, %306 : vector<2x20xf32>
    %308 = vector.extract_strided_slice %17 {offsets = [10, 0], sizes = [2, 20], strides = [1, 1]} : vector<16x20xf32> to vector<2x20xf32>
    %309 = vector.extract_strided_slice %20 {offsets = [10, 0], sizes = [2, 20], strides = [1, 1]} : vector<16x20xf32> to vector<2x20xf32>
    %310 = vector.extract_strided_slice %23 {offsets = [10, 0], sizes = [2, 20], strides = [1, 1]} : vector<16x20xf32> to vector<2x20xf32>
    %cst_205 = arith.constant dense<0.000000e+00> : vector<2x20xf32>
    %311 = tpu.matmul %307, %25, %cst_205 {dimension_numbers = #tpu.dot_dimension_numbers<[1], [0], [0], [1], [0, 0, 1, 1], [], []>} : vector<2x20xf32>, vector<20x20xf32>, vector<2x20xf32> -> vector<2x20xf32>
    %312 = vector.broadcast %31 : vector<1x20xf32> to vector<2x20xf32>
    %313 = arith.addf %311, %312 : vector<2x20xf32>
    %cst_206 = arith.constant dense<0.000000e+00> : vector<2x20xf32>
    %314 = tpu.matmul %307, %27, %cst_206 {dimension_numbers = #tpu.dot_dimension_numbers<[1], [0], [0], [1], [0, 0, 1, 1], [], []>} : vector<2x20xf32>, vector<20x20xf32>, vector<2x20xf32> -> vector<2x20xf32>
    %315 = vector.broadcast %33 : vector<1x20xf32> to vector<2x20xf32>
    %316 = arith.addf %314, %315 : vector<2x20xf32>
    %cst_207 = arith.constant dense<0.000000e+00> : vector<2x20xf32>
    %317 = tpu.matmul %307, %29, %cst_207 {dimension_numbers = #tpu.dot_dimension_numbers<[1], [0], [0], [1], [0, 0, 1, 1], [], []>} : vector<2x20xf32>, vector<20x20xf32>, vector<2x20xf32> -> vector<2x20xf32>
    %318 = vector.broadcast %35 : vector<1x20xf32> to vector<2x20xf32>
    %319 = arith.addf %317, %318 : vector<2x20xf32>
    %320 = arith.addf %308, %313 : vector<2x20xf32>
    %321 = arith.negf %320 : vector<2x20xf32>
    %322 = math.exp %321 : vector<2x20xf32>
    %cst_208 = arith.constant 1.000000e+00 : f32
    %323 = vector.broadcast %cst_208 : f32 to vector<2x20xf32>
    %324 = arith.addf %323, %322 : vector<2x20xf32>
    %325 = arith.divf %323, %324 : vector<2x20xf32>
    %326 = arith.addf %309, %316 : vector<2x20xf32>
    %327 = arith.negf %326 : vector<2x20xf32>
    %328 = math.exp %327 : vector<2x20xf32>
    %cst_209 = arith.constant 1.000000e+00 : f32
    %329 = vector.broadcast %cst_209 : f32 to vector<2x20xf32>
    %330 = arith.addf %329, %328 : vector<2x20xf32>
    %331 = arith.divf %329, %330 : vector<2x20xf32>
    %332 = arith.mulf %325, %319 : vector<2x20xf32>
    %333 = arith.addf %310, %332 : vector<2x20xf32>
    %334 = math.tanh %333 : vector<2x20xf32>
    %cst_210 = arith.constant 1.000000e+00 : f32
    %335 = vector.broadcast %cst_210 : f32 to vector<2x20xf32>
    %336 = arith.subf %335, %331 : vector<2x20xf32>
    %337 = arith.mulf %336, %334 : vector<2x20xf32>
    %338 = arith.mulf %331, %307 : vector<2x20xf32>
    %339 = arith.addf %337, %338 : vector<2x20xf32>
    %340 = vector.extract_strided_slice %17 {offsets = [12, 0], sizes = [2, 20], strides = [1, 1]} : vector<16x20xf32> to vector<2x20xf32>
    %341 = vector.extract_strided_slice %20 {offsets = [12, 0], sizes = [2, 20], strides = [1, 1]} : vector<16x20xf32> to vector<2x20xf32>
    %342 = vector.extract_strided_slice %23 {offsets = [12, 0], sizes = [2, 20], strides = [1, 1]} : vector<16x20xf32> to vector<2x20xf32>
    %cst_211 = arith.constant dense<0.000000e+00> : vector<2x20xf32>
    %343 = tpu.matmul %339, %25, %cst_211 {dimension_numbers = #tpu.dot_dimension_numbers<[1], [0], [0], [1], [0, 0, 1, 1], [], []>} : vector<2x20xf32>, vector<20x20xf32>, vector<2x20xf32> -> vector<2x20xf32>
    %344 = vector.broadcast %31 : vector<1x20xf32> to vector<2x20xf32>
    %345 = arith.addf %343, %344 : vector<2x20xf32>
    %cst_212 = arith.constant dense<0.000000e+00> : vector<2x20xf32>
    %346 = tpu.matmul %339, %27, %cst_212 {dimension_numbers = #tpu.dot_dimension_numbers<[1], [0], [0], [1], [0, 0, 1, 1], [], []>} : vector<2x20xf32>, vector<20x20xf32>, vector<2x20xf32> -> vector<2x20xf32>
    %347 = vector.broadcast %33 : vector<1x20xf32> to vector<2x20xf32>
    %348 = arith.addf %346, %347 : vector<2x20xf32>
    %cst_213 = arith.constant dense<0.000000e+00> : vector<2x20xf32>
    %349 = tpu.matmul %339, %29, %cst_213 {dimension_numbers = #tpu.dot_dimension_numbers<[1], [0], [0], [1], [0, 0, 1, 1], [], []>} : vector<2x20xf32>, vector<20x20xf32>, vector<2x20xf32> -> vector<2x20xf32>
    %350 = vector.broadcast %35 : vector<1x20xf32> to vector<2x20xf32>
    %351 = arith.addf %349, %350 : vector<2x20xf32>
    %352 = arith.addf %340, %345 : vector<2x20xf32>
    %353 = arith.negf %352 : vector<2x20xf32>
    %354 = math.exp %353 : vector<2x20xf32>
    %cst_214 = arith.constant 1.000000e+00 : f32
    %355 = vector.broadcast %cst_214 : f32 to vector<2x20xf32>
    %356 = arith.addf %355, %354 : vector<2x20xf32>
    %357 = arith.divf %355, %356 : vector<2x20xf32>
    %358 = arith.addf %341, %348 : vector<2x20xf32>
    %359 = arith.negf %358 : vector<2x20xf32>
    %360 = math.exp %359 : vector<2x20xf32>
    %cst_215 = arith.constant 1.000000e+00 : f32
    %361 = vector.broadcast %cst_215 : f32 to vector<2x20xf32>
    %362 = arith.addf %361, %360 : vector<2x20xf32>
    %363 = arith.divf %361, %362 : vector<2x20xf32>
    %364 = arith.mulf %357, %351 : vector<2x20xf32>
    %365 = arith.addf %342, %364 : vector<2x20xf32>
    %366 = math.tanh %365 : vector<2x20xf32>
    %cst_216 = arith.constant 1.000000e+00 : f32
    %367 = vector.broadcast %cst_216 : f32 to vector<2x20xf32>
    %368 = arith.subf %367, %363 : vector<2x20xf32>
    %369 = arith.mulf %368, %366 : vector<2x20xf32>
    %370 = arith.mulf %363, %339 : vector<2x20xf32>
    %371 = arith.addf %369, %370 : vector<2x20xf32>
    %372 = vector.extract_strided_slice %17 {offsets = [14, 0], sizes = [2, 20], strides = [1, 1]} : vector<16x20xf32> to vector<2x20xf32>
    %373 = vector.extract_strided_slice %20 {offsets = [14, 0], sizes = [2, 20], strides = [1, 1]} : vector<16x20xf32> to vector<2x20xf32>
    %374 = vector.extract_strided_slice %23 {offsets = [14, 0], sizes = [2, 20], strides = [1, 1]} : vector<16x20xf32> to vector<2x20xf32>
    %cst_217 = arith.constant dense<0.000000e+00> : vector<2x20xf32>
    %375 = tpu.matmul %371, %25, %cst_217 {dimension_numbers = #tpu.dot_dimension_numbers<[1], [0], [0], [1], [0, 0, 1, 1], [], []>} : vector<2x20xf32>, vector<20x20xf32>, vector<2x20xf32> -> vector<2x20xf32>
    %376 = vector.broadcast %31 : vector<1x20xf32> to vector<2x20xf32>
    %377 = arith.addf %375, %376 : vector<2x20xf32>
    %cst_218 = arith.constant dense<0.000000e+00> : vector<2x20xf32>
    %378 = tpu.matmul %371, %27, %cst_218 {dimension_numbers = #tpu.dot_dimension_numbers<[1], [0], [0], [1], [0, 0, 1, 1], [], []>} : vector<2x20xf32>, vector<20x20xf32>, vector<2x20xf32> -> vector<2x20xf32>
    %379 = vector.broadcast %33 : vector<1x20xf32> to vector<2x20xf32>
    %380 = arith.addf %378, %379 : vector<2x20xf32>
    %cst_219 = arith.constant dense<0.000000e+00> : vector<2x20xf32>
    %381 = tpu.matmul %371, %29, %cst_219 {dimension_numbers = #tpu.dot_dimension_numbers<[1], [0], [0], [1], [0, 0, 1, 1], [], []>} : vector<2x20xf32>, vector<20x20xf32>, vector<2x20xf32> -> vector<2x20xf32>
    %382 = vector.broadcast %35 : vector<1x20xf32> to vector<2x20xf32>
    %383 = arith.addf %381, %382 : vector<2x20xf32>
    %384 = arith.addf %372, %377 : vector<2x20xf32>
    %385 = arith.negf %384 : vector<2x20xf32>
    %386 = math.exp %385 : vector<2x20xf32>
    %cst_220 = arith.constant 1.000000e+00 : f32
    %387 = vector.broadcast %cst_220 : f32 to vector<2x20xf32>
    %388 = arith.addf %387, %386 : vector<2x20xf32>
    %389 = arith.divf %387, %388 : vector<2x20xf32>
    %390 = arith.addf %373, %380 : vector<2x20xf32>
    %391 = arith.negf %390 : vector<2x20xf32>
    %392 = math.exp %391 : vector<2x20xf32>
    %cst_221 = arith.constant 1.000000e+00 : f32
    %393 = vector.broadcast %cst_221 : f32 to vector<2x20xf32>
    %394 = arith.addf %393, %392 : vector<2x20xf32>
    %395 = arith.divf %393, %394 : vector<2x20xf32>
    %396 = arith.mulf %389, %383 : vector<2x20xf32>
    %397 = arith.addf %374, %396 : vector<2x20xf32>
    %398 = math.tanh %397 : vector<2x20xf32>
    %cst_222 = arith.constant 1.000000e+00 : f32
    %399 = vector.broadcast %cst_222 : f32 to vector<2x20xf32>
    %400 = arith.subf %399, %395 : vector<2x20xf32>
    %401 = arith.mulf %400, %398 : vector<2x20xf32>
    %402 = arith.mulf %395, %371 : vector<2x20xf32>
    %403 = arith.addf %401, %402 : vector<2x20xf32>
    %404 = vector.broadcast %147 : vector<2x1xf32> to vector<2x20xf32>
    %405 = arith.mulf %404, %403 : vector<2x20xf32>
    %cst_223 = arith.constant 0.000000e+00 : f32
    %406 = vector.broadcast %cst_223 : f32 to vector<4x20xf32>
    %cst_224 = arith.constant dense<0.000000e+00> : vector<4x4xf32>
    %407 = tpu.matmul %120, %49, %cst_224 {dimension_numbers = #tpu.dot_dimension_numbers<[1], [0], [0], [1], [0, 0, 1, 1], [], []>} : vector<4x20xf32>, vector<20x4xf32>, vector<4x4xf32> -> vector<4x4xf32>
    %408 = vector.broadcast %79 : vector<1x4xf32> to vector<4x4xf32>
    %409 = arith.addf %407, %408 : vector<4x4xf32>
    %cst_225 = arith.constant dense<0.000000e+00> : vector<2x4xf32>
    %410 = tpu.matmul %405, %59, %cst_225 {dimension_numbers = #tpu.dot_dimension_numbers<[1], [0], [0], [1], [0, 0, 1, 1], [], []>} : vector<2x20xf32>, vector<20x4xf32>, vector<2x4xf32> -> vector<2x4xf32>
    %411 = vector.broadcast %89 : vector<1x4xf32> to vector<2x4xf32>
    %412 = arith.addf %410, %411 : vector<2x4xf32>
    %cst_226 = arith.constant dense<0.000000e+00> : vector<2x4xf32>
    %413 = tpu.matmul %405, %69, %cst_226 {dimension_numbers = #tpu.dot_dimension_numbers<[1], [0], [0], [1], [0, 0, 1, 1], [], []>} : vector<2x20xf32>, vector<20x4xf32>, vector<2x4xf32> -> vector<2x4xf32>
    %414 = vector.broadcast %99 : vector<1x4xf32> to vector<2x4xf32>
    %415 = arith.addf %413, %414 : vector<2x4xf32>
    %cst_227 = arith.constant dense<0.000000e+00> : vector<4x2xf32>
    %416 = tpu.matmul %409, %412, %cst_227 {dimension_numbers = #tpu.dot_dimension_numbers<[1], [1], [0], [0], [0, 0, 1, 0], [], []>} : vector<4x4xf32>, vector<2x4xf32>, vector<4x2xf32> -> vector<4x2xf32>
    %cst_228 = arith.constant 5.000000e-01 : f32
    %417 = vector.broadcast %cst_228 : f32 to vector<4x2xf32>
    %418 = arith.mulf %416, %417 : vector<4x2xf32>
    %cst_229 = arith.constant dense<0xFF800000> : vector<4xf32>
    %419 = vector.multi_reduction <maximumf>, %418, %cst_229 [1] : vector<4x2xf32> to vector<4xf32>
    %420 = vector.shape_cast %419 : vector<4xf32> to vector<4x1xf32>
    %421 = vector.broadcast %420 : vector<4x1xf32> to vector<4x2xf32>
    %422 = arith.subf %418, %421 : vector<4x2xf32>
    %423 = math.exp %422 : vector<4x2xf32>
    %cst_230 = arith.constant dense<0.000000e+00> : vector<4xf32>
    %424 = vector.multi_reduction <add>, %423, %cst_230 [1] : vector<4x2xf32> to vector<4xf32>
    %425 = vector.shape_cast %424 : vector<4xf32> to vector<4x1xf32>
    %426 = tpu.reciprocal %425 {approx = true} : vector<4x1xf32> -> vector<4x1xf32>
    %427 = vector.broadcast %426 : vector<4x1xf32> to vector<4x2xf32>
    %428 = arith.mulf %423, %427 : vector<4x2xf32>
    %cst_231 = arith.constant dense<0.000000e+00> : vector<4x4xf32>
    %429 = tpu.matmul %428, %415, %cst_231 {dimension_numbers = #tpu.dot_dimension_numbers<[1], [0], [0], [1], [0, 0, 1, 1], [], []>} : vector<4x2xf32>, vector<2x4xf32>, vector<4x4xf32> -> vector<4x4xf32>
    %cst_232 = arith.constant dense<0.000000e+00> : vector<4x20xf32>
    %430 = tpu.matmul %429, %109, %cst_232 {dimension_numbers = #tpu.dot_dimension_numbers<[1], [0], [0], [1], [0, 0, 1, 1], [], []>} : vector<4x4xf32>, vector<4x20xf32>, vector<4x20xf32> -> vector<4x20xf32>
    %431 = arith.addf %406, %430 : vector<4x20xf32>
    %cst_233 = arith.constant dense<0.000000e+00> : vector<4x4xf32>
    %432 = tpu.matmul %120, %51, %cst_233 {dimension_numbers = #tpu.dot_dimension_numbers<[1], [0], [0], [1], [0, 0, 1, 1], [], []>} : vector<4x20xf32>, vector<20x4xf32>, vector<4x4xf32> -> vector<4x4xf32>
    %433 = vector.broadcast %81 : vector<1x4xf32> to vector<4x4xf32>
    %434 = arith.addf %432, %433 : vector<4x4xf32>
    %cst_234 = arith.constant dense<0.000000e+00> : vector<2x4xf32>
    %435 = tpu.matmul %405, %61, %cst_234 {dimension_numbers = #tpu.dot_dimension_numbers<[1], [0], [0], [1], [0, 0, 1, 1], [], []>} : vector<2x20xf32>, vector<20x4xf32>, vector<2x4xf32> -> vector<2x4xf32>
    %436 = vector.broadcast %91 : vector<1x4xf32> to vector<2x4xf32>
    %437 = arith.addf %435, %436 : vector<2x4xf32>
    %cst_235 = arith.constant dense<0.000000e+00> : vector<2x4xf32>
    %438 = tpu.matmul %405, %71, %cst_235 {dimension_numbers = #tpu.dot_dimension_numbers<[1], [0], [0], [1], [0, 0, 1, 1], [], []>} : vector<2x20xf32>, vector<20x4xf32>, vector<2x4xf32> -> vector<2x4xf32>
    %439 = vector.broadcast %101 : vector<1x4xf32> to vector<2x4xf32>
    %440 = arith.addf %438, %439 : vector<2x4xf32>
    %cst_236 = arith.constant dense<0.000000e+00> : vector<4x2xf32>
    %441 = tpu.matmul %434, %437, %cst_236 {dimension_numbers = #tpu.dot_dimension_numbers<[1], [1], [0], [0], [0, 0, 1, 0], [], []>} : vector<4x4xf32>, vector<2x4xf32>, vector<4x2xf32> -> vector<4x2xf32>
    %cst_237 = arith.constant 5.000000e-01 : f32
    %442 = vector.broadcast %cst_237 : f32 to vector<4x2xf32>
    %443 = arith.mulf %441, %442 : vector<4x2xf32>
    %cst_238 = arith.constant dense<0xFF800000> : vector<4xf32>
    %444 = vector.multi_reduction <maximumf>, %443, %cst_238 [1] : vector<4x2xf32> to vector<4xf32>
    %445 = vector.shape_cast %444 : vector<4xf32> to vector<4x1xf32>
    %446 = vector.broadcast %445 : vector<4x1xf32> to vector<4x2xf32>
    %447 = arith.subf %443, %446 : vector<4x2xf32>
    %448 = math.exp %447 : vector<4x2xf32>
    %cst_239 = arith.constant dense<0.000000e+00> : vector<4xf32>
    %449 = vector.multi_reduction <add>, %448, %cst_239 [1] : vector<4x2xf32> to vector<4xf32>
    %450 = vector.shape_cast %449 : vector<4xf32> to vector<4x1xf32>
    %451 = tpu.reciprocal %450 {approx = true} : vector<4x1xf32> -> vector<4x1xf32>
    %452 = vector.broadcast %451 : vector<4x1xf32> to vector<4x2xf32>
    %453 = arith.mulf %448, %452 : vector<4x2xf32>
    %cst_240 = arith.constant dense<0.000000e+00> : vector<4x4xf32>
    %454 = tpu.matmul %453, %440, %cst_240 {dimension_numbers = #tpu.dot_dimension_numbers<[1], [0], [0], [1], [0, 0, 1, 1], [], []>} : vector<4x2xf32>, vector<2x4xf32>, vector<4x4xf32> -> vector<4x4xf32>
    %cst_241 = arith.constant dense<0.000000e+00> : vector<4x20xf32>
    %455 = tpu.matmul %454, %111, %cst_241 {dimension_numbers = #tpu.dot_dimension_numbers<[1], [0], [0], [1], [0, 0, 1, 1], [], []>} : vector<4x4xf32>, vector<4x20xf32>, vector<4x20xf32> -> vector<4x20xf32>
    %456 = arith.addf %431, %455 : vector<4x20xf32>
    %cst_242 = arith.constant dense<0.000000e+00> : vector<4x4xf32>
    %457 = tpu.matmul %120, %53, %cst_242 {dimension_numbers = #tpu.dot_dimension_numbers<[1], [0], [0], [1], [0, 0, 1, 1], [], []>} : vector<4x20xf32>, vector<20x4xf32>, vector<4x4xf32> -> vector<4x4xf32>
    %458 = vector.broadcast %83 : vector<1x4xf32> to vector<4x4xf32>
    %459 = arith.addf %457, %458 : vector<4x4xf32>
    %cst_243 = arith.constant dense<0.000000e+00> : vector<2x4xf32>
    %460 = tpu.matmul %405, %63, %cst_243 {dimension_numbers = #tpu.dot_dimension_numbers<[1], [0], [0], [1], [0, 0, 1, 1], [], []>} : vector<2x20xf32>, vector<20x4xf32>, vector<2x4xf32> -> vector<2x4xf32>
    %461 = vector.broadcast %93 : vector<1x4xf32> to vector<2x4xf32>
    %462 = arith.addf %460, %461 : vector<2x4xf32>
    %cst_244 = arith.constant dense<0.000000e+00> : vector<2x4xf32>
    %463 = tpu.matmul %405, %73, %cst_244 {dimension_numbers = #tpu.dot_dimension_numbers<[1], [0], [0], [1], [0, 0, 1, 1], [], []>} : vector<2x20xf32>, vector<20x4xf32>, vector<2x4xf32> -> vector<2x4xf32>
    %464 = vector.broadcast %103 : vector<1x4xf32> to vector<2x4xf32>
    %465 = arith.addf %463, %464 : vector<2x4xf32>
    %cst_245 = arith.constant dense<0.000000e+00> : vector<4x2xf32>
    %466 = tpu.matmul %459, %462, %cst_245 {dimension_numbers = #tpu.dot_dimension_numbers<[1], [1], [0], [0], [0, 0, 1, 0], [], []>} : vector<4x4xf32>, vector<2x4xf32>, vector<4x2xf32> -> vector<4x2xf32>
    %cst_246 = arith.constant 5.000000e-01 : f32
    %467 = vector.broadcast %cst_246 : f32 to vector<4x2xf32>
    %468 = arith.mulf %466, %467 : vector<4x2xf32>
    %cst_247 = arith.constant dense<0xFF800000> : vector<4xf32>
    %469 = vector.multi_reduction <maximumf>, %468, %cst_247 [1] : vector<4x2xf32> to vector<4xf32>
    %470 = vector.shape_cast %469 : vector<4xf32> to vector<4x1xf32>
    %471 = vector.broadcast %470 : vector<4x1xf32> to vector<4x2xf32>
    %472 = arith.subf %468, %471 : vector<4x2xf32>
    %473 = math.exp %472 : vector<4x2xf32>
    %cst_248 = arith.constant dense<0.000000e+00> : vector<4xf32>
    %474 = vector.multi_reduction <add>, %473, %cst_248 [1] : vector<4x2xf32> to vector<4xf32>
    %475 = vector.shape_cast %474 : vector<4xf32> to vector<4x1xf32>
    %476 = tpu.reciprocal %475 {approx = true} : vector<4x1xf32> -> vector<4x1xf32>
    %477 = vector.broadcast %476 : vector<4x1xf32> to vector<4x2xf32>
    %478 = arith.mulf %473, %477 : vector<4x2xf32>
    %cst_249 = arith.constant dense<0.000000e+00> : vector<4x4xf32>
    %479 = tpu.matmul %478, %465, %cst_249 {dimension_numbers = #tpu.dot_dimension_numbers<[1], [0], [0], [1], [0, 0, 1, 1], [], []>} : vector<4x2xf32>, vector<2x4xf32>, vector<4x4xf32> -> vector<4x4xf32>
    %cst_250 = arith.constant dense<0.000000e+00> : vector<4x20xf32>
    %480 = tpu.matmul %479, %113, %cst_250 {dimension_numbers = #tpu.dot_dimension_numbers<[1], [0], [0], [1], [0, 0, 1, 1], [], []>} : vector<4x4xf32>, vector<4x20xf32>, vector<4x20xf32> -> vector<4x20xf32>
    %481 = arith.addf %456, %480 : vector<4x20xf32>
    %cst_251 = arith.constant dense<0.000000e+00> : vector<4x4xf32>
    %482 = tpu.matmul %120, %55, %cst_251 {dimension_numbers = #tpu.dot_dimension_numbers<[1], [0], [0], [1], [0, 0, 1, 1], [], []>} : vector<4x20xf32>, vector<20x4xf32>, vector<4x4xf32> -> vector<4x4xf32>
    %483 = vector.broadcast %85 : vector<1x4xf32> to vector<4x4xf32>
    %484 = arith.addf %482, %483 : vector<4x4xf32>
    %cst_252 = arith.constant dense<0.000000e+00> : vector<2x4xf32>
    %485 = tpu.matmul %405, %65, %cst_252 {dimension_numbers = #tpu.dot_dimension_numbers<[1], [0], [0], [1], [0, 0, 1, 1], [], []>} : vector<2x20xf32>, vector<20x4xf32>, vector<2x4xf32> -> vector<2x4xf32>
    %486 = vector.broadcast %95 : vector<1x4xf32> to vector<2x4xf32>
    %487 = arith.addf %485, %486 : vector<2x4xf32>
    %cst_253 = arith.constant dense<0.000000e+00> : vector<2x4xf32>
    %488 = tpu.matmul %405, %75, %cst_253 {dimension_numbers = #tpu.dot_dimension_numbers<[1], [0], [0], [1], [0, 0, 1, 1], [], []>} : vector<2x20xf32>, vector<20x4xf32>, vector<2x4xf32> -> vector<2x4xf32>
    %489 = vector.broadcast %105 : vector<1x4xf32> to vector<2x4xf32>
    %490 = arith.addf %488, %489 : vector<2x4xf32>
    %cst_254 = arith.constant dense<0.000000e+00> : vector<4x2xf32>
    %491 = tpu.matmul %484, %487, %cst_254 {dimension_numbers = #tpu.dot_dimension_numbers<[1], [1], [0], [0], [0, 0, 1, 0], [], []>} : vector<4x4xf32>, vector<2x4xf32>, vector<4x2xf32> -> vector<4x2xf32>
    %cst_255 = arith.constant 5.000000e-01 : f32
    %492 = vector.broadcast %cst_255 : f32 to vector<4x2xf32>
    %493 = arith.mulf %491, %492 : vector<4x2xf32>
    %cst_256 = arith.constant dense<0xFF800000> : vector<4xf32>
    %494 = vector.multi_reduction <maximumf>, %493, %cst_256 [1] : vector<4x2xf32> to vector<4xf32>
    %495 = vector.shape_cast %494 : vector<4xf32> to vector<4x1xf32>
    %496 = vector.broadcast %495 : vector<4x1xf32> to vector<4x2xf32>
    %497 = arith.subf %493, %496 : vector<4x2xf32>
    %498 = math.exp %497 : vector<4x2xf32>
    %cst_257 = arith.constant dense<0.000000e+00> : vector<4xf32>
    %499 = vector.multi_reduction <add>, %498, %cst_257 [1] : vector<4x2xf32> to vector<4xf32>
    %500 = vector.shape_cast %499 : vector<4xf32> to vector<4x1xf32>
    %501 = tpu.reciprocal %500 {approx = true} : vector<4x1xf32> -> vector<4x1xf32>
    %502 = vector.broadcast %501 : vector<4x1xf32> to vector<4x2xf32>
    %503 = arith.mulf %498, %502 : vector<4x2xf32>
    %cst_258 = arith.constant dense<0.000000e+00> : vector<4x4xf32>
    %504 = tpu.matmul %503, %490, %cst_258 {dimension_numbers = #tpu.dot_dimension_numbers<[1], [0], [0], [1], [0, 0, 1, 1], [], []>} : vector<4x2xf32>, vector<2x4xf32>, vector<4x4xf32> -> vector<4x4xf32>
    %cst_259 = arith.constant dense<0.000000e+00> : vector<4x20xf32>
    %505 = tpu.matmul %504, %115, %cst_259 {dimension_numbers = #tpu.dot_dimension_numbers<[1], [0], [0], [1], [0, 0, 1, 1], [], []>} : vector<4x4xf32>, vector<4x20xf32>, vector<4x20xf32> -> vector<4x20xf32>
    %506 = arith.addf %481, %505 : vector<4x20xf32>
    %cst_260 = arith.constant dense<0.000000e+00> : vector<4x4xf32>
    %507 = tpu.matmul %120, %57, %cst_260 {dimension_numbers = #tpu.dot_dimension_numbers<[1], [0], [0], [1], [0, 0, 1, 1], [], []>} : vector<4x20xf32>, vector<20x4xf32>, vector<4x4xf32> -> vector<4x4xf32>
    %508 = vector.broadcast %87 : vector<1x4xf32> to vector<4x4xf32>
    %509 = arith.addf %507, %508 : vector<4x4xf32>
    %cst_261 = arith.constant dense<0.000000e+00> : vector<2x4xf32>
    %510 = tpu.matmul %405, %67, %cst_261 {dimension_numbers = #tpu.dot_dimension_numbers<[1], [0], [0], [1], [0, 0, 1, 1], [], []>} : vector<2x20xf32>, vector<20x4xf32>, vector<2x4xf32> -> vector<2x4xf32>
    %511 = vector.broadcast %97 : vector<1x4xf32> to vector<2x4xf32>
    %512 = arith.addf %510, %511 : vector<2x4xf32>
    %cst_262 = arith.constant dense<0.000000e+00> : vector<2x4xf32>
    %513 = tpu.matmul %405, %77, %cst_262 {dimension_numbers = #tpu.dot_dimension_numbers<[1], [0], [0], [1], [0, 0, 1, 1], [], []>} : vector<2x20xf32>, vector<20x4xf32>, vector<2x4xf32> -> vector<2x4xf32>
    %514 = vector.broadcast %107 : vector<1x4xf32> to vector<2x4xf32>
    %515 = arith.addf %513, %514 : vector<2x4xf32>
    %cst_263 = arith.constant dense<0.000000e+00> : vector<4x2xf32>
    %516 = tpu.matmul %509, %512, %cst_263 {dimension_numbers = #tpu.dot_dimension_numbers<[1], [1], [0], [0], [0, 0, 1, 0], [], []>} : vector<4x4xf32>, vector<2x4xf32>, vector<4x2xf32> -> vector<4x2xf32>
    %cst_264 = arith.constant 5.000000e-01 : f32
    %517 = vector.broadcast %cst_264 : f32 to vector<4x2xf32>
    %518 = arith.mulf %516, %517 : vector<4x2xf32>
    %cst_265 = arith.constant dense<0xFF800000> : vector<4xf32>
    %519 = vector.multi_reduction <maximumf>, %518, %cst_265 [1] : vector<4x2xf32> to vector<4xf32>
    %520 = vector.shape_cast %519 : vector<4xf32> to vector<4x1xf32>
    %521 = vector.broadcast %520 : vector<4x1xf32> to vector<4x2xf32>
    %522 = arith.subf %518, %521 : vector<4x2xf32>
    %523 = math.exp %522 : vector<4x2xf32>
    %cst_266 = arith.constant dense<0.000000e+00> : vector<4xf32>
    %524 = vector.multi_reduction <add>, %523, %cst_266 [1] : vector<4x2xf32> to vector<4xf32>
    %525 = vector.shape_cast %524 : vector<4xf32> to vector<4x1xf32>
    %526 = tpu.reciprocal %525 {approx = true} : vector<4x1xf32> -> vector<4x1xf32>
    %527 = vector.broadcast %526 : vector<4x1xf32> to vector<4x2xf32>
    %528 = arith.mulf %523, %527 : vector<4x2xf32>
    %cst_267 = arith.constant dense<0.000000e+00> : vector<4x4xf32>
    %529 = tpu.matmul %528, %515, %cst_267 {dimension_numbers = #tpu.dot_dimension_numbers<[1], [0], [0], [1], [0, 0, 1, 1], [], []>} : vector<4x2xf32>, vector<2x4xf32>, vector<4x4xf32> -> vector<4x4xf32>
    %cst_268 = arith.constant dense<0.000000e+00> : vector<4x20xf32>
    %530 = tpu.matmul %529, %117, %cst_268 {dimension_numbers = #tpu.dot_dimension_numbers<[1], [0], [0], [1], [0, 0, 1, 1], [], []>} : vector<4x4xf32>, vector<4x20xf32>, vector<4x20xf32> -> vector<4x20xf32>
    %531 = arith.addf %506, %530 : vector<4x20xf32>
    %532 = vector.broadcast %47 : vector<1x20xf32> to vector<4x20xf32>
    %533 = arith.addf %531, %532 : vector<4x20xf32>
    %cst_269 = arith.constant dense<0.000000e+00> : vector<1x20xf32>
    %534 = tpu.matmul %118, %533, %cst_269 {dimension_numbers = #tpu.dot_dimension_numbers<[1], [0], [0], [1], [0, 0, 1, 1], [], []>} : vector<1x4xf32>, vector<4x20xf32>, vector<1x20xf32> -> vector<1x20xf32>
    %535 = arith.mulf %1, %2 : vector<2x20xf32>
    %536 = vector.broadcast %534 : vector<1x20xf32> to vector<2x20xf32>
    %537 = arith.mulf %1, %536 : vector<2x20xf32>
    %538 = arith.subf %1, %2 : vector<2x20xf32>
    %539 = math.absf %538 : vector<2x20xf32>
    %540 = vector.broadcast %534 : vector<1x20xf32> to vector<2x20xf32>
    %541 = arith.subf %1, %540 : vector<2x20xf32>
    %542 = math.absf %541 : vector<2x20xf32>
    %cst_270 = arith.constant dense<0.000000e+00> : vector<2x16xf32>
    %543 = tpu.matmul %535, %37, %cst_270 {dimension_numbers = #tpu.dot_dimension_numbers<[1], [0], [0], [1], [0, 0, 1, 1], [], []>} : vector<2x20xf32>, vector<20x16xf32>, vector<2x16xf32> -> vector<2x16xf32>
    %cst_271 = arith.constant dense<0.000000e+00> : vector<2x16xf32>
    %544 = tpu.matmul %537, %39, %cst_271 {dimension_numbers = #tpu.dot_dimension_numbers<[1], [0], [0], [1], [0, 0, 1, 1], [], []>} : vector<2x20xf32>, vector<20x16xf32>, vector<2x16xf32> -> vector<2x16xf32>
    %545 = arith.addf %543, %544 : vector<2x16xf32>
    %cst_272 = arith.constant dense<0.000000e+00> : vector<2x16xf32>
    %546 = tpu.matmul %539, %41, %cst_272 {dimension_numbers = #tpu.dot_dimension_numbers<[1], [0], [0], [1], [0, 0, 1, 1], [], []>} : vector<2x20xf32>, vector<20x16xf32>, vector<2x16xf32> -> vector<2x16xf32>
    %547 = arith.addf %545, %546 : vector<2x16xf32>
    %cst_273 = arith.constant dense<0.000000e+00> : vector<2x16xf32>
    %548 = tpu.matmul %542, %43, %cst_273 {dimension_numbers = #tpu.dot_dimension_numbers<[1], [0], [0], [1], [0, 0, 1, 1], [], []>} : vector<2x20xf32>, vector<20x16xf32>, vector<2x16xf32> -> vector<2x16xf32>
    %549 = arith.addf %547, %548 : vector<2x16xf32>
    %550 = vector.broadcast %44 : vector<1x16xf32> to vector<2x16xf32>
    %551 = arith.addf %549, %550 : vector<2x16xf32>
    %552 = math.tanh %551 : vector<2x16xf32>
    %cst_274 = arith.constant dense<0.000000e+00> : vector<2x1xf32>
    %553 = tpu.matmul %552, %45, %cst_274 {dimension_numbers = #tpu.dot_dimension_numbers<[1], [0], [0], [1], [0, 0, 1, 1], [], []>} : vector<2x16xf32>, vector<16x1xf32>, vector<2x1xf32> -> vector<2x1xf32>
    %554 = vector.broadcast %46 : vector<1x1xf32> to vector<2x1xf32>
    %555 = arith.addf %553, %554 : vector<2x1xf32>
    %556 = arith.negf %555 : vector<2x1xf32>
    %557 = math.exp %556 : vector<2x1xf32>
    %cst_275 = arith.constant 1.000000e+00 : f32
    %558 = vector.broadcast %cst_275 : f32 to vector<2x1xf32>
    %559 = arith.addf %558, %557 : vector<2x1xf32>
    %560 = arith.divf %558, %559 : vector<2x1xf32>
    %561 = vector.extract_strided_slice %17 {offsets = [0, 0], sizes = [2, 20], strides = [1, 1]} : vector<16x20xf32> to vector<2x20xf32>
    %562 = vector.extract_strided_slice %20 {offsets = [0, 0], sizes = [2, 20], strides = [1, 1]} : vector<16x20xf32> to vector<2x20xf32>
    %563 = vector.extract_strided_slice %23 {offsets = [0, 0], sizes = [2, 20], strides = [1, 1]} : vector<16x20xf32> to vector<2x20xf32>
    %cst_276 = arith.constant dense<0.000000e+00> : vector<2x20xf32>
    %564 = tpu.matmul %405, %25, %cst_276 {dimension_numbers = #tpu.dot_dimension_numbers<[1], [0], [0], [1], [0, 0, 1, 1], [], []>} : vector<2x20xf32>, vector<20x20xf32>, vector<2x20xf32> -> vector<2x20xf32>
    %565 = vector.broadcast %31 : vector<1x20xf32> to vector<2x20xf32>
    %566 = arith.addf %564, %565 : vector<2x20xf32>
    %cst_277 = arith.constant dense<0.000000e+00> : vector<2x20xf32>
    %567 = tpu.matmul %405, %27, %cst_277 {dimension_numbers = #tpu.dot_dimension_numbers<[1], [0], [0], [1], [0, 0, 1, 1], [], []>} : vector<2x20xf32>, vector<20x20xf32>, vector<2x20xf32> -> vector<2x20xf32>
    %568 = vector.broadcast %33 : vector<1x20xf32> to vector<2x20xf32>
    %569 = arith.addf %567, %568 : vector<2x20xf32>
    %cst_278 = arith.constant dense<0.000000e+00> : vector<2x20xf32>
    %570 = tpu.matmul %405, %29, %cst_278 {dimension_numbers = #tpu.dot_dimension_numbers<[1], [0], [0], [1], [0, 0, 1, 1], [], []>} : vector<2x20xf32>, vector<20x20xf32>, vector<2x20xf32> -> vector<2x20xf32>
    %571 = vector.broadcast %35 : vector<1x20xf32> to vector<2x20xf32>
    %572 = arith.addf %570, %571 : vector<2x20xf32>
    %573 = arith.addf %561, %566 : vector<2x20xf32>
    %574 = arith.negf %573 : vector<2x20xf32>
    %575 = math.exp %574 : vector<2x20xf32>
    %cst_279 = arith.constant 1.000000e+00 : f32
    %576 = vector.broadcast %cst_279 : f32 to vector<2x20xf32>
    %577 = arith.addf %576, %575 : vector<2x20xf32>
    %578 = arith.divf %576, %577 : vector<2x20xf32>
    %579 = arith.addf %562, %569 : vector<2x20xf32>
    %580 = arith.negf %579 : vector<2x20xf32>
    %581 = math.exp %580 : vector<2x20xf32>
    %cst_280 = arith.constant 1.000000e+00 : f32
    %582 = vector.broadcast %cst_280 : f32 to vector<2x20xf32>
    %583 = arith.addf %582, %581 : vector<2x20xf32>
    %584 = arith.divf %582, %583 : vector<2x20xf32>
    %585 = arith.mulf %578, %572 : vector<2x20xf32>
    %586 = arith.addf %563, %585 : vector<2x20xf32>
    %587 = math.tanh %586 : vector<2x20xf32>
    %cst_281 = arith.constant 1.000000e+00 : f32
    %588 = vector.broadcast %cst_281 : f32 to vector<2x20xf32>
    %589 = arith.subf %588, %584 : vector<2x20xf32>
    %590 = arith.mulf %589, %587 : vector<2x20xf32>
    %591 = arith.mulf %584, %405 : vector<2x20xf32>
    %592 = arith.addf %590, %591 : vector<2x20xf32>
    %593 = vector.extract_strided_slice %17 {offsets = [2, 0], sizes = [2, 20], strides = [1, 1]} : vector<16x20xf32> to vector<2x20xf32>
    %594 = vector.extract_strided_slice %20 {offsets = [2, 0], sizes = [2, 20], strides = [1, 1]} : vector<16x20xf32> to vector<2x20xf32>
    %595 = vector.extract_strided_slice %23 {offsets = [2, 0], sizes = [2, 20], strides = [1, 1]} : vector<16x20xf32> to vector<2x20xf32>
    %cst_282 = arith.constant dense<0.000000e+00> : vector<2x20xf32>
    %596 = tpu.matmul %592, %25, %cst_282 {dimension_numbers = #tpu.dot_dimension_numbers<[1], [0], [0], [1], [0, 0, 1, 1], [], []>} : vector<2x20xf32>, vector<20x20xf32>, vector<2x20xf32> -> vector<2x20xf32>
    %597 = vector.broadcast %31 : vector<1x20xf32> to vector<2x20xf32>
    %598 = arith.addf %596, %597 : vector<2x20xf32>
    %cst_283 = arith.constant dense<0.000000e+00> : vector<2x20xf32>
    %599 = tpu.matmul %592, %27, %cst_283 {dimension_numbers = #tpu.dot_dimension_numbers<[1], [0], [0], [1], [0, 0, 1, 1], [], []>} : vector<2x20xf32>, vector<20x20xf32>, vector<2x20xf32> -> vector<2x20xf32>
    %600 = vector.broadcast %33 : vector<1x20xf32> to vector<2x20xf32>
    %601 = arith.addf %599, %600 : vector<2x20xf32>
    %cst_284 = arith.constant dense<0.000000e+00> : vector<2x20xf32>
    %602 = tpu.matmul %592, %29, %cst_284 {dimension_numbers = #tpu.dot_dimension_numbers<[1], [0], [0], [1], [0, 0, 1, 1], [], []>} : vector<2x20xf32>, vector<20x20xf32>, vector<2x20xf32> -> vector<2x20xf32>
    %603 = vector.broadcast %35 : vector<1x20xf32> to vector<2x20xf32>
    %604 = arith.addf %602, %603 : vector<2x20xf32>
    %605 = arith.addf %593, %598 : vector<2x20xf32>
    %606 = arith.negf %605 : vector<2x20xf32>
    %607 = math.exp %606 : vector<2x20xf32>
    %cst_285 = arith.constant 1.000000e+00 : f32
    %608 = vector.broadcast %cst_285 : f32 to vector<2x20xf32>
    %609 = arith.addf %608, %607 : vector<2x20xf32>
    %610 = arith.divf %608, %609 : vector<2x20xf32>
    %611 = arith.addf %594, %601 : vector<2x20xf32>
    %612 = arith.negf %611 : vector<2x20xf32>
    %613 = math.exp %612 : vector<2x20xf32>
    %cst_286 = arith.constant 1.000000e+00 : f32
    %614 = vector.broadcast %cst_286 : f32 to vector<2x20xf32>
    %615 = arith.addf %614, %613 : vector<2x20xf32>
    %616 = arith.divf %614, %615 : vector<2x20xf32>
    %617 = arith.mulf %610, %604 : vector<2x20xf32>
    %618 = arith.addf %595, %617 : vector<2x20xf32>
    %619 = math.tanh %618 : vector<2x20xf32>
    %cst_287 = arith.constant 1.000000e+00 : f32
    %620 = vector.broadcast %cst_287 : f32 to vector<2x20xf32>
    %621 = arith.subf %620, %616 : vector<2x20xf32>
    %622 = arith.mulf %621, %619 : vector<2x20xf32>
    %623 = arith.mulf %616, %592 : vector<2x20xf32>
    %624 = arith.addf %622, %623 : vector<2x20xf32>
    %625 = vector.extract_strided_slice %17 {offsets = [4, 0], sizes = [2, 20], strides = [1, 1]} : vector<16x20xf32> to vector<2x20xf32>
    %626 = vector.extract_strided_slice %20 {offsets = [4, 0], sizes = [2, 20], strides = [1, 1]} : vector<16x20xf32> to vector<2x20xf32>
    %627 = vector.extract_strided_slice %23 {offsets = [4, 0], sizes = [2, 20], strides = [1, 1]} : vector<16x20xf32> to vector<2x20xf32>
    %cst_288 = arith.constant dense<0.000000e+00> : vector<2x20xf32>
    %628 = tpu.matmul %624, %25, %cst_288 {dimension_numbers = #tpu.dot_dimension_numbers<[1], [0], [0], [1], [0, 0, 1, 1], [], []>} : vector<2x20xf32>, vector<20x20xf32>, vector<2x20xf32> -> vector<2x20xf32>
    %629 = vector.broadcast %31 : vector<1x20xf32> to vector<2x20xf32>
    %630 = arith.addf %628, %629 : vector<2x20xf32>
    %cst_289 = arith.constant dense<0.000000e+00> : vector<2x20xf32>
    %631 = tpu.matmul %624, %27, %cst_289 {dimension_numbers = #tpu.dot_dimension_numbers<[1], [0], [0], [1], [0, 0, 1, 1], [], []>} : vector<2x20xf32>, vector<20x20xf32>, vector<2x20xf32> -> vector<2x20xf32>
    %632 = vector.broadcast %33 : vector<1x20xf32> to vector<2x20xf32>
    %633 = arith.addf %631, %632 : vector<2x20xf32>
    %cst_290 = arith.constant dense<0.000000e+00> : vector<2x20xf32>
    %634 = tpu.matmul %624, %29, %cst_290 {dimension_numbers = #tpu.dot_dimension_numbers<[1], [0], [0], [1], [0, 0, 1, 1], [], []>} : vector<2x20xf32>, vector<20x20xf32>, vector<2x20xf32> -> vector<2x20xf32>
    %635 = vector.broadcast %35 : vector<1x20xf32> to vector<2x20xf32>
    %636 = arith.addf %634, %635 : vector<2x20xf32>
    %637 = arith.addf %625, %630 : vector<2x20xf32>
    %638 = arith.negf %637 : vector<2x20xf32>
    %639 = math.exp %638 : vector<2x20xf32>
    %cst_291 = arith.constant 1.000000e+00 : f32
    %640 = vector.broadcast %cst_291 : f32 to vector<2x20xf32>
    %641 = arith.addf %640, %639 : vector<2x20xf32>
    %642 = arith.divf %640, %641 : vector<2x20xf32>
    %643 = arith.addf %626, %633 : vector<2x20xf32>
    %644 = arith.negf %643 : vector<2x20xf32>
    %645 = math.exp %644 : vector<2x20xf32>
    %cst_292 = arith.constant 1.000000e+00 : f32
    %646 = vector.broadcast %cst_292 : f32 to vector<2x20xf32>
    %647 = arith.addf %646, %645 : vector<2x20xf32>
    %648 = arith.divf %646, %647 : vector<2x20xf32>
    %649 = arith.mulf %642, %636 : vector<2x20xf32>
    %650 = arith.addf %627, %649 : vector<2x20xf32>
    %651 = math.tanh %650 : vector<2x20xf32>
    %cst_293 = arith.constant 1.000000e+00 : f32
    %652 = vector.broadcast %cst_293 : f32 to vector<2x20xf32>
    %653 = arith.subf %652, %648 : vector<2x20xf32>
    %654 = arith.mulf %653, %651 : vector<2x20xf32>
    %655 = arith.mulf %648, %624 : vector<2x20xf32>
    %656 = arith.addf %654, %655 : vector<2x20xf32>
    %657 = vector.extract_strided_slice %17 {offsets = [6, 0], sizes = [2, 20], strides = [1, 1]} : vector<16x20xf32> to vector<2x20xf32>
    %658 = vector.extract_strided_slice %20 {offsets = [6, 0], sizes = [2, 20], strides = [1, 1]} : vector<16x20xf32> to vector<2x20xf32>
    %659 = vector.extract_strided_slice %23 {offsets = [6, 0], sizes = [2, 20], strides = [1, 1]} : vector<16x20xf32> to vector<2x20xf32>
    %cst_294 = arith.constant dense<0.000000e+00> : vector<2x20xf32>
    %660 = tpu.matmul %656, %25, %cst_294 {dimension_numbers = #tpu.dot_dimension_numbers<[1], [0], [0], [1], [0, 0, 1, 1], [], []>} : vector<2x20xf32>, vector<20x20xf32>, vector<2x20xf32> -> vector<2x20xf32>
    %661 = vector.broadcast %31 : vector<1x20xf32> to vector<2x20xf32>
    %662 = arith.addf %660, %661 : vector<2x20xf32>
    %cst_295 = arith.constant dense<0.000000e+00> : vector<2x20xf32>
    %663 = tpu.matmul %656, %27, %cst_295 {dimension_numbers = #tpu.dot_dimension_numbers<[1], [0], [0], [1], [0, 0, 1, 1], [], []>} : vector<2x20xf32>, vector<20x20xf32>, vector<2x20xf32> -> vector<2x20xf32>
    %664 = vector.broadcast %33 : vector<1x20xf32> to vector<2x20xf32>
    %665 = arith.addf %663, %664 : vector<2x20xf32>
    %cst_296 = arith.constant dense<0.000000e+00> : vector<2x20xf32>
    %666 = tpu.matmul %656, %29, %cst_296 {dimension_numbers = #tpu.dot_dimension_numbers<[1], [0], [0], [1], [0, 0, 1, 1], [], []>} : vector<2x20xf32>, vector<20x20xf32>, vector<2x20xf32> -> vector<2x20xf32>
    %667 = vector.broadcast %35 : vector<1x20xf32> to vector<2x20xf32>
    %668 = arith.addf %666, %667 : vector<2x20xf32>
    %669 = arith.addf %657, %662 : vector<2x20xf32>
    %670 = arith.negf %669 : vector<2x20xf32>
    %671 = math.exp %670 : vector<2x20xf32>
    %cst_297 = arith.constant 1.000000e+00 : f32
    %672 = vector.broadcast %cst_297 : f32 to vector<2x20xf32>
    %673 = arith.addf %672, %671 : vector<2x20xf32>
    %674 = arith.divf %672, %673 : vector<2x20xf32>
    %675 = arith.addf %658, %665 : vector<2x20xf32>
    %676 = arith.negf %675 : vector<2x20xf32>
    %677 = math.exp %676 : vector<2x20xf32>
    %cst_298 = arith.constant 1.000000e+00 : f32
    %678 = vector.broadcast %cst_298 : f32 to vector<2x20xf32>
    %679 = arith.addf %678, %677 : vector<2x20xf32>
    %680 = arith.divf %678, %679 : vector<2x20xf32>
    %681 = arith.mulf %674, %668 : vector<2x20xf32>
    %682 = arith.addf %659, %681 : vector<2x20xf32>
    %683 = math.tanh %682 : vector<2x20xf32>
    %cst_299 = arith.constant 1.000000e+00 : f32
    %684 = vector.broadcast %cst_299 : f32 to vector<2x20xf32>
    %685 = arith.subf %684, %680 : vector<2x20xf32>
    %686 = arith.mulf %685, %683 : vector<2x20xf32>
    %687 = arith.mulf %680, %656 : vector<2x20xf32>
    %688 = arith.addf %686, %687 : vector<2x20xf32>
    %689 = vector.extract_strided_slice %17 {offsets = [8, 0], sizes = [2, 20], strides = [1, 1]} : vector<16x20xf32> to vector<2x20xf32>
    %690 = vector.extract_strided_slice %20 {offsets = [8, 0], sizes = [2, 20], strides = [1, 1]} : vector<16x20xf32> to vector<2x20xf32>
    %691 = vector.extract_strided_slice %23 {offsets = [8, 0], sizes = [2, 20], strides = [1, 1]} : vector<16x20xf32> to vector<2x20xf32>
    %cst_300 = arith.constant dense<0.000000e+00> : vector<2x20xf32>
    %692 = tpu.matmul %688, %25, %cst_300 {dimension_numbers = #tpu.dot_dimension_numbers<[1], [0], [0], [1], [0, 0, 1, 1], [], []>} : vector<2x20xf32>, vector<20x20xf32>, vector<2x20xf32> -> vector<2x20xf32>
    %693 = vector.broadcast %31 : vector<1x20xf32> to vector<2x20xf32>
    %694 = arith.addf %692, %693 : vector<2x20xf32>
    %cst_301 = arith.constant dense<0.000000e+00> : vector<2x20xf32>
    %695 = tpu.matmul %688, %27, %cst_301 {dimension_numbers = #tpu.dot_dimension_numbers<[1], [0], [0], [1], [0, 0, 1, 1], [], []>} : vector<2x20xf32>, vector<20x20xf32>, vector<2x20xf32> -> vector<2x20xf32>
    %696 = vector.broadcast %33 : vector<1x20xf32> to vector<2x20xf32>
    %697 = arith.addf %695, %696 : vector<2x20xf32>
    %cst_302 = arith.constant dense<0.000000e+00> : vector<2x20xf32>
    %698 = tpu.matmul %688, %29, %cst_302 {dimension_numbers = #tpu.dot_dimension_numbers<[1], [0], [0], [1], [0, 0, 1, 1], [], []>} : vector<2x20xf32>, vector<20x20xf32>, vector<2x20xf32> -> vector<2x20xf32>
    %699 = vector.broadcast %35 : vector<1x20xf32> to vector<2x20xf32>
    %700 = arith.addf %698, %699 : vector<2x20xf32>
    %701 = arith.addf %689, %694 : vector<2x20xf32>
    %702 = arith.negf %701 : vector<2x20xf32>
    %703 = math.exp %702 : vector<2x20xf32>
    %cst_303 = arith.constant 1.000000e+00 : f32
    %704 = vector.broadcast %cst_303 : f32 to vector<2x20xf32>
    %705 = arith.addf %704, %703 : vector<2x20xf32>
    %706 = arith.divf %704, %705 : vector<2x20xf32>
    %707 = arith.addf %690, %697 : vector<2x20xf32>
    %708 = arith.negf %707 : vector<2x20xf32>
    %709 = math.exp %708 : vector<2x20xf32>
    %cst_304 = arith.constant 1.000000e+00 : f32
    %710 = vector.broadcast %cst_304 : f32 to vector<2x20xf32>
    %711 = arith.addf %710, %709 : vector<2x20xf32>
    %712 = arith.divf %710, %711 : vector<2x20xf32>
    %713 = arith.mulf %706, %700 : vector<2x20xf32>
    %714 = arith.addf %691, %713 : vector<2x20xf32>
    %715 = math.tanh %714 : vector<2x20xf32>
    %cst_305 = arith.constant 1.000000e+00 : f32
    %716 = vector.broadcast %cst_305 : f32 to vector<2x20xf32>
    %717 = arith.subf %716, %712 : vector<2x20xf32>
    %718 = arith.mulf %717, %715 : vector<2x20xf32>
    %719 = arith.mulf %712, %688 : vector<2x20xf32>
    %720 = arith.addf %718, %719 : vector<2x20xf32>
    %721 = vector.extract_strided_slice %17 {offsets = [10, 0], sizes = [2, 20], strides = [1, 1]} : vector<16x20xf32> to vector<2x20xf32>
    %722 = vector.extract_strided_slice %20 {offsets = [10, 0], sizes = [2, 20], strides = [1, 1]} : vector<16x20xf32> to vector<2x20xf32>
    %723 = vector.extract_strided_slice %23 {offsets = [10, 0], sizes = [2, 20], strides = [1, 1]} : vector<16x20xf32> to vector<2x20xf32>
    %cst_306 = arith.constant dense<0.000000e+00> : vector<2x20xf32>
    %724 = tpu.matmul %720, %25, %cst_306 {dimension_numbers = #tpu.dot_dimension_numbers<[1], [0], [0], [1], [0, 0, 1, 1], [], []>} : vector<2x20xf32>, vector<20x20xf32>, vector<2x20xf32> -> vector<2x20xf32>
    %725 = vector.broadcast %31 : vector<1x20xf32> to vector<2x20xf32>
    %726 = arith.addf %724, %725 : vector<2x20xf32>
    %cst_307 = arith.constant dense<0.000000e+00> : vector<2x20xf32>
    %727 = tpu.matmul %720, %27, %cst_307 {dimension_numbers = #tpu.dot_dimension_numbers<[1], [0], [0], [1], [0, 0, 1, 1], [], []>} : vector<2x20xf32>, vector<20x20xf32>, vector<2x20xf32> -> vector<2x20xf32>
    %728 = vector.broadcast %33 : vector<1x20xf32> to vector<2x20xf32>
    %729 = arith.addf %727, %728 : vector<2x20xf32>
    %cst_308 = arith.constant dense<0.000000e+00> : vector<2x20xf32>
    %730 = tpu.matmul %720, %29, %cst_308 {dimension_numbers = #tpu.dot_dimension_numbers<[1], [0], [0], [1], [0, 0, 1, 1], [], []>} : vector<2x20xf32>, vector<20x20xf32>, vector<2x20xf32> -> vector<2x20xf32>
    %731 = vector.broadcast %35 : vector<1x20xf32> to vector<2x20xf32>
    %732 = arith.addf %730, %731 : vector<2x20xf32>
    %733 = arith.addf %721, %726 : vector<2x20xf32>
    %734 = arith.negf %733 : vector<2x20xf32>
    %735 = math.exp %734 : vector<2x20xf32>
    %cst_309 = arith.constant 1.000000e+00 : f32
    %736 = vector.broadcast %cst_309 : f32 to vector<2x20xf32>
    %737 = arith.addf %736, %735 : vector<2x20xf32>
    %738 = arith.divf %736, %737 : vector<2x20xf32>
    %739 = arith.addf %722, %729 : vector<2x20xf32>
    %740 = arith.negf %739 : vector<2x20xf32>
    %741 = math.exp %740 : vector<2x20xf32>
    %cst_310 = arith.constant 1.000000e+00 : f32
    %742 = vector.broadcast %cst_310 : f32 to vector<2x20xf32>
    %743 = arith.addf %742, %741 : vector<2x20xf32>
    %744 = arith.divf %742, %743 : vector<2x20xf32>
    %745 = arith.mulf %738, %732 : vector<2x20xf32>
    %746 = arith.addf %723, %745 : vector<2x20xf32>
    %747 = math.tanh %746 : vector<2x20xf32>
    %cst_311 = arith.constant 1.000000e+00 : f32
    %748 = vector.broadcast %cst_311 : f32 to vector<2x20xf32>
    %749 = arith.subf %748, %744 : vector<2x20xf32>
    %750 = arith.mulf %749, %747 : vector<2x20xf32>
    %751 = arith.mulf %744, %720 : vector<2x20xf32>
    %752 = arith.addf %750, %751 : vector<2x20xf32>
    %753 = vector.extract_strided_slice %17 {offsets = [12, 0], sizes = [2, 20], strides = [1, 1]} : vector<16x20xf32> to vector<2x20xf32>
    %754 = vector.extract_strided_slice %20 {offsets = [12, 0], sizes = [2, 20], strides = [1, 1]} : vector<16x20xf32> to vector<2x20xf32>
    %755 = vector.extract_strided_slice %23 {offsets = [12, 0], sizes = [2, 20], strides = [1, 1]} : vector<16x20xf32> to vector<2x20xf32>
    %cst_312 = arith.constant dense<0.000000e+00> : vector<2x20xf32>
    %756 = tpu.matmul %752, %25, %cst_312 {dimension_numbers = #tpu.dot_dimension_numbers<[1], [0], [0], [1], [0, 0, 1, 1], [], []>} : vector<2x20xf32>, vector<20x20xf32>, vector<2x20xf32> -> vector<2x20xf32>
    %757 = vector.broadcast %31 : vector<1x20xf32> to vector<2x20xf32>
    %758 = arith.addf %756, %757 : vector<2x20xf32>
    %cst_313 = arith.constant dense<0.000000e+00> : vector<2x20xf32>
    %759 = tpu.matmul %752, %27, %cst_313 {dimension_numbers = #tpu.dot_dimension_numbers<[1], [0], [0], [1], [0, 0, 1, 1], [], []>} : vector<2x20xf32>, vector<20x20xf32>, vector<2x20xf32> -> vector<2x20xf32>
    %760 = vector.broadcast %33 : vector<1x20xf32> to vector<2x20xf32>
    %761 = arith.addf %759, %760 : vector<2x20xf32>
    %cst_314 = arith.constant dense<0.000000e+00> : vector<2x20xf32>
    %762 = tpu.matmul %752, %29, %cst_314 {dimension_numbers = #tpu.dot_dimension_numbers<[1], [0], [0], [1], [0, 0, 1, 1], [], []>} : vector<2x20xf32>, vector<20x20xf32>, vector<2x20xf32> -> vector<2x20xf32>
    %763 = vector.broadcast %35 : vector<1x20xf32> to vector<2x20xf32>
    %764 = arith.addf %762, %763 : vector<2x20xf32>
    %765 = arith.addf %753, %758 : vector<2x20xf32>
    %766 = arith.negf %765 : vector<2x20xf32>
    %767 = math.exp %766 : vector<2x20xf32>
    %cst_315 = arith.constant 1.000000e+00 : f32
    %768 = vector.broadcast %cst_315 : f32 to vector<2x20xf32>
    %769 = arith.addf %768, %767 : vector<2x20xf32>
    %770 = arith.divf %768, %769 : vector<2x20xf32>
    %771 = arith.addf %754, %761 : vector<2x20xf32>
    %772 = arith.negf %771 : vector<2x20xf32>
    %773 = math.exp %772 : vector<2x20xf32>
    %cst_316 = arith.constant 1.000000e+00 : f32
    %774 = vector.broadcast %cst_316 : f32 to vector<2x20xf32>
    %775 = arith.addf %774, %773 : vector<2x20xf32>
    %776 = arith.divf %774, %775 : vector<2x20xf32>
    %777 = arith.mulf %770, %764 : vector<2x20xf32>
    %778 = arith.addf %755, %777 : vector<2x20xf32>
    %779 = math.tanh %778 : vector<2x20xf32>
    %cst_317 = arith.constant 1.000000e+00 : f32
    %780 = vector.broadcast %cst_317 : f32 to vector<2x20xf32>
    %781 = arith.subf %780, %776 : vector<2x20xf32>
    %782 = arith.mulf %781, %779 : vector<2x20xf32>
    %783 = arith.mulf %776, %752 : vector<2x20xf32>
    %784 = arith.addf %782, %783 : vector<2x20xf32>
    %785 = vector.extract_strided_slice %17 {offsets = [14, 0], sizes = [2, 20], strides = [1, 1]} : vector<16x20xf32> to vector<2x20xf32>
    %786 = vector.extract_strided_slice %20 {offsets = [14, 0], sizes = [2, 20], strides = [1, 1]} : vector<16x20xf32> to vector<2x20xf32>
    %787 = vector.extract_strided_slice %23 {offsets = [14, 0], sizes = [2, 20], strides = [1, 1]} : vector<16x20xf32> to vector<2x20xf32>
    %cst_318 = arith.constant dense<0.000000e+00> : vector<2x20xf32>
    %788 = tpu.matmul %784, %25, %cst_318 {dimension_numbers = #tpu.dot_dimension_numbers<[1], [0], [0], [1], [0, 0, 1, 1], [], []>} : vector<2x20xf32>, vector<20x20xf32>, vector<2x20xf32> -> vector<2x20xf32>
    %789 = vector.broadcast %31 : vector<1x20xf32> to vector<2x20xf32>
    %790 = arith.addf %788, %789 : vector<2x20xf32>
    %cst_319 = arith.constant dense<0.000000e+00> : vector<2x20xf32>
    %791 = tpu.matmul %784, %27, %cst_319 {dimension_numbers = #tpu.dot_dimension_numbers<[1], [0], [0], [1], [0, 0, 1, 1], [], []>} : vector<2x20xf32>, vector<20x20xf32>, vector<2x20xf32> -> vector<2x20xf32>
    %792 = vector.broadcast %33 : vector<1x20xf32> to vector<2x20xf32>
    %793 = arith.addf %791, %792 : vector<2x20xf32>
    %cst_320 = arith.constant dense<0.000000e+00> : vector<2x20xf32>
    %794 = tpu.matmul %784, %29, %cst_320 {dimension_numbers = #tpu.dot_dimension_numbers<[1], [0], [0], [1], [0, 0, 1, 1], [], []>} : vector<2x20xf32>, vector<20x20xf32>, vector<2x20xf32> -> vector<2x20xf32>
    %795 = vector.broadcast %35 : vector<1x20xf32> to vector<2x20xf32>
    %796 = arith.addf %794, %795 : vector<2x20xf32>
    %797 = arith.addf %785, %790 : vector<2x20xf32>
    %798 = arith.negf %797 : vector<2x20xf32>
    %799 = math.exp %798 : vector<2x20xf32>
    %cst_321 = arith.constant 1.000000e+00 : f32
    %800 = vector.broadcast %cst_321 : f32 to vector<2x20xf32>
    %801 = arith.addf %800, %799 : vector<2x20xf32>
    %802 = arith.divf %800, %801 : vector<2x20xf32>
    %803 = arith.addf %786, %793 : vector<2x20xf32>
    %804 = arith.negf %803 : vector<2x20xf32>
    %805 = math.exp %804 : vector<2x20xf32>
    %cst_322 = arith.constant 1.000000e+00 : f32
    %806 = vector.broadcast %cst_322 : f32 to vector<2x20xf32>
    %807 = arith.addf %806, %805 : vector<2x20xf32>
    %808 = arith.divf %806, %807 : vector<2x20xf32>
    %809 = arith.mulf %802, %796 : vector<2x20xf32>
    %810 = arith.addf %787, %809 : vector<2x20xf32>
    %811 = math.tanh %810 : vector<2x20xf32>
    %cst_323 = arith.constant 1.000000e+00 : f32
    %812 = vector.broadcast %cst_323 : f32 to vector<2x20xf32>
    %813 = arith.subf %812, %808 : vector<2x20xf32>
    %814 = arith.mulf %813, %811 : vector<2x20xf32>
    %815 = arith.mulf %808, %784 : vector<2x20xf32>
    %816 = arith.addf %814, %815 : vector<2x20xf32>
    %817 = vector.broadcast %560 : vector<2x1xf32> to vector<2x20xf32>
    %818 = arith.mulf %817, %816 : vector<2x20xf32>
    %cst_324 = arith.constant 1.000000e+00 : f32
    %819 = vector.broadcast %cst_324 : f32 to vector<2x1xf32>
    %820 = arith.subf %819, %560 : vector<2x1xf32>
    %821 = vector.broadcast %820 : vector<2x1xf32> to vector<2x20xf32>
    %822 = arith.mulf %821, %405 : vector<2x20xf32>
    %823 = arith.addf %818, %822 : vector<2x20xf32>
    %cst_325 = arith.constant 0.000000e+00 : f32
    %824 = vector.broadcast %cst_325 : f32 to vector<4x20xf32>
    %cst_326 = arith.constant dense<0.000000e+00> : vector<4x4xf32>
    %825 = tpu.matmul %533, %49, %cst_326 {dimension_numbers = #tpu.dot_dimension_numbers<[1], [0], [0], [1], [0, 0, 1, 1], [], []>} : vector<4x20xf32>, vector<20x4xf32>, vector<4x4xf32> -> vector<4x4xf32>
    %826 = vector.broadcast %79 : vector<1x4xf32> to vector<4x4xf32>
    %827 = arith.addf %825, %826 : vector<4x4xf32>
    %cst_327 = arith.constant dense<0.000000e+00> : vector<2x4xf32>
    %828 = tpu.matmul %823, %59, %cst_327 {dimension_numbers = #tpu.dot_dimension_numbers<[1], [0], [0], [1], [0, 0, 1, 1], [], []>} : vector<2x20xf32>, vector<20x4xf32>, vector<2x4xf32> -> vector<2x4xf32>
    %829 = vector.broadcast %89 : vector<1x4xf32> to vector<2x4xf32>
    %830 = arith.addf %828, %829 : vector<2x4xf32>
    %cst_328 = arith.constant dense<0.000000e+00> : vector<2x4xf32>
    %831 = tpu.matmul %823, %69, %cst_328 {dimension_numbers = #tpu.dot_dimension_numbers<[1], [0], [0], [1], [0, 0, 1, 1], [], []>} : vector<2x20xf32>, vector<20x4xf32>, vector<2x4xf32> -> vector<2x4xf32>
    %832 = vector.broadcast %99 : vector<1x4xf32> to vector<2x4xf32>
    %833 = arith.addf %831, %832 : vector<2x4xf32>
    %cst_329 = arith.constant dense<0.000000e+00> : vector<4x2xf32>
    %834 = tpu.matmul %827, %830, %cst_329 {dimension_numbers = #tpu.dot_dimension_numbers<[1], [1], [0], [0], [0, 0, 1, 0], [], []>} : vector<4x4xf32>, vector<2x4xf32>, vector<4x2xf32> -> vector<4x2xf32>
    %cst_330 = arith.constant 5.000000e-01 : f32
    %835 = vector.broadcast %cst_330 : f32 to vector<4x2xf32>
    %836 = arith.mulf %834, %835 : vector<4x2xf32>
    %cst_331 = arith.constant dense<0xFF800000> : vector<4xf32>
    %837 = vector.multi_reduction <maximumf>, %836, %cst_331 [1] : vector<4x2xf32> to vector<4xf32>
    %838 = vector.shape_cast %837 : vector<4xf32> to vector<4x1xf32>
    %839 = vector.broadcast %838 : vector<4x1xf32> to vector<4x2xf32>
    %840 = arith.subf %836, %839 : vector<4x2xf32>
    %841 = math.exp %840 : vector<4x2xf32>
    %cst_332 = arith.constant dense<0.000000e+00> : vector<4xf32>
    %842 = vector.multi_reduction <add>, %841, %cst_332 [1] : vector<4x2xf32> to vector<4xf32>
    %843 = vector.shape_cast %842 : vector<4xf32> to vector<4x1xf32>
    %844 = tpu.reciprocal %843 {approx = true} : vector<4x1xf32> -> vector<4x1xf32>
    %845 = vector.broadcast %844 : vector<4x1xf32> to vector<4x2xf32>
    %846 = arith.mulf %841, %845 : vector<4x2xf32>
    %cst_333 = arith.constant dense<0.000000e+00> : vector<4x4xf32>
    %847 = tpu.matmul %846, %833, %cst_333 {dimension_numbers = #tpu.dot_dimension_numbers<[1], [0], [0], [1], [0, 0, 1, 1], [], []>} : vector<4x2xf32>, vector<2x4xf32>, vector<4x4xf32> -> vector<4x4xf32>
    %cst_334 = arith.constant dense<0.000000e+00> : vector<4x20xf32>
    %848 = tpu.matmul %847, %109, %cst_334 {dimension_numbers = #tpu.dot_dimension_numbers<[1], [0], [0], [1], [0, 0, 1, 1], [], []>} : vector<4x4xf32>, vector<4x20xf32>, vector<4x20xf32> -> vector<4x20xf32>
    %849 = arith.addf %824, %848 : vector<4x20xf32>
    %cst_335 = arith.constant dense<0.000000e+00> : vector<4x4xf32>
    %850 = tpu.matmul %533, %51, %cst_335 {dimension_numbers = #tpu.dot_dimension_numbers<[1], [0], [0], [1], [0, 0, 1, 1], [], []>} : vector<4x20xf32>, vector<20x4xf32>, vector<4x4xf32> -> vector<4x4xf32>
    %851 = vector.broadcast %81 : vector<1x4xf32> to vector<4x4xf32>
    %852 = arith.addf %850, %851 : vector<4x4xf32>
    %cst_336 = arith.constant dense<0.000000e+00> : vector<2x4xf32>
    %853 = tpu.matmul %823, %61, %cst_336 {dimension_numbers = #tpu.dot_dimension_numbers<[1], [0], [0], [1], [0, 0, 1, 1], [], []>} : vector<2x20xf32>, vector<20x4xf32>, vector<2x4xf32> -> vector<2x4xf32>
    %854 = vector.broadcast %91 : vector<1x4xf32> to vector<2x4xf32>
    %855 = arith.addf %853, %854 : vector<2x4xf32>
    %cst_337 = arith.constant dense<0.000000e+00> : vector<2x4xf32>
    %856 = tpu.matmul %823, %71, %cst_337 {dimension_numbers = #tpu.dot_dimension_numbers<[1], [0], [0], [1], [0, 0, 1, 1], [], []>} : vector<2x20xf32>, vector<20x4xf32>, vector<2x4xf32> -> vector<2x4xf32>
    %857 = vector.broadcast %101 : vector<1x4xf32> to vector<2x4xf32>
    %858 = arith.addf %856, %857 : vector<2x4xf32>
    %cst_338 = arith.constant dense<0.000000e+00> : vector<4x2xf32>
    %859 = tpu.matmul %852, %855, %cst_338 {dimension_numbers = #tpu.dot_dimension_numbers<[1], [1], [0], [0], [0, 0, 1, 0], [], []>} : vector<4x4xf32>, vector<2x4xf32>, vector<4x2xf32> -> vector<4x2xf32>
    %cst_339 = arith.constant 5.000000e-01 : f32
    %860 = vector.broadcast %cst_339 : f32 to vector<4x2xf32>
    %861 = arith.mulf %859, %860 : vector<4x2xf32>
    %cst_340 = arith.constant dense<0xFF800000> : vector<4xf32>
    %862 = vector.multi_reduction <maximumf>, %861, %cst_340 [1] : vector<4x2xf32> to vector<4xf32>
    %863 = vector.shape_cast %862 : vector<4xf32> to vector<4x1xf32>
    %864 = vector.broadcast %863 : vector<4x1xf32> to vector<4x2xf32>
    %865 = arith.subf %861, %864 : vector<4x2xf32>
    %866 = math.exp %865 : vector<4x2xf32>
    %cst_341 = arith.constant dense<0.000000e+00> : vector<4xf32>
    %867 = vector.multi_reduction <add>, %866, %cst_341 [1] : vector<4x2xf32> to vector<4xf32>
    %868 = vector.shape_cast %867 : vector<4xf32> to vector<4x1xf32>
    %869 = tpu.reciprocal %868 {approx = true} : vector<4x1xf32> -> vector<4x1xf32>
    %870 = vector.broadcast %869 : vector<4x1xf32> to vector<4x2xf32>
    %871 = arith.mulf %866, %870 : vector<4x2xf32>
    %cst_342 = arith.constant dense<0.000000e+00> : vector<4x4xf32>
    %872 = tpu.matmul %871, %858, %cst_342 {dimension_numbers = #tpu.dot_dimension_numbers<[1], [0], [0], [1], [0, 0, 1, 1], [], []>} : vector<4x2xf32>, vector<2x4xf32>, vector<4x4xf32> -> vector<4x4xf32>
    %cst_343 = arith.constant dense<0.000000e+00> : vector<4x20xf32>
    %873 = tpu.matmul %872, %111, %cst_343 {dimension_numbers = #tpu.dot_dimension_numbers<[1], [0], [0], [1], [0, 0, 1, 1], [], []>} : vector<4x4xf32>, vector<4x20xf32>, vector<4x20xf32> -> vector<4x20xf32>
    %874 = arith.addf %849, %873 : vector<4x20xf32>
    %cst_344 = arith.constant dense<0.000000e+00> : vector<4x4xf32>
    %875 = tpu.matmul %533, %53, %cst_344 {dimension_numbers = #tpu.dot_dimension_numbers<[1], [0], [0], [1], [0, 0, 1, 1], [], []>} : vector<4x20xf32>, vector<20x4xf32>, vector<4x4xf32> -> vector<4x4xf32>
    %876 = vector.broadcast %83 : vector<1x4xf32> to vector<4x4xf32>
    %877 = arith.addf %875, %876 : vector<4x4xf32>
    %cst_345 = arith.constant dense<0.000000e+00> : vector<2x4xf32>
    %878 = tpu.matmul %823, %63, %cst_345 {dimension_numbers = #tpu.dot_dimension_numbers<[1], [0], [0], [1], [0, 0, 1, 1], [], []>} : vector<2x20xf32>, vector<20x4xf32>, vector<2x4xf32> -> vector<2x4xf32>
    %879 = vector.broadcast %93 : vector<1x4xf32> to vector<2x4xf32>
    %880 = arith.addf %878, %879 : vector<2x4xf32>
    %cst_346 = arith.constant dense<0.000000e+00> : vector<2x4xf32>
    %881 = tpu.matmul %823, %73, %cst_346 {dimension_numbers = #tpu.dot_dimension_numbers<[1], [0], [0], [1], [0, 0, 1, 1], [], []>} : vector<2x20xf32>, vector<20x4xf32>, vector<2x4xf32> -> vector<2x4xf32>
    %882 = vector.broadcast %103 : vector<1x4xf32> to vector<2x4xf32>
    %883 = arith.addf %881, %882 : vector<2x4xf32>
    %cst_347 = arith.constant dense<0.000000e+00> : vector<4x2xf32>
    %884 = tpu.matmul %877, %880, %cst_347 {dimension_numbers = #tpu.dot_dimension_numbers<[1], [1], [0], [0], [0, 0, 1, 0], [], []>} : vector<4x4xf32>, vector<2x4xf32>, vector<4x2xf32> -> vector<4x2xf32>
    %cst_348 = arith.constant 5.000000e-01 : f32
    %885 = vector.broadcast %cst_348 : f32 to vector<4x2xf32>
    %886 = arith.mulf %884, %885 : vector<4x2xf32>
    %cst_349 = arith.constant dense<0xFF800000> : vector<4xf32>
    %887 = vector.multi_reduction <maximumf>, %886, %cst_349 [1] : vector<4x2xf32> to vector<4xf32>
    %888 = vector.shape_cast %887 : vector<4xf32> to vector<4x1xf32>
    %889 = vector.broadcast %888 : vector<4x1xf32> to vector<4x2xf32>
    %890 = arith.subf %886, %889 : vector<4x2xf32>
    %891 = math.exp %890 : vector<4x2xf32>
    %cst_350 = arith.constant dense<0.000000e+00> : vector<4xf32>
    %892 = vector.multi_reduction <add>, %891, %cst_350 [1] : vector<4x2xf32> to vector<4xf32>
    %893 = vector.shape_cast %892 : vector<4xf32> to vector<4x1xf32>
    %894 = tpu.reciprocal %893 {approx = true} : vector<4x1xf32> -> vector<4x1xf32>
    %895 = vector.broadcast %894 : vector<4x1xf32> to vector<4x2xf32>
    %896 = arith.mulf %891, %895 : vector<4x2xf32>
    %cst_351 = arith.constant dense<0.000000e+00> : vector<4x4xf32>
    %897 = tpu.matmul %896, %883, %cst_351 {dimension_numbers = #tpu.dot_dimension_numbers<[1], [0], [0], [1], [0, 0, 1, 1], [], []>} : vector<4x2xf32>, vector<2x4xf32>, vector<4x4xf32> -> vector<4x4xf32>
    %cst_352 = arith.constant dense<0.000000e+00> : vector<4x20xf32>
    %898 = tpu.matmul %897, %113, %cst_352 {dimension_numbers = #tpu.dot_dimension_numbers<[1], [0], [0], [1], [0, 0, 1, 1], [], []>} : vector<4x4xf32>, vector<4x20xf32>, vector<4x20xf32> -> vector<4x20xf32>
    %899 = arith.addf %874, %898 : vector<4x20xf32>
    %cst_353 = arith.constant dense<0.000000e+00> : vector<4x4xf32>
    %900 = tpu.matmul %533, %55, %cst_353 {dimension_numbers = #tpu.dot_dimension_numbers<[1], [0], [0], [1], [0, 0, 1, 1], [], []>} : vector<4x20xf32>, vector<20x4xf32>, vector<4x4xf32> -> vector<4x4xf32>
    %901 = vector.broadcast %85 : vector<1x4xf32> to vector<4x4xf32>
    %902 = arith.addf %900, %901 : vector<4x4xf32>
    %cst_354 = arith.constant dense<0.000000e+00> : vector<2x4xf32>
    %903 = tpu.matmul %823, %65, %cst_354 {dimension_numbers = #tpu.dot_dimension_numbers<[1], [0], [0], [1], [0, 0, 1, 1], [], []>} : vector<2x20xf32>, vector<20x4xf32>, vector<2x4xf32> -> vector<2x4xf32>
    %904 = vector.broadcast %95 : vector<1x4xf32> to vector<2x4xf32>
    %905 = arith.addf %903, %904 : vector<2x4xf32>
    %cst_355 = arith.constant dense<0.000000e+00> : vector<2x4xf32>
    %906 = tpu.matmul %823, %75, %cst_355 {dimension_numbers = #tpu.dot_dimension_numbers<[1], [0], [0], [1], [0, 0, 1, 1], [], []>} : vector<2x20xf32>, vector<20x4xf32>, vector<2x4xf32> -> vector<2x4xf32>
    %907 = vector.broadcast %105 : vector<1x4xf32> to vector<2x4xf32>
    %908 = arith.addf %906, %907 : vector<2x4xf32>
    %cst_356 = arith.constant dense<0.000000e+00> : vector<4x2xf32>
    %909 = tpu.matmul %902, %905, %cst_356 {dimension_numbers = #tpu.dot_dimension_numbers<[1], [1], [0], [0], [0, 0, 1, 0], [], []>} : vector<4x4xf32>, vector<2x4xf32>, vector<4x2xf32> -> vector<4x2xf32>
    %cst_357 = arith.constant 5.000000e-01 : f32
    %910 = vector.broadcast %cst_357 : f32 to vector<4x2xf32>
    %911 = arith.mulf %909, %910 : vector<4x2xf32>
    %cst_358 = arith.constant dense<0xFF800000> : vector<4xf32>
    %912 = vector.multi_reduction <maximumf>, %911, %cst_358 [1] : vector<4x2xf32> to vector<4xf32>
    %913 = vector.shape_cast %912 : vector<4xf32> to vector<4x1xf32>
    %914 = vector.broadcast %913 : vector<4x1xf32> to vector<4x2xf32>
    %915 = arith.subf %911, %914 : vector<4x2xf32>
    %916 = math.exp %915 : vector<4x2xf32>
    %cst_359 = arith.constant dense<0.000000e+00> : vector<4xf32>
    %917 = vector.multi_reduction <add>, %916, %cst_359 [1] : vector<4x2xf32> to vector<4xf32>
    %918 = vector.shape_cast %917 : vector<4xf32> to vector<4x1xf32>
    %919 = tpu.reciprocal %918 {approx = true} : vector<4x1xf32> -> vector<4x1xf32>
    %920 = vector.broadcast %919 : vector<4x1xf32> to vector<4x2xf32>
    %921 = arith.mulf %916, %920 : vector<4x2xf32>
    %cst_360 = arith.constant dense<0.000000e+00> : vector<4x4xf32>
    %922 = tpu.matmul %921, %908, %cst_360 {dimension_numbers = #tpu.dot_dimension_numbers<[1], [0], [0], [1], [0, 0, 1, 1], [], []>} : vector<4x2xf32>, vector<2x4xf32>, vector<4x4xf32> -> vector<4x4xf32>
    %cst_361 = arith.constant dense<0.000000e+00> : vector<4x20xf32>
    %923 = tpu.matmul %922, %115, %cst_361 {dimension_numbers = #tpu.dot_dimension_numbers<[1], [0], [0], [1], [0, 0, 1, 1], [], []>} : vector<4x4xf32>, vector<4x20xf32>, vector<4x20xf32> -> vector<4x20xf32>
    %924 = arith.addf %899, %923 : vector<4x20xf32>
    %cst_362 = arith.constant dense<0.000000e+00> : vector<4x4xf32>
    %925 = tpu.matmul %533, %57, %cst_362 {dimension_numbers = #tpu.dot_dimension_numbers<[1], [0], [0], [1], [0, 0, 1, 1], [], []>} : vector<4x20xf32>, vector<20x4xf32>, vector<4x4xf32> -> vector<4x4xf32>
    %926 = vector.broadcast %87 : vector<1x4xf32> to vector<4x4xf32>
    %927 = arith.addf %925, %926 : vector<4x4xf32>
    %cst_363 = arith.constant dense<0.000000e+00> : vector<2x4xf32>
    %928 = tpu.matmul %823, %67, %cst_363 {dimension_numbers = #tpu.dot_dimension_numbers<[1], [0], [0], [1], [0, 0, 1, 1], [], []>} : vector<2x20xf32>, vector<20x4xf32>, vector<2x4xf32> -> vector<2x4xf32>
    %929 = vector.broadcast %97 : vector<1x4xf32> to vector<2x4xf32>
    %930 = arith.addf %928, %929 : vector<2x4xf32>
    %cst_364 = arith.constant dense<0.000000e+00> : vector<2x4xf32>
    %931 = tpu.matmul %823, %77, %cst_364 {dimension_numbers = #tpu.dot_dimension_numbers<[1], [0], [0], [1], [0, 0, 1, 1], [], []>} : vector<2x20xf32>, vector<20x4xf32>, vector<2x4xf32> -> vector<2x4xf32>
    %932 = vector.broadcast %107 : vector<1x4xf32> to vector<2x4xf32>
    %933 = arith.addf %931, %932 : vector<2x4xf32>
    %cst_365 = arith.constant dense<0.000000e+00> : vector<4x2xf32>
    %934 = tpu.matmul %927, %930, %cst_365 {dimension_numbers = #tpu.dot_dimension_numbers<[1], [1], [0], [0], [0, 0, 1, 0], [], []>} : vector<4x4xf32>, vector<2x4xf32>, vector<4x2xf32> -> vector<4x2xf32>
    %cst_366 = arith.constant 5.000000e-01 : f32
    %935 = vector.broadcast %cst_366 : f32 to vector<4x2xf32>
    %936 = arith.mulf %934, %935 : vector<4x2xf32>
    %cst_367 = arith.constant dense<0xFF800000> : vector<4xf32>
    %937 = vector.multi_reduction <maximumf>, %936, %cst_367 [1] : vector<4x2xf32> to vector<4xf32>
    %938 = vector.shape_cast %937 : vector<4xf32> to vector<4x1xf32>
    %939 = vector.broadcast %938 : vector<4x1xf32> to vector<4x2xf32>
    %940 = arith.subf %936, %939 : vector<4x2xf32>
    %941 = math.exp %940 : vector<4x2xf32>
    %cst_368 = arith.constant dense<0.000000e+00> : vector<4xf32>
    %942 = vector.multi_reduction <add>, %941, %cst_368 [1] : vector<4x2xf32> to vector<4xf32>
    %943 = vector.shape_cast %942 : vector<4xf32> to vector<4x1xf32>
    %944 = tpu.reciprocal %943 {approx = true} : vector<4x1xf32> -> vector<4x1xf32>
    %945 = vector.broadcast %944 : vector<4x1xf32> to vector<4x2xf32>
    %946 = arith.mulf %941, %945 : vector<4x2xf32>
    %cst_369 = arith.constant dense<0.000000e+00> : vector<4x4xf32>
    %947 = tpu.matmul %946, %933, %cst_369 {dimension_numbers = #tpu.dot_dimension_numbers<[1], [0], [0], [1], [0, 0, 1, 1], [], []>} : vector<4x2xf32>, vector<2x4xf32>, vector<4x4xf32> -> vector<4x4xf32>
    %cst_370 = arith.constant dense<0.000000e+00> : vector<4x20xf32>
    %948 = tpu.matmul %947, %117, %cst_370 {dimension_numbers = #tpu.dot_dimension_numbers<[1], [0], [0], [1], [0, 0, 1, 1], [], []>} : vector<4x4xf32>, vector<4x20xf32>, vector<4x20xf32> -> vector<4x20xf32>
    %949 = arith.addf %924, %948 : vector<4x20xf32>
    %950 = vector.broadcast %47 : vector<1x20xf32> to vector<4x20xf32>
    %951 = arith.addf %949, %950 : vector<4x20xf32>
    %c0_371 = arith.constant 0 : index
    %c0_372 = arith.constant 0 : index
    %952 = vector.load %arg20[%c0_371, %c0_372] : memref<4x20xf32, #tpu.memory_space<vmem>>, vector<4x20xf32>
    tpu.vector_store %arg20[%c0_371, %c0_372], %951 {strides = array<i32>} : memref<4x20xf32, #tpu.memory_space<vmem>>, vector<4x20xf32>,
    return
  }
}

</mosaic_0001>

<llo_original>
// kernel: episode_forward.1
$region0: #{episode_forward.1}
  #allocation0 [shape = 'u32[]', space=smem, size = 0x4, offset = 0x4, fixed_abs, tag = 'smem constant byte address 0x4 - core index']
  #allocation1 [shape = 'u32[144,128]{1,0:T(1,128)}', space=vmem, size = 0x12000, scoped, tag = 'internal scratch']
  #allocation2 [shape = 'f32[1,1]{1,0:T(1,128)S(1)}', space=vmem, size = 0x200, scoped, tag = 'scoped memory for episode_forward.1']
  %s0 = inlined_call_operand.vmem [shape: f32[16,20], index: 0, kind: input, shape index: {}]
  %s1 = inlined_call_operand.vmem [shape: f32[2,20], index: 1, kind: input, shape index: {}]
  %s2 = inlined_call_operand.vmem [shape: f32[2,20], index: 2, kind: input, shape index: {}]
  %s3 = inlined_call_operand.vmem [shape: f32[4,20], index: 3, kind: input, shape index: {}]
  %s4 = inlined_call_operand.vmem [shape: f32[3,20,20], index: 4, kind: input, shape index: {}]
  %s5 = inlined_call_operand.vmem [shape: f32[3,20,20], index: 5, kind: input, shape index: {}]
  %s6 = inlined_call_operand.vmem [shape: f32[3,1,20], index: 6, kind: input, shape index: {}]
  %s7 = inlined_call_operand.vmem [shape: f32[3,1,20], index: 7, kind: input, shape index: {}]
  %s8 = inlined_call_operand.vmem [shape: f32[5,20,4], index: 8, kind: input, shape index: {}]
  %s9 = inlined_call_operand.vmem [shape: f32[5,20,4], index: 9, kind: input, shape index: {}]
  %s10 = inlined_call_operand.vmem [shape: f32[5,20,4], index: 10, kind: input, shape index: {}]
  %s11 = inlined_call_operand.vmem [shape: f32[5,1,4], index: 11, kind: input, shape index: {}]
  %s12 = inlined_call_operand.vmem [shape: f32[5,1,4], index: 12, kind: input, shape index: {}]
  %s13 = inlined_call_operand.vmem [shape: f32[5,1,4], index: 13, kind: input, shape index: {}]
  %s14 = inlined_call_operand.vmem [shape: f32[5,4,20], index: 14, kind: input, shape index: {}]
  %s15 = inlined_call_operand.vmem [shape: f32[1,20], index: 15, kind: input, shape index: {}]
  %s16 = inlined_call_operand.vmem [shape: f32[4,20,16], index: 16, kind: input, shape index: {}]
  %s17 = inlined_call_operand.vmem [shape: f32[1,16], index: 17, kind: input, shape index: {}]
  %s18 = inlined_call_operand.vmem [shape: f32[16,1], index: 18, kind: input, shape index: {}]
  %s19 = inlined_call_operand.<no memory space> [shape: f32[1,1], index: 19, kind: input, shape index: {}]
  %s20 = inlined_call_operand.hbm [shape: f32[4,20], index: 20, kind: output, shape index: {}]
  %s21 = sld [smem:[#allocation0]]
  $region90: #{episode_forward.1} parent=0
    _
  %s23 = ssub.s32 1, %s21
  %s24 = scalar_select 0, %s23, %s21
  %v25 = vstv %s19
  %26 = vst [vmem:[#allocation2] sm:$0x1] %v25
  $region1: #{episode_forward.1} parent=0
    #allocation3 [shape = 'u8[2048]{0}', space=vmem, size = 0x800, scoped, tag = 'output window, operand 0, single buffered']
    #allocation4 [shape = 's32[1]{0}', space=sflag, size = 0x4, scoped, tag = 'scoped memory for episode_forward.1']
    %27 = vsyncpa [#allocation4], 0
    // Predicated region
    $region2: #{episode_forward.1} parent=1 // pred_check
      _
    $region3: #{episode_forward.1} parent=1 // pred_check_branch
      %29 = sbr.rel (0) target = $region5
    $region4: #{episode_forward.1} parent=1 // pred_region
      _
    $region5: #{episode_forward.1} parent=1 // pred_fallthru
      _
    // Predicated region
    $region6: #{episode_forward.1} parent=1 // pred_check
      _
    $region7: #{episode_forward.1} parent=1 // pred_check_branch
      %31 = sbr.rel (0) target = $region9
    $region8: #{episode_forward.1} parent=1 // pred_region
      _
    $region9: #{episode_forward.1} parent=1 // pred_fallthru
      _
    // Predicated region
    $region10: #{episode_forward.1} parent=1 // pred_check
      _
    $region11: #{episode_forward.1} parent=1 // pred_check_branch
      %33 = sbr.rel (0) target = $region13
    $region12: #{episode_forward.1} parent=1 // pred_region
      _
    $region13: #{episode_forward.1} parent=1 // pred_fallthru
      _
    // Predicated region
    $region14: #{episode_forward.1} parent=1 // pred_check
      _
    $region15: #{episode_forward.1} parent=1 // pred_check_branch
      %35 = sbr.rel (0) target = $region17
    $region16: #{episode_forward.1} parent=1 // pred_region
      _
    $region17: #{episode_forward.1} parent=1 // pred_fallthru
      _
    // Predicated region
    $region18: #{episode_forward.1} parent=1 // pred_check
      _
    $region19: #{episode_forward.1} parent=1 // pred_check_branch
      %37 = sbr.rel (0) target = $region21
    $region20: #{episode_forward.1} parent=1 // pred_region
      _
    $region21: #{episode_forward.1} parent=1 // pred_fallthru
      _
    // Predicated region
    $region22: #{episode_forward.1} parent=1 // pred_check
      _
    $region23: #{episode_forward.1} parent=1 // pred_check_branch
      %39 = sbr.rel (0) target = $region25
    $region24: #{episode_forward.1} parent=1 // pred_region
      _
    $region25: #{episode_forward.1} parent=1 // pred_fallthru
      _
    // Predicated region
    $region26: #{episode_forward.1} parent=1 // pred_check
      _
    $region27: #{episode_forward.1} parent=1 // pred_check_branch
      %41 = sbr.rel (0) target = $region29
    $region28: #{episode_forward.1} parent=1 // pred_region
      _
    $region29: #{episode_forward.1} parent=1 // pred_fallthru
      _
    // Predicated region
    $region30: #{episode_forward.1} parent=1 // pred_check
      _
    $region31: #{episode_forward.1} parent=1 // pred_check_branch
      %43 = sbr.rel (0) target = $region33
    $region32: #{episode_forward.1} parent=1 // pred_region
      _
    $region33: #{episode_forward.1} parent=1 // pred_fallthru
      _
    // Predicated region
    $region34: #{episode_forward.1} parent=1 // pred_check
      _
    $region35: #{episode_forward.1} parent=1 // pred_check_branch
      %45 = sbr.rel (0) target = $region37
    $region36: #{episode_forward.1} parent=1 // pred_region
      _
    $region37: #{episode_forward.1} parent=1 // pred_fallthru
      _
    // Predicated region
    $region38: #{episode_forward.1} parent=1 // pred_check
      _
    $region39: #{episode_forward.1} parent=1 // pred_check_branch
      %47 = sbr.rel (0) target = $region41
    $region40: #{episode_forward.1} parent=1 // pred_region
      _
    $region41: #{episode_forward.1} parent=1 // pred_fallthru
      _
    // Predicated region
    $region42: #{episode_forward.1} parent=1 // pred_check
      _
    $region43: #{episode_forward.1} parent=1 // pred_check_branch
      %49 = sbr.rel (0) target = $region45
    $region44: #{episode_forward.1} parent=1 // pred_region
      _
    $region45: #{episode_forward.1} parent=1 // pred_fallthru
      _
    // Predicated region
    $region46: #{episode_forward.1} parent=1 // pred_check
      _
    $region47: #{episode_forward.1} parent=1 // pred_check_branch
      %51 = sbr.rel (0) target = $region49
    $region48: #{episode_forward.1} parent=1 // pred_region
      _
    $region49: #{episode_forward.1} parent=1 // pred_fallthru
      _
    // Predicated region
    $region50: #{episode_forward.1} parent=1 // pred_check
      _
    $region51: #{episode_forward.1} parent=1 // pred_check_branch
      %53 = sbr.rel (0) target = $region53
    $region52: #{episode_forward.1} parent=1 // pred_region
      _
    $region53: #{episode_forward.1} parent=1 // pred_fallthru
      _
    // Predicated region
    $region54: #{episode_forward.1} parent=1 // pred_check
      _
    $region55: #{episode_forward.1} parent=1 // pred_check_branch
      %55 = sbr.rel (0) target = $region57
    $region56: #{episode_forward.1} parent=1 // pred_region
      _
    $region57: #{episode_forward.1} parent=1 // pred_fallthru
      _
    // Predicated region
    $region58: #{episode_forward.1} parent=1 // pred_check
      _
    $region59: #{episode_forward.1} parent=1 // pred_check_branch
      %57 = sbr.rel (0) target = $region61
    $region60: #{episode_forward.1} parent=1 // pred_region
      _
    $region61: #{episode_forward.1} parent=1 // pred_fallthru
      _
    // Predicated region
    $region62: #{episode_forward.1} parent=1 // pred_check
      _
    $region63: #{episode_forward.1} parent=1 // pred_check_branch
      %59 = sbr.rel (0) target = $region65
    $region64: #{episode_forward.1} parent=1 // pred_region
      _
    $region65: #{episode_forward.1} parent=1 // pred_fallthru
      _
    // Predicated region
    $region66: #{episode_forward.1} parent=1 // pred_check
      _
    $region67: #{episode_forward.1} parent=1 // pred_check_branch
      %61 = sbr.rel (0) target = $region69
    $region68: #{episode_forward.1} parent=1 // pred_region
      _
    $region69: #{episode_forward.1} parent=1 // pred_fallthru
      _
    // Predicated region
    $region70: #{episode_forward.1} parent=1 // pred_check
      _
    $region71: #{episode_forward.1} parent=1 // pred_check_branch
      %63 = sbr.rel (0) target = $region73
    $region72: #{episode_forward.1} parent=1 // pred_region
      _
    $region73: #{episode_forward.1} parent=1 // pred_fallthru
      _
    // Predicated region
    $region74: #{episode_forward.1} parent=1 // pred_check
      _
    $region75: #{episode_forward.1} parent=1 // pred_check_branch
      %65 = sbr.rel (0) target = $region77
    $region76: #{episode_forward.1} parent=1 // pred_region
      _
    $region77: #{episode_forward.1} parent=1 // pred_fallthru
      _
    // Predicated region
    $region78: #{episode_forward.1} parent=1 // pred_check
      _
    $region79: #{episode_forward.1} parent=1 // pred_check_branch
      %67 = sbr.rel (0) target = $region81
    $region80: #{episode_forward.1} parent=1 // pred_region
      _
    $region81: #{episode_forward.1} parent=1 // pred_fallthru
      _
    %v68 = vld [vmem:[%s0] sm:$0xff]
    %v69 = vld [vmem:[%s0 + $0x8] sm:$0xff]
    %v70 = vld [vmem:[%s1] sm:$0x3]
    %v71 = vld [vmem:[%s2] sm:$0x3]
    %v72 = vld [vmem:[%s4] sm:$0xff]
    %v73 = vld [vmem:[%s4 + $0x8] sm:$0xff]
    %v74 = vld [vmem:[%s4 + $0x10] sm:$0xf]
    %s75 = scalar_lea.vmem %s4, 24
    %v76 = vld [vmem:[%s75] sm:$0xff]
    %v77 = vld [vmem:[%s75 + $0x8] sm:$0xff]
    %v78 = vld [vmem:[%s75 + $0x10] sm:$0xf]
    %s79 = scalar_lea.vmem %s4, 48
    %v80 = vld [vmem:[%s79] sm:$0xff]
    %v81 = vld [vmem:[%s79 + $0x8] sm:$0xff]
    %v82 = vld [vmem:[%s79 + $0x10] sm:$0xf]
    %v83 = vld [vmem:[%s6] sm:$0x1]
    %s84 = scalar_lea.vmem %s6, 1
    %v85 = vld [vmem:[%s84] sm:$0x1]
    %s86 = scalar_lea.vmem %s6, 2
    %v87 = vld [vmem:[%s86] sm:$0x1]
    %v89 = vlaneseq
    %v90 = vshrl.u32 %v89, 7
    %v91 = vsub.s32 0, %v90
    %v92 = vrot.slane %v83, %v91
    %vm94 = vcmask 162816
    %v96 = vsel %vm94, %v68, 0
    %v99 = vsel %vm94, %v69, 0
    %vm101 = vcmask 1043456
    %v103 = vsel %vm101, %v74, 0
    %105 = vmatprep.subr.mxu0 0.0
    %106 = vmatpush1.msra.mxu0 %v72
    %107 = vmatprep.subr.mxu0 0.0
    %108 = vmatpush1.msra.mxu0 %v73
    %109 = vmatprep.subr.mxu0 0.0
    %110 = vmatpush1.msra.mxu0 %v103
    %111 = vmatprep.subr.mxu0 0.0
    %112 = vmatpush1.msra.mxu0 0.0
    %113 = vmatprep.subr.mxu0 0.0
    %114 = vmatpush1.msra.mxu0 0.0
    %115 = vmatprep.subr.mxu0 0.0
    %116 = vmatpush1.msra.mxu0 0.0
    %117 = vmatprep.subr.mxu0 0.0
    %118 = vmatpush1.msra.mxu0 0.0
    %119 = vmatprep.subr.mxu0 0.0
    %120 = vmatpush1.msra.mxu0 0.0
    %121 = vmatprep.subr.mxu0 0.0
    %122 = vmatpush1.msra.mxu0 0.0
    %123 = vmatprep.subr.mxu0 0.0
    %124 = vmatpush1.msra.mxu0 0.0
    %125 = vmatprep.subr.mxu0 0.0
    %126 = vmatpush1.msra.mxu0 0.0
    %127 = vmatprep.subr.mxu0 0.0
    %128 = vmatpush1.msra.mxu0 0.0
    %129 = vmatprep.subr.mxu0 0.0
    %130 = vmatpush1.msra.mxu0 0.0
    %131 = vmatprep.subr.mxu0 0.0
    %132 = vmatpush1.msra.mxu0 0.0
    %133 = vmatprep.subr.mxu0 0.0
    %134 = vmatpush1.msra.mxu0 0.0
    %135 = vmatprep.subr.mxu0 0.0
    %136 = vmatpush1.msra.mxu0 0.0
    %137 = vmatprep.subr.mxu0 0.0
    %138 = vmatpush1.msra.mxu0 0.0
    %139 = vmatprep.subr.mxu0 0.0
    %140 = vmatpush1.msra.mxu0 0.0
    %141 = vmatprep.subr.mxu0 0.0
    %142 = vmatpush1.msra.mxu0 0.0
    %143 = vmatprep.subr.mxu0 0.0
    %144 = vmatpush1.msra.mxu0 0.0
    %145 = vmatprep.subr.mxu0 0.0
    %146 = vmatpush1.msra.mxu0 0.0
    %147 = vmatprep.subr.mxu0 0.0
    %148 = vmatpush1.msra.mxu0 0.0
    %149 = vmatprep.subr.mxu0 0.0
    %150 = vmatpush1.msra.mxu0 0.0
    %151 = vmatprep.subr.mxu0 0.0
    %152 = vmatpush1.msra.mxu0 0.0
    %153 = vmatprep.subr.mxu0 0.0
    %154 = vmatpush1.msra.mxu0 0.0
    %155 = vmatprep.subr.mxu0 0.0
    %156 = vmatpush1.msra.mxu0 0.0
    %157 = vmatprep.subr.mxu0 0.0
    %158 = vmatpush1.msra.mxu0 0.0
    %159 = vmatprep.subr.mxu0 0.0
    %160 = vmatpush1.msra.mxu0 0.0
    %161 = vmatprep.subr.mxu0 0.0
    %162 = vmatpush1.msra.mxu0 0.0
    %163 = vmatprep.subr.mxu0 0.0
    %164 = vmatpush1.msra.mxu0 0.0
    %165 = vmatprep.subr.mxu0 0.0
    %166 = vmatpush1.msra.mxu0 0.0
    %167 = vmatprep.subr.mxu0 0.0
    %168 = vmatpush1.msra.mxu0 0.0
    %169 = vmatprep.mubr.f32.mxu0 0.0
    %170 = vmatmul.mubr.f32.gmra.mrb[0].mxu0 %v96
    %v171 = vpop.f32.mrb[0].mxu0
    %v172 = vadd.f32 %v92, %v171
    %v173 = vpop.f32.mrb[0].mxu0
    %174 = vmatprep.mubr.f32.mxu0 0.0
    %175 = vmatmul.mubr.f32.gmra.mrb[0].mxu0 %v99
    %v176 = vpop.f32.mrb[0].mxu0
    %v177 = vadd.f32 %v92, %v176
    %v178 = vpop.f32.mrb[0].mxu0
    %179 = vdwg.mxu0
    %v181 = vlaneseq
    %v182 = vshrl.u32 %v181, 7
    %v183 = vsub.s32 0, %v182
    %v184 = vrot.slane %v85, %v183
    %v187 = vsel %vm101, %v78, 0
    %189 = vmatprep.subr.mxu0 0.0
    %190 = vmatpush1.msra.mxu0 %v76
    %191 = vmatprep.subr.mxu0 0.0
    %192 = vmatpush1.msra.mxu0 %v77
    %193 = vmatprep.subr.mxu0 0.0
    %194 = vmatpush1.msra.mxu0 %v187
    %195 = vmatprep.subr.mxu0 0.0
    %196 = vmatpush1.msra.mxu0 0.0
    %197 = vmatprep.subr.mxu0 0.0
    %198 = vmatpush1.msra.mxu0 0.0
    %199 = vmatprep.subr.mxu0 0.0
    %200 = vmatpush1.msra.mxu0 0.0
    %201 = vmatprep.subr.mxu0 0.0
    %202 = vmatpush1.msra.mxu0 0.0
    %203 = vmatprep.subr.mxu0 0.0
    %204 = vmatpush1.msra.mxu0 0.0
    %205 = vmatprep.subr.mxu0 0.0
    %206 = vmatpush1.msra.mxu0 0.0
    %207 = vmatprep.subr.mxu0 0.0
    %208 = vmatpush1.msra.mxu0 0.0
    %209 = vmatprep.subr.mxu0 0.0
    %210 = vmatpush1.msra.mxu0 0.0
    %211 = vmatprep.subr.mxu0 0.0
    %212 = vmatpush1.msra.mxu0 0.0
    %213 = vmatprep.subr.mxu0 0.0
    %214 = vmatpush1.msra.mxu0 0.0
    %215 = vmatprep.subr.mxu0 0.0
    %216 = vmatpush1.msra.mxu0 0.0
    %217 = vmatprep.subr.mxu0 0.0
    %218 = vmatpush1.msra.mxu0 0.0
    %219 = vmatprep.subr.mxu0 0.0
    %220 = vmatpush1.msra.mxu0 0.0
    %221 = vmatprep.subr.mxu0 0.0
    %222 = vmatpush1.msra.mxu0 0.0
    %223 = vmatprep.subr.mxu0 0.0
    %224 = vmatpush1.msra.mxu0 0.0
    %225 = vmatprep.subr.mxu0 0.0
    %226 = vmatpush1.msra.mxu0 0.0
    %227 = vmatprep.subr.mxu0 0.0
    %228 = vmatpush1.msra.mxu0 0.0
    %229 = vmatprep.subr.mxu0 0.0
    %230 = vmatpush1.msra.mxu0 0.0
    %231 = vmatprep.subr.mxu0 0.0
    %232 = vmatpush1.msra.mxu0 0.0
    %233 = vmatprep.subr.mxu0 0.0
    %234 = vmatpush1.msra.mxu0 0.0
    %235 = vmatprep.subr.mxu0 0.0
    %236 = vmatpush1.msra.mxu0 0.0
    %237 = vmatprep.subr.mxu0 0.0
    %238 = vmatpush1.msra.mxu0 0.0
    %239 = vmatprep.subr.mxu0 0.0
    %240 = vmatpush1.msra.mxu0 0.0
    %241 = vmatprep.subr.mxu0 0.0
    %242 = vmatpush1.msra.mxu0 0.0
    %243 = vmatprep.subr.mxu0 0.0
    %244 = vmatpush1.msra.mxu0 0.0
    %245 = vmatprep.subr.mxu0 0.0
    %246 = vmatpush1.msra.mxu0 0.0
    %247 = vmatprep.subr.mxu0 0.0
    %248 = vmatpush1.msra.mxu0 0.0
    %249 = vmatprep.subr.mxu0 0.0
    %250 = vmatpush1.msra.mxu0 0.0
    %251 = vmatprep.subr.mxu0 0.0
    %252 = vmatpush1.msra.mxu0 0.0
    %253 = vmatprep.mubr.f32.mxu0 0.0
    %254 = vmatmul.mubr.f32.gmra.mrb[0].mxu0 %v96
    %v255 = vpop.f32.mrb[0].mxu0
    %v256 = vadd.f32 %v184, %v255
    %v257 = vpop.f32.mrb[0].mxu0
    %258 = vmatprep.mubr.f32.mxu0 0.0
    %259 = vmatmul.mubr.f32.gmra.mrb[0].mxu0 %v99
    %v260 = vpop.f32.mrb[0].mxu0
    %v261 = vadd.f32 %v184, %v260
    %v262 = vpop.f32.mrb[0].mxu0
    %263 = vdwg.mxu0
    %v265 = vlaneseq
    %v266 = vshrl.u32 %v265, 7
    %v267 = vsub.s32 0, %v266
    %v268 = vrot.slane %v87, %v267
    %v271 = vsel %vm101, %v82, 0
    %273 = vmatprep.subr.mxu0 0.0
    %274 = vmatpush1.msra.mxu0 %v80
    %275 = vmatprep.subr.mxu0 0.0
    %276 = vmatpush1.msra.mxu0 %v81
    %277 = vmatprep.subr.mxu0 0.0
    %278 = vmatpush1.msra.mxu0 %v271
    %279 = vmatprep.subr.mxu0 0.0
    %280 = vmatpush1.msra.mxu0 0.0
    %281 = vmatprep.subr.mxu0 0.0
    %282 = vmatpush1.msra.mxu0 0.0
    %283 = vmatprep.subr.mxu0 0.0
    %284 = vmatpush1.msra.mxu0 0.0
    %285 = vmatprep.subr.mxu0 0.0
    %286 = vmatpush1.msra.mxu0 0.0
    %287 = vmatprep.subr.mxu0 0.0
    %288 = vmatpush1.msra.mxu0 0.0
    %289 = vmatprep.subr.mxu0 0.0
    %290 = vmatpush1.msra.mxu0 0.0
    %291 = vmatprep.subr.mxu0 0.0
    %292 = vmatpush1.msra.mxu0 0.0
    %293 = vmatprep.subr.mxu0 0.0
    %294 = vmatpush1.msra.mxu0 0.0
    %295 = vmatprep.subr.mxu0 0.0
    %296 = vmatpush1.msra.mxu0 0.0
    %297 = vmatprep.subr.mxu0 0.0
    %298 = vmatpush1.msra.mxu0 0.0
    %299 = vmatprep.subr.mxu0 0.0
    %300 = vmatpush1.msra.mxu0 0.0
    %301 = vmatprep.subr.mxu0 0.0
    %302 = vmatpush1.msra.mxu0 0.0
    %303 = vmatprep.subr.mxu0 0.0
    %304 = vmatpush1.msra.mxu0 0.0
    %305 = vmatprep.subr.mxu0 0.0
    %306 = vmatpush1.msra.mxu0 0.0
    %307 = vmatprep.subr.mxu0 0.0
    %308 = vmatpush1.msra.mxu0 0.0
    %309 = vmatprep.subr.mxu0 0.0
    %310 = vmatpush1.msra.mxu0 0.0
    %311 = vmatprep.subr.mxu0 0.0
    %312 = vmatpush1.msra.mxu0 0.0
    %313 = vmatprep.subr.mxu0 0.0
    %314 = vmatpush1.msra.mxu0 0.0
    %315 = vmatprep.subr.mxu0 0.0
    %316 = vmatpush1.msra.mxu0 0.0
    %317 = vmatprep.subr.mxu0 0.0
    %318 = vmatpush1.msra.mxu0 0.0
    %319 = vmatprep.subr.mxu0 0.0
    %320 = vmatpush1.msra.mxu0 0.0
    %321 = vmatprep.subr.mxu0 0.0
    %322 = vmatpush1.msra.mxu0 0.0
    %323 = vmatprep.subr.mxu0 0.0
    %324 = vmatpush1.msra.mxu0 0.0
    %325 = vmatprep.subr.mxu0 0.0
    %326 = vmatpush1.msra.mxu0 0.0
    %327 = vmatprep.subr.mxu0 0.0
    %328 = vmatpush1.msra.mxu0 0.0
    %329 = vmatprep.subr.mxu0 0.0
    %330 = vmatpush1.msra.mxu0 0.0
    %331 = vmatprep.subr.mxu0 0.0
    %332 = vmatpush1.msra.mxu0 0.0
    %333 = vmatprep.subr.mxu0 0.0
    %334 = vmatpush1.msra.mxu0 0.0
    %335 = vmatprep.subr.mxu0 0.0
    %336 = vmatpush1.msra.mxu0 0.0
    %337 = vmatprep.mubr.f32.mxu0 0.0
    %338 = vmatmul.mubr.f32.gmra.mrb[0].mxu0 %v96
    %v339 = vpop.f32.mrb[0].mxu0
    %v340 = vadd.f32 %v268, %v339
    %v341 = vpop.f32.mrb[0].mxu0
    %342 = vmatprep.mubr.f32.mxu0 0.0
    %343 = vmatmul.mubr.f32.gmra.mrb[0].mxu0 %v99
    %v344 = vpop.f32.mrb[0].mxu0
    %v345 = vadd.f32 %v268, %v344
    %v346 = vpop.f32.mrb[0].mxu0
    %347 = vdwg.mxu0
    %v348 = vld [vmem:[%s5] sm:$0xff]
    %v349 = vld [vmem:[%s5 + $0x8] sm:$0xff]
    %v350 = vld [vmem:[%s5 + $0x10] sm:$0xf]
    %s351 = scalar_lea.vmem %s5, 24
    %v352 = vld [vmem:[%s351] sm:$0xff]
    %v353 = vld [vmem:[%s351 + $0x8] sm:$0xff]
    %v354 = vld [vmem:[%s351 + $0x10] sm:$0xf]
    %s355 = scalar_lea.vmem %s5, 48
    %v356 = vld [vmem:[%s355] sm:$0xff]
    %v357 = vld [vmem:[%s355 + $0x8] sm:$0xff]
    %v358 = vld [vmem:[%s355 + $0x10] sm:$0xf]
    %v359 = vld [vmem:[%s7] sm:$0x1]
    %s360 = scalar_lea.vmem %s7, 1
    %v361 = vld [vmem:[%s360] sm:$0x1]
    %s362 = scalar_lea.vmem %s7, 2
    %v363 = vld [vmem:[%s362] sm:$0x1]
    %v364 = vld [vmem:[%s16] sm:$0xff]
    %v365 = vld [vmem:[%s16 + $0x8] sm:$0xff]
    %v366 = vld [vmem:[%s16 + $0x10] sm:$0xf]
    %s367 = scalar_lea.vmem %s16, 24
    %v368 = vld [vmem:[%s367] sm:$0xff]
    %v369 = vld [vmem:[%s367 + $0x8] sm:$0xff]
    %v370 = vld [vmem:[%s367 + $0x10] sm:$0xf]
    %s371 = scalar_lea.vmem %s16, 48
    %v372 = vld [vmem:[%s371] sm:$0xff]
    %v373 = vld [vmem:[%s371 + $0x8] sm:$0xff]
    %v374 = vld [vmem:[%s371 + $0x10] sm:$0xf]
    %s375 = scalar_lea.vmem %s16, 72
    %v376 = vld [vmem:[%s375] sm:$0xff]
    %v377 = vld [vmem:[%s375 + $0x8] sm:$0xff]
    %v378 = vld [vmem:[%s375 + $0x10] sm:$0xf]
    %v379 = vld [vmem:[%s17] sm:$0x1]
    %v380 = vld [vmem:[%s18] sm:$0xff]
    %v381 = vld [vmem:[%s18 + $0x8] sm:$0xff]
    %v382 = vld [vmem:[#allocation2] sm:$0x1]
    %v383 = vld [vmem:[%s15] sm:$0x1]
    %v384 = vld [vmem:[%s8] sm:$0xff]
    %v385 = vld [vmem:[%s8 + $0x8] sm:$0xff]
    %v386 = vld [vmem:[%s8 + $0x10] sm:$0xf]
    %s387 = scalar_lea.vmem %s8, 24
    %v388 = vld [vmem:[%s387] sm:$0xff]
    %v389 = vld [vmem:[%s387 + $0x8] sm:$0xff]
    %v390 = vld [vmem:[%s387 + $0x10] sm:$0xf]
    %s391 = scalar_lea.vmem %s8, 48
    %v392 = vld [vmem:[%s391] sm:$0xff]
    %v393 = vld [vmem:[%s391 + $0x8] sm:$0xff]
    %v394 = vld [vmem:[%s391 + $0x10] sm:$0xf]
    %s395 = scalar_lea.vmem %s8, 72
    %v396 = vld [vmem:[%s395] sm:$0xff]
    %v397 = vld [vmem:[%s395 + $0x8] sm:$0xff]
    %v398 = vld [vmem:[%s395 + $0x10] sm:$0xf]
    %s399 = scalar_lea.vmem %s8, 96
    %v400 = vld [vmem:[%s399] sm:$0xff]
    %v401 = vld [vmem:[%s399 + $0x8] sm:$0xff]
    %v402 = vld [vmem:[%s399 + $0x10] sm:$0xf]
    %v403 = vld [vmem:[%s9] sm:$0xff]
    %v404 = vld [vmem:[%s9 + $0x8] sm:$0xff]
    %v405 = vld [vmem:[%s9 + $0x10] sm:$0xf]
    %s406 = scalar_lea.vmem %s9, 24
    %v407 = vld [vmem:[%s406] sm:$0xff]
    %v408 = vld [vmem:[%s406 + $0x8] sm:$0xff]
    %v409 = vld [vmem:[%s406 + $0x10] sm:$0xf]
    %s410 = scalar_lea.vmem %s9, 48
    %v411 = vld [vmem:[%s410] sm:$0xff]
    %v412 = vld [vmem:[%s410 + $0x8] sm:$0xff]
    %v413 = vld [vmem:[%s410 + $0x10] sm:$0xf]
    %s414 = scalar_lea.vmem %s9, 72
    %v415 = vld [vmem:[%s414] sm:$0xff]
    %v416 = vld [vmem:[%s414 + $0x8] sm:$0xff]
    %v417 = vld [vmem:[%s414 + $0x10] sm:$0xf]
    %s418 = scalar_lea.vmem %s9, 96
    %v419 = vld [vmem:[%s418] sm:$0xff]
    %v420 = vld [vmem:[%s418 + $0x8] sm:$0xff]
    %v421 = vld [vmem:[%s418 + $0x10] sm:$0xf]
    %v422 = vld [vmem:[%s10] sm:$0xff]
    %v423 = vld [vmem:[%s10 + $0x8] sm:$0xff]
    %v424 = vld [vmem:[%s10 + $0x10] sm:$0xf]
    %s425 = scalar_lea.vmem %s10, 24
    %v426 = vld [vmem:[%s425] sm:$0xff]
    %v427 = vld [vmem:[%s425 + $0x8] sm:$0xff]
    %v428 = vld [vmem:[%s425 + $0x10] sm:$0xf]
    %s429 = scalar_lea.vmem %s10, 48
    %v430 = vld [vmem:[%s429] sm:$0xff]
    %v431 = vld [vmem:[%s429 + $0x8] sm:$0xff]
    %v432 = vld [vmem:[%s429 + $0x10] sm:$0xf]
    %s433 = scalar_lea.vmem %s10, 72
    %v434 = vld [vmem:[%s433] sm:$0xff]
    %v435 = vld [vmem:[%s433 + $0x8] sm:$0xff]
    %v436 = vld [vmem:[%s433 + $0x10] sm:$0xf]
    %s437 = scalar_lea.vmem %s10, 96
    %v438 = vld [vmem:[%s437] sm:$0xff]
    %v439 = vld [vmem:[%s437 + $0x8] sm:$0xff]
    %v440 = vld [vmem:[%s437 + $0x10] sm:$0xf]
    %v441 = vld [vmem:[%s11] sm:$0x1]
    %s442 = scalar_lea.vmem %s11, 1
    %v443 = vld [vmem:[%s442] sm:$0x1]
    %s444 = scalar_lea.vmem %s11, 2
    %v445 = vld [vmem:[%s444] sm:$0x1]
    %s446 = scalar_lea.vmem %s11, 3
    %v447 = vld [vmem:[%s446] sm:$0x1]
    %s448 = scalar_lea.vmem %s11, 4
    %v449 = vld [vmem:[%s448] sm:$0x1]
    %v450 = vld [vmem:[%s12] sm:$0x1]
    %s451 = scalar_lea.vmem %s12, 1
    %v452 = vld [vmem:[%s451] sm:$0x1]
    %s453 = scalar_lea.vmem %s12, 2
    %v454 = vld [vmem:[%s453] sm:$0x1]
    %s455 = scalar_lea.vmem %s12, 3
    %v456 = vld [vmem:[%s455] sm:$0x1]
    %s457 = scalar_lea.vmem %s12, 4
    %v458 = vld [vmem:[%s457] sm:$0x1]
    %v459 = vld [vmem:[%s13] sm:$0x1]
    %s460 = scalar_lea.vmem %s13, 1
    %v461 = vld [vmem:[%s460] sm:$0x1]
    %s462 = scalar_lea.vmem %s13, 2
    %v463 = vld [vmem:[%s462] sm:$0x1]
    %s464 = scalar_lea.vmem %s13, 3
    %v465 = vld [vmem:[%s464] sm:$0x1]
    %s466 = scalar_lea.vmem %s13, 4
    %v467 = vld [vmem:[%s466] sm:$0x1]
    %v468 = vld [vmem:[%s14] sm:$0xf]
    %s469 = scalar_lea.vmem %s14, 4
    %v470 = vld [vmem:[%s469] sm:$0xf]
    %s471 = scalar_lea.vmem %s14, 8
    %v472 = vld [vmem:[%s471] sm:$0xf]
    %s473 = scalar_lea.vmem %s14, 12
    %v474 = vld [vmem:[%s473] sm:$0xf]
    %s475 = scalar_lea.vmem %s14, 16
    %v476 = vld [vmem:[%s475] sm:$0xf]
    %v477 = vld [vmem:[%s3] sm:$0xf]
    %vm478 = vcmask 31744
    %v480 = vsel %vm478, 0.25, 0
    %v483 = vsel %vm101, %v477, 0
    %485 = vmatprep.subr.mxu0 0.0
    %486 = vmatpush1.msra.mxu0 %v483
    %487 = vmatprep.subr.mxu0 0.0
    %488 = vmatpush1.msra.mxu0 0.0
    %489 = vmatprep.subr.mxu0 0.0
    %490 = vmatpush1.msra.mxu0 0.0
    %491 = vmatprep.subr.mxu0 0.0
    %492 = vmatpush1.msra.mxu0 0.0
    %493 = vmatprep.subr.mxu0 0.0
    %494 = vmatpush1.msra.mxu0 0.0
    %495 = vmatprep.subr.mxu0 0.0
    %496 = vmatpush1.msra.mxu0 0.0
    %497 = vmatprep.subr.mxu0 0.0
    %498 = vmatpush1.msra.mxu0 0.0
    %499 = vmatprep.subr.mxu0 0.0
    %500 = vmatpush1.msra.mxu0 0.0
    %501 = vmatprep.subr.mxu0 0.0
    %502 = vmatpush1.msra.mxu0 0.0
    %503 = vmatprep.subr.mxu0 0.0
    %504 = vmatpush1.msra.mxu0 0.0
    %505 = vmatprep.subr.mxu0 0.0
    %506 = vmatpush1.msra.mxu0 0.0
    %507 = vmatprep.subr.mxu0 0.0
    %508 = vmatpush1.msra.mxu0 0.0
    %509 = vmatprep.subr.mxu0 0.0
    %510 = vmatpush1.msra.mxu0 0.0
    %511 = vmatprep.subr.mxu0 0.0
    %512 = vmatpush1.msra.mxu0 0.0
    %513 = vmatprep.subr.mxu0 0.0
    %514 = vmatpush1.msra.mxu0 0.0
    %515 = vmatprep.subr.mxu0 0.0
    %516 = vmatpush1.msra.mxu0 0.0
    %517 = vmatprep.subr.mxu0 0.0
    %518 = vmatpush1.msra.mxu0 0.0
    %519 = vmatprep.subr.mxu0 0.0
    %520 = vmatpush1.msra.mxu0 0.0
    %521 = vmatprep.subr.mxu0 0.0
    %522 = vmatpush1.msra.mxu0 0.0
    %523 = vmatprep.subr.mxu0 0.0
    %524 = vmatpush1.msra.mxu0 0.0
    %525 = vmatprep.subr.mxu0 0.0
    %526 = vmatpush1.msra.mxu0 0.0
    %527 = vmatprep.subr.mxu0 0.0
    %528 = vmatpush1.msra.mxu0 0.0
    %529 = vmatprep.subr.mxu0 0.0
    %530 = vmatpush1.msra.mxu0 0.0
    %531 = vmatprep.subr.mxu0 0.0
    %532 = vmatpush1.msra.mxu0 0.0
    %533 = vmatprep.subr.mxu0 0.0
    %534 = vmatpush1.msra.mxu0 0.0
    %535 = vmatprep.subr.mxu0 0.0
    %536 = vmatpush1.msra.mxu0 0.0
    %537 = vmatprep.subr.mxu0 0.0
    %538 = vmatpush1.msra.mxu0 0.0
    %539 = vmatprep.subr.mxu0 0.0
    %540 = vmatpush1.msra.mxu0 0.0
    %541 = vmatprep.subr.mxu0 0.0
    %542 = vmatpush1.msra.mxu0 0.0
    %543 = vmatprep.subr.mxu0 0.0
    %544 = vmatpush1.msra.mxu0 0.0
    %545 = vmatprep.subr.mxu0 0.0
    %546 = vmatpush1.msra.mxu0 0.0
    %547 = vmatprep.subr.mxu0 0.0
    %548 = vmatpush1.msra.mxu0 0.0
    %549 = vmatprep.mubr.f32.mxu0 0.0
    %550 = vmatmul.mubr.f32.gmra.mrb[0].mxu0 %v480
    %v551 = vpop.f32.mrb[0].mxu0
    %v552 = vadd.f32 0.0, %v551
    %v553 = vpop.f32.mrb[0].mxu0
    %554 = vdwg.mxu0
    %v555 = vmul.f32 %v70, %v71
    %v556 = vlaneseq
    %v557 = vshrl.u32 %v556, 7
    %v558 = vsub.s32 0, %v557
    %v559 = vrot.slane %v552, %v558
    %v560 = vmul.f32 %v70, %v559
    %v561 = vsub.f32 %v70, %v71
    %v562 = vand.u32 2147483647, %v561
    %v563 = vsub.f32 %v70, %v559
    %v564 = vand.u32 2147483647, %v563
    %v566 = vsel %vm94, %v560, 0
    %v569 = vsel %vm101, %v370, 0
    %571 = vmatprep.subr.mxu0 0.0
    %572 = vmatpush1.msra.mxu0 %v368
    %573 = vmatprep.subr.mxu0 0.0
    %574 = vmatpush1.msra.mxu0 %v369
    %575 = vmatprep.subr.mxu0 0.0
    %576 = vmatpush1.msra.mxu0 %v569
    %577 = vmatprep.subr.mxu0 0.0
    %578 = vmatpush1.msra.mxu0 0.0
    %579 = vmatprep.subr.mxu0 0.0
    %580 = vmatpush1.msra.mxu0 0.0
    %581 = vmatprep.subr.mxu0 0.0
    %582 = vmatpush1.msra.mxu0 0.0
    %583 = vmatprep.subr.mxu0 0.0
    %584 = vmatpush1.msra.mxu0 0.0
    %585 = vmatprep.subr.mxu0 0.0
    %586 = vmatpush1.msra.mxu0 0.0
    %587 = vmatprep.subr.mxu0 0.0
    %588 = vmatpush1.msra.mxu0 0.0
    %589 = vmatprep.subr.mxu0 0.0
    %590 = vmatpush1.msra.mxu0 0.0
    %591 = vmatprep.subr.mxu0 0.0
    %592 = vmatpush1.msra.mxu0 0.0
    %593 = vmatprep.subr.mxu0 0.0
    %594 = vmatpush1.msra.mxu0 0.0
    %595 = vmatprep.subr.mxu0 0.0
    %596 = vmatpush1.msra.mxu0 0.0
    %597 = vmatprep.subr.mxu0 0.0
    %598 = vmatpush1.msra.mxu0 0.0
    %599 = vmatprep.subr.mxu0 0.0
    %600 = vmatpush1.msra.mxu0 0.0
    %601 = vmatprep.subr.mxu0 0.0
    %602 = vmatpush1.msra.mxu0 0.0
    %603 = vmatprep.subr.mxu0 0.0
    %604 = vmatpush1.msra.mxu0 0.0
    %605 = vmatprep.subr.mxu0 0.0
    %606 = vmatpush1.msra.mxu0 0.0
    %607 = vmatprep.subr.mxu0 0.0
    %608 = vmatpush1.msra.mxu0 0.0
    %609 = vmatprep.subr.mxu0 0.0
    %610 = vmatpush1.msra.mxu0 0.0
    %611 = vmatprep.subr.mxu0 0.0
    %612 = vmatpush1.msra.mxu0 0.0
    %613 = vmatprep.subr.mxu0 0.0
    %614 = vmatpush1.msra.mxu0 0.0
    %615 = vmatprep.subr.mxu0 0.0
    %616 = vmatpush1.msra.mxu0 0.0
    %617 = vmatprep.subr.mxu0 0.0
    %618 = vmatpush1.msra.mxu0 0.0
    %619 = vmatprep.subr.mxu0 0.0
    %620 = vmatpush1.msra.mxu0 0.0
    %621 = vmatprep.subr.mxu0 0.0
    %622 = vmatpush1.msra.mxu0 0.0
    %623 = vmatprep.subr.mxu0 0.0
    %624 = vmatpush1.msra.mxu0 0.0
    %625 = vmatprep.subr.mxu0 0.0
    %626 = vmatpush1.msra.mxu0 0.0
    %627 = vmatprep.subr.mxu0 0.0
    %628 = vmatpush1.msra.mxu0 0.0
    %629 = vmatprep.subr.mxu0 0.0
    %630 = vmatpush1.msra.mxu0 0.0
    %631 = vmatprep.subr.mxu0 0.0
    %632 = vmatpush1.msra.mxu0 0.0
    %633 = vmatprep.subr.mxu0 0.0
    %634 = vmatpush1.msra.mxu0 0.0
    %635 = vmatprep.mubr.f32.mxu0 0.0
    %636 = vmatmul.mubr.f32.gmra.mrb[0].mxu0 %v566
    %v637 = vpop.f32.mrb[0].mxu0
    %v638 = vadd.f32 0.0, %v637
    %v639 = vpop.f32.mrb[0].mxu0
    %640 = vdwg.mxu0
    %v642 = vsel %vm94, %v555, 0
    %v645 = vsel %vm101, %v366, 0
    %647 = vmatprep.subr.mxu0 0.0
    %648 = vmatpush1.msra.mxu0 %v364
    %649 = vmatprep.subr.mxu0 0.0
    %650 = vmatpush1.msra.mxu0 %v365
    %651 = vmatprep.subr.mxu0 0.0
    %652 = vmatpush1.msra.mxu0 %v645
    %653 = vmatprep.subr.mxu0 0.0
    %654 = vmatpush1.msra.mxu0 0.0
    %655 = vmatprep.subr.mxu0 0.0
    %656 = vmatpush1.msra.mxu0 0.0
    %657 = vmatprep.subr.mxu0 0.0
    %658 = vmatpush1.msra.mxu0 0.0
    %659 = vmatprep.subr.mxu0 0.0
    %660 = vmatpush1.msra.mxu0 0.0
    %661 = vmatprep.subr.mxu0 0.0
    %662 = vmatpush1.msra.mxu0 0.0
    %663 = vmatprep.subr.mxu0 0.0
    %664 = vmatpush1.msra.mxu0 0.0
    %665 = vmatprep.subr.mxu0 0.0
    %666 = vmatpush1.msra.mxu0 0.0
    %667 = vmatprep.subr.mxu0 0.0
    %668 = vmatpush1.msra.mxu0 0.0
    %669 = vmatprep.subr.mxu0 0.0
    %670 = vmatpush1.msra.mxu0 0.0
    %671 = vmatprep.subr.mxu0 0.0
    %672 = vmatpush1.msra.mxu0 0.0
    %673 = vmatprep.subr.mxu0 0.0
    %674 = vmatpush1.msra.mxu0 0.0
    %675 = vmatprep.subr.mxu0 0.0
    %676 = vmatpush1.msra.mxu0 0.0
    %677 = vmatprep.subr.mxu0 0.0
    %678 = vmatpush1.msra.mxu0 0.0
    %679 = vmatprep.subr.mxu0 0.0
    %680 = vmatpush1.msra.mxu0 0.0
    %681 = vmatprep.subr.mxu0 0.0
    %682 = vmatpush1.msra.mxu0 0.0
    %683 = vmatprep.subr.mxu0 0.0
    %684 = vmatpush1.msra.mxu0 0.0
    %685 = vmatprep.subr.mxu0 0.0
    %686 = vmatpush1.msra.mxu0 0.0
    %687 = vmatprep.subr.mxu0 0.0
    %688 = vmatpush1.msra.mxu0 0.0
    %689 = vmatprep.subr.mxu0 0.0
    %690 = vmatpush1.msra.mxu0 0.0
    %691 = vmatprep.subr.mxu0 0.0
    %692 = vmatpush1.msra.mxu0 0.0
    %693 = vmatprep.subr.mxu0 0.0
    %694 = vmatpush1.msra.mxu0 0.0
    %695 = vmatprep.subr.mxu0 0.0
    %696 = vmatpush1.msra.mxu0 0.0
    %697 = vmatprep.subr.mxu0 0.0
    %698 = vmatpush1.msra.mxu0 0.0
    %699 = vmatprep.subr.mxu0 0.0
    %700 = vmatpush1.msra.mxu0 0.0
    %701 = vmatprep.subr.mxu0 0.0
    %702 = vmatpush1.msra.mxu0 0.0
    %703 = vmatprep.subr.mxu0 0.0
    %704 = vmatpush1.msra.mxu0 0.0
    %705 = vmatprep.subr.mxu0 0.0
    %706 = vmatpush1.msra.mxu0 0.0
    %707 = vmatprep.subr.mxu0 0.0
    %708 = vmatpush1.msra.mxu0 0.0
    %709 = vmatprep.subr.mxu0 0.0
    %710 = vmatpush1.msra.mxu0 0.0
    %711 = vmatprep.mubr.f32.mxu0 0.0
    %712 = vmatmul.mubr.f32.gmra.mrb[0].mxu0 %v642
    %v713 = vpop.f32.mrb[0].mxu0
    %v714 = vadd.f32 %v638, %v713
    %v715 = vpop.f32.mrb[0].mxu0
    %716 = vdwg.mxu0
    %v718 = vsel %vm94, %v562, 0
    %v721 = vsel %vm101, %v374, 0
    %723 = vmatprep.subr.mxu0 0.0
    %724 = vmatpush1.msra.mxu0 %v372
    %725 = vmatprep.subr.mxu0 0.0
    %726 = vmatpush1.msra.mxu0 %v373
    %727 = vmatprep.subr.mxu0 0.0
    %728 = vmatpush1.msra.mxu0 %v721
    %729 = vmatprep.subr.mxu0 0.0
    %730 = vmatpush1.msra.mxu0 0.0
    %731 = vmatprep.subr.mxu0 0.0
    %732 = vmatpush1.msra.mxu0 0.0
    %733 = vmatprep.subr.mxu0 0.0
    %734 = vmatpush1.msra.mxu0 0.0
    %735 = vmatprep.subr.mxu0 0.0
    %736 = vmatpush1.msra.mxu0 0.0
    %737 = vmatprep.subr.mxu0 0.0
    %738 = vmatpush1.msra.mxu0 0.0
    %739 = vmatprep.subr.mxu0 0.0
    %740 = vmatpush1.msra.mxu0 0.0
    %741 = vmatprep.subr.mxu0 0.0
    %742 = vmatpush1.msra.mxu0 0.0
    %743 = vmatprep.subr.mxu0 0.0
    %744 = vmatpush1.msra.mxu0 0.0
    %745 = vmatprep.subr.mxu0 0.0
    %746 = vmatpush1.msra.mxu0 0.0
    %747 = vmatprep.subr.mxu0 0.0
    %748 = vmatpush1.msra.mxu0 0.0
    %749 = vmatprep.subr.mxu0 0.0
    %750 = vmatpush1.msra.mxu0 0.0
    %751 = vmatprep.subr.mxu0 0.0
    %752 = vmatpush1.msra.mxu0 0.0
    %753 = vmatprep.subr.mxu0 0.0
    %754 = vmatpush1.msra.mxu0 0.0
    %755 = vmatprep.subr.mxu0 0.0
    %756 = vmatpush1.msra.mxu0 0.0
    %757 = vmatprep.subr.mxu0 0.0
    %758 = vmatpush1.msra.mxu0 0.0
    %759 = vmatprep.subr.mxu0 0.0
    %760 = vmatpush1.msra.mxu0 0.0
    %761 = vmatprep.subr.mxu0 0.0
    %762 = vmatpush1.msra.mxu0 0.0
    %763 = vmatprep.subr.mxu0 0.0
    %764 = vmatpush1.msra.mxu0 0.0
    %765 = vmatprep.subr.mxu0 0.0
    %766 = vmatpush1.msra.mxu0 0.0
    %767 = vmatprep.subr.mxu0 0.0
    %768 = vmatpush1.msra.mxu0 0.0
    %769 = vmatprep.subr.mxu0 0.0
    %770 = vmatpush1.msra.mxu0 0.0
    %771 = vmatprep.subr.mxu0 0.0
    %772 = vmatpush1.msra.mxu0 0.0
    %773 = vmatprep.subr.mxu0 0.0
    %774 = vmatpush1.msra.mxu0 0.0
    %775 = vmatprep.subr.mxu0 0.0
    %776 = vmatpush1.msra.mxu0 0.0
    %777 = vmatprep.subr.mxu0 0.0
    %778 = vmatpush1.msra.mxu0 0.0
    %779 = vmatprep.subr.mxu0 0.0
    %780 = vmatpush1.msra.mxu0 0.0
    %781 = vmatprep.subr.mxu0 0.0
    %782 = vmatpush1.msra.mxu0 0.0
    %783 = vmatprep.subr.mxu0 0.0
    %784 = vmatpush1.msra.mxu0 0.0
    %785 = vmatprep.subr.mxu0 0.0
    %786 = vmatpush1.msra.mxu0 0.0
    %787 = vmatprep.mubr.f32.mxu0 0.0
    %788 = vmatmul.mubr.f32.gmra.mrb[0].mxu0 %v718
    %v789 = vpop.f32.mrb[0].mxu0
    %v790 = vadd.f32 0.0, %v789
    %v791 = vpop.f32.mrb[0].mxu0
    %792 = vdwg.mxu0
    %v793 = vadd.f32 %v714, %v790
    %v795 = vsel %vm94, %v564, 0
    %v798 = vsel %vm101, %v378, 0
    %800 = vmatprep.subr.mxu0 0.0
    %801 = vmatpush1.msra.mxu0 %v376
    %802 = vmatprep.subr.mxu0 0.0
    %803 = vmatpush1.msra.mxu0 %v377
    %804 = vmatprep.subr.mxu0 0.0
    %805 = vmatpush1.msra.mxu0 %v798
    %806 = vmatprep.subr.mxu0 0.0
    %807 = vmatpush1.msra.mxu0 0.0
    %808 = vmatprep.subr.mxu0 0.0
    %809 = vmatpush1.msra.mxu0 0.0
    %810 = vmatprep.subr.mxu0 0.0
    %811 = vmatpush1.msra.mxu0 0.0
    %812 = vmatprep.subr.mxu0 0.0
    %813 = vmatpush1.msra.mxu0 0.0
    %814 = vmatprep.subr.mxu0 0.0
    %815 = vmatpush1.msra.mxu0 0.0
    %816 = vmatprep.subr.mxu0 0.0
    %817 = vmatpush1.msra.mxu0 0.0
    %818 = vmatprep.subr.mxu0 0.0
    %819 = vmatpush1.msra.mxu0 0.0
    %820 = vmatprep.subr.mxu0 0.0
    %821 = vmatpush1.msra.mxu0 0.0
    %822 = vmatprep.subr.mxu0 0.0
    %823 = vmatpush1.msra.mxu0 0.0
    %824 = vmatprep.subr.mxu0 0.0
    %825 = vmatpush1.msra.mxu0 0.0
    %826 = vmatprep.subr.mxu0 0.0
    %827 = vmatpush1.msra.mxu0 0.0
    %828 = vmatprep.subr.mxu0 0.0
    %829 = vmatpush1.msra.mxu0 0.0
    %830 = vmatprep.subr.mxu0 0.0
    %831 = vmatpush1.msra.mxu0 0.0
    %832 = vmatprep.subr.mxu0 0.0
    %833 = vmatpush1.msra.mxu0 0.0
    %834 = vmatprep.subr.mxu0 0.0
    %835 = vmatpush1.msra.mxu0 0.0
    %836 = vmatprep.subr.mxu0 0.0
    %837 = vmatpush1.msra.mxu0 0.0
    %838 = vmatprep.subr.mxu0 0.0
    %839 = vmatpush1.msra.mxu0 0.0
    %840 = vmatprep.subr.mxu0 0.0
    %841 = vmatpush1.msra.mxu0 0.0
    %842 = vmatprep.subr.mxu0 0.0
    %843 = vmatpush1.msra.mxu0 0.0
    %844 = vmatprep.subr.mxu0 0.0
    %845 = vmatpush1.msra.mxu0 0.0
    %846 = vmatprep.subr.mxu0 0.0
    %847 = vmatpush1.msra.mxu0 0.0
    %848 = vmatprep.subr.mxu0 0.0
    %849 = vmatpush1.msra.mxu0 0.0
    %850 = vmatprep.subr.mxu0 0.0
    %851 = vmatpush1.msra.mxu0 0.0
    %852 = vmatprep.subr.mxu0 0.0
    %853 = vmatpush1.msra.mxu0 0.0
    %854 = vmatprep.subr.mxu0 0.0
    %855 = vmatpush1.msra.mxu0 0.0
    %856 = vmatprep.subr.mxu0 0.0
    %857 = vmatpush1.msra.mxu0 0.0
    %858 = vmatprep.subr.mxu0 0.0
    %859 = vmatpush1.msra.mxu0 0.0
    %860 = vmatprep.subr.mxu0 0.0
    %861 = vmatpush1.msra.mxu0 0.0
    %862 = vmatprep.subr.mxu0 0.0
    %863 = vmatpush1.msra.mxu0 0.0
    %864 = vmatprep.mubr.f32.mxu0 0.0
    %865 = vmatmul.mubr.f32.gmra.mrb[0].mxu0 %v795
    %v866 = vpop.f32.mrb[0].mxu0
    %v867 = vadd.f32 0.0, %v866
    %v868 = vpop.f32.mrb[0].mxu0
    %869 = vdwg.mxu0
    %v870 = vadd.f32 %v793, %v867
    %v872 = vlaneseq
    %v873 = vshrl.u32 %v872, 7
    %v874 = vsub.s32 0, %v873
    %v875 = vrot.slane %v379, %v874
    %v877 = vadd.f32 %v870, %v875
    %v878 = vtanh.pop %v877
    %v880 = vlaneseq
    %v881 = vshrl.u32 %v880, 7
    %v882 = vsub.s32 0, %v881
    %v883 = vrot.slane %v382, %v882
    %vm885 = vcmask 130048
    %v887 = vsel %vm885, %v878, 0
    %889 = vmatprep.subr.mxu0 0.0
    %890 = vmatpush1.msra.mxu0 %v380
    %891 = vmatprep.subr.mxu0 0.0
    %892 = vmatpush1.msra.mxu0 %v381
    %893 = vmatprep.subr.mxu0 0.0
    %894 = vmatpush1.msra.mxu0 0.0
    %895 = vmatprep.subr.mxu0 0.0
    %896 = vmatpush1.msra.mxu0 0.0
    %897 = vmatprep.subr.mxu0 0.0
    %898 = vmatpush1.msra.mxu0 0.0
    %899 = vmatprep.subr.mxu0 0.0
    %900 = vmatpush1.msra.mxu0 0.0
    %901 = vmatprep.subr.mxu0 0.0
    %902 = vmatpush1.msra.mxu0 0.0
    %903 = vmatprep.subr.mxu0 0.0
    %904 = vmatpush1.msra.mxu0 0.0
    %905 = vmatprep.subr.mxu0 0.0
    %906 = vmatpush1.msra.mxu0 0.0
    %907 = vmatprep.subr.mxu0 0.0
    %908 = vmatpush1.msra.mxu0 0.0
    %909 = vmatprep.subr.mxu0 0.0
    %910 = vmatpush1.msra.mxu0 0.0
    %911 = vmatprep.subr.mxu0 0.0
    %912 = vmatpush1.msra.mxu0 0.0
    %913 = vmatprep.subr.mxu0 0.0
    %914 = vmatpush1.msra.mxu0 0.0
    %915 = vmatprep.subr.mxu0 0.0
    %916 = vmatpush1.msra.mxu0 0.0
    %917 = vmatprep.subr.mxu0 0.0
    %918 = vmatpush1.msra.mxu0 0.0
    %919 = vmatprep.subr.mxu0 0.0
    %920 = vmatpush1.msra.mxu0 0.0
    %921 = vmatprep.subr.mxu0 0.0
    %922 = vmatpush1.msra.mxu0 0.0
    %923 = vmatprep.subr.mxu0 0.0
    %924 = vmatpush1.msra.mxu0 0.0
    %925 = vmatprep.subr.mxu0 0.0
    %926 = vmatpush1.msra.mxu0 0.0
    %927 = vmatprep.subr.mxu0 0.0
    %928 = vmatpush1.msra.mxu0 0.0
    %929 = vmatprep.subr.mxu0 0.0
    %930 = vmatpush1.msra.mxu0 0.0
    %931 = vmatprep.subr.mxu0 0.0
    %932 = vmatpush1.msra.mxu0 0.0
    %933 = vmatprep.subr.mxu0 0.0
    %934 = vmatpush1.msra.mxu0 0.0
    %935 = vmatprep.subr.mxu0 0.0
    %936 = vmatpush1.msra.mxu0 0.0
    %937 = vmatprep.subr.mxu0 0.0
    %938 = vmatpush1.msra.mxu0 0.0
    %939 = vmatprep.subr.mxu0 0.0
    %940 = vmatpush1.msra.mxu0 0.0
    %941 = vmatprep.subr.mxu0 0.0
    %942 = vmatpush1.msra.mxu0 0.0
    %943 = vmatprep.subr.mxu0 0.0
    %944 = vmatpush1.msra.mxu0 0.0
    %945 = vmatprep.subr.mxu0 0.0
    %946 = vmatpush1.msra.mxu0 0.0
    %947 = vmatprep.subr.mxu0 0.0
    %948 = vmatpush1.msra.mxu0 0.0
    %949 = vmatprep.subr.mxu0 0.0
    %950 = vmatpush1.msra.mxu0 0.0
    %951 = vmatprep.subr.mxu0 0.0
    %952 = vmatpush1.msra.mxu0 0.0
    %953 = vmatprep.mubr.f32.mxu0 0.0
    %954 = vmatmul.mubr.f32.gmra.mrb[0].mxu0 %v887
    %v955 = vpop.f32.mrb[0].mxu0
    %v956 = vadd.f32 %v883, %v955
    %v957 = vpop.f32.mrb[0].mxu0
    %958 = vdwg.mxu0
    %v959 = vxor.u32 %v956, 2147483648
    %v960 = vmul.f32 %v959, 1.442695
    %v961 = vpow.pop %v960
    %v962 = vadd.f32 %v961, 1.0
    %v963 = vrcp.pop %v962
    %v964 = vmul.f32 1.0, %v963
    %v966 = vlaneseq
    %v967 = vshrl.u32 %v966, 7
    %v968 = vsub.s32 0, %v967
    %v969 = vrot.slane %v359, %v968
    %v972 = vsel %vm94, 0.0, 0
    %v975 = vsel %vm101, %v350, 0
    %977 = vmatprep.subr.mxu0 0.0
    %978 = vmatpush1.msra.mxu0 %v348
    %979 = vmatprep.subr.mxu0 0.0
    %980 = vmatpush1.msra.mxu0 %v349
    %981 = vmatprep.subr.mxu0 0.0
    %982 = vmatpush1.msra.mxu0 %v975
    %983 = vmatprep.subr.mxu0 0.0
    %984 = vmatpush1.msra.mxu0 0.0
    %985 = vmatprep.subr.mxu0 0.0
    %986 = vmatpush1.msra.mxu0 0.0
    %987 = vmatprep.subr.mxu0 0.0
    %988 = vmatpush1.msra.mxu0 0.0
    %989 = vmatprep.subr.mxu0 0.0
    %990 = vmatpush1.msra.mxu0 0.0
    %991 = vmatprep.subr.mxu0 0.0
    %992 = vmatpush1.msra.mxu0 0.0
    %993 = vmatprep.subr.mxu0 0.0
    %994 = vmatpush1.msra.mxu0 0.0
    %995 = vmatprep.subr.mxu0 0.0
    %996 = vmatpush1.msra.mxu0 0.0
    %997 = vmatprep.subr.mxu0 0.0
    %998 = vmatpush1.msra.mxu0 0.0
    %999 = vmatprep.subr.mxu0 0.0
    %1000 = vmatpush1.msra.mxu0 0.0
    %1001 = vmatprep.subr.mxu0 0.0
    %1002 = vmatpush1.msra.mxu0 0.0
    %1003 = vmatprep.subr.mxu0 0.0
    %1004 = vmatpush1.msra.mxu0 0.0
    %1005 = vmatprep.subr.mxu0 0.0
    %1006 = vmatpush1.msra.mxu0 0.0
    %1007 = vmatprep.subr.mxu0 0.0
    %1008 = vmatpush1.msra.mxu0 0.0
    %1009 = vmatprep.subr.mxu0 0.0
    %1010 = vmatpush1.msra.mxu0 0.0
    %1011 = vmatprep.subr.mxu0 0.0
    %1012 = vmatpush1.msra.mxu0 0.0
    %1013 = vmatprep.subr.mxu0 0.0
    %1014 = vmatpush1.msra.mxu0 0.0
    %1015 = vmatprep.subr.mxu0 0.0
    %1016 = vmatpush1.msra.mxu0 0.0
    %1017 = vmatprep.subr.mxu0 0.0
    %1018 = vmatpush1.msra.mxu0 0.0
    %1019 = vmatprep.subr.mxu0 0.0
    %1020 = vmatpush1.msra.mxu0 0.0
    %1021 = vmatprep.subr.mxu0 0.0
    %1022 = vmatpush1.msra.mxu0 0.0
    %1023 = vmatprep.subr.mxu0 0.0
    %1024 = vmatpush1.msra.mxu0 0.0
    %1025 = vmatprep.subr.mxu0 0.0
    %1026 = vmatpush1.msra.mxu0 0.0
    %1027 = vmatprep.subr.mxu0 0.0
    %1028 = vmatpush1.msra.mxu0 0.0
    %1029 = vmatprep.subr.mxu0 0.0
    %1030 = vmatpush1.msra.mxu0 0.0
    %1031 = vmatprep.subr.mxu0 0.0
    %1032 = vmatpush1.msra.mxu0 0.0
    %1033 = vmatprep.subr.mxu0 0.0
    %1034 = vmatpush1.msra.mxu0 0.0
    %1035 = vmatprep.subr.mxu0 0.0
    %1036 = vmatpush1.msra.mxu0 0.0
    %1037 = vmatprep.subr.mxu0 0.0
    %1038 = vmatpush1.msra.mxu0 0.0
    %1039 = vmatprep.subr.mxu0 0.0
    %1040 = vmatpush1.msra.mxu0 0.0
    %1041 = vmatprep.mubr.f32.mxu0 0.0
    %1042 = vmatmul.mubr.f32.gmra.mrb[0].mxu0 %v972
    %v1043 = vpop.f32.mrb[0].mxu0
    %v1044 = vadd.f32 %v969, %v1043
    %v1045 = vpop.f32.mrb[0].mxu0
    %1046 = vdwg.mxu0
    %v1048 = vlaneseq
    %v1049 = vshrl.u32 %v1048, 7
    %v1050 = vsub.s32 0, %v1049
    %v1051 = vrot.slane %v361, %v1050
    %v1054 = vsel %vm101, %v354, 0
    %1056 = vmatprep.subr.mxu0 0.0
    %1057 = vmatpush1.msra.mxu0 %v352
    %1058 = vmatprep.subr.mxu0 0.0
    %1059 = vmatpush1.msra.mxu0 %v353
    %1060 = vmatprep.subr.mxu0 0.0
    %1061 = vmatpush1.msra.mxu0 %v1054
    %1062 = vmatprep.subr.mxu0 0.0
    %1063 = vmatpush1.msra.mxu0 0.0
    %1064 = vmatprep.subr.mxu0 0.0
    %1065 = vmatpush1.msra.mxu0 0.0
    %1066 = vmatprep.subr.mxu0 0.0
    %1067 = vmatpush1.msra.mxu0 0.0
    %1068 = vmatprep.subr.mxu0 0.0
    %1069 = vmatpush1.msra.mxu0 0.0
    %1070 = vmatprep.subr.mxu0 0.0
    %1071 = vmatpush1.msra.mxu0 0.0
    %1072 = vmatprep.subr.mxu0 0.0
    %1073 = vmatpush1.msra.mxu0 0.0
    %1074 = vmatprep.subr.mxu0 0.0
    %1075 = vmatpush1.msra.mxu0 0.0
    %1076 = vmatprep.subr.mxu0 0.0
    %1077 = vmatpush1.msra.mxu0 0.0
    %1078 = vmatprep.subr.mxu0 0.0
    %1079 = vmatpush1.msra.mxu0 0.0
    %1080 = vmatprep.subr.mxu0 0.0
    %1081 = vmatpush1.msra.mxu0 0.0
    %1082 = vmatprep.subr.mxu0 0.0
    %1083 = vmatpush1.msra.mxu0 0.0
    %1084 = vmatprep.subr.mxu0 0.0
    %1085 = vmatpush1.msra.mxu0 0.0
    %1086 = vmatprep.subr.mxu0 0.0
    %1087 = vmatpush1.msra.mxu0 0.0
    %1088 = vmatprep.subr.mxu0 0.0
    %1089 = vmatpush1.msra.mxu0 0.0
    %1090 = vmatprep.subr.mxu0 0.0
    %1091 = vmatpush1.msra.mxu0 0.0
    %1092 = vmatprep.subr.mxu0 0.0
    %1093 = vmatpush1.msra.mxu0 0.0
    %1094 = vmatprep.subr.mxu0 0.0
    %1095 = vmatpush1.msra.mxu0 0.0
    %1096 = vmatprep.subr.mxu0 0.0
    %1097 = vmatpush1.msra.mxu0 0.0
    %1098 = vmatprep.subr.mxu0 0.0
    %1099 = vmatpush1.msra.mxu0 0.0
    %1100 = vmatprep.subr.mxu0 0.0
    %1101 = vmatpush1.msra.mxu0 0.0
    %1102 = vmatprep.subr.mxu0 0.0
    %1103 = vmatpush1.msra.mxu0 0.0
    %1104 = vmatprep.subr.mxu0 0.0
    %1105 = vmatpush1.msra.mxu0 0.0
    %1106 = vmatprep.subr.mxu0 0.0
    %1107 = vmatpush1.msra.mxu0 0.0
    %1108 = vmatprep.subr.mxu0 0.0
    %1109 = vmatpush1.msra.mxu0 0.0
    %1110 = vmatprep.subr.mxu0 0.0
    %1111 = vmatpush1.msra.mxu0 0.0
    %1112 = vmatprep.subr.mxu0 0.0
    %1113 = vmatpush1.msra.mxu0 0.0
    %1114 = vmatprep.subr.mxu0 0.0
    %1115 = vmatpush1.msra.mxu0 0.0
    %1116 = vmatprep.subr.mxu0 0.0
    %1117 = vmatpush1.msra.mxu0 0.0
    %1118 = vmatprep.subr.mxu0 0.0
    %1119 = vmatpush1.msra.mxu0 0.0
    %1120 = vmatprep.mubr.f32.mxu0 0.0
    %1121 = vmatmul.mubr.f32.gmra.mrb[0].mxu0 %v972
    %v1122 = vpop.f32.mrb[0].mxu0
    %v1123 = vadd.f32 %v1051, %v1122
    %v1124 = vpop.f32.mrb[0].mxu0
    %1125 = vdwg.mxu0
    %v1127 = vlaneseq
    %v1128 = vshrl.u32 %v1127, 7
    %v1129 = vsub.s32 0, %v1128
    %v1130 = vrot.slane %v363, %v1129
    %v1133 = vsel %vm101, %v358, 0
    %1135 = vmatprep.subr.mxu0 0.0
    %1136 = vmatpush1.msra.mxu0 %v356
    %1137 = vmatprep.subr.mxu0 0.0
    %1138 = vmatpush1.msra.mxu0 %v357
    %1139 = vmatprep.subr.mxu0 0.0
    %1140 = vmatpush1.msra.mxu0 %v1133
    %1141 = vmatprep.subr.mxu0 0.0
    %1142 = vmatpush1.msra.mxu0 0.0
    %1143 = vmatprep.subr.mxu0 0.0
    %1144 = vmatpush1.msra.mxu0 0.0
    %1145 = vmatprep.subr.mxu0 0.0
    %1146 = vmatpush1.msra.mxu0 0.0
    %1147 = vmatprep.subr.mxu0 0.0
    %1148 = vmatpush1.msra.mxu0 0.0
    %1149 = vmatprep.subr.mxu0 0.0
    %1150 = vmatpush1.msra.mxu0 0.0
    %1151 = vmatprep.subr.mxu0 0.0
    %1152 = vmatpush1.msra.mxu0 0.0
    %1153 = vmatprep.subr.mxu0 0.0
    %1154 = vmatpush1.msra.mxu0 0.0
    %1155 = vmatprep.subr.mxu0 0.0
    %1156 = vmatpush1.msra.mxu0 0.0
    %1157 = vmatprep.subr.mxu0 0.0
    %1158 = vmatpush1.msra.mxu0 0.0
    %1159 = vmatprep.subr.mxu0 0.0
    %1160 = vmatpush1.msra.mxu0 0.0
    %1161 = vmatprep.subr.mxu0 0.0
    %1162 = vmatpush1.msra.mxu0 0.0
    %1163 = vmatprep.subr.mxu0 0.0
    %1164 = vmatpush1.msra.mxu0 0.0
    %1165 = vmatprep.subr.mxu0 0.0
    %1166 = vmatpush1.msra.mxu0 0.0
    %1167 = vmatprep.subr.mxu0 0.0
    %1168 = vmatpush1.msra.mxu0 0.0
    %1169 = vmatprep.subr.mxu0 0.0
    %1170 = vmatpush1.msra.mxu0 0.0
    %1171 = vmatprep.subr.mxu0 0.0
    %1172 = vmatpush1.msra.mxu0 0.0
    %1173 = vmatprep.subr.mxu0 0.0
    %1174 = vmatpush1.msra.mxu0 0.0
    %1175 = vmatprep.subr.mxu0 0.0
    %1176 = vmatpush1.msra.mxu0 0.0
    %1177 = vmatprep.subr.mxu0 0.0
    %1178 = vmatpush1.msra.mxu0 0.0
    %1179 = vmatprep.subr.mxu0 0.0
    %1180 = vmatpush1.msra.mxu0 0.0
    %1181 = vmatprep.subr.mxu0 0.0
    %1182 = vmatpush1.msra.mxu0 0.0
    %1183 = vmatprep.subr.mxu0 0.0
    %1184 = vmatpush1.msra.mxu0 0.0
    %1185 = vmatprep.subr.mxu0 0.0
    %1186 = vmatpush1.msra.mxu0 0.0
    %1187 = vmatprep.subr.mxu0 0.0
    %1188 = vmatpush1.msra.mxu0 0.0
    %1189 = vmatprep.subr.mxu0 0.0
    %1190 = vmatpush1.msra.mxu0 0.0
    %1191 = vmatprep.subr.mxu0 0.0
    %1192 = vmatpush1.msra.mxu0 0.0
    %1193 = vmatprep.subr.mxu0 0.0
    %1194 = vmatpush1.msra.mxu0 0.0
    %1195 = vmatprep.subr.mxu0 0.0
    %1196 = vmatpush1.msra.mxu0 0.0
    %1197 = vmatprep.subr.mxu0 0.0
    %1198 = vmatpush1.msra.mxu0 0.0
    %1199 = vmatprep.mubr.f32.mxu0 0.0
    %1200 = vmatmul.mubr.f32.gmra.mrb[0].mxu0 %v972
    %v1201 = vpop.f32.mrb[0].mxu0
    %v1202 = vadd.f32 %v1130, %v1201
    %v1203 = vpop.f32.mrb[0].mxu0
    %1204 = vdwg.mxu0
    %v1205 = vadd.f32 %v172, %v1044
    %v1206 = vxor.u32 %v1205, 2147483648
    %v1207 = vmul.f32 %v1206, 1.442695
    %v1208 = vpow.pop %v1207
    %v1209 = vadd.f32 %v1208, 1.0
    %v1210 = vrcp.pop %v1209
    %v1211 = vmul.f32 1.0, %v1210
    %v1212 = vadd.f32 %v256, %v1123
    %v1213 = vxor.u32 %v1212, 2147483648
    %v1214 = vmul.f32 %v1213, 1.442695
    %v1215 = vpow.pop %v1214
    %v1216 = vadd.f32 %v1215, 1.0
    %v1217 = vrcp.pop %v1216
    %v1218 = vmul.f32 1.0, %v1217
    %v1219 = vmul.f32 %v1211, %v1202
    %v1220 = vadd.f32 %v340, %v1219
    %v1221 = vtanh.pop %v1220
    %v1222 = vsub.f32 1.0, %v1218
    %v1223 = vmul.f32 %v1222, %v1221
    %v1224 = vmul.f32 %v1218, 0.0
    %v1225 = vadd.f32 %v1223, %v1224
    %v1227 = vsel %vm94, %v1225, 0
    %1229 = vmatprep.subr.mxu0 0.0
    %1230 = vmatpush1.msra.mxu0 %v348
    %1231 = vmatprep.subr.mxu0 0.0
    %1232 = vmatpush1.msra.mxu0 %v349
    %1233 = vmatprep.subr.mxu0 0.0
    %1234 = vmatpush1.msra.mxu0 %v975
    %1235 = vmatprep.subr.mxu0 0.0
    %1236 = vmatpush1.msra.mxu0 0.0
    %1237 = vmatprep.subr.mxu0 0.0
    %1238 = vmatpush1.msra.mxu0 0.0
    %1239 = vmatprep.subr.mxu0 0.0
    %1240 = vmatpush1.msra.mxu0 0.0
    %1241 = vmatprep.subr.mxu0 0.0
    %1242 = vmatpush1.msra.mxu0 0.0
    %1243 = vmatprep.subr.mxu0 0.0
    %1244 = vmatpush1.msra.mxu0 0.0
    %1245 = vmatprep.subr.mxu0 0.0
    %1246 = vmatpush1.msra.mxu0 0.0
    %1247 = vmatprep.subr.mxu0 0.0
    %1248 = vmatpush1.msra.mxu0 0.0
    %1249 = vmatprep.subr.mxu0 0.0
    %1250 = vmatpush1.msra.mxu0 0.0
    %1251 = vmatprep.subr.mxu0 0.0
    %1252 = vmatpush1.msra.mxu0 0.0
    %1253 = vmatprep.subr.mxu0 0.0
    %1254 = vmatpush1.msra.mxu0 0.0
    %1255 = vmatprep.subr.mxu0 0.0
    %1256 = vmatpush1.msra.mxu0 0.0
    %1257 = vmatprep.subr.mxu0 0.0
    %1258 = vmatpush1.msra.mxu0 0.0
    %1259 = vmatprep.subr.mxu0 0.0
    %1260 = vmatpush1.msra.mxu0 0.0
    %1261 = vmatprep.subr.mxu0 0.0
    %1262 = vmatpush1.msra.mxu0 0.0
    %1263 = vmatprep.subr.mxu0 0.0
    %1264 = vmatpush1.msra.mxu0 0.0
    %1265 = vmatprep.subr.mxu0 0.0
    %1266 = vmatpush1.msra.mxu0 0.0
    %1267 = vmatprep.subr.mxu0 0.0
    %1268 = vmatpush1.msra.mxu0 0.0
    %1269 = vmatprep.subr.mxu0 0.0
    %1270 = vmatpush1.msra.mxu0 0.0
    %1271 = vmatprep.subr.mxu0 0.0
    %1272 = vmatpush1.msra.mxu0 0.0
    %1273 = vmatprep.subr.mxu0 0.0
    %1274 = vmatpush1.msra.mxu0 0.0
    %1275 = vmatprep.subr.mxu0 0.0
    %1276 = vmatpush1.msra.mxu0 0.0
    %1277 = vmatprep.subr.mxu0 0.0
    %1278 = vmatpush1.msra.mxu0 0.0
    %1279 = vmatprep.subr.mxu0 0.0
    %1280 = vmatpush1.msra.mxu0 0.0
    %1281 = vmatprep.subr.mxu0 0.0
    %1282 = vmatpush1.msra.mxu0 0.0
    %1283 = vmatprep.subr.mxu0 0.0
    %1284 = vmatpush1.msra.mxu0 0.0
    %1285 = vmatprep.subr.mxu0 0.0
    %1286 = vmatpush1.msra.mxu0 0.0
    %1287 = vmatprep.subr.mxu0 0.0
    %1288 = vmatpush1.msra.mxu0 0.0
    %1289 = vmatprep.subr.mxu0 0.0
    %1290 = vmatpush1.msra.mxu0 0.0
    %1291 = vmatprep.subr.mxu0 0.0
    %1292 = vmatpush1.msra.mxu0 0.0
    %1293 = vmatprep.mubr.f32.mxu0 0.0
    %1294 = vmatmul.mubr.f32.gmra.mrb[0].mxu0 %v1227
    %v1295 = vpop.f32.mrb[0].mxu0
    %v1296 = vadd.f32 %v969, %v1295
    %v1297 = vpop.f32.mrb[0].mxu0
    %1298 = vdwg.mxu0
    %1299 = vmatprep.subr.mxu0 0.0
    %1300 = vmatpush1.msra.mxu0 %v352
    %1301 = vmatprep.subr.mxu0 0.0
    %1302 = vmatpush1.msra.mxu0 %v353
    %1303 = vmatprep.subr.mxu0 0.0
    %1304 = vmatpush1.msra.mxu0 %v1054
    %1305 = vmatprep.subr.mxu0 0.0
    %1306 = vmatpush1.msra.mxu0 0.0
    %1307 = vmatprep.subr.mxu0 0.0
    %1308 = vmatpush1.msra.mxu0 0.0
    %1309 = vmatprep.subr.mxu0 0.0
    %1310 = vmatpush1.msra.mxu0 0.0
    %1311 = vmatprep.subr.mxu0 0.0
    %1312 = vmatpush1.msra.mxu0 0.0
    %1313 = vmatprep.subr.mxu0 0.0
    %1314 = vmatpush1.msra.mxu0 0.0
    %1315 = vmatprep.subr.mxu0 0.0
    %1316 = vmatpush1.msra.mxu0 0.0
    %1317 = vmatprep.subr.mxu0 0.0
    %1318 = vmatpush1.msra.mxu0 0.0
    %1319 = vmatprep.subr.mxu0 0.0
    %1320 = vmatpush1.msra.mxu0 0.0
    %1321 = vmatprep.subr.mxu0 0.0
    %1322 = vmatpush1.msra.mxu0 0.0
    %1323 = vmatprep.subr.mxu0 0.0
    %1324 = vmatpush1.msra.mxu0 0.0
    %1325 = vmatprep.subr.mxu0 0.0
    %1326 = vmatpush1.msra.mxu0 0.0
    %1327 = vmatprep.subr.mxu0 0.0
    %1328 = vmatpush1.msra.mxu0 0.0
    %1329 = vmatprep.subr.mxu0 0.0
    %1330 = vmatpush1.msra.mxu0 0.0
    %1331 = vmatprep.subr.mxu0 0.0
    %1332 = vmatpush1.msra.mxu0 0.0
    %1333 = vmatprep.subr.mxu0 0.0
    %1334 = vmatpush1.msra.mxu0 0.0
    %1335 = vmatprep.subr.mxu0 0.0
    %1336 = vmatpush1.msra.mxu0 0.0
    %1337 = vmatprep.subr.mxu0 0.0
    %1338 = vmatpush1.msra.mxu0 0.0
    %1339 = vmatprep.subr.mxu0 0.0
    %1340 = vmatpush1.msra.mxu0 0.0
    %1341 = vmatprep.subr.mxu0 0.0
    %1342 = vmatpush1.msra.mxu0 0.0
    %1343 = vmatprep.subr.mxu0 0.0
    %1344 = vmatpush1.msra.mxu0 0.0
    %1345 = vmatprep.subr.mxu0 0.0
    %1346 = vmatpush1.msra.mxu0 0.0
    %1347 = vmatprep.subr.mxu0 0.0
    %1348 = vmatpush1.msra.mxu0 0.0
    %1349 = vmatprep.subr.mxu0 0.0
    %1350 = vmatpush1.msra.mxu0 0.0
    %1351 = vmatprep.subr.mxu0 0.0
    %1352 = vmatpush1.msra.mxu0 0.0
    %1353 = vmatprep.subr.mxu0 0.0
    %1354 = vmatpush1.msra.mxu0 0.0
    %1355 = vmatprep.subr.mxu0 0.0
    %1356 = vmatpush1.msra.mxu0 0.0
    %1357 = vmatprep.subr.mxu0 0.0
    %1358 = vmatpush1.msra.mxu0 0.0
    %1359 = vmatprep.subr.mxu0 0.0
    %1360 = vmatpush1.msra.mxu0 0.0
    %1361 = vmatprep.subr.mxu0 0.0
    %1362 = vmatpush1.msra.mxu0 0.0
    %1363 = vmatprep.mubr.f32.mxu0 0.0
    %1364 = vmatmul.mubr.f32.gmra.mrb[0].mxu0 %v1227
    %v1365 = vpop.f32.mrb[0].mxu0
    %v1366 = vadd.f32 %v1051, %v1365
    %v1367 = vpop.f32.mrb[0].mxu0
    %1368 = vdwg.mxu0
    %1369 = vmatprep.subr.mxu0 0.0
    %1370 = vmatpush1.msra.mxu0 %v356
    %1371 = vmatprep.subr.mxu0 0.0
    %1372 = vmatpush1.msra.mxu0 %v357
    %1373 = vmatprep.subr.mxu0 0.0
    %1374 = vmatpush1.msra.mxu0 %v1133
    %1375 = vmatprep.subr.mxu0 0.0
    %1376 = vmatpush1.msra.mxu0 0.0
    %1377 = vmatprep.subr.mxu0 0.0
    %1378 = vmatpush1.msra.mxu0 0.0
    %1379 = vmatprep.subr.mxu0 0.0
    %1380 = vmatpush1.msra.mxu0 0.0
    %1381 = vmatprep.subr.mxu0 0.0
    %1382 = vmatpush1.msra.mxu0 0.0
    %1383 = vmatprep.subr.mxu0 0.0
    %1384 = vmatpush1.msra.mxu0 0.0
    %1385 = vmatprep.subr.mxu0 0.0
    %1386 = vmatpush1.msra.mxu0 0.0
    %1387 = vmatprep.subr.mxu0 0.0
    %1388 = vmatpush1.msra.mxu0 0.0
    %1389 = vmatprep.subr.mxu0 0.0
    %1390 = vmatpush1.msra.mxu0 0.0
    %1391 = vmatprep.subr.mxu0 0.0
    %1392 = vmatpush1.msra.mxu0 0.0
    %1393 = vmatprep.subr.mxu0 0.0
    %1394 = vmatpush1.msra.mxu0 0.0
    %1395 = vmatprep.subr.mxu0 0.0
    %1396 = vmatpush1.msra.mxu0 0.0
    %1397 = vmatprep.subr.mxu0 0.0
    %1398 = vmatpush1.msra.mxu0 0.0
    %1399 = vmatprep.subr.mxu0 0.0
    %1400 = vmatpush1.msra.mxu0 0.0
    %1401 = vmatprep.subr.mxu0 0.0
    %1402 = vmatpush1.msra.mxu0 0.0
    %1403 = vmatprep.subr.mxu0 0.0
    %1404 = vmatpush1.msra.mxu0 0.0
    %1405 = vmatprep.subr.mxu0 0.0
    %1406 = vmatpush1.msra.mxu0 0.0
    %1407 = vmatprep.subr.mxu0 0.0
    %1408 = vmatpush1.msra.mxu0 0.0
    %1409 = vmatprep.subr.mxu0 0.0
    %1410 = vmatpush1.msra.mxu0 0.0
    %1411 = vmatprep.subr.mxu0 0.0
    %1412 = vmatpush1.msra.mxu0 0.0
    %1413 = vmatprep.subr.mxu0 0.0
    %1414 = vmatpush1.msra.mxu0 0.0
    %1415 = vmatprep.subr.mxu0 0.0
    %1416 = vmatpush1.msra.mxu0 0.0
    %1417 = vmatprep.subr.mxu0 0.0
    %1418 = vmatpush1.msra.mxu0 0.0
    %1419 = vmatprep.subr.mxu0 0.0
    %1420 = vmatpush1.msra.mxu0 0.0
    %1421 = vmatprep.subr.mxu0 0.0
    %1422 = vmatpush1.msra.mxu0 0.0
    %1423 = vmatprep.subr.mxu0 0.0
    %1424 = vmatpush1.msra.mxu0 0.0
    %1425 = vmatprep.subr.mxu0 0.0
    %1426 = vmatpush1.msra.mxu0 0.0
    %1427 = vmatprep.subr.mxu0 0.0
    %1428 = vmatpush1.msra.mxu0 0.0
    %1429 = vmatprep.subr.mxu0 0.0
    %1430 = vmatpush1.msra.mxu0 0.0
    %1431 = vmatprep.subr.mxu0 0.0
    %1432 = vmatpush1.msra.mxu0 0.0
    %1433 = vmatprep.mubr.f32.mxu0 0.0
    %1434 = vmatmul.mubr.f32.gmra.mrb[0].mxu0 %v1227
    %v1435 = vpop.f32.mrb[0].mxu0
    %v1436 = vadd.f32 %v1130, %v1435
    %v1437 = vpop.f32.mrb[0].mxu0
    %1438 = vdwg.mxu0
    %v1440 = vrot.slane %v1296, 6
    %v1442 = vadd.f32 %v172, %v1440
    %v1443 = vxor.u32 %v1442, 2147483648
    %v1444 = vmul.f32 %v1443, 1.442695
    %v1445 = vpow.pop %v1444
    %v1446 = vadd.f32 %v1445, 1.0
    %v1447 = vrcp.pop %v1446
    %v1448 = vmul.f32 1.0, %v1447
    %v1450 = vrot.slane %v1366, 6
    %v1452 = vadd.f32 %v256, %v1450
    %v1453 = vxor.u32 %v1452, 2147483648
    %v1454 = vmul.f32 %v1453, 1.442695
    %v1455 = vpow.pop %v1454
    %v1456 = vadd.f32 %v1455, 1.0
    %v1457 = vrcp.pop %v1456
    %v1458 = vmul.f32 1.0, %v1457
    %v1460 = vrot.slane %v1436, 6
    %v1462 = vmul.f32 %v1448, %v1460
    %v1463 = vadd.f32 %v340, %v1462
    %v1464 = vtanh.pop %v1463
    %v1465 = vsub.f32 1.0, %v1458
    %v1466 = vmul.f32 %v1465, %v1464
    %v1467 = vrot.slane %v1225, 6
    %v1469 = vmul.f32 %v1458, %v1467
    %v1470 = vadd.f32 %v1466, %v1469
    %v1472 = vrot.slane %v1470, 2
    %v1473 = vsel %vm94, %v1472, 0
    %1475 = vmatprep.subr.mxu0 0.0
    %1476 = vmatpush1.msra.mxu0 %v348
    %1477 = vmatprep.subr.mxu0 0.0
    %1478 = vmatpush1.msra.mxu0 %v349
    %1479 = vmatprep.subr.mxu0 0.0
    %1480 = vmatpush1.msra.mxu0 %v975
    %1481 = vmatprep.subr.mxu0 0.0
    %1482 = vmatpush1.msra.mxu0 0.0
    %1483 = vmatprep.subr.mxu0 0.0
    %1484 = vmatpush1.msra.mxu0 0.0
    %1485 = vmatprep.subr.mxu0 0.0
    %1486 = vmatpush1.msra.mxu0 0.0
    %1487 = vmatprep.subr.mxu0 0.0
    %1488 = vmatpush1.msra.mxu0 0.0
    %1489 = vmatprep.subr.mxu0 0.0
    %1490 = vmatpush1.msra.mxu0 0.0
    %1491 = vmatprep.subr.mxu0 0.0
    %1492 = vmatpush1.msra.mxu0 0.0
    %1493 = vmatprep.subr.mxu0 0.0
    %1494 = vmatpush1.msra.mxu0 0.0
    %1495 = vmatprep.subr.mxu0 0.0
    %1496 = vmatpush1.msra.mxu0 0.0
    %1497 = vmatprep.subr.mxu0 0.0
    %1498 = vmatpush1.msra.mxu0 0.0
    %1499 = vmatprep.subr.mxu0 0.0
    %1500 = vmatpush1.msra.mxu0 0.0
    %1501 = vmatprep.subr.mxu0 0.0
    %1502 = vmatpush1.msra.mxu0 0.0
    %1503 = vmatprep.subr.mxu0 0.0
    %1504 = vmatpush1.msra.mxu0 0.0
    %1505 = vmatprep.subr.mxu0 0.0
    %1506 = vmatpush1.msra.mxu0 0.0
    %1507 = vmatprep.subr.mxu0 0.0
    %1508 = vmatpush1.msra.mxu0 0.0
    %1509 = vmatprep.subr.mxu0 0.0
    %1510 = vmatpush1.msra.mxu0 0.0
    %1511 = vmatprep.subr.mxu0 0.0
    %1512 = vmatpush1.msra.mxu0 0.0
    %1513 = vmatprep.subr.mxu0 0.0
    %1514 = vmatpush1.msra.mxu0 0.0
    %1515 = vmatprep.subr.mxu0 0.0
    %1516 = vmatpush1.msra.mxu0 0.0
    %1517 = vmatprep.subr.mxu0 0.0
    %1518 = vmatpush1.msra.mxu0 0.0
    %1519 = vmatprep.subr.mxu0 0.0
    %1520 = vmatpush1.msra.mxu0 0.0
    %1521 = vmatprep.subr.mxu0 0.0
    %1522 = vmatpush1.msra.mxu0 0.0
    %1523 = vmatprep.subr.mxu0 0.0
    %1524 = vmatpush1.msra.mxu0 0.0
    %1525 = vmatprep.subr.mxu0 0.0
    %1526 = vmatpush1.msra.mxu0 0.0
    %1527 = vmatprep.subr.mxu0 0.0
    %1528 = vmatpush1.msra.mxu0 0.0
    %1529 = vmatprep.subr.mxu0 0.0
    %1530 = vmatpush1.msra.mxu0 0.0
    %1531 = vmatprep.subr.mxu0 0.0
    %1532 = vmatpush1.msra.mxu0 0.0
    %1533 = vmatprep.subr.mxu0 0.0
    %1534 = vmatpush1.msra.mxu0 0.0
    %1535 = vmatprep.subr.mxu0 0.0
    %1536 = vmatpush1.msra.mxu0 0.0
    %1537 = vmatprep.subr.mxu0 0.0
    %1538 = vmatpush1.msra.mxu0 0.0
    %1539 = vmatprep.mubr.f32.mxu0 0.0
    %1540 = vmatmul.mubr.f32.gmra.mrb[0].mxu0 %v1473
    %v1541 = vpop.f32.mrb[0].mxu0
    %v1542 = vadd.f32 %v969, %v1541
    %v1543 = vpop.f32.mrb[0].mxu0
    %1544 = vdwg.mxu0
    %1545 = vmatprep.subr.mxu0 0.0
    %1546 = vmatpush1.msra.mxu0 %v352
    %1547 = vmatprep.subr.mxu0 0.0
    %1548 = vmatpush1.msra.mxu0 %v353
    %1549 = vmatprep.subr.mxu0 0.0
    %1550 = vmatpush1.msra.mxu0 %v1054
    %1551 = vmatprep.subr.mxu0 0.0
    %1552 = vmatpush1.msra.mxu0 0.0
    %1553 = vmatprep.subr.mxu0 0.0
    %1554 = vmatpush1.msra.mxu0 0.0
    %1555 = vmatprep.subr.mxu0 0.0
    %1556 = vmatpush1.msra.mxu0 0.0
    %1557 = vmatprep.subr.mxu0 0.0
    %1558 = vmatpush1.msra.mxu0 0.0
    %1559 = vmatprep.subr.mxu0 0.0
    %1560 = vmatpush1.msra.mxu0 0.0
    %1561 = vmatprep.subr.mxu0 0.0
    %1562 = vmatpush1.msra.mxu0 0.0
    %1563 = vmatprep.subr.mxu0 0.0
    %1564 = vmatpush1.msra.mxu0 0.0
    %1565 = vmatprep.subr.mxu0 0.0
    %1566 = vmatpush1.msra.mxu0 0.0
    %1567 = vmatprep.subr.mxu0 0.0
    %1568 = vmatpush1.msra.mxu0 0.0
    %1569 = vmatprep.subr.mxu0 0.0
    %1570 = vmatpush1.msra.mxu0 0.0
    %1571 = vmatprep.subr.mxu0 0.0
    %1572 = vmatpush1.msra.mxu0 0.0
    %1573 = vmatprep.subr.mxu0 0.0
    %1574 = vmatpush1.msra.mxu0 0.0
    %1575 = vmatprep.subr.mxu0 0.0
    %1576 = vmatpush1.msra.mxu0 0.0
    %1577 = vmatprep.subr.mxu0 0.0
    %1578 = vmatpush1.msra.mxu0 0.0
    %1579 = vmatprep.subr.mxu0 0.0
    %1580 = vmatpush1.msra.mxu0 0.0
    %1581 = vmatprep.subr.mxu0 0.0
    %1582 = vmatpush1.msra.mxu0 0.0
    %1583 = vmatprep.subr.mxu0 0.0
    %1584 = vmatpush1.msra.mxu0 0.0
    %1585 = vmatprep.subr.mxu0 0.0
    %1586 = vmatpush1.msra.mxu0 0.0
    %1587 = vmatprep.subr.mxu0 0.0
    %1588 = vmatpush1.msra.mxu0 0.0
    %1589 = vmatprep.subr.mxu0 0.0
    %1590 = vmatpush1.msra.mxu0 0.0
    %1591 = vmatprep.subr.mxu0 0.0
    %1592 = vmatpush1.msra.mxu0 0.0
    %1593 = vmatprep.subr.mxu0 0.0
    %1594 = vmatpush1.msra.mxu0 0.0
    %1595 = vmatprep.subr.mxu0 0.0
    %1596 = vmatpush1.msra.mxu0 0.0
    %1597 = vmatprep.subr.mxu0 0.0
    %1598 = vmatpush1.msra.mxu0 0.0
    %1599 = vmatprep.subr.mxu0 0.0
    %1600 = vmatpush1.msra.mxu0 0.0
    %1601 = vmatprep.subr.mxu0 0.0
    %1602 = vmatpush1.msra.mxu0 0.0
    %1603 = vmatprep.subr.mxu0 0.0
    %1604 = vmatpush1.msra.mxu0 0.0
    %1605 = vmatprep.subr.mxu0 0.0
    %1606 = vmatpush1.msra.mxu0 0.0
    %1607 = vmatprep.subr.mxu0 0.0
    %1608 = vmatpush1.msra.mxu0 0.0
    %1609 = vmatprep.mubr.f32.mxu0 0.0
    %1610 = vmatmul.mubr.f32.gmra.mrb[0].mxu0 %v1473
    %v1611 = vpop.f32.mrb[0].mxu0
    %v1612 = vadd.f32 %v1051, %v1611
    %v1613 = vpop.f32.mrb[0].mxu0
    %1614 = vdwg.mxu0
    %1615 = vmatprep.subr.mxu0 0.0
    %1616 = vmatpush1.msra.mxu0 %v356
    %1617 = vmatprep.subr.mxu0 0.0
    %1618 = vmatpush1.msra.mxu0 %v357
    %1619 = vmatprep.subr.mxu0 0.0
    %1620 = vmatpush1.msra.mxu0 %v1133
    %1621 = vmatprep.subr.mxu0 0.0
    %1622 = vmatpush1.msra.mxu0 0.0
    %1623 = vmatprep.subr.mxu0 0.0
    %1624 = vmatpush1.msra.mxu0 0.0
    %1625 = vmatprep.subr.mxu0 0.0
    %1626 = vmatpush1.msra.mxu0 0.0
    %1627 = vmatprep.subr.mxu0 0.0
    %1628 = vmatpush1.msra.mxu0 0.0
    %1629 = vmatprep.subr.mxu0 0.0
    %1630 = vmatpush1.msra.mxu0 0.0
    %1631 = vmatprep.subr.mxu0 0.0
    %1632 = vmatpush1.msra.mxu0 0.0
    %1633 = vmatprep.subr.mxu0 0.0
    %1634 = vmatpush1.msra.mxu0 0.0
    %1635 = vmatprep.subr.mxu0 0.0
    %1636 = vmatpush1.msra.mxu0 0.0
    %1637 = vmatprep.subr.mxu0 0.0
    %1638 = vmatpush1.msra.mxu0 0.0
    %1639 = vmatprep.subr.mxu0 0.0
    %1640 = vmatpush1.msra.mxu0 0.0
    %1641 = vmatprep.subr.mxu0 0.0
    %1642 = vmatpush1.msra.mxu0 0.0
    %1643 = vmatprep.subr.mxu0 0.0
    %1644 = vmatpush1.msra.mxu0 0.0
    %1645 = vmatprep.subr.mxu0 0.0
    %1646 = vmatpush1.msra.mxu0 0.0
    %1647 = vmatprep.subr.mxu0 0.0
    %1648 = vmatpush1.msra.mxu0 0.0
    %1649 = vmatprep.subr.mxu0 0.0
    %1650 = vmatpush1.msra.mxu0 0.0
    %1651 = vmatprep.subr.mxu0 0.0
    %1652 = vmatpush1.msra.mxu0 0.0
    %1653 = vmatprep.subr.mxu0 0.0
    %1654 = vmatpush1.msra.mxu0 0.0
    %1655 = vmatprep.subr.mxu0 0.0
    %1656 = vmatpush1.msra.mxu0 0.0
    %1657 = vmatprep.subr.mxu0 0.0
    %1658 = vmatpush1.msra.mxu0 0.0
    %1659 = vmatprep.subr.mxu0 0.0
    %1660 = vmatpush1.msra.mxu0 0.0
    %1661 = vmatprep.subr.mxu0 0.0
    %1662 = vmatpush1.msra.mxu0 0.0
    %1663 = vmatprep.subr.mxu0 0.0
    %1664 = vmatpush1.msra.mxu0 0.0
    %1665 = vmatprep.subr.mxu0 0.0
    %1666 = vmatpush1.msra.mxu0 0.0
    %1667 = vmatprep.subr.mxu0 0.0
    %1668 = vmatpush1.msra.mxu0 0.0
    %1669 = vmatprep.subr.mxu0 0.0
    %1670 = vmatpush1.msra.mxu0 0.0
    %1671 = vmatprep.subr.mxu0 0.0
    %1672 = vmatpush1.msra.mxu0 0.0
    %1673 = vmatprep.subr.mxu0 0.0
    %1674 = vmatpush1.msra.mxu0 0.0
    %1675 = vmatprep.subr.mxu0 0.0
    %1676 = vmatpush1.msra.mxu0 0.0
    %1677 = vmatprep.subr.mxu0 0.0
    %1678 = vmatpush1.msra.mxu0 0.0
    %1679 = vmatprep.mubr.f32.mxu0 0.0
    %1680 = vmatmul.mubr.f32.gmra.mrb[0].mxu0 %v1473
    %v1681 = vpop.f32.mrb[0].mxu0
    %v1682 = vadd.f32 %v1130, %v1681
    %v1683 = vpop.f32.mrb[0].mxu0
    %1684 = vdwg.mxu0
    %v1686 = vrot.slane %v1542, 4
    %v1688 = vadd.f32 %v172, %v1686
    %v1689 = vxor.u32 %v1688, 2147483648
    %v1690 = vmul.f32 %v1689, 1.442695
    %v1691 = vpow.pop %v1690
    %v1692 = vadd.f32 %v1691, 1.0
    %v1693 = vrcp.pop %v1692
    %v1694 = vmul.f32 1.0, %v1693
    %v1696 = vrot.slane %v1612, 4
    %v1698 = vadd.f32 %v256, %v1696
    %v1699 = vxor.u32 %v1698, 2147483648
    %v1700 = vmul.f32 %v1699, 1.442695
    %v1701 = vpow.pop %v1700
    %v1702 = vadd.f32 %v1701, 1.0
    %v1703 = vrcp.pop %v1702
    %v1704 = vmul.f32 1.0, %v1703
    %v1706 = vrot.slane %v1682, 4
    %v1708 = vmul.f32 %v1694, %v1706
    %v1709 = vadd.f32 %v340, %v1708
    %v1710 = vtanh.pop %v1709
    %v1711 = vsub.f32 1.0, %v1704
    %v1712 = vmul.f32 %v1711, %v1710
    %v1713 = vrot.slane %v1470, 6
    %v1715 = vmul.f32 %v1704, %v1713
    %v1716 = vadd.f32 %v1712, %v1715
    %v1718 = vrot.slane %v1716, 4
    %v1719 = vsel %vm94, %v1718, 0
    %1721 = vmatprep.subr.mxu0 0.0
    %1722 = vmatpush1.msra.mxu0 %v348
    %1723 = vmatprep.subr.mxu0 0.0
    %1724 = vmatpush1.msra.mxu0 %v349
    %1725 = vmatprep.subr.mxu0 0.0
    %1726 = vmatpush1.msra.mxu0 %v975
    %1727 = vmatprep.subr.mxu0 0.0
    %1728 = vmatpush1.msra.mxu0 0.0
    %1729 = vmatprep.subr.mxu0 0.0
    %1730 = vmatpush1.msra.mxu0 0.0
    %1731 = vmatprep.subr.mxu0 0.0
    %1732 = vmatpush1.msra.mxu0 0.0
    %1733 = vmatprep.subr.mxu0 0.0
    %1734 = vmatpush1.msra.mxu0 0.0
    %1735 = vmatprep.subr.mxu0 0.0
    %1736 = vmatpush1.msra.mxu0 0.0
    %1737 = vmatprep.subr.mxu0 0.0
    %1738 = vmatpush1.msra.mxu0 0.0
    %1739 = vmatprep.subr.mxu0 0.0
    %1740 = vmatpush1.msra.mxu0 0.0
    %1741 = vmatprep.subr.mxu0 0.0
    %1742 = vmatpush1.msra.mxu0 0.0
    %1743 = vmatprep.subr.mxu0 0.0
    %1744 = vmatpush1.msra.mxu0 0.0
    %1745 = vmatprep.subr.mxu0 0.0
    %1746 = vmatpush1.msra.mxu0 0.0
    %1747 = vmatprep.subr.mxu0 0.0
    %1748 = vmatpush1.msra.mxu0 0.0
    %1749 = vmatprep.subr.mxu0 0.0
    %1750 = vmatpush1.msra.mxu0 0.0
    %1751 = vmatprep.subr.mxu0 0.0
    %1752 = vmatpush1.msra.mxu0 0.0
    %1753 = vmatprep.subr.mxu0 0.0
    %1754 = vmatpush1.msra.mxu0 0.0
    %1755 = vmatprep.subr.mxu0 0.0
    %1756 = vmatpush1.msra.mxu0 0.0
    %1757 = vmatprep.subr.mxu0 0.0
    %1758 = vmatpush1.msra.mxu0 0.0
    %1759 = vmatprep.subr.mxu0 0.0
    %1760 = vmatpush1.msra.mxu0 0.0
    %1761 = vmatprep.subr.mxu0 0.0
    %1762 = vmatpush1.msra.mxu0 0.0
    %1763 = vmatprep.subr.mxu0 0.0
    %1764 = vmatpush1.msra.mxu0 0.0
    %1765 = vmatprep.subr.mxu0 0.0
    %1766 = vmatpush1.msra.mxu0 0.0
    %1767 = vmatprep.subr.mxu0 0.0
    %1768 = vmatpush1.msra.mxu0 0.0
    %1769 = vmatprep.subr.mxu0 0.0
    %1770 = vmatpush1.msra.mxu0 0.0
    %1771 = vmatprep.subr.mxu0 0.0
    %1772 = vmatpush1.msra.mxu0 0.0
    %1773 = vmatprep.subr.mxu0 0.0
    %1774 = vmatpush1.msra.mxu0 0.0
    %1775 = vmatprep.subr.mxu0 0.0
    %1776 = vmatpush1.msra.mxu0 0.0
    %1777 = vmatprep.subr.mxu0 0.0
    %1778 = vmatpush1.msra.mxu0 0.0
    %1779 = vmatprep.subr.mxu0 0.0
    %1780 = vmatpush1.msra.mxu0 0.0
    %1781 = vmatprep.subr.mxu0 0.0
    %1782 = vmatpush1.msra.mxu0 0.0
    %1783 = vmatprep.subr.mxu0 0.0
    %1784 = vmatpush1.msra.mxu0 0.0
    %1785 = vmatprep.mubr.f32.mxu0 0.0
    %1786 = vmatmul.mubr.f32.gmra.mrb[0].mxu0 %v1719
    %v1787 = vpop.f32.mrb[0].mxu0
    %v1788 = vadd.f32 %v969, %v1787
    %v1789 = vpop.f32.mrb[0].mxu0
    %1790 = vdwg.mxu0
    %1791 = vmatprep.subr.mxu0 0.0
    %1792 = vmatpush1.msra.mxu0 %v352
    %1793 = vmatprep.subr.mxu0 0.0
    %1794 = vmatpush1.msra.mxu0 %v353
    %1795 = vmatprep.subr.mxu0 0.0
    %1796 = vmatpush1.msra.mxu0 %v1054
    %1797 = vmatprep.subr.mxu0 0.0
    %1798 = vmatpush1.msra.mxu0 0.0
    %1799 = vmatprep.subr.mxu0 0.0
    %1800 = vmatpush1.msra.mxu0 0.0
    %1801 = vmatprep.subr.mxu0 0.0
    %1802 = vmatpush1.msra.mxu0 0.0
    %1803 = vmatprep.subr.mxu0 0.0
    %1804 = vmatpush1.msra.mxu0 0.0
    %1805 = vmatprep.subr.mxu0 0.0
    %1806 = vmatpush1.msra.mxu0 0.0
    %1807 = vmatprep.subr.mxu0 0.0
    %1808 = vmatpush1.msra.mxu0 0.0
    %1809 = vmatprep.subr.mxu0 0.0
    %1810 = vmatpush1.msra.mxu0 0.0
    %1811 = vmatprep.subr.mxu0 0.0
    %1812 = vmatpush1.msra.mxu0 0.0
    %1813 = vmatprep.subr.mxu0 0.0
    %1814 = vmatpush1.msra.mxu0 0.0
    %1815 = vmatprep.subr.mxu0 0.0
    %1816 = vmatpush1.msra.mxu0 0.0
    %1817 = vmatprep.subr.mxu0 0.0
    %1818 = vmatpush1.msra.mxu0 0.0
    %1819 = vmatprep.subr.mxu0 0.0
    %1820 = vmatpush1.msra.mxu0 0.0
    %1821 = vmatprep.subr.mxu0 0.0
    %1822 = vmatpush1.msra.mxu0 0.0
    %1823 = vmatprep.subr.mxu0 0.0
    %1824 = vmatpush1.msra.mxu0 0.0
    %1825 = vmatprep.subr.mxu0 0.0
    %1826 = vmatpush1.msra.mxu0 0.0
    %1827 = vmatprep.subr.mxu0 0.0
    %1828 = vmatpush1.msra.mxu0 0.0
    %1829 = vmatprep.subr.mxu0 0.0
    %1830 = vmatpush1.msra.mxu0 0.0
    %1831 = vmatprep.subr.mxu0 0.0
    %1832 = vmatpush1.msra.mxu0 0.0
    %1833 = vmatprep.subr.mxu0 0.0
    %1834 = vmatpush1.msra.mxu0 0.0
    %1835 = vmatprep.subr.mxu0 0.0
    %1836 = vmatpush1.msra.mxu0 0.0
    %1837 = vmatprep.subr.mxu0 0.0
    %1838 = vmatpush1.msra.mxu0 0.0
    %1839 = vmatprep.subr.mxu0 0.0
    %1840 = vmatpush1.msra.mxu0 0.0
    %1841 = vmatprep.subr.mxu0 0.0
    %1842 = vmatpush1.msra.mxu0 0.0
    %1843 = vmatprep.subr.mxu0 0.0
    %1844 = vmatpush1.msra.mxu0 0.0
    %1845 = vmatprep.subr.mxu0 0.0
    %1846 = vmatpush1.msra.mxu0 0.0
    %1847 = vmatprep.subr.mxu0 0.0
    %1848 = vmatpush1.msra.mxu0 0.0
    %1849 = vmatprep.subr.mxu0 0.0
    %1850 = vmatpush1.msra.mxu0 0.0
    %1851 = vmatprep.subr.mxu0 0.0
    %1852 = vmatpush1.msra.mxu0 0.0
    %1853 = vmatprep.subr.mxu0 0.0
    %1854 = vmatpush1.msra.mxu0 0.0
    %1855 = vmatprep.mubr.f32.mxu0 0.0
    %1856 = vmatmul.mubr.f32.gmra.mrb[0].mxu0 %v1719
    %v1857 = vpop.f32.mrb[0].mxu0
    %v1858 = vadd.f32 %v1051, %v1857
    %v1859 = vpop.f32.mrb[0].mxu0
    %1860 = vdwg.mxu0
    %1861 = vmatprep.subr.mxu0 0.0
    %1862 = vmatpush1.msra.mxu0 %v356
    %1863 = vmatprep.subr.mxu0 0.0
    %1864 = vmatpush1.msra.mxu0 %v357
    %1865 = vmatprep.subr.mxu0 0.0
    %1866 = vmatpush1.msra.mxu0 %v1133
    %1867 = vmatprep.subr.mxu0 0.0
    %1868 = vmatpush1.msra.mxu0 0.0
    %1869 = vmatprep.subr.mxu0 0.0
    %1870 = vmatpush1.msra.mxu0 0.0
    %1871 = vmatprep.subr.mxu0 0.0
    %1872 = vmatpush1.msra.mxu0 0.0
    %1873 = vmatprep.subr.mxu0 0.0
    %1874 = vmatpush1.msra.mxu0 0.0
    %1875 = vmatprep.subr.mxu0 0.0
    %1876 = vmatpush1.msra.mxu0 0.0
    %1877 = vmatprep.subr.mxu0 0.0
    %1878 = vmatpush1.msra.mxu0 0.0
    %1879 = vmatprep.subr.mxu0 0.0
    %1880 = vmatpush1.msra.mxu0 0.0
    %1881 = vmatprep.subr.mxu0 0.0
    %1882 = vmatpush1.msra.mxu0 0.0
    %1883 = vmatprep.subr.mxu0 0.0
    %1884 = vmatpush1.msra.mxu0 0.0
    %1885 = vmatprep.subr.mxu0 0.0
    %1886 = vmatpush1.msra.mxu0 0.0
    %1887 = vmatprep.subr.mxu0 0.0
    %1888 = vmatpush1.msra.mxu0 0.0
    %1889 = vmatprep.subr.mxu0 0.0
    %1890 = vmatpush1.msra.mxu0 0.0
    %1891 = vmatprep.subr.mxu0 0.0
    %1892 = vmatpush1.msra.mxu0 0.0
    %1893 = vmatprep.subr.mxu0 0.0
    %1894 = vmatpush1.msra.mxu0 0.0
    %1895 = vmatprep.subr.mxu0 0.0
    %1896 = vmatpush1.msra.mxu0 0.0
    %1897 = vmatprep.subr.mxu0 0.0
    %1898 = vmatpush1.msra.mxu0 0.0
    %1899 = vmatprep.subr.mxu0 0.0
    %1900 = vmatpush1.msra.mxu0 0.0
    %1901 = vmatprep.subr.mxu0 0.0
    %1902 = vmatpush1.msra.mxu0 0.0
    %1903 = vmatprep.subr.mxu0 0.0
    %1904 = vmatpush1.msra.mxu0 0.0
    %1905 = vmatprep.subr.mxu0 0.0
    %1906 = vmatpush1.msra.mxu0 0.0
    %1907 = vmatprep.subr.mxu0 0.0
    %1908 = vmatpush1.msra.mxu0 0.0
    %1909 = vmatprep.subr.mxu0 0.0
    %1910 = vmatpush1.msra.mxu0 0.0
    %1911 = vmatprep.subr.mxu0 0.0
    %1912 = vmatpush1.msra.mxu0 0.0
    %1913 = vmatprep.subr.mxu0 0.0
    %1914 = vmatpush1.msra.mxu0 0.0
    %1915 = vmatprep.subr.mxu0 0.0
    %1916 = vmatpush1.msra.mxu0 0.0
    %1917 = vmatprep.subr.mxu0 0.0
    %1918 = vmatpush1.msra.mxu0 0.0
    %1919 = vmatprep.subr.mxu0 0.0
    %1920 = vmatpush1.msra.mxu0 0.0
    %1921 = vmatprep.subr.mxu0 0.0
    %1922 = vmatpush1.msra.mxu0 0.0
    %1923 = vmatprep.subr.mxu0 0.0
    %1924 = vmatpush1.msra.mxu0 0.0
    %1925 = vmatprep.mubr.f32.mxu0 0.0
    %1926 = vmatmul.mubr.f32.gmra.mrb[0].mxu0 %v1719
    %v1927 = vpop.f32.mrb[0].mxu0
    %v1928 = vadd.f32 %v1130, %v1927
    %v1929 = vpop.f32.mrb[0].mxu0
    %1930 = vdwg.mxu0
    %v1932 = vrot.slane %v1788, 2
    %v1934 = vadd.f32 %v172, %v1932
    %v1935 = vxor.u32 %v1934, 2147483648
    %v1936 = vmul.f32 %v1935, 1.442695
    %v1937 = vpow.pop %v1936
    %v1938 = vadd.f32 %v1937, 1.0
    %v1939 = vrcp.pop %v1938
    %v1940 = vmul.f32 1.0, %v1939
    %v1942 = vrot.slane %v1858, 2
    %v1944 = vadd.f32 %v256, %v1942
    %v1945 = vxor.u32 %v1944, 2147483648
    %v1946 = vmul.f32 %v1945, 1.442695
    %v1947 = vpow.pop %v1946
    %v1948 = vadd.f32 %v1947, 1.0
    %v1949 = vrcp.pop %v1948
    %v1950 = vmul.f32 1.0, %v1949
    %v1952 = vrot.slane %v1928, 2
    %v1954 = vmul.f32 %v1940, %v1952
    %v1955 = vadd.f32 %v340, %v1954
    %v1956 = vtanh.pop %v1955
    %v1957 = vsub.f32 1.0, %v1950
    %v1958 = vmul.f32 %v1957, %v1956
    %v1959 = vrot.slane %v1716, 6
    %v1961 = vmul.f32 %v1950, %v1959
    %v1962 = vadd.f32 %v1958, %v1961
    %v1964 = vrot.slane %v1962, 6
    %v1965 = vsel %vm94, %v1964, 0
    %1967 = vmatprep.subr.mxu0 0.0
    %1968 = vmatpush1.msra.mxu0 %v348
    %1969 = vmatprep.subr.mxu0 0.0
    %1970 = vmatpush1.msra.mxu0 %v349
    %1971 = vmatprep.subr.mxu0 0.0
    %1972 = vmatpush1.msra.mxu0 %v975
    %1973 = vmatprep.subr.mxu0 0.0
    %1974 = vmatpush1.msra.mxu0 0.0
    %1975 = vmatprep.subr.mxu0 0.0
    %1976 = vmatpush1.msra.mxu0 0.0
    %1977 = vmatprep.subr.mxu0 0.0
    %1978 = vmatpush1.msra.mxu0 0.0
    %1979 = vmatprep.subr.mxu0 0.0
    %1980 = vmatpush1.msra.mxu0 0.0
    %1981 = vmatprep.subr.mxu0 0.0
    %1982 = vmatpush1.msra.mxu0 0.0
    %1983 = vmatprep.subr.mxu0 0.0
    %1984 = vmatpush1.msra.mxu0 0.0
    %1985 = vmatprep.subr.mxu0 0.0
    %1986 = vmatpush1.msra.mxu0 0.0
    %1987 = vmatprep.subr.mxu0 0.0
    %1988 = vmatpush1.msra.mxu0 0.0
    %1989 = vmatprep.subr.mxu0 0.0
    %1990 = vmatpush1.msra.mxu0 0.0
    %1991 = vmatprep.subr.mxu0 0.0
    %1992 = vmatpush1.msra.mxu0 0.0
    %1993 = vmatprep.subr.mxu0 0.0
    %1994 = vmatpush1.msra.mxu0 0.0
    %1995 = vmatprep.subr.mxu0 0.0
    %1996 = vmatpush1.msra.mxu0 0.0
    %1997 = vmatprep.subr.mxu0 0.0
    %1998 = vmatpush1.msra.mxu0 0.0
    %1999 = vmatprep.subr.mxu0 0.0
    %2000 = vmatpush1.msra.mxu0 0.0
    %2001 = vmatprep.subr.mxu0 0.0
    %2002 = vmatpush1.msra.mxu0 0.0
    %2003 = vmatprep.subr.mxu0 0.0
    %2004 = vmatpush1.msra.mxu0 0.0
    %2005 = vmatprep.subr.mxu0 0.0
    %2006 = vmatpush1.msra.mxu0 0.0
    %2007 = vmatprep.subr.mxu0 0.0
    %2008 = vmatpush1.msra.mxu0 0.0
    %2009 = vmatprep.subr.mxu0 0.0
    %2010 = vmatpush1.msra.mxu0 0.0
    %2011 = vmatprep.subr.mxu0 0.0
    %2012 = vmatpush1.msra.mxu0 0.0
    %2013 = vmatprep.subr.mxu0 0.0
    %2014 = vmatpush1.msra.mxu0 0.0
    %2015 = vmatprep.subr.mxu0 0.0
    %2016 = vmatpush1.msra.mxu0 0.0
    %2017 = vmatprep.subr.mxu0 0.0
    %2018 = vmatpush1.msra.mxu0 0.0
    %2019 = vmatprep.subr.mxu0 0.0
    %2020 = vmatpush1.msra.mxu0 0.0
    %2021 = vmatprep.subr.mxu0 0.0
    %2022 = vmatpush1.msra.mxu0 0.0
    %2023 = vmatprep.subr.mxu0 0.0
    %2024 = vmatpush1.msra.mxu0 0.0
    %2025 = vmatprep.subr.mxu0 0.0
    %2026 = vmatpush1.msra.mxu0 0.0
    %2027 = vmatprep.subr.mxu0 0.0
    %2028 = vmatpush1.msra.mxu0 0.0
    %2029 = vmatprep.subr.mxu0 0.0
    %2030 = vmatpush1.msra.mxu0 0.0
    %2031 = vmatprep.mubr.f32.mxu0 0.0
    %2032 = vmatmul.mubr.f32.gmra.mrb[0].mxu0 %v1965
    %v2033 = vpop.f32.mrb[0].mxu0
    %v2034 = vadd.f32 %v969, %v2033
    %v2035 = vpop.f32.mrb[0].mxu0
    %2036 = vdwg.mxu0
    %2037 = vmatprep.subr.mxu0 0.0
    %2038 = vmatpush1.msra.mxu0 %v352
    %2039 = vmatprep.subr.mxu0 0.0
    %2040 = vmatpush1.msra.mxu0 %v353
    %2041 = vmatprep.subr.mxu0 0.0
    %2042 = vmatpush1.msra.mxu0 %v1054
    %2043 = vmatprep.subr.mxu0 0.0
    %2044 = vmatpush1.msra.mxu0 0.0
    %2045 = vmatprep.subr.mxu0 0.0
    %2046 = vmatpush1.msra.mxu0 0.0
    %2047 = vmatprep.subr.mxu0 0.0
    %2048 = vmatpush1.msra.mxu0 0.0
    %2049 = vmatprep.subr.mxu0 0.0
    %2050 = vmatpush1.msra.mxu0 0.0
    %2051 = vmatprep.subr.mxu0 0.0
    %2052 = vmatpush1.msra.mxu0 0.0
    %2053 = vmatprep.subr.mxu0 0.0
    %2054 = vmatpush1.msra.mxu0 0.0
    %2055 = vmatprep.subr.mxu0 0.0
    %2056 = vmatpush1.msra.mxu0 0.0
    %2057 = vmatprep.subr.mxu0 0.0
    %2058 = vmatpush1.msra.mxu0 0.0
    %2059 = vmatprep.subr.mxu0 0.0
    %2060 = vmatpush1.msra.mxu0 0.0
    %2061 = vmatprep.subr.mxu0 0.0
    %2062 = vmatpush1.msra.mxu0 0.0
    %2063 = vmatprep.subr.mxu0 0.0
    %2064 = vmatpush1.msra.mxu0 0.0
    %2065 = vmatprep.subr.mxu0 0.0
    %2066 = vmatpush1.msra.mxu0 0.0
    %2067 = vmatprep.subr.mxu0 0.0
    %2068 = vmatpush1.msra.mxu0 0.0
    %2069 = vmatprep.subr.mxu0 0.0
    %2070 = vmatpush1.msra.mxu0 0.0
    %2071 = vmatprep.subr.mxu0 0.0
    %2072 = vmatpush1.msra.mxu0 0.0
    %2073 = vmatprep.subr.mxu0 0.0
    %2074 = vmatpush1.msra.mxu0 0.0
    %2075 = vmatprep.subr.mxu0 0.0
    %2076 = vmatpush1.msra.mxu0 0.0
    %2077 = vmatprep.subr.mxu0 0.0
    %2078 = vmatpush1.msra.mxu0 0.0
    %2079 = vmatprep.subr.mxu0 0.0
    %2080 = vmatpush1.msra.mxu0 0.0
    %2081 = vmatprep.subr.mxu0 0.0
    %2082 = vmatpush1.msra.mxu0 0.0
    %2083 = vmatprep.subr.mxu0 0.0
    %2084 = vmatpush1.msra.mxu0 0.0
    %2085 = vmatprep.subr.mxu0 0.0
    %2086 = vmatpush1.msra.mxu0 0.0
    %2087 = vmatprep.subr.mxu0 0.0
    %2088 = vmatpush1.msra.mxu0 0.0
    %2089 = vmatprep.subr.mxu0 0.0
    %2090 = vmatpush1.msra.mxu0 0.0
    %2091 = vmatprep.subr.mxu0 0.0
    %2092 = vmatpush1.msra.mxu0 0.0
    %2093 = vmatprep.subr.mxu0 0.0
    %2094 = vmatpush1.msra.mxu0 0.0
    %2095 = vmatprep.subr.mxu0 0.0
    %2096 = vmatpush1.msra.mxu0 0.0
    %2097 = vmatprep.subr.mxu0 0.0
    %2098 = vmatpush1.msra.mxu0 0.0
    %2099 = vmatprep.subr.mxu0 0.0
    %2100 = vmatpush1.msra.mxu0 0.0
    %2101 = vmatprep.mubr.f32.mxu0 0.0
    %2102 = vmatmul.mubr.f32.gmra.mrb[0].mxu0 %v1965
    %v2103 = vpop.f32.mrb[0].mxu0
    %v2104 = vadd.f32 %v1051, %v2103
    %v2105 = vpop.f32.mrb[0].mxu0
    %2106 = vdwg.mxu0
    %2107 = vmatprep.subr.mxu0 0.0
    %2108 = vmatpush1.msra.mxu0 %v356
    %2109 = vmatprep.subr.mxu0 0.0
    %2110 = vmatpush1.msra.mxu0 %v357
    %2111 = vmatprep.subr.mxu0 0.0
    %2112 = vmatpush1.msra.mxu0 %v1133
    %2113 = vmatprep.subr.mxu0 0.0
    %2114 = vmatpush1.msra.mxu0 0.0
    %2115 = vmatprep.subr.mxu0 0.0
    %2116 = vmatpush1.msra.mxu0 0.0
    %2117 = vmatprep.subr.mxu0 0.0
    %2118 = vmatpush1.msra.mxu0 0.0
    %2119 = vmatprep.subr.mxu0 0.0
    %2120 = vmatpush1.msra.mxu0 0.0
    %2121 = vmatprep.subr.mxu0 0.0
    %2122 = vmatpush1.msra.mxu0 0.0
    %2123 = vmatprep.subr.mxu0 0.0
    %2124 = vmatpush1.msra.mxu0 0.0
    %2125 = vmatprep.subr.mxu0 0.0
    %2126 = vmatpush1.msra.mxu0 0.0
    %2127 = vmatprep.subr.mxu0 0.0
    %2128 = vmatpush1.msra.mxu0 0.0
    %2129 = vmatprep.subr.mxu0 0.0
    %2130 = vmatpush1.msra.mxu0 0.0
    %2131 = vmatprep.subr.mxu0 0.0
    %2132 = vmatpush1.msra.mxu0 0.0
    %2133 = vmatprep.subr.mxu0 0.0
    %2134 = vmatpush1.msra.mxu0 0.0
    %2135 = vmatprep.subr.mxu0 0.0
    %2136 = vmatpush1.msra.mxu0 0.0
    %2137 = vmatprep.subr.mxu0 0.0
    %2138 = vmatpush1.msra.mxu0 0.0
    %2139 = vmatprep.subr.mxu0 0.0
    %2140 = vmatpush1.msra.mxu0 0.0
    %2141 = vmatprep.subr.mxu0 0.0
    %2142 = vmatpush1.msra.mxu0 0.0
    %2143 = vmatprep.subr.mxu0 0.0
    %2144 = vmatpush1.msra.mxu0 0.0
    %2145 = vmatprep.subr.mxu0 0.0
    %2146 = vmatpush1.msra.mxu0 0.0
    %2147 = vmatprep.subr.mxu0 0.0
    %2148 = vmatpush1.msra.mxu0 0.0
    %2149 = vmatprep.subr.mxu0 0.0
    %2150 = vmatpush1.msra.mxu0 0.0
    %2151 = vmatprep.subr.mxu0 0.0
    %2152 = vmatpush1.msra.mxu0 0.0
    %2153 = vmatprep.subr.mxu0 0.0
    %2154 = vmatpush1.msra.mxu0 0.0
    %2155 = vmatprep.subr.mxu0 0.0
    %2156 = vmatpush1.msra.mxu0 0.0
    %2157 = vmatprep.subr.mxu0 0.0
    %2158 = vmatpush1.msra.mxu0 0.0
    %2159 = vmatprep.subr.mxu0 0.0
    %2160 = vmatpush1.msra.mxu0 0.0
    %2161 = vmatprep.subr.mxu0 0.0
    %2162 = vmatpush1.msra.mxu0 0.0
    %2163 = vmatprep.subr.mxu0 0.0
    %2164 = vmatpush1.msra.mxu0 0.0
    %2165 = vmatprep.subr.mxu0 0.0
    %2166 = vmatpush1.msra.mxu0 0.0
    %2167 = vmatprep.subr.mxu0 0.0
    %2168 = vmatpush1.msra.mxu0 0.0
    %2169 = vmatprep.subr.mxu0 0.0
    %2170 = vmatpush1.msra.mxu0 0.0
    %2171 = vmatprep.mubr.f32.mxu0 0.0
    %2172 = vmatmul.mubr.f32.gmra.mrb[0].mxu0 %v1965
    %v2173 = vpop.f32.mrb[0].mxu0
    %v2174 = vadd.f32 %v1130, %v2173
    %v2175 = vpop.f32.mrb[0].mxu0
    %2176 = vdwg.mxu0
    %v2177 = vadd.f32 %v177, %v2034
    %v2178 = vxor.u32 %v2177, 2147483648
    %v2179 = vmul.f32 %v2178, 1.442695
    %v2180 = vpow.pop %v2179
    %v2181 = vadd.f32 %v2180, 1.0
    %v2182 = vrcp.pop %v2181
    %v2183 = vmul.f32 1.0, %v2182
    %v2184 = vadd.f32 %v261, %v2104
    %v2185 = vxor.u32 %v2184, 2147483648
    %v2186 = vmul.f32 %v2185, 1.442695
    %v2187 = vpow.pop %v2186
    %v2188 = vadd.f32 %v2187, 1.0
    %v2189 = vrcp.pop %v2188
    %v2190 = vmul.f32 1.0, %v2189
    %v2191 = vmul.f32 %v2183, %v2174
    %v2192 = vadd.f32 %v345, %v2191
    %v2193 = vtanh.pop %v2192
    %v2194 = vsub.f32 1.0, %v2190
    %v2195 = vmul.f32 %v2194, %v2193
    %v2197 = vmul.f32 %v2190, %v1964
    %v2198 = vadd.f32 %v2195, %v2197
    %v2200 = vsel %vm94, %v2198, 0
    %2202 = vmatprep.subr.mxu0 0.0
    %2203 = vmatpush1.msra.mxu0 %v348
    %2204 = vmatprep.subr.mxu0 0.0
    %2205 = vmatpush1.msra.mxu0 %v349
    %2206 = vmatprep.subr.mxu0 0.0
    %2207 = vmatpush1.msra.mxu0 %v975
    %2208 = vmatprep.subr.mxu0 0.0
    %2209 = vmatpush1.msra.mxu0 0.0
    %2210 = vmatprep.subr.mxu0 0.0
    %2211 = vmatpush1.msra.mxu0 0.0
    %2212 = vmatprep.subr.mxu0 0.0
    %2213 = vmatpush1.msra.mxu0 0.0
    %2214 = vmatprep.subr.mxu0 0.0
    %2215 = vmatpush1.msra.mxu0 0.0
    %2216 = vmatprep.subr.mxu0 0.0
    %2217 = vmatpush1.msra.mxu0 0.0
    %2218 = vmatprep.subr.mxu0 0.0
    %2219 = vmatpush1.msra.mxu0 0.0
    %2220 = vmatprep.subr.mxu0 0.0
    %2221 = vmatpush1.msra.mxu0 0.0
    %2222 = vmatprep.subr.mxu0 0.0
    %2223 = vmatpush1.msra.mxu0 0.0
    %2224 = vmatprep.subr.mxu0 0.0
    %2225 = vmatpush1.msra.mxu0 0.0
    %2226 = vmatprep.subr.mxu0 0.0
    %2227 = vmatpush1.msra.mxu0 0.0
    %2228 = vmatprep.subr.mxu0 0.0
    %2229 = vmatpush1.msra.mxu0 0.0
    %2230 = vmatprep.subr.mxu0 0.0
    %2231 = vmatpush1.msra.mxu0 0.0
    %2232 = vmatprep.subr.mxu0 0.0
    %2233 = vmatpush1.msra.mxu0 0.0
    %2234 = vmatprep.subr.mxu0 0.0
    %2235 = vmatpush1.msra.mxu0 0.0
    %2236 = vmatprep.subr.mxu0 0.0
    %2237 = vmatpush1.msra.mxu0 0.0
    %2238 = vmatprep.subr.mxu0 0.0
    %2239 = vmatpush1.msra.mxu0 0.0
    %2240 = vmatprep.subr.mxu0 0.0
    %2241 = vmatpush1.msra.mxu0 0.0
    %2242 = vmatprep.subr.mxu0 0.0
    %2243 = vmatpush1.msra.mxu0 0.0
    %2244 = vmatprep.subr.mxu0 0.0
    %2245 = vmatpush1.msra.mxu0 0.0
    %2246 = vmatprep.subr.mxu0 0.0
    %2247 = vmatpush1.msra.mxu0 0.0
    %2248 = vmatprep.subr.mxu0 0.0
    %2249 = vmatpush1.msra.mxu0 0.0
    %2250 = vmatprep.subr.mxu0 0.0
    %2251 = vmatpush1.msra.mxu0 0.0
    %2252 = vmatprep.subr.mxu0 0.0
    %2253 = vmatpush1.msra.mxu0 0.0
    %2254 = vmatprep.subr.mxu0 0.0
    %2255 = vmatpush1.msra.mxu0 0.0
    %2256 = vmatprep.subr.mxu0 0.0
    %2257 = vmatpush1.msra.mxu0 0.0
    %2258 = vmatprep.subr.mxu0 0.0
    %2259 = vmatpush1.msra.mxu0 0.0
    %2260 = vmatprep.subr.mxu0 0.0
    %2261 = vmatpush1.msra.mxu0 0.0
    %2262 = vmatprep.subr.mxu0 0.0
    %2263 = vmatpush1.msra.mxu0 0.0
    %2264 = vmatprep.subr.mxu0 0.0
    %2265 = vmatpush1.msra.mxu0 0.0
    %2266 = vmatprep.mubr.f32.mxu0 0.0
    %2267 = vmatmul.mubr.f32.gmra.mrb[0].mxu0 %v2200
    %v2268 = vpop.f32.mrb[0].mxu0
    %v2269 = vadd.f32 %v969, %v2268
    %v2270 = vpop.f32.mrb[0].mxu0
    %2271 = vdwg.mxu0
    %2272 = vmatprep.subr.mxu0 0.0
    %2273 = vmatpush1.msra.mxu0 %v352
    %2274 = vmatprep.subr.mxu0 0.0
    %2275 = vmatpush1.msra.mxu0 %v353
    %2276 = vmatprep.subr.mxu0 0.0
    %2277 = vmatpush1.msra.mxu0 %v1054
    %2278 = vmatprep.subr.mxu0 0.0
    %2279 = vmatpush1.msra.mxu0 0.0
    %2280 = vmatprep.subr.mxu0 0.0
    %2281 = vmatpush1.msra.mxu0 0.0
    %2282 = vmatprep.subr.mxu0 0.0
    %2283 = vmatpush1.msra.mxu0 0.0
    %2284 = vmatprep.subr.mxu0 0.0
    %2285 = vmatpush1.msra.mxu0 0.0
    %2286 = vmatprep.subr.mxu0 0.0
    %2287 = vmatpush1.msra.mxu0 0.0
    %2288 = vmatprep.subr.mxu0 0.0
    %2289 = vmatpush1.msra.mxu0 0.0
    %2290 = vmatprep.subr.mxu0 0.0
    %2291 = vmatpush1.msra.mxu0 0.0
    %2292 = vmatprep.subr.mxu0 0.0
    %2293 = vmatpush1.msra.mxu0 0.0
    %2294 = vmatprep.subr.mxu0 0.0
    %2295 = vmatpush1.msra.mxu0 0.0
    %2296 = vmatprep.subr.mxu0 0.0
    %2297 = vmatpush1.msra.mxu0 0.0
    %2298 = vmatprep.subr.mxu0 0.0
    %2299 = vmatpush1.msra.mxu0 0.0
    %2300 = vmatprep.subr.mxu0 0.0
    %2301 = vmatpush1.msra.mxu0 0.0
    %2302 = vmatprep.subr.mxu0 0.0
    %2303 = vmatpush1.msra.mxu0 0.0
    %2304 = vmatprep.subr.mxu0 0.0
    %2305 = vmatpush1.msra.mxu0 0.0
    %2306 = vmatprep.subr.mxu0 0.0
    %2307 = vmatpush1.msra.mxu0 0.0
    %2308 = vmatprep.subr.mxu0 0.0
    %2309 = vmatpush1.msra.mxu0 0.0
    %2310 = vmatprep.subr.mxu0 0.0
    %2311 = vmatpush1.msra.mxu0 0.0
    %2312 = vmatprep.subr.mxu0 0.0
    %2313 = vmatpush1.msra.mxu0 0.0
    %2314 = vmatprep.subr.mxu0 0.0
    %2315 = vmatpush1.msra.mxu0 0.0
    %2316 = vmatprep.subr.mxu0 0.0
    %2317 = vmatpush1.msra.mxu0 0.0
    %2318 = vmatprep.subr.mxu0 0.0
    %2319 = vmatpush1.msra.mxu0 0.0
    %2320 = vmatprep.subr.mxu0 0.0
    %2321 = vmatpush1.msra.mxu0 0.0
    %2322 = vmatprep.subr.mxu0 0.0
    %2323 = vmatpush1.msra.mxu0 0.0
    %2324 = vmatprep.subr.mxu0 0.0
    %2325 = vmatpush1.msra.mxu0 0.0
    %2326 = vmatprep.subr.mxu0 0.0
    %2327 = vmatpush1.msra.mxu0 0.0
    %2328 = vmatprep.subr.mxu0 0.0
    %2329 = vmatpush1.msra.mxu0 0.0
    %2330 = vmatprep.subr.mxu0 0.0
    %2331 = vmatpush1.msra.mxu0 0.0
    %2332 = vmatprep.subr.mxu0 0.0
    %2333 = vmatpush1.msra.mxu0 0.0
    %2334 = vmatprep.subr.mxu0 0.0
    %2335 = vmatpush1.msra.mxu0 0.0
    %2336 = vmatprep.mubr.f32.mxu0 0.0
    %2337 = vmatmul.mubr.f32.gmra.mrb[0].mxu0 %v2200
    %v2338 = vpop.f32.mrb[0].mxu0
    %v2339 = vadd.f32 %v1051, %v2338
    %v2340 = vpop.f32.mrb[0].mxu0
    %2341 = vdwg.mxu0
    %2342 = vmatprep.subr.mxu0 0.0
    %2343 = vmatpush1.msra.mxu0 %v356
    %2344 = vmatprep.subr.mxu0 0.0
    %2345 = vmatpush1.msra.mxu0 %v357
    %2346 = vmatprep.subr.mxu0 0.0
    %2347 = vmatpush1.msra.mxu0 %v1133
    %2348 = vmatprep.subr.mxu0 0.0
    %2349 = vmatpush1.msra.mxu0 0.0
    %2350 = vmatprep.subr.mxu0 0.0
    %2351 = vmatpush1.msra.mxu0 0.0
    %2352 = vmatprep.subr.mxu0 0.0
    %2353 = vmatpush1.msra.mxu0 0.0
    %2354 = vmatprep.subr.mxu0 0.0
    %2355 = vmatpush1.msra.mxu0 0.0
    %2356 = vmatprep.subr.mxu0 0.0
    %2357 = vmatpush1.msra.mxu0 0.0
    %2358 = vmatprep.subr.mxu0 0.0
    %2359 = vmatpush1.msra.mxu0 0.0
    %2360 = vmatprep.subr.mxu0 0.0
    %2361 = vmatpush1.msra.mxu0 0.0
    %2362 = vmatprep.subr.mxu0 0.0
    %2363 = vmatpush1.msra.mxu0 0.0
    %2364 = vmatprep.subr.mxu0 0.0
    %2365 = vmatpush1.msra.mxu0 0.0
    %2366 = vmatprep.subr.mxu0 0.0
    %2367 = vmatpush1.msra.mxu0 0.0
    %2368 = vmatprep.subr.mxu0 0.0
    %2369 = vmatpush1.msra.mxu0 0.0
    %2370 = vmatprep.subr.mxu0 0.0
    %2371 = vmatpush1.msra.mxu0 0.0
    %2372 = vmatprep.subr.mxu0 0.0
    %2373 = vmatpush1.msra.mxu0 0.0
    %2374 = vmatprep.subr.mxu0 0.0
    %2375 = vmatpush1.msra.mxu0 0.0
    %2376 = vmatprep.subr.mxu0 0.0
    %2377 = vmatpush1.msra.mxu0 0.0
    %2378 = vmatprep.subr.mxu0 0.0
    %2379 = vmatpush1.msra.mxu0 0.0
    %2380 = vmatprep.subr.mxu0 0.0
    %2381 = vmatpush1.msra.mxu0 0.0
    %2382 = vmatprep.subr.mxu0 0.0
    %2383 = vmatpush1.msra.mxu0 0.0
    %2384 = vmatprep.subr.mxu0 0.0
    %2385 = vmatpush1.msra.mxu0 0.0
    %2386 = vmatprep.subr.mxu0 0.0
    %2387 = vmatpush1.msra.mxu0 0.0
    %2388 = vmatprep.subr.mxu0 0.0
    %2389 = vmatpush1.msra.mxu0 0.0
    %2390 = vmatprep.subr.mxu0 0.0
    %2391 = vmatpush1.msra.mxu0 0.0
    %2392 = vmatprep.subr.mxu0 0.0
    %2393 = vmatpush1.msra.mxu0 0.0
    %2394 = vmatprep.subr.mxu0 0.0
    %2395 = vmatpush1.msra.mxu0 0.0
    %2396 = vmatprep.subr.mxu0 0.0
    %2397 = vmatpush1.msra.mxu0 0.0
    %2398 = vmatprep.subr.mxu0 0.0
    %2399 = vmatpush1.msra.mxu0 0.0
    %2400 = vmatprep.subr.mxu0 0.0
    %2401 = vmatpush1.msra.mxu0 0.0
    %2402 = vmatprep.subr.mxu0 0.0
    %2403 = vmatpush1.msra.mxu0 0.0
    %2404 = vmatprep.subr.mxu0 0.0
    %2405 = vmatpush1.msra.mxu0 0.0
    %2406 = vmatprep.mubr.f32.mxu0 0.0
    %2407 = vmatmul.mubr.f32.gmra.mrb[0].mxu0 %v2200
    %v2408 = vpop.f32.mrb[0].mxu0
    %v2409 = vadd.f32 %v1130, %v2408
    %v2410 = vpop.f32.mrb[0].mxu0
    %2411 = vdwg.mxu0
    %v2413 = vrot.slane %v2269, 6
    %v2415 = vadd.f32 %v177, %v2413
    %v2416 = vxor.u32 %v2415, 2147483648
    %v2417 = vmul.f32 %v2416, 1.442695
    %v2418 = vpow.pop %v2417
    %v2419 = vadd.f32 %v2418, 1.0
    %v2420 = vrcp.pop %v2419
    %v2421 = vmul.f32 1.0, %v2420
    %v2423 = vrot.slane %v2339, 6
    %v2425 = vadd.f32 %v261, %v2423
    %v2426 = vxor.u32 %v2425, 2147483648
    %v2427 = vmul.f32 %v2426, 1.442695
    %v2428 = vpow.pop %v2427
    %v2429 = vadd.f32 %v2428, 1.0
    %v2430 = vrcp.pop %v2429
    %v2431 = vmul.f32 1.0, %v2430
    %v2433 = vrot.slane %v2409, 6
    %v2435 = vmul.f32 %v2421, %v2433
    %v2436 = vadd.f32 %v345, %v2435
    %v2437 = vtanh.pop %v2436
    %v2438 = vsub.f32 1.0, %v2431
    %v2439 = vmul.f32 %v2438, %v2437
    %v2440 = vrot.slane %v2198, 6
    %v2442 = vmul.f32 %v2431, %v2440
    %v2443 = vadd.f32 %v2439, %v2442
    %v2445 = vrot.slane %v2443, 2
    %v2446 = vsel %vm94, %v2445, 0
    %2448 = vmatprep.subr.mxu0 0.0
    %2449 = vmatpush1.msra.mxu0 %v348
    %2450 = vmatprep.subr.mxu0 0.0
    %2451 = vmatpush1.msra.mxu0 %v349
    %2452 = vmatprep.subr.mxu0 0.0
    %2453 = vmatpush1.msra.mxu0 %v975
    %2454 = vmatprep.subr.mxu0 0.0
    %2455 = vmatpush1.msra.mxu0 0.0
    %2456 = vmatprep.subr.mxu0 0.0
    %2457 = vmatpush1.msra.mxu0 0.0
    %2458 = vmatprep.subr.mxu0 0.0
    %2459 = vmatpush1.msra.mxu0 0.0
    %2460 = vmatprep.subr.mxu0 0.0
    %2461 = vmatpush1.msra.mxu0 0.0
    %2462 = vmatprep.subr.mxu0 0.0
    %2463 = vmatpush1.msra.mxu0 0.0
    %2464 = vmatprep.subr.mxu0 0.0
    %2465 = vmatpush1.msra.mxu0 0.0
    %2466 = vmatprep.subr.mxu0 0.0
    %2467 = vmatpush1.msra.mxu0 0.0
    %2468 = vmatprep.subr.mxu0 0.0
    %2469 = vmatpush1.msra.mxu0 0.0
    %2470 = vmatprep.subr.mxu0 0.0
    %2471 = vmatpush1.msra.mxu0 0.0
    %2472 = vmatprep.subr.mxu0 0.0
    %2473 = vmatpush1.msra.mxu0 0.0
    %2474 = vmatprep.subr.mxu0 0.0
    %2475 = vmatpush1.msra.mxu0 0.0
    %2476 = vmatprep.subr.mxu0 0.0
    %2477 = vmatpush1.msra.mxu0 0.0
    %2478 = vmatprep.subr.mxu0 0.0
    %2479 = vmatpush1.msra.mxu0 0.0
    %2480 = vmatprep.subr.mxu0 0.0
    %2481 = vmatpush1.msra.mxu0 0.0
    %2482 = vmatprep.subr.mxu0 0.0
    %2483 = vmatpush1.msra.mxu0 0.0
    %2484 = vmatprep.subr.mxu0 0.0
    %2485 = vmatpush1.msra.mxu0 0.0
    %2486 = vmatprep.subr.mxu0 0.0
    %2487 = vmatpush1.msra.mxu0 0.0
    %2488 = vmatprep.subr.mxu0 0.0
    %2489 = vmatpush1.msra.mxu0 0.0
    %2490 = vmatprep.subr.mxu0 0.0
    %2491 = vmatpush1.msra.mxu0 0.0
    %2492 = vmatprep.subr.mxu0 0.0
    %2493 = vmatpush1.msra.mxu0 0.0
    %2494 = vmatprep.subr.mxu0 0.0
    %2495 = vmatpush1.msra.mxu0 0.0
    %2496 = vmatprep.subr.mxu0 0.0
    %2497 = vmatpush1.msra.mxu0 0.0
    %2498 = vmatprep.subr.mxu0 0.0
    %2499 = vmatpush1.msra.mxu0 0.0
    %2500 = vmatprep.subr.mxu0 0.0
    %2501 = vmatpush1.msra.mxu0 0.0
    %2502 = vmatprep.subr.mxu0 0.0
    %2503 = vmatpush1.msra.mxu0 0.0
    %2504 = vmatprep.subr.mxu0 0.0
    %2505 = vmatpush1.msra.mxu0 0.0
    %2506 = vmatprep.subr.mxu0 0.0
    %2507 = vmatpush1.msra.mxu0 0.0
    %2508 = vmatprep.subr.mxu0 0.0
    %2509 = vmatpush1.msra.mxu0 0.0
    %2510 = vmatprep.subr.mxu0 0.0
    %2511 = vmatpush1.msra.mxu0 0.0
    %2512 = vmatprep.mubr.f32.mxu0 0.0
    %2513 = vmatmul.mubr.f32.gmra.mrb[0].mxu0 %v2446
    %v2514 = vpop.f32.mrb[0].mxu0
    %v2515 = vadd.f32 %v969, %v2514
    %v2516 = vpop.f32.mrb[0].mxu0
    %2517 = vdwg.mxu0
    %2518 = vmatprep.subr.mxu0 0.0
    %2519 = vmatpush1.msra.mxu0 %v352
    %2520 = vmatprep.subr.mxu0 0.0
    %2521 = vmatpush1.msra.mxu0 %v353
    %2522 = vmatprep.subr.mxu0 0.0
    %2523 = vmatpush1.msra.mxu0 %v1054
    %2524 = vmatprep.subr.mxu0 0.0
    %2525 = vmatpush1.msra.mxu0 0.0
    %2526 = vmatprep.subr.mxu0 0.0
    %2527 = vmatpush1.msra.mxu0 0.0
    %2528 = vmatprep.subr.mxu0 0.0
    %2529 = vmatpush1.msra.mxu0 0.0
    %2530 = vmatprep.subr.mxu0 0.0
    %2531 = vmatpush1.msra.mxu0 0.0
    %2532 = vmatprep.subr.mxu0 0.0
    %2533 = vmatpush1.msra.mxu0 0.0
    %2534 = vmatprep.subr.mxu0 0.0
    %2535 = vmatpush1.msra.mxu0 0.0
    %2536 = vmatprep.subr.mxu0 0.0
    %2537 = vmatpush1.msra.mxu0 0.0
    %2538 = vmatprep.subr.mxu0 0.0
    %2539 = vmatpush1.msra.mxu0 0.0
    %2540 = vmatprep.subr.mxu0 0.0
    %2541 = vmatpush1.msra.mxu0 0.0
    %2542 = vmatprep.subr.mxu0 0.0
    %2543 = vmatpush1.msra.mxu0 0.0
    %2544 = vmatprep.subr.mxu0 0.0
    %2545 = vmatpush1.msra.mxu0 0.0
    %2546 = vmatprep.subr.mxu0 0.0
    %2547 = vmatpush1.msra.mxu0 0.0
    %2548 = vmatprep.subr.mxu0 0.0
    %2549 = vmatpush1.msra.mxu0 0.0
    %2550 = vmatprep.subr.mxu0 0.0
    %2551 = vmatpush1.msra.mxu0 0.0
    %2552 = vmatprep.subr.mxu0 0.0
    %2553 = vmatpush1.msra.mxu0 0.0
    %2554 = vmatprep.subr.mxu0 0.0
    %2555 = vmatpush1.msra.mxu0 0.0
    %2556 = vmatprep.subr.mxu0 0.0
    %2557 = vmatpush1.msra.mxu0 0.0
    %2558 = vmatprep.subr.mxu0 0.0
    %2559 = vmatpush1.msra.mxu0 0.0
    %2560 = vmatprep.subr.mxu0 0.0
    %2561 = vmatpush1.msra.mxu0 0.0
    %2562 = vmatprep.subr.mxu0 0.0
    %2563 = vmatpush1.msra.mxu0 0.0
    %2564 = vmatprep.subr.mxu0 0.0
    %2565 = vmatpush1.msra.mxu0 0.0
    %2566 = vmatprep.subr.mxu0 0.0
    %2567 = vmatpush1.msra.mxu0 0.0
    %2568 = vmatprep.subr.mxu0 0.0
    %2569 = vmatpush1.msra.mxu0 0.0
    %2570 = vmatprep.subr.mxu0 0.0
    %2571 = vmatpush1.msra.mxu0 0.0
    %2572 = vmatprep.subr.mxu0 0.0
    %2573 = vmatpush1.msra.mxu0 0.0
    %2574 = vmatprep.subr.mxu0 0.0
    %2575 = vmatpush1.msra.mxu0 0.0
    %2576 = vmatprep.subr.mxu0 0.0
    %2577 = vmatpush1.msra.mxu0 0.0
    %2578 = vmatprep.subr.mxu0 0.0
    %2579 = vmatpush1.msra.mxu0 0.0
    %2580 = vmatprep.subr.mxu0 0.0
    %2581 = vmatpush1.msra.mxu0 0.0
    %2582 = vmatprep.mubr.f32.mxu0 0.0
    %2583 = vmatmul.mubr.f32.gmra.mrb[0].mxu0 %v2446
    %v2584 = vpop.f32.mrb[0].mxu0
    %v2585 = vadd.f32 %v1051, %v2584
    %v2586 = vpop.f32.mrb[0].mxu0
    %2587 = vdwg.mxu0
    %2588 = vmatprep.subr.mxu0 0.0
    %2589 = vmatpush1.msra.mxu0 %v356
    %2590 = vmatprep.subr.mxu0 0.0
    %2591 = vmatpush1.msra.mxu0 %v357
    %2592 = vmatprep.subr.mxu0 0.0
    %2593 = vmatpush1.msra.mxu0 %v1133
    %2594 = vmatprep.subr.mxu0 0.0
    %2595 = vmatpush1.msra.mxu0 0.0
    %2596 = vmatprep.subr.mxu0 0.0
    %2597 = vmatpush1.msra.mxu0 0.0
    %2598 = vmatprep.subr.mxu0 0.0
    %2599 = vmatpush1.msra.mxu0 0.0
    %2600 = vmatprep.subr.mxu0 0.0
    %2601 = vmatpush1.msra.mxu0 0.0
    %2602 = vmatprep.subr.mxu0 0.0
    %2603 = vmatpush1.msra.mxu0 0.0
    %2604 = vmatprep.subr.mxu0 0.0
    %2605 = vmatpush1.msra.mxu0 0.0
    %2606 = vmatprep.subr.mxu0 0.0
    %2607 = vmatpush1.msra.mxu0 0.0
    %2608 = vmatprep.subr.mxu0 0.0
    %2609 = vmatpush1.msra.mxu0 0.0
    %2610 = vmatprep.subr.mxu0 0.0
    %2611 = vmatpush1.msra.mxu0 0.0
    %2612 = vmatprep.subr.mxu0 0.0
    %2613 = vmatpush1.msra.mxu0 0.0
    %2614 = vmatprep.subr.mxu0 0.0
    %2615 = vmatpush1.msra.mxu0 0.0
    %2616 = vmatprep.subr.mxu0 0.0
    %2617 = vmatpush1.msra.mxu0 0.0
    %2618 = vmatprep.subr.mxu0 0.0
    %2619 = vmatpush1.msra.mxu0 0.0
    %2620 = vmatprep.subr.mxu0 0.0
    %2621 = vmatpush1.msra.mxu0 0.0
    %2622 = vmatprep.subr.mxu0 0.0
    %2623 = vmatpush1.msra.mxu0 0.0
    %2624 = vmatprep.subr.mxu0 0.0
    %2625 = vmatpush1.msra.mxu0 0.0
    %2626 = vmatprep.subr.mxu0 0.0
    %2627 = vmatpush1.msra.mxu0 0.0
    %2628 = vmatprep.subr.mxu0 0.0
    %2629 = vmatpush1.msra.mxu0 0.0
    %2630 = vmatprep.subr.mxu0 0.0
    %2631 = vmatpush1.msra.mxu0 0.0
    %2632 = vmatprep.subr.mxu0 0.0
    %2633 = vmatpush1.msra.mxu0 0.0
    %2634 = vmatprep.subr.mxu0 0.0
    %2635 = vmatpush1.msra.mxu0 0.0
    %2636 = vmatprep.subr.mxu0 0.0
    %2637 = vmatpush1.msra.mxu0 0.0
    %2638 = vmatprep.subr.mxu0 0.0
    %2639 = vmatpush1.msra.mxu0 0.0
    %2640 = vmatprep.subr.mxu0 0.0
    %2641 = vmatpush1.msra.mxu0 0.0
    %2642 = vmatprep.subr.mxu0 0.0
    %2643 = vmatpush1.msra.mxu0 0.0
    %2644 = vmatprep.subr.mxu0 0.0
    %2645 = vmatpush1.msra.mxu0 0.0
    %2646 = vmatprep.subr.mxu0 0.0
    %2647 = vmatpush1.msra.mxu0 0.0
    %2648 = vmatprep.subr.mxu0 0.0
    %2649 = vmatpush1.msra.mxu0 0.0
    %2650 = vmatprep.subr.mxu0 0.0
    %2651 = vmatpush1.msra.mxu0 0.0
    %2652 = vmatprep.mubr.f32.mxu0 0.0
    %2653 = vmatmul.mubr.f32.gmra.mrb[0].mxu0 %v2446
    %v2654 = vpop.f32.mrb[0].mxu0
    %v2655 = vadd.f32 %v1130, %v2654
    %v2656 = vpop.f32.mrb[0].mxu0
    %2657 = vdwg.mxu0
    %v2659 = vrot.slane %v2515, 4
    %v2661 = vadd.f32 %v177, %v2659
    %v2662 = vxor.u32 %v2661, 2147483648
    %v2663 = vmul.f32 %v2662, 1.442695
    %v2664 = vpow.pop %v2663
    %v2665 = vadd.f32 %v2664, 1.0
    %v2666 = vrcp.pop %v2665
    %v2667 = vmul.f32 1.0, %v2666
    %v2669 = vrot.slane %v2585, 4
    %v2671 = vadd.f32 %v261, %v2669
    %v2672 = vxor.u32 %v2671, 2147483648
    %v2673 = vmul.f32 %v2672, 1.442695
    %v2674 = vpow.pop %v2673
    %v2675 = vadd.f32 %v2674, 1.0
    %v2676 = vrcp.pop %v2675
    %v2677 = vmul.f32 1.0, %v2676
    %v2679 = vrot.slane %v2655, 4
    %v2681 = vmul.f32 %v2667, %v2679
    %v2682 = vadd.f32 %v345, %v2681
    %v2683 = vtanh.pop %v2682
    %v2684 = vsub.f32 1.0, %v2677
    %v2685 = vmul.f32 %v2684, %v2683
    %v2686 = vrot.slane %v2443, 6
    %v2688 = vmul.f32 %v2677, %v2686
    %v2689 = vadd.f32 %v2685, %v2688
    %v2691 = vrot.slane %v2689, 4
    %v2692 = vsel %vm94, %v2691, 0
    %2694 = vmatprep.subr.mxu0 0.0
    %2695 = vmatpush1.msra.mxu0 %v348
    %2696 = vmatprep.subr.mxu0 0.0
    %2697 = vmatpush1.msra.mxu0 %v349
    %2698 = vmatprep.subr.mxu0 0.0
    %2699 = vmatpush1.msra.mxu0 %v975
    %2700 = vmatprep.subr.mxu0 0.0
    %2701 = vmatpush1.msra.mxu0 0.0
    %2702 = vmatprep.subr.mxu0 0.0
    %2703 = vmatpush1.msra.mxu0 0.0
    %2704 = vmatprep.subr.mxu0 0.0
    %2705 = vmatpush1.msra.mxu0 0.0
    %2706 = vmatprep.subr.mxu0 0.0
    %2707 = vmatpush1.msra.mxu0 0.0
    %2708 = vmatprep.subr.mxu0 0.0
    %2709 = vmatpush1.msra.mxu0 0.0
    %2710 = vmatprep.subr.mxu0 0.0
    %2711 = vmatpush1.msra.mxu0 0.0
    %2712 = vmatprep.subr.mxu0 0.0
    %2713 = vmatpush1.msra.mxu0 0.0
    %2714 = vmatprep.subr.mxu0 0.0
    %2715 = vmatpush1.msra.mxu0 0.0
    %2716 = vmatprep.subr.mxu0 0.0
    %2717 = vmatpush1.msra.mxu0 0.0
    %2718 = vmatprep.subr.mxu0 0.0
    %2719 = vmatpush1.msra.mxu0 0.0
    %2720 = vmatprep.subr.mxu0 0.0
    %2721 = vmatpush1.msra.mxu0 0.0
    %2722 = vmatprep.subr.mxu0 0.0
    %2723 = vmatpush1.msra.mxu0 0.0
    %2724 = vmatprep.subr.mxu0 0.0
    %2725 = vmatpush1.msra.mxu0 0.0
    %2726 = vmatprep.subr.mxu0 0.0
    %2727 = vmatpush1.msra.mxu0 0.0
    %2728 = vmatprep.subr.mxu0 0.0
    %2729 = vmatpush1.msra.mxu0 0.0
    %2730 = vmatprep.subr.mxu0 0.0
    %2731 = vmatpush1.msra.mxu0 0.0
    %2732 = vmatprep.subr.mxu0 0.0
    %2733 = vmatpush1.msra.mxu0 0.0
    %2734 = vmatprep.subr.mxu0 0.0
    %2735 = vmatpush1.msra.mxu0 0.0
    %2736 = vmatprep.subr.mxu0 0.0
    %2737 = vmatpush1.msra.mxu0 0.0
    %2738 = vmatprep.subr.mxu0 0.0
    %2739 = vmatpush1.msra.mxu0 0.0
    %2740 = vmatprep.subr.mxu0 0.0
    %2741 = vmatpush1.msra.mxu0 0.0
    %2742 = vmatprep.subr.mxu0 0.0
    %2743 = vmatpush1.msra.mxu0 0.0
    %2744 = vmatprep.subr.mxu0 0.0
    %2745 = vmatpush1.msra.mxu0 0.0
    %2746 = vmatprep.subr.mxu0 0.0
    %2747 = vmatpush1.msra.mxu0 0.0
    %2748 = vmatprep.subr.mxu0 0.0
    %2749 = vmatpush1.msra.mxu0 0.0
    %2750 = vmatprep.subr.mxu0 0.0
    %2751 = vmatpush1.msra.mxu0 0.0
    %2752 = vmatprep.subr.mxu0 0.0
    %2753 = vmatpush1.msra.mxu0 0.0
    %2754 = vmatprep.subr.mxu0 0.0
    %2755 = vmatpush1.msra.mxu0 0.0
    %2756 = vmatprep.subr.mxu0 0.0
    %2757 = vmatpush1.msra.mxu0 0.0
    %2758 = vmatprep.mubr.f32.mxu0 0.0
    %2759 = vmatmul.mubr.f32.gmra.mrb[0].mxu0 %v2692
    %v2760 = vpop.f32.mrb[0].mxu0
    %v2761 = vadd.f32 %v969, %v2760
    %v2762 = vpop.f32.mrb[0].mxu0
    %2763 = vdwg.mxu0
    %2764 = vmatprep.subr.mxu0 0.0
    %2765 = vmatpush1.msra.mxu0 %v352
    %2766 = vmatprep.subr.mxu0 0.0
    %2767 = vmatpush1.msra.mxu0 %v353
    %2768 = vmatprep.subr.mxu0 0.0
    %2769 = vmatpush1.msra.mxu0 %v1054
    %2770 = vmatprep.subr.mxu0 0.0
    %2771 = vmatpush1.msra.mxu0 0.0
    %2772 = vmatprep.subr.mxu0 0.0
    %2773 = vmatpush1.msra.mxu0 0.0
    %2774 = vmatprep.subr.mxu0 0.0
    %2775 = vmatpush1.msra.mxu0 0.0
    %2776 = vmatprep.subr.mxu0 0.0
    %2777 = vmatpush1.msra.mxu0 0.0
    %2778 = vmatprep.subr.mxu0 0.0
    %2779 = vmatpush1.msra.mxu0 0.0
    %2780 = vmatprep.subr.mxu0 0.0
    %2781 = vmatpush1.msra.mxu0 0.0
    %2782 = vmatprep.subr.mxu0 0.0
    %2783 = vmatpush1.msra.mxu0 0.0
    %2784 = vmatprep.subr.mxu0 0.0
    %2785 = vmatpush1.msra.mxu0 0.0
    %2786 = vmatprep.subr.mxu0 0.0
    %2787 = vmatpush1.msra.mxu0 0.0
    %2788 = vmatprep.subr.mxu0 0.0
    %2789 = vmatpush1.msra.mxu0 0.0
    %2790 = vmatprep.subr.mxu0 0.0
    %2791 = vmatpush1.msra.mxu0 0.0
    %2792 = vmatprep.subr.mxu0 0.0
    %2793 = vmatpush1.msra.mxu0 0.0
    %2794 = vmatprep.subr.mxu0 0.0
    %2795 = vmatpush1.msra.mxu0 0.0
    %2796 = vmatprep.subr.mxu0 0.0
    %2797 = vmatpush1.msra.mxu0 0.0
    %2798 = vmatprep.subr.mxu0 0.0
    %2799 = vmatpush1.msra.mxu0 0.0
    %2800 = vmatprep.subr.mxu0 0.0
    %2801 = vmatpush1.msra.mxu0 0.0
    %2802 = vmatprep.subr.mxu0 0.0
    %2803 = vmatpush1.msra.mxu0 0.0
    %2804 = vmatprep.subr.mxu0 0.0
    %2805 = vmatpush1.msra.mxu0 0.0
    %2806 = vmatprep.subr.mxu0 0.0
    %2807 = vmatpush1.msra.mxu0 0.0
    %2808 = vmatprep.subr.mxu0 0.0
    %2809 = vmatpush1.msra.mxu0 0.0
    %2810 = vmatprep.subr.mxu0 0.0
    %2811 = vmatpush1.msra.mxu0 0.0
    %2812 = vmatprep.subr.mxu0 0.0
    %2813 = vmatpush1.msra.mxu0 0.0
    %2814 = vmatprep.subr.mxu0 0.0
    %2815 = vmatpush1.msra.mxu0 0.0
    %2816 = vmatprep.subr.mxu0 0.0
    %2817 = vmatpush1.msra.mxu0 0.0
    %2818 = vmatprep.subr.mxu0 0.0
    %2819 = vmatpush1.msra.mxu0 0.0
    %2820 = vmatprep.subr.mxu0 0.0
    %2821 = vmatpush1.msra.mxu0 0.0
    %2822 = vmatprep.subr.mxu0 0.0
    %2823 = vmatpush1.msra.mxu0 0.0
    %2824 = vmatprep.subr.mxu0 0.0
    %2825 = vmatpush1.msra.mxu0 0.0
    %2826 = vmatprep.subr.mxu0 0.0
    %2827 = vmatpush1.msra.mxu0 0.0
    %2828 = vmatprep.mubr.f32.mxu0 0.0
    %2829 = vmatmul.mubr.f32.gmra.mrb[0].mxu0 %v2692
    %v2830 = vpop.f32.mrb[0].mxu0
    %v2831 = vadd.f32 %v1051, %v2830
    %v2832 = vpop.f32.mrb[0].mxu0
    %2833 = vdwg.mxu0
    %2834 = vmatprep.subr.mxu0 0.0
    %2835 = vmatpush1.msra.mxu0 %v356
    %2836 = vmatprep.subr.mxu0 0.0
    %2837 = vmatpush1.msra.mxu0 %v357
    %2838 = vmatprep.subr.mxu0 0.0
    %2839 = vmatpush1.msra.mxu0 %v1133
    %2840 = vmatprep.subr.mxu0 0.0
    %2841 = vmatpush1.msra.mxu0 0.0
    %2842 = vmatprep.subr.mxu0 0.0
    %2843 = vmatpush1.msra.mxu0 0.0
    %2844 = vmatprep.subr.mxu0 0.0
    %2845 = vmatpush1.msra.mxu0 0.0
    %2846 = vmatprep.subr.mxu0 0.0
    %2847 = vmatpush1.msra.mxu0 0.0
    %2848 = vmatprep.subr.mxu0 0.0
    %2849 = vmatpush1.msra.mxu0 0.0
    %2850 = vmatprep.subr.mxu0 0.0
    %2851 = vmatpush1.msra.mxu0 0.0
    %2852 = vmatprep.subr.mxu0 0.0
    %2853 = vmatpush1.msra.mxu0 0.0
    %2854 = vmatprep.subr.mxu0 0.0
    %2855 = vmatpush1.msra.mxu0 0.0
    %2856 = vmatprep.subr.mxu0 0.0
    %2857 = vmatpush1.msra.mxu0 0.0
    %2858 = vmatprep.subr.mxu0 0.0
    %2859 = vmatpush1.msra.mxu0 0.0
    %2860 = vmatprep.subr.mxu0 0.0
    %2861 = vmatpush1.msra.mxu0 0.0
    %2862 = vmatprep.subr.mxu0 0.0
    %2863 = vmatpush1.msra.mxu0 0.0
    %2864 = vmatprep.subr.mxu0 0.0
    %2865 = vmatpush1.msra.mxu0 0.0
    %2866 = vmatprep.subr.mxu0 0.0
    %2867 = vmatpush1.msra.mxu0 0.0
    %2868 = vmatprep.subr.mxu0 0.0
    %2869 = vmatpush1.msra.mxu0 0.0
    %2870 = vmatprep.subr.mxu0 0.0
    %2871 = vmatpush1.msra.mxu0 0.0
    %2872 = vmatprep.subr.mxu0 0.0
    %2873 = vmatpush1.msra.mxu0 0.0
    %2874 = vmatprep.subr.mxu0 0.0
    %2875 = vmatpush1.msra.mxu0 0.0
    %2876 = vmatprep.subr.mxu0 0.0
    %2877 = vmatpush1.msra.mxu0 0.0
    %2878 = vmatprep.subr.mxu0 0.0
    %2879 = vmatpush1.msra.mxu0 0.0
    %2880 = vmatprep.subr.mxu0 0.0
    %2881 = vmatpush1.msra.mxu0 0.0
    %2882 = vmatprep.subr.mxu0 0.0
    %2883 = vmatpush1.msra.mxu0 0.0
    %2884 = vmatprep.subr.mxu0 0.0
    %2885 = vmatpush1.msra.mxu0 0.0
    %2886 = vmatprep.subr.mxu0 0.0
    %2887 = vmatpush1.msra.mxu0 0.0
    %2888 = vmatprep.subr.mxu0 0.0
    %2889 = vmatpush1.msra.mxu0 0.0
    %2890 = vmatprep.subr.mxu0 0.0
    %2891 = vmatpush1.msra.mxu0 0.0
    %2892 = vmatprep.subr.mxu0 0.0
    %2893 = vmatpush1.msra.mxu0 0.0
    %2894 = vmatprep.subr.mxu0 0.0
    %2895 = vmatpush1.msra.mxu0 0.0
    %2896 = vmatprep.subr.mxu0 0.0
    %2897 = vmatpush1.msra.mxu0 0.0
    %2898 = vmatprep.mubr.f32.mxu0 0.0
    %2899 = vmatmul.mubr.f32.gmra.mrb[0].mxu0 %v2692
    %v2900 = vpop.f32.mrb[0].mxu0
    %v2901 = vadd.f32 %v1130, %v2900
    %v2902 = vpop.f32.mrb[0].mxu0
    %2903 = vdwg.mxu0
    %v2905 = vrot.slane %v2761, 2
    %v2907 = vadd.f32 %v177, %v2905
    %v2908 = vxor.u32 %v2907, 2147483648
    %v2909 = vmul.f32 %v2908, 1.442695
    %v2910 = vpow.pop %v2909
    %v2911 = vadd.f32 %v2910, 1.0
    %v2912 = vrcp.pop %v2911
    %v2913 = vmul.f32 1.0, %v2912
    %v2915 = vrot.slane %v2831, 2
    %v2917 = vadd.f32 %v261, %v2915
    %v2918 = vxor.u32 %v2917, 2147483648
    %v2919 = vmul.f32 %v2918, 1.442695
    %v2920 = vpow.pop %v2919
    %v2921 = vadd.f32 %v2920, 1.0
    %v2922 = vrcp.pop %v2921
    %v2923 = vmul.f32 1.0, %v2922
    %v2925 = vrot.slane %v2901, 2
    %v2927 = vmul.f32 %v2913, %v2925
    %v2928 = vadd.f32 %v345, %v2927
    %v2929 = vtanh.pop %v2928
    %v2930 = vsub.f32 1.0, %v2923
    %v2931 = vmul.f32 %v2930, %v2929
    %v2932 = vrot.slane %v2689, 6
    %v2934 = vmul.f32 %v2923, %v2932
    %v2935 = vadd.f32 %v2931, %v2934
    %2937 = vset.pattern.permute.xlu0 0
    %2938 = vperm.xlu0 %2937, %v964
    %v2939 = vpop.permute.xlu0 %2938
    %v2942 = vrot.slane %v2935, 6
    %v2944 = vmul.f32 %v2939, %v2942
    %v2946 = vlaneseq
    %v2947 = vshrl.u32 %v2946, 7
    %v2948 = vsub.s32 0, %v2947
    %v2949 = vrot.slane %v441, %v2948
    %v2951 = vsel %vm94, %v477, 0
    %v2954 = vsel %vm101, %v386, 0
    %2956 = vmatprep.subr.mxu0 0.0
    %2957 = vmatpush1.msra.mxu0 %v384
    %2958 = vmatprep.subr.mxu0 0.0
    %2959 = vmatpush1.msra.mxu0 %v385
    %2960 = vmatprep.subr.mxu0 0.0
    %2961 = vmatpush1.msra.mxu0 %v2954
    %2962 = vmatprep.subr.mxu0 0.0
    %2963 = vmatpush1.msra.mxu0 0.0
    %2964 = vmatprep.subr.mxu0 0.0
    %2965 = vmatpush1.msra.mxu0 0.0
    %2966 = vmatprep.subr.mxu0 0.0
    %2967 = vmatpush1.msra.mxu0 0.0
    %2968 = vmatprep.subr.mxu0 0.0
    %2969 = vmatpush1.msra.mxu0 0.0
    %2970 = vmatprep.subr.mxu0 0.0
    %2971 = vmatpush1.msra.mxu0 0.0
    %2972 = vmatprep.subr.mxu0 0.0
    %2973 = vmatpush1.msra.mxu0 0.0
    %2974 = vmatprep.subr.mxu0 0.0
    %2975 = vmatpush1.msra.mxu0 0.0
    %2976 = vmatprep.subr.mxu0 0.0
    %2977 = vmatpush1.msra.mxu0 0.0
    %2978 = vmatprep.subr.mxu0 0.0
    %2979 = vmatpush1.msra.mxu0 0.0
    %2980 = vmatprep.subr.mxu0 0.0
    %2981 = vmatpush1.msra.mxu0 0.0
    %2982 = vmatprep.subr.mxu0 0.0
    %2983 = vmatpush1.msra.mxu0 0.0
    %2984 = vmatprep.subr.mxu0 0.0
    %2985 = vmatpush1.msra.mxu0 0.0
    %2986 = vmatprep.subr.mxu0 0.0
    %2987 = vmatpush1.msra.mxu0 0.0
    %2988 = vmatprep.subr.mxu0 0.0
    %2989 = vmatpush1.msra.mxu0 0.0
    %2990 = vmatprep.subr.mxu0 0.0
    %2991 = vmatpush1.msra.mxu0 0.0
    %2992 = vmatprep.subr.mxu0 0.0
    %2993 = vmatpush1.msra.mxu0 0.0
    %2994 = vmatprep.subr.mxu0 0.0
    %2995 = vmatpush1.msra.mxu0 0.0
    %2996 = vmatprep.subr.mxu0 0.0
    %2997 = vmatpush1.msra.mxu0 0.0
    %2998 = vmatprep.subr.mxu0 0.0
    %2999 = vmatpush1.msra.mxu0 0.0
    %3000 = vmatprep.subr.mxu0 0.0
    %3001 = vmatpush1.msra.mxu0 0.0
    %3002 = vmatprep.subr.mxu0 0.0
    %3003 = vmatpush1.msra.mxu0 0.0
    %3004 = vmatprep.subr.mxu0 0.0
    %3005 = vmatpush1.msra.mxu0 0.0
    %3006 = vmatprep.subr.mxu0 0.0
    %3007 = vmatpush1.msra.mxu0 0.0
    %3008 = vmatprep.subr.mxu0 0.0
    %3009 = vmatpush1.msra.mxu0 0.0
    %3010 = vmatprep.subr.mxu0 0.0
    %3011 = vmatpush1.msra.mxu0 0.0
    %3012 = vmatprep.subr.mxu0 0.0
    %3013 = vmatpush1.msra.mxu0 0.0
    %3014 = vmatprep.subr.mxu0 0.0
    %3015 = vmatpush1.msra.mxu0 0.0
    %3016 = vmatprep.subr.mxu0 0.0
    %3017 = vmatpush1.msra.mxu0 0.0
    %3018 = vmatprep.subr.mxu0 0.0
    %3019 = vmatpush1.msra.mxu0 0.0
    %3020 = vmatprep.mubr.f32.mxu0 0.0
    %3021 = vmatmul.mubr.f32.gmra.mrb[0].mxu0 %v2951
    %v3022 = vpop.f32.mrb[0].mxu0
    %v3023 = vadd.f32 %v2949, %v3022
    %v3024 = vpop.f32.mrb[0].mxu0
    %3025 = vdwg.mxu0
    %v3027 = vlaneseq
    %v3028 = vshrl.u32 %v3027, 7
    %v3029 = vsub.s32 0, %v3028
    %v3030 = vrot.slane %v450, %v3029
    %v3033 = vsel %vm94, %v2944, 0
    %v3036 = vsel %vm101, %v405, 0
    %3038 = vmatprep.subr.mxu0 0.0
    %3039 = vmatpush1.msra.mxu0 %v403
    %3040 = vmatprep.subr.mxu0 0.0
    %3041 = vmatpush1.msra.mxu0 %v404
    %3042 = vmatprep.subr.mxu0 0.0
    %3043 = vmatpush1.msra.mxu0 %v3036
    %3044 = vmatprep.subr.mxu0 0.0
    %3045 = vmatpush1.msra.mxu0 0.0
    %3046 = vmatprep.subr.mxu0 0.0
    %3047 = vmatpush1.msra.mxu0 0.0
    %3048 = vmatprep.subr.mxu0 0.0
    %3049 = vmatpush1.msra.mxu0 0.0
    %3050 = vmatprep.subr.mxu0 0.0
    %3051 = vmatpush1.msra.mxu0 0.0
    %3052 = vmatprep.subr.mxu0 0.0
    %3053 = vmatpush1.msra.mxu0 0.0
    %3054 = vmatprep.subr.mxu0 0.0
    %3055 = vmatpush1.msra.mxu0 0.0
    %3056 = vmatprep.subr.mxu0 0.0
    %3057 = vmatpush1.msra.mxu0 0.0
    %3058 = vmatprep.subr.mxu0 0.0
    %3059 = vmatpush1.msra.mxu0 0.0
    %3060 = vmatprep.subr.mxu0 0.0
    %3061 = vmatpush1.msra.mxu0 0.0
    %3062 = vmatprep.subr.mxu0 0.0
    %3063 = vmatpush1.msra.mxu0 0.0
    %3064 = vmatprep.subr.mxu0 0.0
    %3065 = vmatpush1.msra.mxu0 0.0
    %3066 = vmatprep.subr.mxu0 0.0
    %3067 = vmatpush1.msra.mxu0 0.0
    %3068 = vmatprep.subr.mxu0 0.0
    %3069 = vmatpush1.msra.mxu0 0.0
    %3070 = vmatprep.subr.mxu0 0.0
    %3071 = vmatpush1.msra.mxu0 0.0
    %3072 = vmatprep.subr.mxu0 0.0
    %3073 = vmatpush1.msra.mxu0 0.0
    %3074 = vmatprep.subr.mxu0 0.0
    %3075 = vmatpush1.msra.mxu0 0.0
    %3076 = vmatprep.subr.mxu0 0.0
    %3077 = vmatpush1.msra.mxu0 0.0
    %3078 = vmatprep.subr.mxu0 0.0
    %3079 = vmatpush1.msra.mxu0 0.0
    %3080 = vmatprep.subr.mxu0 0.0
    %3081 = vmatpush1.msra.mxu0 0.0
    %3082 = vmatprep.subr.mxu0 0.0
    %3083 = vmatpush1.msra.mxu0 0.0
    %3084 = vmatprep.subr.mxu0 0.0
    %3085 = vmatpush1.msra.mxu0 0.0
    %3086 = vmatprep.subr.mxu0 0.0
    %3087 = vmatpush1.msra.mxu0 0.0
    %3088 = vmatprep.subr.mxu0 0.0
    %3089 = vmatpush1.msra.mxu0 0.0
    %3090 = vmatprep.subr.mxu0 0.0
    %3091 = vmatpush1.msra.mxu0 0.0
    %3092 = vmatprep.subr.mxu0 0.0
    %3093 = vmatpush1.msra.mxu0 0.0
    %3094 = vmatprep.subr.mxu0 0.0
    %3095 = vmatpush1.msra.mxu0 0.0
    %3096 = vmatprep.subr.mxu0 0.0
    %3097 = vmatpush1.msra.mxu0 0.0
    %3098 = vmatprep.subr.mxu0 0.0
    %3099 = vmatpush1.msra.mxu0 0.0
    %3100 = vmatprep.subr.mxu0 0.0
    %3101 = vmatpush1.msra.mxu0 0.0
    %3102 = vmatprep.mubr.f32.mxu0 0.0
    %3103 = vmatmul.mubr.f32.gmra.mrb[0].mxu0 %v3033
    %v3104 = vpop.f32.mrb[0].mxu0
    %v3105 = vadd.f32 %v3030, %v3104
    %v3106 = vpop.f32.mrb[0].mxu0
    %3107 = vdwg.mxu0
    %v3109 = vlaneseq
    %v3110 = vshrl.u32 %v3109, 7
    %v3111 = vsub.s32 0, %v3110
    %v3112 = vrot.slane %v459, %v3111
    %v3115 = vsel %vm101, %v424, 0
    %3117 = vmatprep.subr.mxu0 0.0
    %3118 = vmatpush1.msra.mxu0 %v422
    %3119 = vmatprep.subr.mxu0 0.0
    %3120 = vmatpush1.msra.mxu0 %v423
    %3121 = vmatprep.subr.mxu0 0.0
    %3122 = vmatpush1.msra.mxu0 %v3115
    %3123 = vmatprep.subr.mxu0 0.0
    %3124 = vmatpush1.msra.mxu0 0.0
    %3125 = vmatprep.subr.mxu0 0.0
    %3126 = vmatpush1.msra.mxu0 0.0
    %3127 = vmatprep.subr.mxu0 0.0
    %3128 = vmatpush1.msra.mxu0 0.0
    %3129 = vmatprep.subr.mxu0 0.0
    %3130 = vmatpush1.msra.mxu0 0.0
    %3131 = vmatprep.subr.mxu0 0.0
    %3132 = vmatpush1.msra.mxu0 0.0
    %3133 = vmatprep.subr.mxu0 0.0
    %3134 = vmatpush1.msra.mxu0 0.0
    %3135 = vmatprep.subr.mxu0 0.0
    %3136 = vmatpush1.msra.mxu0 0.0
    %3137 = vmatprep.subr.mxu0 0.0
    %3138 = vmatpush1.msra.mxu0 0.0
    %3139 = vmatprep.subr.mxu0 0.0
    %3140 = vmatpush1.msra.mxu0 0.0
    %3141 = vmatprep.subr.mxu0 0.0
    %3142 = vmatpush1.msra.mxu0 0.0
    %3143 = vmatprep.subr.mxu0 0.0
    %3144 = vmatpush1.msra.mxu0 0.0
    %3145 = vmatprep.subr.mxu0 0.0
    %3146 = vmatpush1.msra.mxu0 0.0
    %3147 = vmatprep.subr.mxu0 0.0
    %3148 = vmatpush1.msra.mxu0 0.0
    %3149 = vmatprep.subr.mxu0 0.0
    %3150 = vmatpush1.msra.mxu0 0.0
    %3151 = vmatprep.subr.mxu0 0.0
    %3152 = vmatpush1.msra.mxu0 0.0
    %3153 = vmatprep.subr.mxu0 0.0
    %3154 = vmatpush1.msra.mxu0 0.0
    %3155 = vmatprep.subr.mxu0 0.0
    %3156 = vmatpush1.msra.mxu0 0.0
    %3157 = vmatprep.subr.mxu0 0.0
    %3158 = vmatpush1.msra.mxu0 0.0
    %3159 = vmatprep.subr.mxu0 0.0
    %3160 = vmatpush1.msra.mxu0 0.0
    %3161 = vmatprep.subr.mxu0 0.0
    %3162 = vmatpush1.msra.mxu0 0.0
    %3163 = vmatprep.subr.mxu0 0.0
    %3164 = vmatpush1.msra.mxu0 0.0
    %3165 = vmatprep.subr.mxu0 0.0
    %3166 = vmatpush1.msra.mxu0 0.0
    %3167 = vmatprep.subr.mxu0 0.0
    %3168 = vmatpush1.msra.mxu0 0.0
    %3169 = vmatprep.subr.mxu0 0.0
    %3170 = vmatpush1.msra.mxu0 0.0
    %3171 = vmatprep.subr.mxu0 0.0
    %3172 = vmatpush1.msra.mxu0 0.0
    %3173 = vmatprep.subr.mxu0 0.0
    %3174 = vmatpush1.msra.mxu0 0.0
    %3175 = vmatprep.subr.mxu0 0.0
    %3176 = vmatpush1.msra.mxu0 0.0
    %3177 = vmatprep.subr.mxu0 0.0
    %3178 = vmatpush1.msra.mxu0 0.0
    %3179 = vmatprep.subr.mxu0 0.0
    %3180 = vmatpush1.msra.mxu0 0.0
    %3181 = vmatprep.mubr.f32.mxu0 0.0
    %3182 = vmatmul.mubr.f32.gmra.mrb[0].mxu0 %v3033
    %v3183 = vpop.f32.mrb[0].mxu0
    %v3184 = vadd.f32 %v3112, %v3183
    %v3185 = vpop.f32.mrb[0].mxu0
    %3186 = vdwg.mxu0
    %v3188 = vsel %vm478, %v3023, 0
    %v3191 = vsel %vm478, %v3105, 0
    %3193 = vmatprep.subr.mxu0 0.0
    %3194 = vmatpush1.xpose.msra.mxu0 %v3191
    %3195 = vmatprep.subr.mxu0 0.0
    %3196 = vmatpush1.xpose.msra.mxu0 0.0
    %3197 = vmatprep.subr.mxu0 0.0
    %3198 = vmatpush1.xpose.msra.mxu0 0.0
    %3199 = vmatprep.subr.mxu0 0.0
    %3200 = vmatpush1.xpose.msra.mxu0 0.0
    %3201 = vmatprep.subr.mxu0 0.0
    %3202 = vmatpush1.xpose.msra.mxu0 0.0
    %3203 = vmatprep.subr.mxu0 0.0
    %3204 = vmatpush1.xpose.msra.mxu0 0.0
    %3205 = vmatprep.subr.mxu0 0.0
    %3206 = vmatpush1.xpose.msra.mxu0 0.0
    %3207 = vmatprep.subr.mxu0 0.0
    %3208 = vmatpush1.xpose.msra.mxu0 0.0
    %3209 = vmatprep.subr.mxu0 0.0
    %3210 = vmatpush1.xpose.msra.mxu0 0.0
    %3211 = vmatprep.subr.mxu0 0.0
    %3212 = vmatpush1.xpose.msra.mxu0 0.0
    %3213 = vmatprep.subr.mxu0 0.0
    %3214 = vmatpush1.xpose.msra.mxu0 0.0
    %3215 = vmatprep.subr.mxu0 0.0
    %3216 = vmatpush1.xpose.msra.mxu0 0.0
    %3217 = vmatprep.subr.mxu0 0.0
    %3218 = vmatpush1.xpose.msra.mxu0 0.0
    %3219 = vmatprep.subr.mxu0 0.0
    %3220 = vmatpush1.xpose.msra.mxu0 0.0
    %3221 = vmatprep.subr.mxu0 0.0
    %3222 = vmatpush1.xpose.msra.mxu0 0.0
    %3223 = vmatprep.subr.mxu0 0.0
    %3224 = vmatpush1.xpose.msra.mxu0 0.0
    %3225 = vmatprep.subr.mxu0 0.0
    %3226 = vmatpush1.xpose.msra.mxu0 0.0
    %3227 = vmatprep.subr.mxu0 0.0
    %3228 = vmatpush1.xpose.msra.mxu0 0.0
    %3229 = vmatprep.subr.mxu0 0.0
    %3230 = vmatpush1.xpose.msra.mxu0 0.0
    %3231 = vmatprep.subr.mxu0 0.0
    %3232 = vmatpush1.xpose.msra.mxu0 0.0
    %3233 = vmatprep.subr.mxu0 0.0
    %3234 = vmatpush1.xpose.msra.mxu0 0.0
    %3235 = vmatprep.subr.mxu0 0.0
    %3236 = vmatpush1.xpose.msra.mxu0 0.0
    %3237 = vmatprep.subr.mxu0 0.0
    %3238 = vmatpush1.xpose.msra.mxu0 0.0
    %3239 = vmatprep.subr.mxu0 0.0
    %3240 = vmatpush1.xpose.msra.mxu0 0.0
    %3241 = vmatprep.subr.mxu0 0.0
    %3242 = vmatpush1.xpose.msra.mxu0 0.0
    %3243 = vmatprep.subr.mxu0 0.0
    %3244 = vmatpush1.xpose.msra.mxu0 0.0
    %3245 = vmatprep.subr.mxu0 0.0
    %3246 = vmatpush1.xpose.msra.mxu0 0.0
    %3247 = vmatprep.subr.mxu0 0.0
    %3248 = vmatpush1.xpose.msra.mxu0 0.0
    %3249 = vmatprep.subr.mxu0 0.0
    %3250 = vmatpush1.xpose.msra.mxu0 0.0
    %3251 = vmatprep.subr.mxu0 0.0
    %3252 = vmatpush1.xpose.msra.mxu0 0.0
    %3253 = vmatprep.subr.mxu0 0.0
    %3254 = vmatpush1.xpose.msra.mxu0 0.0
    %3255 = vmatprep.subr.mxu0 0.0
    %3256 = vmatpush1.xpose.msra.mxu0 0.0
    %3257 = vmatprep.mubr.f32.mxu0 0.0
    %3258 = vmatmul.mubr.f32.gmra.mrb[0].mxu0 %v3188
    %v3259 = vpop.f32.mrb[0].mxu0
    %v3260 = vadd.f32 0.0, %v3259
    %v3261 = vpop.f32.mrb[0].mxu0
    %3262 = vdwg.mxu0
    %v3263 = vmul.f32 %v3260, 0.5
    %vm3264 = vcmask 11264
    %v3265 = vsel %vm3264, %v3263, -inf
    %3266 = vmax.xlane.f32.xlu0 %v3265
    %v3267 = vpop.xlane.xlu0 %3266
    %v3268 = vsub.f32 %v3263, %v3267
    %v3269 = vmul.f32 %v3268, 1.442695
    %v3270 = vpow.pop %v3269
    %v3271 = vsel %vm3264, %v3270, 0.0
    %3272 = vadd.xlane.f32.xlu0 %v3271
    %v3273 = vpop.xlane.xlu0 %3272
    %v3274 = vrcp.pop %v3273
    %v3275 = vmul.f32 %v3270, %v3274
    %vm3276 = vcmask 15360
    %v3278 = vsel %vm3276, %v3275, 0
    %vm3280 = vcmask 1041408
    %v3282 = vsel %vm3280, %v3184, 0
    %3284 = vmatprep.subr.mxu0 0.0
    %3285 = vmatpush1.msra.mxu0 %v3282
    %3286 = vmatprep.subr.mxu0 0.0
    %3287 = vmatpush1.msra.mxu0 0.0
    %3288 = vmatprep.subr.mxu0 0.0
    %3289 = vmatpush1.msra.mxu0 0.0
    %3290 = vmatprep.subr.mxu0 0.0
    %3291 = vmatpush1.msra.mxu0 0.0
    %3292 = vmatprep.subr.mxu0 0.0
    %3293 = vmatpush1.msra.mxu0 0.0
    %3294 = vmatprep.subr.mxu0 0.0
    %3295 = vmatpush1.msra.mxu0 0.0
    %3296 = vmatprep.subr.mxu0 0.0
    %3297 = vmatpush1.msra.mxu0 0.0
    %3298 = vmatprep.subr.mxu0 0.0
    %3299 = vmatpush1.msra.mxu0 0.0
    %3300 = vmatprep.subr.mxu0 0.0
    %3301 = vmatpush1.msra.mxu0 0.0
    %3302 = vmatprep.subr.mxu0 0.0
    %3303 = vmatpush1.msra.mxu0 0.0
    %3304 = vmatprep.subr.mxu0 0.0
    %3305 = vmatpush1.msra.mxu0 0.0
    %3306 = vmatprep.subr.mxu0 0.0
    %3307 = vmatpush1.msra.mxu0 0.0
    %3308 = vmatprep.subr.mxu0 0.0
    %3309 = vmatpush1.msra.mxu0 0.0
    %3310 = vmatprep.subr.mxu0 0.0
    %3311 = vmatpush1.msra.mxu0 0.0
    %3312 = vmatprep.subr.mxu0 0.0
    %3313 = vmatpush1.msra.mxu0 0.0
    %3314 = vmatprep.subr.mxu0 0.0
    %3315 = vmatpush1.msra.mxu0 0.0
    %3316 = vmatprep.subr.mxu0 0.0
    %3317 = vmatpush1.msra.mxu0 0.0
    %3318 = vmatprep.subr.mxu0 0.0
    %3319 = vmatpush1.msra.mxu0 0.0
    %3320 = vmatprep.subr.mxu0 0.0
    %3321 = vmatpush1.msra.mxu0 0.0
    %3322 = vmatprep.subr.mxu0 0.0
    %3323 = vmatpush1.msra.mxu0 0.0
    %3324 = vmatprep.subr.mxu0 0.0
    %3325 = vmatpush1.msra.mxu0 0.0
    %3326 = vmatprep.subr.mxu0 0.0
    %3327 = vmatpush1.msra.mxu0 0.0
    %3328 = vmatprep.subr.mxu0 0.0
    %3329 = vmatpush1.msra.mxu0 0.0
    %3330 = vmatprep.subr.mxu0 0.0
    %3331 = vmatpush1.msra.mxu0 0.0
    %3332 = vmatprep.subr.mxu0 0.0
    %3333 = vmatpush1.msra.mxu0 0.0
    %3334 = vmatprep.subr.mxu0 0.0
    %3335 = vmatpush1.msra.mxu0 0.0
    %3336 = vmatprep.subr.mxu0 0.0
    %3337 = vmatpush1.msra.mxu0 0.0
    %3338 = vmatprep.subr.mxu0 0.0
    %3339 = vmatpush1.msra.mxu0 0.0
    %3340 = vmatprep.subr.mxu0 0.0
    %3341 = vmatpush1.msra.mxu0 0.0
    %3342 = vmatprep.subr.mxu0 0.0
    %3343 = vmatpush1.msra.mxu0 0.0
    %3344 = vmatprep.subr.mxu0 0.0
    %3345 = vmatpush1.msra.mxu0 0.0
    %3346 = vmatprep.subr.mxu0 0.0
    %3347 = vmatpush1.msra.mxu0 0.0
    %3348 = vmatprep.mubr.f32.mxu0 0.0
    %3349 = vmatmul.mubr.f32.gmra.mrb[0].mxu0 %v3278
    %v3350 = vpop.f32.mrb[0].mxu0
    %v3351 = vadd.f32 0.0, %v3350
    %v3352 = vpop.f32.mrb[0].mxu0
    %3353 = vdwg.mxu0
    %v3355 = vlaneseq
    %v3356 = vshrl.u32 %v3355, 7
    %v3357 = vsub.s32 0, %v3356
    %v3358 = vrot.slane %v443, %v3357
    %v3361 = vsel %vm101, %v390, 0
    %3363 = vmatprep.subr.mxu0 0.0
    %3364 = vmatpush1.msra.mxu0 %v388
    %3365 = vmatprep.subr.mxu0 0.0
    %3366 = vmatpush1.msra.mxu0 %v389
    %3367 = vmatprep.subr.mxu0 0.0
    %3368 = vmatpush1.msra.mxu0 %v3361
    %3369 = vmatprep.subr.mxu0 0.0
    %3370 = vmatpush1.msra.mxu0 0.0
    %3371 = vmatprep.subr.mxu0 0.0
    %3372 = vmatpush1.msra.mxu0 0.0
    %3373 = vmatprep.subr.mxu0 0.0
    %3374 = vmatpush1.msra.mxu0 0.0
    %3375 = vmatprep.subr.mxu0 0.0
    %3376 = vmatpush1.msra.mxu0 0.0
    %3377 = vmatprep.subr.mxu0 0.0
    %3378 = vmatpush1.msra.mxu0 0.0
    %3379 = vmatprep.subr.mxu0 0.0
    %3380 = vmatpush1.msra.mxu0 0.0
    %3381 = vmatprep.subr.mxu0 0.0
    %3382 = vmatpush1.msra.mxu0 0.0
    %3383 = vmatprep.subr.mxu0 0.0
    %3384 = vmatpush1.msra.mxu0 0.0
    %3385 = vmatprep.subr.mxu0 0.0
    %3386 = vmatpush1.msra.mxu0 0.0
    %3387 = vmatprep.subr.mxu0 0.0
    %3388 = vmatpush1.msra.mxu0 0.0
    %3389 = vmatprep.subr.mxu0 0.0
    %3390 = vmatpush1.msra.mxu0 0.0
    %3391 = vmatprep.subr.mxu0 0.0
    %3392 = vmatpush1.msra.mxu0 0.0
    %3393 = vmatprep.subr.mxu0 0.0
    %3394 = vmatpush1.msra.mxu0 0.0
    %3395 = vmatprep.subr.mxu0 0.0
    %3396 = vmatpush1.msra.mxu0 0.0
    %3397 = vmatprep.subr.mxu0 0.0
    %3398 = vmatpush1.msra.mxu0 0.0
    %3399 = vmatprep.subr.mxu0 0.0
    %3400 = vmatpush1.msra.mxu0 0.0
    %3401 = vmatprep.subr.mxu0 0.0
    %3402 = vmatpush1.msra.mxu0 0.0
    %3403 = vmatprep.subr.mxu0 0.0
    %3404 = vmatpush1.msra.mxu0 0.0
    %3405 = vmatprep.subr.mxu0 0.0
    %3406 = vmatpush1.msra.mxu0 0.0
    %3407 = vmatprep.subr.mxu0 0.0
    %3408 = vmatpush1.msra.mxu0 0.0
    %3409 = vmatprep.subr.mxu0 0.0
    %3410 = vmatpush1.msra.mxu0 0.0
    %3411 = vmatprep.subr.mxu0 0.0
    %3412 = vmatpush1.msra.mxu0 0.0
    %3413 = vmatprep.subr.mxu0 0.0
    %3414 = vmatpush1.msra.mxu0 0.0
    %3415 = vmatprep.subr.mxu0 0.0
    %3416 = vmatpush1.msra.mxu0 0.0
    %3417 = vmatprep.subr.mxu0 0.0
    %3418 = vmatpush1.msra.mxu0 0.0
    %3419 = vmatprep.subr.mxu0 0.0
    %3420 = vmatpush1.msra.mxu0 0.0
    %3421 = vmatprep.subr.mxu0 0.0
    %3422 = vmatpush1.msra.mxu0 0.0
    %3423 = vmatprep.subr.mxu0 0.0
    %3424 = vmatpush1.msra.mxu0 0.0
    %3425 = vmatprep.subr.mxu0 0.0
    %3426 = vmatpush1.msra.mxu0 0.0
    %3427 = vmatprep.mubr.f32.mxu0 0.0
    %3428 = vmatmul.mubr.f32.gmra.mrb[0].mxu0 %v2951
    %v3429 = vpop.f32.mrb[0].mxu0
    %v3430 = vadd.f32 %v3358, %v3429
    %v3431 = vpop.f32.mrb[0].mxu0
    %3432 = vdwg.mxu0
    %v3434 = vlaneseq
    %v3435 = vshrl.u32 %v3434, 7
    %v3436 = vsub.s32 0, %v3435
    %v3437 = vrot.slane %v452, %v3436
    %v3440 = vsel %vm101, %v409, 0
    %3442 = vmatprep.subr.mxu0 0.0
    %3443 = vmatpush1.msra.mxu0 %v407
    %3444 = vmatprep.subr.mxu0 0.0
    %3445 = vmatpush1.msra.mxu0 %v408
    %3446 = vmatprep.subr.mxu0 0.0
    %3447 = vmatpush1.msra.mxu0 %v3440
    %3448 = vmatprep.subr.mxu0 0.0
    %3449 = vmatpush1.msra.mxu0 0.0
    %3450 = vmatprep.subr.mxu0 0.0
    %3451 = vmatpush1.msra.mxu0 0.0
    %3452 = vmatprep.subr.mxu0 0.0
    %3453 = vmatpush1.msra.mxu0 0.0
    %3454 = vmatprep.subr.mxu0 0.0
    %3455 = vmatpush1.msra.mxu0 0.0
    %3456 = vmatprep.subr.mxu0 0.0
    %3457 = vmatpush1.msra.mxu0 0.0
    %3458 = vmatprep.subr.mxu0 0.0
    %3459 = vmatpush1.msra.mxu0 0.0
    %3460 = vmatprep.subr.mxu0 0.0
    %3461 = vmatpush1.msra.mxu0 0.0
    %3462 = vmatprep.subr.mxu0 0.0
    %3463 = vmatpush1.msra.mxu0 0.0
    %3464 = vmatprep.subr.mxu0 0.0
    %3465 = vmatpush1.msra.mxu0 0.0
    %3466 = vmatprep.subr.mxu0 0.0
    %3467 = vmatpush1.msra.mxu0 0.0
    %3468 = vmatprep.subr.mxu0 0.0
    %3469 = vmatpush1.msra.mxu0 0.0
    %3470 = vmatprep.subr.mxu0 0.0
    %3471 = vmatpush1.msra.mxu0 0.0
    %3472 = vmatprep.subr.mxu0 0.0
    %3473 = vmatpush1.msra.mxu0 0.0
    %3474 = vmatprep.subr.mxu0 0.0
    %3475 = vmatpush1.msra.mxu0 0.0
    %3476 = vmatprep.subr.mxu0 0.0
    %3477 = vmatpush1.msra.mxu0 0.0
    %3478 = vmatprep.subr.mxu0 0.0
    %3479 = vmatpush1.msra.mxu0 0.0
    %3480 = vmatprep.subr.mxu0 0.0
    %3481 = vmatpush1.msra.mxu0 0.0
    %3482 = vmatprep.subr.mxu0 0.0
    %3483 = vmatpush1.msra.mxu0 0.0
    %3484 = vmatprep.subr.mxu0 0.0
    %3485 = vmatpush1.msra.mxu0 0.0
    %3486 = vmatprep.subr.mxu0 0.0
    %3487 = vmatpush1.msra.mxu0 0.0
    %3488 = vmatprep.subr.mxu0 0.0
    %3489 = vmatpush1.msra.mxu0 0.0
    %3490 = vmatprep.subr.mxu0 0.0
    %3491 = vmatpush1.msra.mxu0 0.0
    %3492 = vmatprep.subr.mxu0 0.0
    %3493 = vmatpush1.msra.mxu0 0.0
    %3494 = vmatprep.subr.mxu0 0.0
    %3495 = vmatpush1.msra.mxu0 0.0
    %3496 = vmatprep.subr.mxu0 0.0
    %3497 = vmatpush1.msra.mxu0 0.0
    %3498 = vmatprep.subr.mxu0 0.0
    %3499 = vmatpush1.msra.mxu0 0.0
    %3500 = vmatprep.subr.mxu0 0.0
    %3501 = vmatpush1.msra.mxu0 0.0
    %3502 = vmatprep.subr.mxu0 0.0
    %3503 = vmatpush1.msra.mxu0 0.0
    %3504 = vmatprep.subr.mxu0 0.0
    %3505 = vmatpush1.msra.mxu0 0.0
    %3506 = vmatprep.mubr.f32.mxu0 0.0
    %3507 = vmatmul.mubr.f32.gmra.mrb[0].mxu0 %v3033
    %v3508 = vpop.f32.mrb[0].mxu0
    %v3509 = vadd.f32 %v3437, %v3508
    %v3510 = vpop.f32.mrb[0].mxu0
    %3511 = vdwg.mxu0
    %v3513 = vlaneseq
    %v3514 = vshrl.u32 %v3513, 7
    %v3515 = vsub.s32 0, %v3514
    %v3516 = vrot.slane %v461, %v3515
    %v3519 = vsel %vm101, %v428, 0
    %3521 = vmatprep.subr.mxu0 0.0
    %3522 = vmatpush1.msra.mxu0 %v426
    %3523 = vmatprep.subr.mxu0 0.0
    %3524 = vmatpush1.msra.mxu0 %v427
    %3525 = vmatprep.subr.mxu0 0.0
    %3526 = vmatpush1.msra.mxu0 %v3519
    %3527 = vmatprep.subr.mxu0 0.0
    %3528 = vmatpush1.msra.mxu0 0.0
    %3529 = vmatprep.subr.mxu0 0.0
    %3530 = vmatpush1.msra.mxu0 0.0
    %3531 = vmatprep.subr.mxu0 0.0
    %3532 = vmatpush1.msra.mxu0 0.0
    %3533 = vmatprep.subr.mxu0 0.0
    %3534 = vmatpush1.msra.mxu0 0.0
    %3535 = vmatprep.subr.mxu0 0.0
    %3536 = vmatpush1.msra.mxu0 0.0
    %3537 = vmatprep.subr.mxu0 0.0
    %3538 = vmatpush1.msra.mxu0 0.0
    %3539 = vmatprep.subr.mxu0 0.0
    %3540 = vmatpush1.msra.mxu0 0.0
    %3541 = vmatprep.subr.mxu0 0.0
    %3542 = vmatpush1.msra.mxu0 0.0
    %3543 = vmatprep.subr.mxu0 0.0
    %3544 = vmatpush1.msra.mxu0 0.0
    %3545 = vmatprep.subr.mxu0 0.0
    %3546 = vmatpush1.msra.mxu0 0.0
    %3547 = vmatprep.subr.mxu0 0.0
    %3548 = vmatpush1.msra.mxu0 0.0
    %3549 = vmatprep.subr.mxu0 0.0
    %3550 = vmatpush1.msra.mxu0 0.0
    %3551 = vmatprep.subr.mxu0 0.0
    %3552 = vmatpush1.msra.mxu0 0.0
    %3553 = vmatprep.subr.mxu0 0.0
    %3554 = vmatpush1.msra.mxu0 0.0
    %3555 = vmatprep.subr.mxu0 0.0
    %3556 = vmatpush1.msra.mxu0 0.0
    %3557 = vmatprep.subr.mxu0 0.0
    %3558 = vmatpush1.msra.mxu0 0.0
    %3559 = vmatprep.subr.mxu0 0.0
    %3560 = vmatpush1.msra.mxu0 0.0
    %3561 = vmatprep.subr.mxu0 0.0
    %3562 = vmatpush1.msra.mxu0 0.0
    %3563 = vmatprep.subr.mxu0 0.0
    %3564 = vmatpush1.msra.mxu0 0.0
    %3565 = vmatprep.subr.mxu0 0.0
    %3566 = vmatpush1.msra.mxu0 0.0
    %3567 = vmatprep.subr.mxu0 0.0
    %3568 = vmatpush1.msra.mxu0 0.0
    %3569 = vmatprep.subr.mxu0 0.0
    %3570 = vmatpush1.msra.mxu0 0.0
    %3571 = vmatprep.subr.mxu0 0.0
    %3572 = vmatpush1.msra.mxu0 0.0
    %3573 = vmatprep.subr.mxu0 0.0
    %3574 = vmatpush1.msra.mxu0 0.0
    %3575 = vmatprep.subr.mxu0 0.0
    %3576 = vmatpush1.msra.mxu0 0.0
    %3577 = vmatprep.subr.mxu0 0.0
    %3578 = vmatpush1.msra.mxu0 0.0
    %3579 = vmatprep.subr.mxu0 0.0
    %3580 = vmatpush1.msra.mxu0 0.0
    %3581 = vmatprep.subr.mxu0 0.0
    %3582 = vmatpush1.msra.mxu0 0.0
    %3583 = vmatprep.subr.mxu0 0.0
    %3584 = vmatpush1.msra.mxu0 0.0
    %3585 = vmatprep.mubr.f32.mxu0 0.0
    %3586 = vmatmul.mubr.f32.gmra.mrb[0].mxu0 %v3033
    %v3587 = vpop.f32.mrb[0].mxu0
    %v3588 = vadd.f32 %v3516, %v3587
    %v3589 = vpop.f32.mrb[0].mxu0
    %3590 = vdwg.mxu0
    %v3592 = vsel %vm478, %v3430, 0
    %v3595 = vsel %vm478, %v3509, 0
    %3597 = vmatprep.subr.mxu0 0.0
    %3598 = vmatpush1.xpose.msra.mxu0 %v3595
    %3599 = vmatprep.subr.mxu0 0.0
    %3600 = vmatpush1.xpose.msra.mxu0 0.0
    %3601 = vmatprep.subr.mxu0 0.0
    %3602 = vmatpush1.xpose.msra.mxu0 0.0
    %3603 = vmatprep.subr.mxu0 0.0
    %3604 = vmatpush1.xpose.msra.mxu0 0.0
    %3605 = vmatprep.subr.mxu0 0.0
    %3606 = vmatpush1.xpose.msra.mxu0 0.0
    %3607 = vmatprep.subr.mxu0 0.0
    %3608 = vmatpush1.xpose.msra.mxu0 0.0
    %3609 = vmatprep.subr.mxu0 0.0
    %3610 = vmatpush1.xpose.msra.mxu0 0.0
    %3611 = vmatprep.subr.mxu0 0.0
    %3612 = vmatpush1.xpose.msra.mxu0 0.0
    %3613 = vmatprep.subr.mxu0 0.0
    %3614 = vmatpush1.xpose.msra.mxu0 0.0
    %3615 = vmatprep.subr.mxu0 0.0
    %3616 = vmatpush1.xpose.msra.mxu0 0.0
    %3617 = vmatprep.subr.mxu0 0.0
    %3618 = vmatpush1.xpose.msra.mxu0 0.0
    %3619 = vmatprep.subr.mxu0 0.0
    %3620 = vmatpush1.xpose.msra.mxu0 0.0
    %3621 = vmatprep.subr.mxu0 0.0
    %3622 = vmatpush1.xpose.msra.mxu0 0.0
    %3623 = vmatprep.subr.mxu0 0.0
    %3624 = vmatpush1.xpose.msra.mxu0 0.0
    %3625 = vmatprep.subr.mxu0 0.0
    %3626 = vmatpush1.xpose.msra.mxu0 0.0
    %3627 = vmatprep.subr.mxu0 0.0
    %3628 = vmatpush1.xpose.msra.mxu0 0.0
    %3629 = vmatprep.subr.mxu0 0.0
    %3630 = vmatpush1.xpose.msra.mxu0 0.0
    %3631 = vmatprep.subr.mxu0 0.0
    %3632 = vmatpush1.xpose.msra.mxu0 0.0
    %3633 = vmatprep.subr.mxu0 0.0
    %3634 = vmatpush1.xpose.msra.mxu0 0.0
    %3635 = vmatprep.subr.mxu0 0.0
    %3636 = vmatpush1.xpose.msra.mxu0 0.0
    %3637 = vmatprep.subr.mxu0 0.0
    %3638 = vmatpush1.xpose.msra.mxu0 0.0
    %3639 = vmatprep.subr.mxu0 0.0
    %3640 = vmatpush1.xpose.msra.mxu0 0.0
    %3641 = vmatprep.subr.mxu0 0.0
    %3642 = vmatpush1.xpose.msra.mxu0 0.0
    %3643 = vmatprep.subr.mxu0 0.0
    %3644 = vmatpush1.xpose.msra.mxu0 0.0
    %3645 = vmatprep.subr.mxu0 0.0
    %3646 = vmatpush1.xpose.msra.mxu0 0.0
    %3647 = vmatprep.subr.mxu0 0.0
    %3648 = vmatpush1.xpose.msra.mxu0 0.0
    %3649 = vmatprep.subr.mxu0 0.0
    %3650 = vmatpush1.xpose.msra.mxu0 0.0
    %3651 = vmatprep.subr.mxu0 0.0
    %3652 = vmatpush1.xpose.msra.mxu0 0.0
    %3653 = vmatprep.subr.mxu0 0.0
    %3654 = vmatpush1.xpose.msra.mxu0 0.0
    %3655 = vmatprep.subr.mxu0 0.0
    %3656 = vmatpush1.xpose.msra.mxu0 0.0
    %3657 = vmatprep.subr.mxu0 0.0
    %3658 = vmatpush1.xpose.msra.mxu0 0.0
    %3659 = vmatprep.subr.mxu0 0.0
    %3660 = vmatpush1.xpose.msra.mxu0 0.0
    %3661 = vmatprep.mubr.f32.mxu0 0.0
    %3662 = vmatmul.mubr.f32.gmra.mrb[0].mxu0 %v3592
    %v3663 = vpop.f32.mrb[0].mxu0
    %v3664 = vadd.f32 0.0, %v3663
    %v3665 = vpop.f32.mrb[0].mxu0
    %3666 = vdwg.mxu0
    %v3667 = vmul.f32 %v3664, 0.5
    %v3668 = vsel %vm3264, %v3667, -inf
    %3669 = vmax.xlane.f32.xlu0 %v3668
    %v3670 = vpop.xlane.xlu0 %3669
    %v3671 = vsub.f32 %v3667, %v3670
    %v3672 = vmul.f32 %v3671, 1.442695
    %v3673 = vpow.pop %v3672
    %v3674 = vsel %vm3264, %v3673, 0.0
    %3675 = vadd.xlane.f32.xlu0 %v3674
    %v3676 = vpop.xlane.xlu0 %3675
    %v3677 = vrcp.pop %v3676
    %v3678 = vmul.f32 %v3673, %v3677
    %v3680 = vsel %vm3276, %v3678, 0
    %v3683 = vsel %vm3280, %v3588, 0
    %3685 = vmatprep.subr.mxu0 0.0
    %3686 = vmatpush1.msra.mxu0 %v3683
    %3687 = vmatprep.subr.mxu0 0.0
    %3688 = vmatpush1.msra.mxu0 0.0
    %3689 = vmatprep.subr.mxu0 0.0
    %3690 = vmatpush1.msra.mxu0 0.0
    %3691 = vmatprep.subr.mxu0 0.0
    %3692 = vmatpush1.msra.mxu0 0.0
    %3693 = vmatprep.subr.mxu0 0.0
    %3694 = vmatpush1.msra.mxu0 0.0
    %3695 = vmatprep.subr.mxu0 0.0
    %3696 = vmatpush1.msra.mxu0 0.0
    %3697 = vmatprep.subr.mxu0 0.0
    %3698 = vmatpush1.msra.mxu0 0.0
    %3699 = vmatprep.subr.mxu0 0.0
    %3700 = vmatpush1.msra.mxu0 0.0
    %3701 = vmatprep.subr.mxu0 0.0
    %3702 = vmatpush1.msra.mxu0 0.0
    %3703 = vmatprep.subr.mxu0 0.0
    %3704 = vmatpush1.msra.mxu0 0.0
    %3705 = vmatprep.subr.mxu0 0.0
    %3706 = vmatpush1.msra.mxu0 0.0
    %3707 = vmatprep.subr.mxu0 0.0
    %3708 = vmatpush1.msra.mxu0 0.0
    %3709 = vmatprep.subr.mxu0 0.0
    %3710 = vmatpush1.msra.mxu0 0.0
    %3711 = vmatprep.subr.mxu0 0.0
    %3712 = vmatpush1.msra.mxu0 0.0
    %3713 = vmatprep.subr.mxu0 0.0
    %3714 = vmatpush1.msra.mxu0 0.0
    %3715 = vmatprep.subr.mxu0 0.0
    %3716 = vmatpush1.msra.mxu0 0.0
    %3717 = vmatprep.subr.mxu0 0.0
    %3718 = vmatpush1.msra.mxu0 0.0
    %3719 = vmatprep.subr.mxu0 0.0
    %3720 = vmatpush1.msra.mxu0 0.0
    %3721 = vmatprep.subr.mxu0 0.0
    %3722 = vmatpush1.msra.mxu0 0.0
    %3723 = vmatprep.subr.mxu0 0.0
    %3724 = vmatpush1.msra.mxu0 0.0
    %3725 = vmatprep.subr.mxu0 0.0
    %3726 = vmatpush1.msra.mxu0 0.0
    %3727 = vmatprep.subr.mxu0 0.0
    %3728 = vmatpush1.msra.mxu0 0.0
    %3729 = vmatprep.subr.mxu0 0.0
    %3730 = vmatpush1.msra.mxu0 0.0
    %3731 = vmatprep.subr.mxu0 0.0
    %3732 = vmatpush1.msra.mxu0 0.0
    %3733 = vmatprep.subr.mxu0 0.0
    %3734 = vmatpush1.msra.mxu0 0.0
    %3735 = vmatprep.subr.mxu0 0.0
    %3736 = vmatpush1.msra.mxu0 0.0
    %3737 = vmatprep.subr.mxu0 0.0
    %3738 = vmatpush1.msra.mxu0 0.0
    %3739 = vmatprep.subr.mxu0 0.0
    %3740 = vmatpush1.msra.mxu0 0.0
    %3741 = vmatprep.subr.mxu0 0.0
    %3742 = vmatpush1.msra.mxu0 0.0
    %3743 = vmatprep.subr.mxu0 0.0
    %3744 = vmatpush1.msra.mxu0 0.0
    %3745 = vmatprep.subr.mxu0 0.0
    %3746 = vmatpush1.msra.mxu0 0.0
    %3747 = vmatprep.subr.mxu0 0.0
    %3748 = vmatpush1.msra.mxu0 0.0
    %3749 = vmatprep.mubr.f32.mxu0 0.0
    %3750 = vmatmul.mubr.f32.gmra.mrb[0].mxu0 %v3680
    %v3751 = vpop.f32.mrb[0].mxu0
    %v3752 = vadd.f32 0.0, %v3751
    %v3753 = vpop.f32.mrb[0].mxu0
    %3754 = vdwg.mxu0
    %v3756 = vsel %vm478, %v3752, 0
    %v3759 = vsel %vm101, %v470, 0
    %3761 = vmatprep.subr.mxu0 0.0
    %3762 = vmatpush1.msra.mxu0 %v3759
    %3763 = vmatprep.subr.mxu0 0.0
    %3764 = vmatpush1.msra.mxu0 0.0
    %3765 = vmatprep.subr.mxu0 0.0
    %3766 = vmatpush1.msra.mxu0 0.0
    %3767 = vmatprep.subr.mxu0 0.0
    %3768 = vmatpush1.msra.mxu0 0.0
    %3769 = vmatprep.subr.mxu0 0.0
    %3770 = vmatpush1.msra.mxu0 0.0
    %3771 = vmatprep.subr.mxu0 0.0
    %3772 = vmatpush1.msra.mxu0 0.0
    %3773 = vmatprep.subr.mxu0 0.0
    %3774 = vmatpush1.msra.mxu0 0.0
    %3775 = vmatprep.subr.mxu0 0.0
    %3776 = vmatpush1.msra.mxu0 0.0
    %3777 = vmatprep.subr.mxu0 0.0
    %3778 = vmatpush1.msra.mxu0 0.0
    %3779 = vmatprep.subr.mxu0 0.0
    %3780 = vmatpush1.msra.mxu0 0.0
    %3781 = vmatprep.subr.mxu0 0.0
    %3782 = vmatpush1.msra.mxu0 0.0
    %3783 = vmatprep.subr.mxu0 0.0
    %3784 = vmatpush1.msra.mxu0 0.0
    %3785 = vmatprep.subr.mxu0 0.0
    %3786 = vmatpush1.msra.mxu0 0.0
    %3787 = vmatprep.subr.mxu0 0.0
    %3788 = vmatpush1.msra.mxu0 0.0
    %3789 = vmatprep.subr.mxu0 0.0
    %3790 = vmatpush1.msra.mxu0 0.0
    %3791 = vmatprep.subr.mxu0 0.0
    %3792 = vmatpush1.msra.mxu0 0.0
    %3793 = vmatprep.subr.mxu0 0.0
    %3794 = vmatpush1.msra.mxu0 0.0
    %3795 = vmatprep.subr.mxu0 0.0
    %3796 = vmatpush1.msra.mxu0 0.0
    %3797 = vmatprep.subr.mxu0 0.0
    %3798 = vmatpush1.msra.mxu0 0.0
    %3799 = vmatprep.subr.mxu0 0.0
    %3800 = vmatpush1.msra.mxu0 0.0
    %3801 = vmatprep.subr.mxu0 0.0
    %3802 = vmatpush1.msra.mxu0 0.0
    %3803 = vmatprep.subr.mxu0 0.0
    %3804 = vmatpush1.msra.mxu0 0.0
    %3805 = vmatprep.subr.mxu0 0.0
    %3806 = vmatpush1.msra.mxu0 0.0
    %3807 = vmatprep.subr.mxu0 0.0
    %3808 = vmatpush1.msra.mxu0 0.0
    %3809 = vmatprep.subr.mxu0 0.0
    %3810 = vmatpush1.msra.mxu0 0.0
    %3811 = vmatprep.subr.mxu0 0.0
    %3812 = vmatpush1.msra.mxu0 0.0
    %3813 = vmatprep.subr.mxu0 0.0
    %3814 = vmatpush1.msra.mxu0 0.0
    %3815 = vmatprep.subr.mxu0 0.0
    %3816 = vmatpush1.msra.mxu0 0.0
    %3817 = vmatprep.subr.mxu0 0.0
    %3818 = vmatpush1.msra.mxu0 0.0
    %3819 = vmatprep.subr.mxu0 0.0
    %3820 = vmatpush1.msra.mxu0 0.0
    %3821 = vmatprep.subr.mxu0 0.0
    %3822 = vmatpush1.msra.mxu0 0.0
    %3823 = vmatprep.subr.mxu0 0.0
    %3824 = vmatpush1.msra.mxu0 0.0
    %3825 = vmatprep.mubr.f32.mxu0 0.0
    %3826 = vmatmul.mubr.f32.gmra.mrb[0].mxu0 %v3756
    %v3827 = vpop.f32.mrb[0].mxu0
    %v3828 = vadd.f32 0.0, %v3827
    %v3829 = vpop.f32.mrb[0].mxu0
    %3830 = vdwg.mxu0
    %v3832 = vsel %vm478, %v3351, 0
    %v3835 = vsel %vm101, %v468, 0
    %3837 = vmatprep.subr.mxu0 0.0
    %3838 = vmatpush1.msra.mxu0 %v3835
    %3839 = vmatprep.subr.mxu0 0.0
    %3840 = vmatpush1.msra.mxu0 0.0
    %3841 = vmatprep.subr.mxu0 0.0
    %3842 = vmatpush1.msra.mxu0 0.0
    %3843 = vmatprep.subr.mxu0 0.0
    %3844 = vmatpush1.msra.mxu0 0.0
    %3845 = vmatprep.subr.mxu0 0.0
    %3846 = vmatpush1.msra.mxu0 0.0
    %3847 = vmatprep.subr.mxu0 0.0
    %3848 = vmatpush1.msra.mxu0 0.0
    %3849 = vmatprep.subr.mxu0 0.0
    %3850 = vmatpush1.msra.mxu0 0.0
    %3851 = vmatprep.subr.mxu0 0.0
    %3852 = vmatpush1.msra.mxu0 0.0
    %3853 = vmatprep.subr.mxu0 0.0
    %3854 = vmatpush1.msra.mxu0 0.0
    %3855 = vmatprep.subr.mxu0 0.0
    %3856 = vmatpush1.msra.mxu0 0.0
    %3857 = vmatprep.subr.mxu0 0.0
    %3858 = vmatpush1.msra.mxu0 0.0
    %3859 = vmatprep.subr.mxu0 0.0
    %3860 = vmatpush1.msra.mxu0 0.0
    %3861 = vmatprep.subr.mxu0 0.0
    %3862 = vmatpush1.msra.mxu0 0.0
    %3863 = vmatprep.subr.mxu0 0.0
    %3864 = vmatpush1.msra.mxu0 0.0
    %3865 = vmatprep.subr.mxu0 0.0
    %3866 = vmatpush1.msra.mxu0 0.0
    %3867 = vmatprep.subr.mxu0 0.0
    %3868 = vmatpush1.msra.mxu0 0.0
    %3869 = vmatprep.subr.mxu0 0.0
    %3870 = vmatpush1.msra.mxu0 0.0
    %3871 = vmatprep.subr.mxu0 0.0
    %3872 = vmatpush1.msra.mxu0 0.0
    %3873 = vmatprep.subr.mxu0 0.0
    %3874 = vmatpush1.msra.mxu0 0.0
    %3875 = vmatprep.subr.mxu0 0.0
    %3876 = vmatpush1.msra.mxu0 0.0
    %3877 = vmatprep.subr.mxu0 0.0
    %3878 = vmatpush1.msra.mxu0 0.0
    %3879 = vmatprep.subr.mxu0 0.0
    %3880 = vmatpush1.msra.mxu0 0.0
    %3881 = vmatprep.subr.mxu0 0.0
    %3882 = vmatpush1.msra.mxu0 0.0
    %3883 = vmatprep.subr.mxu0 0.0
    %3884 = vmatpush1.msra.mxu0 0.0
    %3885 = vmatprep.subr.mxu0 0.0
    %3886 = vmatpush1.msra.mxu0 0.0
    %3887 = vmatprep.subr.mxu0 0.0
    %3888 = vmatpush1.msra.mxu0 0.0
    %3889 = vmatprep.subr.mxu0 0.0
    %3890 = vmatpush1.msra.mxu0 0.0
    %3891 = vmatprep.subr.mxu0 0.0
    %3892 = vmatpush1.msra.mxu0 0.0
    %3893 = vmatprep.subr.mxu0 0.0
    %3894 = vmatpush1.msra.mxu0 0.0
    %3895 = vmatprep.subr.mxu0 0.0
    %3896 = vmatpush1.msra.mxu0 0.0
    %3897 = vmatprep.subr.mxu0 0.0
    %3898 = vmatpush1.msra.mxu0 0.0
    %3899 = vmatprep.subr.mxu0 0.0
    %3900 = vmatpush1.msra.mxu0 0.0
    %3901 = vmatprep.mubr.f32.mxu0 0.0
    %3902 = vmatmul.mubr.f32.gmra.mrb[0].mxu0 %v3832
    %v3903 = vpop.f32.mrb[0].mxu0
    %v3904 = vadd.f32 %v3828, %v3903
    %v3905 = vpop.f32.mrb[0].mxu0
    %3906 = vdwg.mxu0
    %v3908 = vlaneseq
    %v3909 = vshrl.u32 %v3908, 7
    %v3910 = vsub.s32 0, %v3909
    %v3911 = vrot.slane %v445, %v3910
    %v3914 = vsel %vm101, %v394, 0
    %3916 = vmatprep.subr.mxu0 0.0
    %3917 = vmatpush1.msra.mxu0 %v392
    %3918 = vmatprep.subr.mxu0 0.0
    %3919 = vmatpush1.msra.mxu0 %v393
    %3920 = vmatprep.subr.mxu0 0.0
    %3921 = vmatpush1.msra.mxu0 %v3914
    %3922 = vmatprep.subr.mxu0 0.0
    %3923 = vmatpush1.msra.mxu0 0.0
    %3924 = vmatprep.subr.mxu0 0.0
    %3925 = vmatpush1.msra.mxu0 0.0
    %3926 = vmatprep.subr.mxu0 0.0
    %3927 = vmatpush1.msra.mxu0 0.0
    %3928 = vmatprep.subr.mxu0 0.0
    %3929 = vmatpush1.msra.mxu0 0.0
    %3930 = vmatprep.subr.mxu0 0.0
    %3931 = vmatpush1.msra.mxu0 0.0
    %3932 = vmatprep.subr.mxu0 0.0
    %3933 = vmatpush1.msra.mxu0 0.0
    %3934 = vmatprep.subr.mxu0 0.0
    %3935 = vmatpush1.msra.mxu0 0.0
    %3936 = vmatprep.subr.mxu0 0.0
    %3937 = vmatpush1.msra.mxu0 0.0
    %3938 = vmatprep.subr.mxu0 0.0
    %3939 = vmatpush1.msra.mxu0 0.0
    %3940 = vmatprep.subr.mxu0 0.0
    %3941 = vmatpush1.msra.mxu0 0.0
    %3942 = vmatprep.subr.mxu0 0.0
    %3943 = vmatpush1.msra.mxu0 0.0
    %3944 = vmatprep.subr.mxu0 0.0
    %3945 = vmatpush1.msra.mxu0 0.0
    %3946 = vmatprep.subr.mxu0 0.0
    %3947 = vmatpush1.msra.mxu0 0.0
    %3948 = vmatprep.subr.mxu0 0.0
    %3949 = vmatpush1.msra.mxu0 0.0
    %3950 = vmatprep.subr.mxu0 0.0
    %3951 = vmatpush1.msra.mxu0 0.0
    %3952 = vmatprep.subr.mxu0 0.0
    %3953 = vmatpush1.msra.mxu0 0.0
    %3954 = vmatprep.subr.mxu0 0.0
    %3955 = vmatpush1.msra.mxu0 0.0
    %3956 = vmatprep.subr.mxu0 0.0
    %3957 = vmatpush1.msra.mxu0 0.0
    %3958 = vmatprep.subr.mxu0 0.0
    %3959 = vmatpush1.msra.mxu0 0.0
    %3960 = vmatprep.subr.mxu0 0.0
    %3961 = vmatpush1.msra.mxu0 0.0
    %3962 = vmatprep.subr.mxu0 0.0
    %3963 = vmatpush1.msra.mxu0 0.0
    %3964 = vmatprep.subr.mxu0 0.0
    %3965 = vmatpush1.msra.mxu0 0.0
    %3966 = vmatprep.subr.mxu0 0.0
    %3967 = vmatpush1.msra.mxu0 0.0
    %3968 = vmatprep.subr.mxu0 0.0
    %3969 = vmatpush1.msra.mxu0 0.0
    %3970 = vmatprep.subr.mxu0 0.0
    %3971 = vmatpush1.msra.mxu0 0.0
    %3972 = vmatprep.subr.mxu0 0.0
    %3973 = vmatpush1.msra.mxu0 0.0
    %3974 = vmatprep.subr.mxu0 0.0
    %3975 = vmatpush1.msra.mxu0 0.0
    %3976 = vmatprep.subr.mxu0 0.0
    %3977 = vmatpush1.msra.mxu0 0.0
    %3978 = vmatprep.subr.mxu0 0.0
    %3979 = vmatpush1.msra.mxu0 0.0
    %3980 = vmatprep.mubr.f32.mxu0 0.0
    %3981 = vmatmul.mubr.f32.gmra.mrb[0].mxu0 %v2951
    %v3982 = vpop.f32.mrb[0].mxu0
    %v3983 = vadd.f32 %v3911, %v3982
    %v3984 = vpop.f32.mrb[0].mxu0
    %3985 = vdwg.mxu0
    %v3987 = vlaneseq
    %v3988 = vshrl.u32 %v3987, 7
    %v3989 = vsub.s32 0, %v3988
    %v3990 = vrot.slane %v454, %v3989
    %v3993 = vsel %vm101, %v413, 0
    %3995 = vmatprep.subr.mxu0 0.0
    %3996 = vmatpush1.msra.mxu0 %v411
    %3997 = vmatprep.subr.mxu0 0.0
    %3998 = vmatpush1.msra.mxu0 %v412
    %3999 = vmatprep.subr.mxu0 0.0
    %4000 = vmatpush1.msra.mxu0 %v3993
    %4001 = vmatprep.subr.mxu0 0.0
    %4002 = vmatpush1.msra.mxu0 0.0
    %4003 = vmatprep.subr.mxu0 0.0
    %4004 = vmatpush1.msra.mxu0 0.0
    %4005 = vmatprep.subr.mxu0 0.0
    %4006 = vmatpush1.msra.mxu0 0.0
    %4007 = vmatprep.subr.mxu0 0.0
    %4008 = vmatpush1.msra.mxu0 0.0
    %4009 = vmatprep.subr.mxu0 0.0
    %4010 = vmatpush1.msra.mxu0 0.0
    %4011 = vmatprep.subr.mxu0 0.0
    %4012 = vmatpush1.msra.mxu0 0.0
    %4013 = vmatprep.subr.mxu0 0.0
    %4014 = vmatpush1.msra.mxu0 0.0
    %4015 = vmatprep.subr.mxu0 0.0
    %4016 = vmatpush1.msra.mxu0 0.0
    %4017 = vmatprep.subr.mxu0 0.0
    %4018 = vmatpush1.msra.mxu0 0.0
    %4019 = vmatprep.subr.mxu0 0.0
    %4020 = vmatpush1.msra.mxu0 0.0
    %4021 = vmatprep.subr.mxu0 0.0
    %4022 = vmatpush1.msra.mxu0 0.0
    %4023 = vmatprep.subr.mxu0 0.0
    %4024 = vmatpush1.msra.mxu0 0.0
    %4025 = vmatprep.subr.mxu0 0.0
    %4026 = vmatpush1.msra.mxu0 0.0
    %4027 = vmatprep.subr.mxu0 0.0
    %4028 = vmatpush1.msra.mxu0 0.0
    %4029 = vmatprep.subr.mxu0 0.0
    %4030 = vmatpush1.msra.mxu0 0.0
    %4031 = vmatprep.subr.mxu0 0.0
    %4032 = vmatpush1.msra.mxu0 0.0
    %4033 = vmatprep.subr.mxu0 0.0
    %4034 = vmatpush1.msra.mxu0 0.0
    %4035 = vmatprep.subr.mxu0 0.0
    %4036 = vmatpush1.msra.mxu0 0.0
    %4037 = vmatprep.subr.mxu0 0.0
    %4038 = vmatpush1.msra.mxu0 0.0
    %4039 = vmatprep.subr.mxu0 0.0
    %4040 = vmatpush1.msra.mxu0 0.0
    %4041 = vmatprep.subr.mxu0 0.0
    %4042 = vmatpush1.msra.mxu0 0.0
    %4043 = vmatprep.subr.mxu0 0.0
    %4044 = vmatpush1.msra.mxu0 0.0
    %4045 = vmatprep.subr.mxu0 0.0
    %4046 = vmatpush1.msra.mxu0 0.0
    %4047 = vmatprep.subr.mxu0 0.0
    %4048 = vmatpush1.msra.mxu0 0.0
    %4049 = vmatprep.subr.mxu0 0.0
    %4050 = vmatpush1.msra.mxu0 0.0
    %4051 = vmatprep.subr.mxu0 0.0
    %4052 = vmatpush1.msra.mxu0 0.0
    %4053 = vmatprep.subr.mxu0 0.0
    %4054 = vmatpush1.msra.mxu0 0.0
    %4055 = vmatprep.subr.mxu0 0.0
    %4056 = vmatpush1.msra.mxu0 0.0
    %4057 = vmatprep.subr.mxu0 0.0
    %4058 = vmatpush1.msra.mxu0 0.0
    %4059 = vmatprep.mubr.f32.mxu0 0.0
    %4060 = vmatmul.mubr.f32.gmra.mrb[0].mxu0 %v3033
    %v4061 = vpop.f32.mrb[0].mxu0
    %v4062 = vadd.f32 %v3990, %v4061
    %v4063 = vpop.f32.mrb[0].mxu0
    %4064 = vdwg.mxu0
    %v4066 = vlaneseq
    %v4067 = vshrl.u32 %v4066, 7
    %v4068 = vsub.s32 0, %v4067
    %v4069 = vrot.slane %v463, %v4068
    %v4072 = vsel %vm101, %v432, 0
    %4074 = vmatprep.subr.mxu0 0.0
    %4075 = vmatpush1.msra.mxu0 %v430
    %4076 = vmatprep.subr.mxu0 0.0
    %4077 = vmatpush1.msra.mxu0 %v431
    %4078 = vmatprep.subr.mxu0 0.0
    %4079 = vmatpush1.msra.mxu0 %v4072
    %4080 = vmatprep.subr.mxu0 0.0
    %4081 = vmatpush1.msra.mxu0 0.0
    %4082 = vmatprep.subr.mxu0 0.0
    %4083 = vmatpush1.msra.mxu0 0.0
    %4084 = vmatprep.subr.mxu0 0.0
    %4085 = vmatpush1.msra.mxu0 0.0
    %4086 = vmatprep.subr.mxu0 0.0
    %4087 = vmatpush1.msra.mxu0 0.0
    %4088 = vmatprep.subr.mxu0 0.0
    %4089 = vmatpush1.msra.mxu0 0.0
    %4090 = vmatprep.subr.mxu0 0.0
    %4091 = vmatpush1.msra.mxu0 0.0
    %4092 = vmatprep.subr.mxu0 0.0
    %4093 = vmatpush1.msra.mxu0 0.0
    %4094 = vmatprep.subr.mxu0 0.0
    %4095 = vmatpush1.msra.mxu0 0.0
    %4096 = vmatprep.subr.mxu0 0.0
    %4097 = vmatpush1.msra.mxu0 0.0
    %4098 = vmatprep.subr.mxu0 0.0
    %4099 = vmatpush1.msra.mxu0 0.0
    %4100 = vmatprep.subr.mxu0 0.0
    %4101 = vmatpush1.msra.mxu0 0.0
    %4102 = vmatprep.subr.mxu0 0.0
    %4103 = vmatpush1.msra.mxu0 0.0
    %4104 = vmatprep.subr.mxu0 0.0
    %4105 = vmatpush1.msra.mxu0 0.0
    %4106 = vmatprep.subr.mxu0 0.0
    %4107 = vmatpush1.msra.mxu0 0.0
    %4108 = vmatprep.subr.mxu0 0.0
    %4109 = vmatpush1.msra.mxu0 0.0
    %4110 = vmatprep.subr.mxu0 0.0
    %4111 = vmatpush1.msra.mxu0 0.0
    %4112 = vmatprep.subr.mxu0 0.0
    %4113 = vmatpush1.msra.mxu0 0.0
    %4114 = vmatprep.subr.mxu0 0.0
    %4115 = vmatpush1.msra.mxu0 0.0
    %4116 = vmatprep.subr.mxu0 0.0
    %4117 = vmatpush1.msra.mxu0 0.0
    %4118 = vmatprep.subr.mxu0 0.0
    %4119 = vmatpush1.msra.mxu0 0.0
    %4120 = vmatprep.subr.mxu0 0.0
    %4121 = vmatpush1.msra.mxu0 0.0
    %4122 = vmatprep.subr.mxu0 0.0
    %4123 = vmatpush1.msra.mxu0 0.0
    %4124 = vmatprep.subr.mxu0 0.0
    %4125 = vmatpush1.msra.mxu0 0.0
    %4126 = vmatprep.subr.mxu0 0.0
    %4127 = vmatpush1.msra.mxu0 0.0
    %4128 = vmatprep.subr.mxu0 0.0
    %4129 = vmatpush1.msra.mxu0 0.0
    %4130 = vmatprep.subr.mxu0 0.0
    %4131 = vmatpush1.msra.mxu0 0.0
    %4132 = vmatprep.subr.mxu0 0.0
    %4133 = vmatpush1.msra.mxu0 0.0
    %4134 = vmatprep.subr.mxu0 0.0
    %4135 = vmatpush1.msra.mxu0 0.0
    %4136 = vmatprep.subr.mxu0 0.0
    %4137 = vmatpush1.msra.mxu0 0.0
    %4138 = vmatprep.mubr.f32.mxu0 0.0
    %4139 = vmatmul.mubr.f32.gmra.mrb[0].mxu0 %v3033
    %v4140 = vpop.f32.mrb[0].mxu0
    %v4141 = vadd.f32 %v4069, %v4140
    %v4142 = vpop.f32.mrb[0].mxu0
    %4143 = vdwg.mxu0
    %v4145 = vsel %vm478, %v3983, 0
    %v4148 = vsel %vm478, %v4062, 0
    %4150 = vmatprep.subr.mxu0 0.0
    %4151 = vmatpush1.xpose.msra.mxu0 %v4148
    %4152 = vmatprep.subr.mxu0 0.0
    %4153 = vmatpush1.xpose.msra.mxu0 0.0
    %4154 = vmatprep.subr.mxu0 0.0
    %4155 = vmatpush1.xpose.msra.mxu0 0.0
    %4156 = vmatprep.subr.mxu0 0.0
    %4157 = vmatpush1.xpose.msra.mxu0 0.0
    %4158 = vmatprep.subr.mxu0 0.0
    %4159 = vmatpush1.xpose.msra.mxu0 0.0
    %4160 = vmatprep.subr.mxu0 0.0
    %4161 = vmatpush1.xpose.msra.mxu0 0.0
    %4162 = vmatprep.subr.mxu0 0.0
    %4163 = vmatpush1.xpose.msra.mxu0 0.0
    %4164 = vmatprep.subr.mxu0 0.0
    %4165 = vmatpush1.xpose.msra.mxu0 0.0
    %4166 = vmatprep.subr.mxu0 0.0
    %4167 = vmatpush1.xpose.msra.mxu0 0.0
    %4168 = vmatprep.subr.mxu0 0.0
    %4169 = vmatpush1.xpose.msra.mxu0 0.0
    %4170 = vmatprep.subr.mxu0 0.0
    %4171 = vmatpush1.xpose.msra.mxu0 0.0
    %4172 = vmatprep.subr.mxu0 0.0
    %4173 = vmatpush1.xpose.msra.mxu0 0.0
    %4174 = vmatprep.subr.mxu0 0.0
    %4175 = vmatpush1.xpose.msra.mxu0 0.0
    %4176 = vmatprep.subr.mxu0 0.0
    %4177 = vmatpush1.xpose.msra.mxu0 0.0
    %4178 = vmatprep.subr.mxu0 0.0
    %4179 = vmatpush1.xpose.msra.mxu0 0.0
    %4180 = vmatprep.subr.mxu0 0.0
    %4181 = vmatpush1.xpose.msra.mxu0 0.0
    %4182 = vmatprep.subr.mxu0 0.0
    %4183 = vmatpush1.xpose.msra.mxu0 0.0
    %4184 = vmatprep.subr.mxu0 0.0
    %4185 = vmatpush1.xpose.msra.mxu0 0.0
    %4186 = vmatprep.subr.mxu0 0.0
    %4187 = vmatpush1.xpose.msra.mxu0 0.0
    %4188 = vmatprep.subr.mxu0 0.0
    %4189 = vmatpush1.xpose.msra.mxu0 0.0
    %4190 = vmatprep.subr.mxu0 0.0
    %4191 = vmatpush1.xpose.msra.mxu0 0.0
    %4192 = vmatprep.subr.mxu0 0.0
    %4193 = vmatpush1.xpose.msra.mxu0 0.0
    %4194 = vmatprep.subr.mxu0 0.0
    %4195 = vmatpush1.xpose.msra.mxu0 0.0
    %4196 = vmatprep.subr.mxu0 0.0
    %4197 = vmatpush1.xpose.msra.mxu0 0.0
    %4198 = vmatprep.subr.mxu0 0.0
    %4199 = vmatpush1.xpose.msra.mxu0 0.0
    %4200 = vmatprep.subr.mxu0 0.0
    %4201 = vmatpush1.xpose.msra.mxu0 0.0
    %4202 = vmatprep.subr.mxu0 0.0
    %4203 = vmatpush1.xpose.msra.mxu0 0.0
    %4204 = vmatprep.subr.mxu0 0.0
    %4205 = vmatpush1.xpose.msra.mxu0 0.0
    %4206 = vmatprep.subr.mxu0 0.0
    %4207 = vmatpush1.xpose.msra.mxu0 0.0
    %4208 = vmatprep.subr.mxu0 0.0
    %4209 = vmatpush1.xpose.msra.mxu0 0.0
    %4210 = vmatprep.subr.mxu0 0.0
    %4211 = vmatpush1.xpose.msra.mxu0 0.0
    %4212 = vmatprep.subr.mxu0 0.0
    %4213 = vmatpush1.xpose.msra.mxu0 0.0
    %4214 = vmatprep.mubr.f32.mxu0 0.0
    %4215 = vmatmul.mubr.f32.gmra.mrb[0].mxu0 %v4145
    %v4216 = vpop.f32.mrb[0].mxu0
    %v4217 = vadd.f32 0.0, %v4216
    %v4218 = vpop.f32.mrb[0].mxu0
    %4219 = vdwg.mxu0
    %v4220 = vmul.f32 %v4217, 0.5
    %v4221 = vsel %vm3264, %v4220, -inf
    %4222 = vmax.xlane.f32.xlu0 %v4221
    %v4223 = vpop.xlane.xlu0 %4222
    %v4224 = vsub.f32 %v4220, %v4223
    %v4225 = vmul.f32 %v4224, 1.442695
    %v4226 = vpow.pop %v4225
    %v4227 = vsel %vm3264, %v4226, 0.0
    %4228 = vadd.xlane.f32.xlu0 %v4227
    %v4229 = vpop.xlane.xlu0 %4228
    %v4230 = vrcp.pop %v4229
    %v4231 = vmul.f32 %v4226, %v4230
    %v4233 = vsel %vm3276, %v4231, 0
    %v4236 = vsel %vm3280, %v4141, 0
    %4238 = vmatprep.subr.mxu0 0.0
    %4239 = vmatpush1.msra.mxu0 %v4236
    %4240 = vmatprep.subr.mxu0 0.0
    %4241 = vmatpush1.msra.mxu0 0.0
    %4242 = vmatprep.subr.mxu0 0.0
    %4243 = vmatpush1.msra.mxu0 0.0
    %4244 = vmatprep.subr.mxu0 0.0
    %4245 = vmatpush1.msra.mxu0 0.0
    %4246 = vmatprep.subr.mxu0 0.0
    %4247 = vmatpush1.msra.mxu0 0.0
    %4248 = vmatprep.subr.mxu0 0.0
    %4249 = vmatpush1.msra.mxu0 0.0
    %4250 = vmatprep.subr.mxu0 0.0
    %4251 = vmatpush1.msra.mxu0 0.0
    %4252 = vmatprep.subr.mxu0 0.0
    %4253 = vmatpush1.msra.mxu0 0.0
    %4254 = vmatprep.subr.mxu0 0.0
    %4255 = vmatpush1.msra.mxu0 0.0
    %4256 = vmatprep.subr.mxu0 0.0
    %4257 = vmatpush1.msra.mxu0 0.0
    %4258 = vmatprep.subr.mxu0 0.0
    %4259 = vmatpush1.msra.mxu0 0.0
    %4260 = vmatprep.subr.mxu0 0.0
    %4261 = vmatpush1.msra.mxu0 0.0
    %4262 = vmatprep.subr.mxu0 0.0
    %4263 = vmatpush1.msra.mxu0 0.0
    %4264 = vmatprep.subr.mxu0 0.0
    %4265 = vmatpush1.msra.mxu0 0.0
    %4266 = vmatprep.subr.mxu0 0.0
    %4267 = vmatpush1.msra.mxu0 0.0
    %4268 = vmatprep.subr.mxu0 0.0
    %4269 = vmatpush1.msra.mxu0 0.0
    %4270 = vmatprep.subr.mxu0 0.0
    %4271 = vmatpush1.msra.mxu0 0.0
    %4272 = vmatprep.subr.mxu0 0.0
    %4273 = vmatpush1.msra.mxu0 0.0
    %4274 = vmatprep.subr.mxu0 0.0
    %4275 = vmatpush1.msra.mxu0 0.0
    %4276 = vmatprep.subr.mxu0 0.0
    %4277 = vmatpush1.msra.mxu0 0.0
    %4278 = vmatprep.subr.mxu0 0.0
    %4279 = vmatpush1.msra.mxu0 0.0
    %4280 = vmatprep.subr.mxu0 0.0
    %4281 = vmatpush1.msra.mxu0 0.0
    %4282 = vmatprep.subr.mxu0 0.0
    %4283 = vmatpush1.msra.mxu0 0.0
    %4284 = vmatprep.subr.mxu0 0.0
    %4285 = vmatpush1.msra.mxu0 0.0
    %4286 = vmatprep.subr.mxu0 0.0
    %4287 = vmatpush1.msra.mxu0 0.0
    %4288 = vmatprep.subr.mxu0 0.0
    %4289 = vmatpush1.msra.mxu0 0.0
    %4290 = vmatprep.subr.mxu0 0.0
    %4291 = vmatpush1.msra.mxu0 0.0
    %4292 = vmatprep.subr.mxu0 0.0
    %4293 = vmatpush1.msra.mxu0 0.0
    %4294 = vmatprep.subr.mxu0 0.0
    %4295 = vmatpush1.msra.mxu0 0.0
    %4296 = vmatprep.subr.mxu0 0.0
    %4297 = vmatpush1.msra.mxu0 0.0
    %4298 = vmatprep.subr.mxu0 0.0
    %4299 = vmatpush1.msra.mxu0 0.0
    %4300 = vmatprep.subr.mxu0 0.0
    %4301 = vmatpush1.msra.mxu0 0.0
    %4302 = vmatprep.mubr.f32.mxu0 0.0
    %4303 = vmatmul.mubr.f32.gmra.mrb[0].mxu0 %v4233
    %v4304 = vpop.f32.mrb[0].mxu0
    %v4305 = vadd.f32 0.0, %v4304
    %v4306 = vpop.f32.mrb[0].mxu0
    %4307 = vdwg.mxu0
    %v4309 = vsel %vm478, %v4305, 0
    %v4312 = vsel %vm101, %v472, 0
    %4314 = vmatprep.subr.mxu0 0.0
    %4315 = vmatpush1.msra.mxu0 %v4312
    %4316 = vmatprep.subr.mxu0 0.0
    %4317 = vmatpush1.msra.mxu0 0.0
    %4318 = vmatprep.subr.mxu0 0.0
    %4319 = vmatpush1.msra.mxu0 0.0
    %4320 = vmatprep.subr.mxu0 0.0
    %4321 = vmatpush1.msra.mxu0 0.0
    %4322 = vmatprep.subr.mxu0 0.0
    %4323 = vmatpush1.msra.mxu0 0.0
    %4324 = vmatprep.subr.mxu0 0.0
    %4325 = vmatpush1.msra.mxu0 0.0
    %4326 = vmatprep.subr.mxu0 0.0
    %4327 = vmatpush1.msra.mxu0 0.0
    %4328 = vmatprep.subr.mxu0 0.0
    %4329 = vmatpush1.msra.mxu0 0.0
    %4330 = vmatprep.subr.mxu0 0.0
    %4331 = vmatpush1.msra.mxu0 0.0
    %4332 = vmatprep.subr.mxu0 0.0
    %4333 = vmatpush1.msra.mxu0 0.0
    %4334 = vmatprep.subr.mxu0 0.0
    %4335 = vmatpush1.msra.mxu0 0.0
    %4336 = vmatprep.subr.mxu0 0.0
    %4337 = vmatpush1.msra.mxu0 0.0
    %4338 = vmatprep.subr.mxu0 0.0
    %4339 = vmatpush1.msra.mxu0 0.0
    %4340 = vmatprep.subr.mxu0 0.0
    %4341 = vmatpush1.msra.mxu0 0.0
    %4342 = vmatprep.subr.mxu0 0.0
    %4343 = vmatpush1.msra.mxu0 0.0
    %4344 = vmatprep.subr.mxu0 0.0
    %4345 = vmatpush1.msra.mxu0 0.0
    %4346 = vmatprep.subr.mxu0 0.0
    %4347 = vmatpush1.msra.mxu0 0.0
    %4348 = vmatprep.subr.mxu0 0.0
    %4349 = vmatpush1.msra.mxu0 0.0
    %4350 = vmatprep.subr.mxu0 0.0
    %4351 = vmatpush1.msra.mxu0 0.0
    %4352 = vmatprep.subr.mxu0 0.0
    %4353 = vmatpush1.msra.mxu0 0.0
    %4354 = vmatprep.subr.mxu0 0.0
    %4355 = vmatpush1.msra.mxu0 0.0
    %4356 = vmatprep.subr.mxu0 0.0
    %4357 = vmatpush1.msra.mxu0 0.0
    %4358 = vmatprep.subr.mxu0 0.0
    %4359 = vmatpush1.msra.mxu0 0.0
    %4360 = vmatprep.subr.mxu0 0.0
    %4361 = vmatpush1.msra.mxu0 0.0
    %4362 = vmatprep.subr.mxu0 0.0
    %4363 = vmatpush1.msra.mxu0 0.0
    %4364 = vmatprep.subr.mxu0 0.0
    %4365 = vmatpush1.msra.mxu0 0.0
    %4366 = vmatprep.subr.mxu0 0.0
    %4367 = vmatpush1.msra.mxu0 0.0
    %4368 = vmatprep.subr.mxu0 0.0
    %4369 = vmatpush1.msra.mxu0 0.0
    %4370 = vmatprep.subr.mxu0 0.0
    %4371 = vmatpush1.msra.mxu0 0.0
    %4372 = vmatprep.subr.mxu0 0.0
    %4373 = vmatpush1.msra.mxu0 0.0
    %4374 = vmatprep.subr.mxu0 0.0
    %4375 = vmatpush1.msra.mxu0 0.0
    %4376 = vmatprep.subr.mxu0 0.0
    %4377 = vmatpush1.msra.mxu0 0.0
    %4378 = vmatprep.mubr.f32.mxu0 0.0
    %4379 = vmatmul.mubr.f32.gmra.mrb[0].mxu0 %v4309
    %v4380 = vpop.f32.mrb[0].mxu0
    %v4381 = vadd.f32 0.0, %v4380
    %v4382 = vpop.f32.mrb[0].mxu0
    %4383 = vdwg.mxu0
    %v4384 = vadd.f32 %v3904, %v4381
    %v4386 = vlaneseq
    %v4387 = vshrl.u32 %v4386, 7
    %v4388 = vsub.s32 0, %v4387
    %v4389 = vrot.slane %v447, %v4388
    %v4392 = vsel %vm101, %v398, 0
    %4394 = vmatprep.subr.mxu0 0.0
    %4395 = vmatpush1.msra.mxu0 %v396
    %4396 = vmatprep.subr.mxu0 0.0
    %4397 = vmatpush1.msra.mxu0 %v397
    %4398 = vmatprep.subr.mxu0 0.0
    %4399 = vmatpush1.msra.mxu0 %v4392
    %4400 = vmatprep.subr.mxu0 0.0
    %4401 = vmatpush1.msra.mxu0 0.0
    %4402 = vmatprep.subr.mxu0 0.0
    %4403 = vmatpush1.msra.mxu0 0.0
    %4404 = vmatprep.subr.mxu0 0.0
    %4405 = vmatpush1.msra.mxu0 0.0
    %4406 = vmatprep.subr.mxu0 0.0
    %4407 = vmatpush1.msra.mxu0 0.0
    %4408 = vmatprep.subr.mxu0 0.0
    %4409 = vmatpush1.msra.mxu0 0.0
    %4410 = vmatprep.subr.mxu0 0.0
    %4411 = vmatpush1.msra.mxu0 0.0
    %4412 = vmatprep.subr.mxu0 0.0
    %4413 = vmatpush1.msra.mxu0 0.0
    %4414 = vmatprep.subr.mxu0 0.0
    %4415 = vmatpush1.msra.mxu0 0.0
    %4416 = vmatprep.subr.mxu0 0.0
    %4417 = vmatpush1.msra.mxu0 0.0
    %4418 = vmatprep.subr.mxu0 0.0
    %4419 = vmatpush1.msra.mxu0 0.0
    %4420 = vmatprep.subr.mxu0 0.0
    %4421 = vmatpush1.msra.mxu0 0.0
    %4422 = vmatprep.subr.mxu0 0.0
    %4423 = vmatpush1.msra.mxu0 0.0
    %4424 = vmatprep.subr.mxu0 0.0
    %4425 = vmatpush1.msra.mxu0 0.0
    %4426 = vmatprep.subr.mxu0 0.0
    %4427 = vmatpush1.msra.mxu0 0.0
    %4428 = vmatprep.subr.mxu0 0.0
    %4429 = vmatpush1.msra.mxu0 0.0
    %4430 = vmatprep.subr.mxu0 0.0
    %4431 = vmatpush1.msra.mxu0 0.0
    %4432 = vmatprep.subr.mxu0 0.0
    %4433 = vmatpush1.msra.mxu0 0.0
    %4434 = vmatprep.subr.mxu0 0.0
    %4435 = vmatpush1.msra.mxu0 0.0
    %4436 = vmatprep.subr.mxu0 0.0
    %4437 = vmatpush1.msra.mxu0 0.0
    %4438 = vmatprep.subr.mxu0 0.0
    %4439 = vmatpush1.msra.mxu0 0.0
    %4440 = vmatprep.subr.mxu0 0.0
    %4441 = vmatpush1.msra.mxu0 0.0
    %4442 = vmatprep.subr.mxu0 0.0
    %4443 = vmatpush1.msra.mxu0 0.0
    %4444 = vmatprep.subr.mxu0 0.0
    %4445 = vmatpush1.msra.mxu0 0.0
    %4446 = vmatprep.subr.mxu0 0.0
    %4447 = vmatpush1.msra.mxu0 0.0
    %4448 = vmatprep.subr.mxu0 0.0
    %4449 = vmatpush1.msra.mxu0 0.0
    %4450 = vmatprep.subr.mxu0 0.0
    %4451 = vmatpush1.msra.mxu0 0.0
    %4452 = vmatprep.subr.mxu0 0.0
    %4453 = vmatpush1.msra.mxu0 0.0
    %4454 = vmatprep.subr.mxu0 0.0
    %4455 = vmatpush1.msra.mxu0 0.0
    %4456 = vmatprep.subr.mxu0 0.0
    %4457 = vmatpush1.msra.mxu0 0.0
    %4458 = vmatprep.mubr.f32.mxu0 0.0
    %4459 = vmatmul.mubr.f32.gmra.mrb[0].mxu0 %v2951
    %v4460 = vpop.f32.mrb[0].mxu0
    %v4461 = vadd.f32 %v4389, %v4460
    %v4462 = vpop.f32.mrb[0].mxu0
    %4463 = vdwg.mxu0
    %v4465 = vlaneseq
    %v4466 = vshrl.u32 %v4465, 7
    %v4467 = vsub.s32 0, %v4466
    %v4468 = vrot.slane %v456, %v4467
    %v4471 = vsel %vm101, %v417, 0
    %4473 = vmatprep.subr.mxu0 0.0
    %4474 = vmatpush1.msra.mxu0 %v415
    %4475 = vmatprep.subr.mxu0 0.0
    %4476 = vmatpush1.msra.mxu0 %v416
    %4477 = vmatprep.subr.mxu0 0.0
    %4478 = vmatpush1.msra.mxu0 %v4471
    %4479 = vmatprep.subr.mxu0 0.0
    %4480 = vmatpush1.msra.mxu0 0.0
    %4481 = vmatprep.subr.mxu0 0.0
    %4482 = vmatpush1.msra.mxu0 0.0
    %4483 = vmatprep.subr.mxu0 0.0
    %4484 = vmatpush1.msra.mxu0 0.0
    %4485 = vmatprep.subr.mxu0 0.0
    %4486 = vmatpush1.msra.mxu0 0.0
    %4487 = vmatprep.subr.mxu0 0.0
    %4488 = vmatpush1.msra.mxu0 0.0
    %4489 = vmatprep.subr.mxu0 0.0
    %4490 = vmatpush1.msra.mxu0 0.0
    %4491 = vmatprep.subr.mxu0 0.0
    %4492 = vmatpush1.msra.mxu0 0.0
    %4493 = vmatprep.subr.mxu0 0.0
    %4494 = vmatpush1.msra.mxu0 0.0
    %4495 = vmatprep.subr.mxu0 0.0
    %4496 = vmatpush1.msra.mxu0 0.0
    %4497 = vmatprep.subr.mxu0 0.0
    %4498 = vmatpush1.msra.mxu0 0.0
    %4499 = vmatprep.subr.mxu0 0.0
    %4500 = vmatpush1.msra.mxu0 0.0
    %4501 = vmatprep.subr.mxu0 0.0
    %4502 = vmatpush1.msra.mxu0 0.0
    %4503 = vmatprep.subr.mxu0 0.0
    %4504 = vmatpush1.msra.mxu0 0.0
    %4505 = vmatprep.subr.mxu0 0.0
    %4506 = vmatpush1.msra.mxu0 0.0
    %4507 = vmatprep.subr.mxu0 0.0
    %4508 = vmatpush1.msra.mxu0 0.0
    %4509 = vmatprep.subr.mxu0 0.0
    %4510 = vmatpush1.msra.mxu0 0.0
    %4511 = vmatprep.subr.mxu0 0.0
    %4512 = vmatpush1.msra.mxu0 0.0
    %4513 = vmatprep.subr.mxu0 0.0
    %4514 = vmatpush1.msra.mxu0 0.0
    %4515 = vmatprep.subr.mxu0 0.0
    %4516 = vmatpush1.msra.mxu0 0.0
    %4517 = vmatprep.subr.mxu0 0.0
    %4518 = vmatpush1.msra.mxu0 0.0
    %4519 = vmatprep.subr.mxu0 0.0
    %4520 = vmatpush1.msra.mxu0 0.0
    %4521 = vmatprep.subr.mxu0 0.0
    %4522 = vmatpush1.msra.mxu0 0.0
    %4523 = vmatprep.subr.mxu0 0.0
    %4524 = vmatpush1.msra.mxu0 0.0
    %4525 = vmatprep.subr.mxu0 0.0
    %4526 = vmatpush1.msra.mxu0 0.0
    %4527 = vmatprep.subr.mxu0 0.0
    %4528 = vmatpush1.msra.mxu0 0.0
    %4529 = vmatprep.subr.mxu0 0.0
    %4530 = vmatpush1.msra.mxu0 0.0
    %4531 = vmatprep.subr.mxu0 0.0
    %4532 = vmatpush1.msra.mxu0 0.0
    %4533 = vmatprep.subr.mxu0 0.0
    %4534 = vmatpush1.msra.mxu0 0.0
    %4535 = vmatprep.subr.mxu0 0.0
    %4536 = vmatpush1.msra.mxu0 0.0
    %4537 = vmatprep.mubr.f32.mxu0 0.0
    %4538 = vmatmul.mubr.f32.gmra.mrb[0].mxu0 %v3033
    %v4539 = vpop.f32.mrb[0].mxu0
    %v4540 = vadd.f32 %v4468, %v4539
    %v4541 = vpop.f32.mrb[0].mxu0
    %4542 = vdwg.mxu0
    %v4544 = vlaneseq
    %v4545 = vshrl.u32 %v4544, 7
    %v4546 = vsub.s32 0, %v4545
    %v4547 = vrot.slane %v465, %v4546
    %v4550 = vsel %vm101, %v436, 0
    %4552 = vmatprep.subr.mxu0 0.0
    %4553 = vmatpush1.msra.mxu0 %v434
    %4554 = vmatprep.subr.mxu0 0.0
    %4555 = vmatpush1.msra.mxu0 %v435
    %4556 = vmatprep.subr.mxu0 0.0
    %4557 = vmatpush1.msra.mxu0 %v4550
    %4558 = vmatprep.subr.mxu0 0.0
    %4559 = vmatpush1.msra.mxu0 0.0
    %4560 = vmatprep.subr.mxu0 0.0
    %4561 = vmatpush1.msra.mxu0 0.0
    %4562 = vmatprep.subr.mxu0 0.0
    %4563 = vmatpush1.msra.mxu0 0.0
    %4564 = vmatprep.subr.mxu0 0.0
    %4565 = vmatpush1.msra.mxu0 0.0
    %4566 = vmatprep.subr.mxu0 0.0
    %4567 = vmatpush1.msra.mxu0 0.0
    %4568 = vmatprep.subr.mxu0 0.0
    %4569 = vmatpush1.msra.mxu0 0.0
    %4570 = vmatprep.subr.mxu0 0.0
    %4571 = vmatpush1.msra.mxu0 0.0
    %4572 = vmatprep.subr.mxu0 0.0
    %4573 = vmatpush1.msra.mxu0 0.0
    %4574 = vmatprep.subr.mxu0 0.0
    %4575 = vmatpush1.msra.mxu0 0.0
    %4576 = vmatprep.subr.mxu0 0.0
    %4577 = vmatpush1.msra.mxu0 0.0
    %4578 = vmatprep.subr.mxu0 0.0
    %4579 = vmatpush1.msra.mxu0 0.0
    %4580 = vmatprep.subr.mxu0 0.0
    %4581 = vmatpush1.msra.mxu0 0.0
    %4582 = vmatprep.subr.mxu0 0.0
    %4583 = vmatpush1.msra.mxu0 0.0
    %4584 = vmatprep.subr.mxu0 0.0
    %4585 = vmatpush1.msra.mxu0 0.0
    %4586 = vmatprep.subr.mxu0 0.0
    %4587 = vmatpush1.msra.mxu0 0.0
    %4588 = vmatprep.subr.mxu0 0.0
    %4589 = vmatpush1.msra.mxu0 0.0
    %4590 = vmatprep.subr.mxu0 0.0
    %4591 = vmatpush1.msra.mxu0 0.0
    %4592 = vmatprep.subr.mxu0 0.0
    %4593 = vmatpush1.msra.mxu0 0.0
    %4594 = vmatprep.subr.mxu0 0.0
    %4595 = vmatpush1.msra.mxu0 0.0
    %4596 = vmatprep.subr.mxu0 0.0
    %4597 = vmatpush1.msra.mxu0 0.0
    %4598 = vmatprep.subr.mxu0 0.0
    %4599 = vmatpush1.msra.mxu0 0.0
    %4600 = vmatprep.subr.mxu0 0.0
    %4601 = vmatpush1.msra.mxu0 0.0
    %4602 = vmatprep.subr.mxu0 0.0
    %4603 = vmatpush1.msra.mxu0 0.0
    %4604 = vmatprep.subr.mxu0 0.0
    %4605 = vmatpush1.msra.mxu0 0.0
    %4606 = vmatprep.subr.mxu0 0.0
    %4607 = vmatpush1.msra.mxu0 0.0
    %4608 = vmatprep.subr.mxu0 0.0
    %4609 = vmatpush1.msra.mxu0 0.0
    %4610 = vmatprep.subr.mxu0 0.0
    %4611 = vmatpush1.msra.mxu0 0.0
    %4612 = vmatprep.subr.mxu0 0.0
    %4613 = vmatpush1.msra.mxu0 0.0
    %4614 = vmatprep.subr.mxu0 0.0
    %4615 = vmatpush1.msra.mxu0 0.0
    %4616 = vmatprep.mubr.f32.mxu0 0.0
    %4617 = vmatmul.mubr.f32.gmra.mrb[0].mxu0 %v3033
    %v4618 = vpop.f32.mrb[0].mxu0
    %v4619 = vadd.f32 %v4547, %v4618
    %v4620 = vpop.f32.mrb[0].mxu0
    %4621 = vdwg.mxu0
    %v4623 = vsel %vm478, %v4461, 0
    %v4626 = vsel %vm478, %v4540, 0
    %4628 = vmatprep.subr.mxu0 0.0
    %4629 = vmatpush1.xpose.msra.mxu0 %v4626
    %4630 = vmatprep.subr.mxu0 0.0
    %4631 = vmatpush1.xpose.msra.mxu0 0.0
    %4632 = vmatprep.subr.mxu0 0.0
    %4633 = vmatpush1.xpose.msra.mxu0 0.0
    %4634 = vmatprep.subr.mxu0 0.0
    %4635 = vmatpush1.xpose.msra.mxu0 0.0
    %4636 = vmatprep.subr.mxu0 0.0
    %4637 = vmatpush1.xpose.msra.mxu0 0.0
    %4638 = vmatprep.subr.mxu0 0.0
    %4639 = vmatpush1.xpose.msra.mxu0 0.0
    %4640 = vmatprep.subr.mxu0 0.0
    %4641 = vmatpush1.xpose.msra.mxu0 0.0
    %4642 = vmatprep.subr.mxu0 0.0
    %4643 = vmatpush1.xpose.msra.mxu0 0.0
    %4644 = vmatprep.subr.mxu0 0.0
    %4645 = vmatpush1.xpose.msra.mxu0 0.0
    %4646 = vmatprep.subr.mxu0 0.0
    %4647 = vmatpush1.xpose.msra.mxu0 0.0
    %4648 = vmatprep.subr.mxu0 0.0
    %4649 = vmatpush1.xpose.msra.mxu0 0.0
    %4650 = vmatprep.subr.mxu0 0.0
    %4651 = vmatpush1.xpose.msra.mxu0 0.0
    %4652 = vmatprep.subr.mxu0 0.0
    %4653 = vmatpush1.xpose.msra.mxu0 0.0
    %4654 = vmatprep.subr.mxu0 0.0
    %4655 = vmatpush1.xpose.msra.mxu0 0.0
    %4656 = vmatprep.subr.mxu0 0.0
    %4657 = vmatpush1.xpose.msra.mxu0 0.0
    %4658 = vmatprep.subr.mxu0 0.0
    %4659 = vmatpush1.xpose.msra.mxu0 0.0
    %4660 = vmatprep.subr.mxu0 0.0
    %4661 = vmatpush1.xpose.msra.mxu0 0.0
    %4662 = vmatprep.subr.mxu0 0.0
    %4663 = vmatpush1.xpose.msra.mxu0 0.0
    %4664 = vmatprep.subr.mxu0 0.0
    %4665 = vmatpush1.xpose.msra.mxu0 0.0
    %4666 = vmatprep.subr.mxu0 0.0
    %4667 = vmatpush1.xpose.msra.mxu0 0.0
    %4668 = vmatprep.subr.mxu0 0.0
    %4669 = vmatpush1.xpose.msra.mxu0 0.0
    %4670 = vmatprep.subr.mxu0 0.0
    %4671 = vmatpush1.xpose.msra.mxu0 0.0
    %4672 = vmatprep.subr.mxu0 0.0
    %4673 = vmatpush1.xpose.msra.mxu0 0.0
    %4674 = vmatprep.subr.mxu0 0.0
    %4675 = vmatpush1.xpose.msra.mxu0 0.0
    %4676 = vmatprep.subr.mxu0 0.0
    %4677 = vmatpush1.xpose.msra.mxu0 0.0
    %4678 = vmatprep.subr.mxu0 0.0
    %4679 = vmatpush1.xpose.msra.mxu0 0.0
    %4680 = vmatprep.subr.mxu0 0.0
    %4681 = vmatpush1.xpose.msra.mxu0 0.0
    %4682 = vmatprep.subr.mxu0 0.0
    %4683 = vmatpush1.xpose.msra.mxu0 0.0
    %4684 = vmatprep.subr.mxu0 0.0
    %4685 = vmatpush1.xpose.msra.mxu0 0.0
    %4686 = vmatprep.subr.mxu0 0.0
    %4687 = vmatpush1.xpose.msra.mxu0 0.0
    %4688 = vmatprep.subr.mxu0 0.0
    %4689 = vmatpush1.xpose.msra.mxu0 0.0
    %4690 = vmatprep.subr.mxu0 0.0
    %4691 = vmatpush1.xpose.msra.mxu0 0.0
    %4692 = vmatprep.mubr.f32.mxu0 0.0
    %4693 = vmatmul.mubr.f32.gmra.mrb[0].mxu0 %v4623
    %v4694 = vpop.f32.mrb[0].mxu0
    %v4695 = vadd.f32 0.0, %v4694
    %v4696 = vpop.f32.mrb[0].mxu0
    %4697 = vdwg.mxu0
    %v4698 = vmul.f32 %v4695, 0.5
    %v4699 = vsel %vm3264, %v4698, -inf
    %4700 = vmax.xlane.f32.xlu0 %v4699
    %v4701 = vpop.xlane.xlu0 %4700
    %v4702 = vsub.f32 %v4698, %v4701
    %v4703 = vmul.f32 %v4702, 1.442695
    %v4704 = vpow.pop %v4703
    %v4705 = vsel %vm3264, %v4704, 0.0
    %4706 = vadd.xlane.f32.xlu0 %v4705
    %v4707 = vpop.xlane.xlu0 %4706
    %v4708 = vrcp.pop %v4707
    %v4709 = vmul.f32 %v4704, %v4708
    %v4711 = vsel %vm3276, %v4709, 0
    %v4714 = vsel %vm3280, %v4619, 0
    %4716 = vmatprep.subr.mxu0 0.0
    %4717 = vmatpush1.msra.mxu0 %v4714
    %4718 = vmatprep.subr.mxu0 0.0
    %4719 = vmatpush1.msra.mxu0 0.0
    %4720 = vmatprep.subr.mxu0 0.0
    %4721 = vmatpush1.msra.mxu0 0.0
    %4722 = vmatprep.subr.mxu0 0.0
    %4723 = vmatpush1.msra.mxu0 0.0
    %4724 = vmatprep.subr.mxu0 0.0
    %4725 = vmatpush1.msra.mxu0 0.0
    %4726 = vmatprep.subr.mxu0 0.0
    %4727 = vmatpush1.msra.mxu0 0.0
    %4728 = vmatprep.subr.mxu0 0.0
    %4729 = vmatpush1.msra.mxu0 0.0
    %4730 = vmatprep.subr.mxu0 0.0
    %4731 = vmatpush1.msra.mxu0 0.0
    %4732 = vmatprep.subr.mxu0 0.0
    %4733 = vmatpush1.msra.mxu0 0.0
    %4734 = vmatprep.subr.mxu0 0.0
    %4735 = vmatpush1.msra.mxu0 0.0
    %4736 = vmatprep.subr.mxu0 0.0
    %4737 = vmatpush1.msra.mxu0 0.0
    %4738 = vmatprep.subr.mxu0 0.0
    %4739 = vmatpush1.msra.mxu0 0.0
    %4740 = vmatprep.subr.mxu0 0.0
    %4741 = vmatpush1.msra.mxu0 0.0
    %4742 = vmatprep.subr.mxu0 0.0
    %4743 = vmatpush1.msra.mxu0 0.0
    %4744 = vmatprep.subr.mxu0 0.0
    %4745 = vmatpush1.msra.mxu0 0.0
    %4746 = vmatprep.subr.mxu0 0.0
    %4747 = vmatpush1.msra.mxu0 0.0
    %4748 = vmatprep.subr.mxu0 0.0
    %4749 = vmatpush1.msra.mxu0 0.0
    %4750 = vmatprep.subr.mxu0 0.0
    %4751 = vmatpush1.msra.mxu0 0.0
    %4752 = vmatprep.subr.mxu0 0.0
    %4753 = vmatpush1.msra.mxu0 0.0
    %4754 = vmatprep.subr.mxu0 0.0
    %4755 = vmatpush1.msra.mxu0 0.0
    %4756 = vmatprep.subr.mxu0 0.0
    %4757 = vmatpush1.msra.mxu0 0.0
    %4758 = vmatprep.subr.mxu0 0.0
    %4759 = vmatpush1.msra.mxu0 0.0
    %4760 = vmatprep.subr.mxu0 0.0
    %4761 = vmatpush1.msra.mxu0 0.0
    %4762 = vmatprep.subr.mxu0 0.0
    %4763 = vmatpush1.msra.mxu0 0.0
    %4764 = vmatprep.subr.mxu0 0.0
    %4765 = vmatpush1.msra.mxu0 0.0
    %4766 = vmatprep.subr.mxu0 0.0
    %4767 = vmatpush1.msra.mxu0 0.0
    %4768 = vmatprep.subr.mxu0 0.0
    %4769 = vmatpush1.msra.mxu0 0.0
    %4770 = vmatprep.subr.mxu0 0.0
    %4771 = vmatpush1.msra.mxu0 0.0
    %4772 = vmatprep.subr.mxu0 0.0
    %4773 = vmatpush1.msra.mxu0 0.0
    %4774 = vmatprep.subr.mxu0 0.0
    %4775 = vmatpush1.msra.mxu0 0.0
    %4776 = vmatprep.subr.mxu0 0.0
    %4777 = vmatpush1.msra.mxu0 0.0
    %4778 = vmatprep.subr.mxu0 0.0
    %4779 = vmatpush1.msra.mxu0 0.0
    %4780 = vmatprep.mubr.f32.mxu0 0.0
    %4781 = vmatmul.mubr.f32.gmra.mrb[0].mxu0 %v4711
    %v4782 = vpop.f32.mrb[0].mxu0
    %v4783 = vadd.f32 0.0, %v4782
    %v4784 = vpop.f32.mrb[0].mxu0
    %4785 = vdwg.mxu0
    %v4787 = vsel %vm478, %v4783, 0
    %v4790 = vsel %vm101, %v474, 0
    %4792 = vmatprep.subr.mxu0 0.0
    %4793 = vmatpush1.msra.mxu0 %v4790
    %4794 = vmatprep.subr.mxu0 0.0
    %4795 = vmatpush1.msra.mxu0 0.0
    %4796 = vmatprep.subr.mxu0 0.0
    %4797 = vmatpush1.msra.mxu0 0.0
    %4798 = vmatprep.subr.mxu0 0.0
    %4799 = vmatpush1.msra.mxu0 0.0
    %4800 = vmatprep.subr.mxu0 0.0
    %4801 = vmatpush1.msra.mxu0 0.0
    %4802 = vmatprep.subr.mxu0 0.0
    %4803 = vmatpush1.msra.mxu0 0.0
    %4804 = vmatprep.subr.mxu0 0.0
    %4805 = vmatpush1.msra.mxu0 0.0
    %4806 = vmatprep.subr.mxu0 0.0
    %4807 = vmatpush1.msra.mxu0 0.0
    %4808 = vmatprep.subr.mxu0 0.0
    %4809 = vmatpush1.msra.mxu0 0.0
    %4810 = vmatprep.subr.mxu0 0.0
    %4811 = vmatpush1.msra.mxu0 0.0
    %4812 = vmatprep.subr.mxu0 0.0
    %4813 = vmatpush1.msra.mxu0 0.0
    %4814 = vmatprep.subr.mxu0 0.0
    %4815 = vmatpush1.msra.mxu0 0.0
    %4816 = vmatprep.subr.mxu0 0.0
    %4817 = vmatpush1.msra.mxu0 0.0
    %4818 = vmatprep.subr.mxu0 0.0
    %4819 = vmatpush1.msra.mxu0 0.0
    %4820 = vmatprep.subr.mxu0 0.0
    %4821 = vmatpush1.msra.mxu0 0.0
    %4822 = vmatprep.subr.mxu0 0.0
    %4823 = vmatpush1.msra.mxu0 0.0
    %4824 = vmatprep.subr.mxu0 0.0
    %4825 = vmatpush1.msra.mxu0 0.0
    %4826 = vmatprep.subr.mxu0 0.0
    %4827 = vmatpush1.msra.mxu0 0.0
    %4828 = vmatprep.subr.mxu0 0.0
    %4829 = vmatpush1.msra.mxu0 0.0
    %4830 = vmatprep.subr.mxu0 0.0
    %4831 = vmatpush1.msra.mxu0 0.0
    %4832 = vmatprep.subr.mxu0 0.0
    %4833 = vmatpush1.msra.mxu0 0.0
    %4834 = vmatprep.subr.mxu0 0.0
    %4835 = vmatpush1.msra.mxu0 0.0
    %4836 = vmatprep.subr.mxu0 0.0
    %4837 = vmatpush1.msra.mxu0 0.0
    %4838 = vmatprep.subr.mxu0 0.0
    %4839 = vmatpush1.msra.mxu0 0.0
    %4840 = vmatprep.subr.mxu0 0.0
    %4841 = vmatpush1.msra.mxu0 0.0
    %4842 = vmatprep.subr.mxu0 0.0
    %4843 = vmatpush1.msra.mxu0 0.0
    %4844 = vmatprep.subr.mxu0 0.0
    %4845 = vmatpush1.msra.mxu0 0.0
    %4846 = vmatprep.subr.mxu0 0.0
    %4847 = vmatpush1.msra.mxu0 0.0
    %4848 = vmatprep.subr.mxu0 0.0
    %4849 = vmatpush1.msra.mxu0 0.0
    %4850 = vmatprep.subr.mxu0 0.0
    %4851 = vmatpush1.msra.mxu0 0.0
    %4852 = vmatprep.subr.mxu0 0.0
    %4853 = vmatpush1.msra.mxu0 0.0
    %4854 = vmatprep.subr.mxu0 0.0
    %4855 = vmatpush1.msra.mxu0 0.0
    %4856 = vmatprep.mubr.f32.mxu0 0.0
    %4857 = vmatmul.mubr.f32.gmra.mrb[0].mxu0 %v4787
    %v4858 = vpop.f32.mrb[0].mxu0
    %v4859 = vadd.f32 0.0, %v4858
    %v4860 = vpop.f32.mrb[0].mxu0
    %4861 = vdwg.mxu0
    %v4862 = vadd.f32 %v4384, %v4859
    %v4864 = vlaneseq
    %v4865 = vshrl.u32 %v4864, 7
    %v4866 = vsub.s32 0, %v4865
    %v4867 = vrot.slane %v449, %v4866
    %v4870 = vsel %vm101, %v402, 0
    %4872 = vmatprep.subr.mxu0 0.0
    %4873 = vmatpush1.msra.mxu0 %v400
    %4874 = vmatprep.subr.mxu0 0.0
    %4875 = vmatpush1.msra.mxu0 %v401
    %4876 = vmatprep.subr.mxu0 0.0
    %4877 = vmatpush1.msra.mxu0 %v4870
    %4878 = vmatprep.subr.mxu0 0.0
    %4879 = vmatpush1.msra.mxu0 0.0
    %4880 = vmatprep.subr.mxu0 0.0
    %4881 = vmatpush1.msra.mxu0 0.0
    %4882 = vmatprep.subr.mxu0 0.0
    %4883 = vmatpush1.msra.mxu0 0.0
    %4884 = vmatprep.subr.mxu0 0.0
    %4885 = vmatpush1.msra.mxu0 0.0
    %4886 = vmatprep.subr.mxu0 0.0
    %4887 = vmatpush1.msra.mxu0 0.0
    %4888 = vmatprep.subr.mxu0 0.0
    %4889 = vmatpush1.msra.mxu0 0.0
    %4890 = vmatprep.subr.mxu0 0.0
    %4891 = vmatpush1.msra.mxu0 0.0
    %4892 = vmatprep.subr.mxu0 0.0
    %4893 = vmatpush1.msra.mxu0 0.0
    %4894 = vmatprep.subr.mxu0 0.0
    %4895 = vmatpush1.msra.mxu0 0.0
    %4896 = vmatprep.subr.mxu0 0.0
    %4897 = vmatpush1.msra.mxu0 0.0
    %4898 = vmatprep.subr.mxu0 0.0
    %4899 = vmatpush1.msra.mxu0 0.0
    %4900 = vmatprep.subr.mxu0 0.0
    %4901 = vmatpush1.msra.mxu0 0.0
    %4902 = vmatprep.subr.mxu0 0.0
    %4903 = vmatpush1.msra.mxu0 0.0
    %4904 = vmatprep.subr.mxu0 0.0
    %4905 = vmatpush1.msra.mxu0 0.0
    %4906 = vmatprep.subr.mxu0 0.0
    %4907 = vmatpush1.msra.mxu0 0.0
    %4908 = vmatprep.subr.mxu0 0.0
    %4909 = vmatpush1.msra.mxu0 0.0
    %4910 = vmatprep.subr.mxu0 0.0
    %4911 = vmatpush1.msra.mxu0 0.0
    %4912 = vmatprep.subr.mxu0 0.0
    %4913 = vmatpush1.msra.mxu0 0.0
    %4914 = vmatprep.subr.mxu0 0.0
    %4915 = vmatpush1.msra.mxu0 0.0
    %4916 = vmatprep.subr.mxu0 0.0
    %4917 = vmatpush1.msra.mxu0 0.0
    %4918 = vmatprep.subr.mxu0 0.0
    %4919 = vmatpush1.msra.mxu0 0.0
    %4920 = vmatprep.subr.mxu0 0.0
    %4921 = vmatpush1.msra.mxu0 0.0
    %4922 = vmatprep.subr.mxu0 0.0
    %4923 = vmatpush1.msra.mxu0 0.0
    %4924 = vmatprep.subr.mxu0 0.0
    %4925 = vmatpush1.msra.mxu0 0.0
    %4926 = vmatprep.subr.mxu0 0.0
    %4927 = vmatpush1.msra.mxu0 0.0
    %4928 = vmatprep.subr.mxu0 0.0
    %4929 = vmatpush1.msra.mxu0 0.0
    %4930 = vmatprep.subr.mxu0 0.0
    %4931 = vmatpush1.msra.mxu0 0.0
    %4932 = vmatprep.subr.mxu0 0.0
    %4933 = vmatpush1.msra.mxu0 0.0
    %4934 = vmatprep.subr.mxu0 0.0
    %4935 = vmatpush1.msra.mxu0 0.0
    %4936 = vmatprep.mubr.f32.mxu0 0.0
    %4937 = vmatmul.mubr.f32.gmra.mrb[0].mxu0 %v2951
    %v4938 = vpop.f32.mrb[0].mxu0
    %v4939 = vadd.f32 %v4867, %v4938
    %v4940 = vpop.f32.mrb[0].mxu0
    %4941 = vdwg.mxu0
    %v4943 = vlaneseq
    %v4944 = vshrl.u32 %v4943, 7
    %v4945 = vsub.s32 0, %v4944
    %v4946 = vrot.slane %v458, %v4945
    %v4949 = vsel %vm101, %v421, 0
    %4951 = vmatprep.subr.mxu0 0.0
    %4952 = vmatpush1.msra.mxu0 %v419
    %4953 = vmatprep.subr.mxu0 0.0
    %4954 = vmatpush1.msra.mxu0 %v420
    %4955 = vmatprep.subr.mxu0 0.0
    %4956 = vmatpush1.msra.mxu0 %v4949
    %4957 = vmatprep.subr.mxu0 0.0
    %4958 = vmatpush1.msra.mxu0 0.0
    %4959 = vmatprep.subr.mxu0 0.0
    %4960 = vmatpush1.msra.mxu0 0.0
    %4961 = vmatprep.subr.mxu0 0.0
    %4962 = vmatpush1.msra.mxu0 0.0
    %4963 = vmatprep.subr.mxu0 0.0
    %4964 = vmatpush1.msra.mxu0 0.0
    %4965 = vmatprep.subr.mxu0 0.0
    %4966 = vmatpush1.msra.mxu0 0.0
    %4967 = vmatprep.subr.mxu0 0.0
    %4968 = vmatpush1.msra.mxu0 0.0
    %4969 = vmatprep.subr.mxu0 0.0
    %4970 = vmatpush1.msra.mxu0 0.0
    %4971 = vmatprep.subr.mxu0 0.0
    %4972 = vmatpush1.msra.mxu0 0.0
    %4973 = vmatprep.subr.mxu0 0.0
    %4974 = vmatpush1.msra.mxu0 0.0
    %4975 = vmatprep.subr.mxu0 0.0
    %4976 = vmatpush1.msra.mxu0 0.0
    %4977 = vmatprep.subr.mxu0 0.0
    %4978 = vmatpush1.msra.mxu0 0.0
    %4979 = vmatprep.subr.mxu0 0.0
    %4980 = vmatpush1.msra.mxu0 0.0
    %4981 = vmatprep.subr.mxu0 0.0
    %4982 = vmatpush1.msra.mxu0 0.0
    %4983 = vmatprep.subr.mxu0 0.0
    %4984 = vmatpush1.msra.mxu0 0.0
    %4985 = vmatprep.subr.mxu0 0.0
    %4986 = vmatpush1.msra.mxu0 0.0
    %4987 = vmatprep.subr.mxu0 0.0
    %4988 = vmatpush1.msra.mxu0 0.0
    %4989 = vmatprep.subr.mxu0 0.0
    %4990 = vmatpush1.msra.mxu0 0.0
    %4991 = vmatprep.subr.mxu0 0.0
    %4992 = vmatpush1.msra.mxu0 0.0
    %4993 = vmatprep.subr.mxu0 0.0
    %4994 = vmatpush1.msra.mxu0 0.0
    %4995 = vmatprep.subr.mxu0 0.0
    %4996 = vmatpush1.msra.mxu0 0.0
    %4997 = vmatprep.subr.mxu0 0.0
    %4998 = vmatpush1.msra.mxu0 0.0
    %4999 = vmatprep.subr.mxu0 0.0
    %5000 = vmatpush1.msra.mxu0 0.0
    %5001 = vmatprep.subr.mxu0 0.0
    %5002 = vmatpush1.msra.mxu0 0.0
    %5003 = vmatprep.subr.mxu0 0.0
    %5004 = vmatpush1.msra.mxu0 0.0
    %5005 = vmatprep.subr.mxu0 0.0
    %5006 = vmatpush1.msra.mxu0 0.0
    %5007 = vmatprep.subr.mxu0 0.0
    %5008 = vmatpush1.msra.mxu0 0.0
    %5009 = vmatprep.subr.mxu0 0.0
    %5010 = vmatpush1.msra.mxu0 0.0
    %5011 = vmatprep.subr.mxu0 0.0
    %5012 = vmatpush1.msra.mxu0 0.0
    %5013 = vmatprep.subr.mxu0 0.0
    %5014 = vmatpush1.msra.mxu0 0.0
    %5015 = vmatprep.mubr.f32.mxu0 0.0
    %5016 = vmatmul.mubr.f32.gmra.mrb[0].mxu0 %v3033
    %v5017 = vpop.f32.mrb[0].mxu0
    %v5018 = vadd.f32 %v4946, %v5017
    %v5019 = vpop.f32.mrb[0].mxu0
    %5020 = vdwg.mxu0
    %v5022 = vlaneseq
    %v5023 = vshrl.u32 %v5022, 7
    %v5024 = vsub.s32 0, %v5023
    %v5025 = vrot.slane %v467, %v5024
    %v5028 = vsel %vm101, %v440, 0
    %5030 = vmatprep.subr.mxu0 0.0
    %5031 = vmatpush1.msra.mxu0 %v438
    %5032 = vmatprep.subr.mxu0 0.0
    %5033 = vmatpush1.msra.mxu0 %v439
    %5034 = vmatprep.subr.mxu0 0.0
    %5035 = vmatpush1.msra.mxu0 %v5028
    %5036 = vmatprep.subr.mxu0 0.0
    %5037 = vmatpush1.msra.mxu0 0.0
    %5038 = vmatprep.subr.mxu0 0.0
    %5039 = vmatpush1.msra.mxu0 0.0
    %5040 = vmatprep.subr.mxu0 0.0
    %5041 = vmatpush1.msra.mxu0 0.0
    %5042 = vmatprep.subr.mxu0 0.0
    %5043 = vmatpush1.msra.mxu0 0.0
    %5044 = vmatprep.subr.mxu0 0.0
    %5045 = vmatpush1.msra.mxu0 0.0
    %5046 = vmatprep.subr.mxu0 0.0
    %5047 = vmatpush1.msra.mxu0 0.0
    %5048 = vmatprep.subr.mxu0 0.0
    %5049 = vmatpush1.msra.mxu0 0.0
    %5050 = vmatprep.subr.mxu0 0.0
    %5051 = vmatpush1.msra.mxu0 0.0
    %5052 = vmatprep.subr.mxu0 0.0
    %5053 = vmatpush1.msra.mxu0 0.0
    %5054 = vmatprep.subr.mxu0 0.0
    %5055 = vmatpush1.msra.mxu0 0.0
    %5056 = vmatprep.subr.mxu0 0.0
    %5057 = vmatpush1.msra.mxu0 0.0
    %5058 = vmatprep.subr.mxu0 0.0
    %5059 = vmatpush1.msra.mxu0 0.0
    %5060 = vmatprep.subr.mxu0 0.0
    %5061 = vmatpush1.msra.mxu0 0.0
    %5062 = vmatprep.subr.mxu0 0.0
    %5063 = vmatpush1.msra.mxu0 0.0
    %5064 = vmatprep.subr.mxu0 0.0
    %5065 = vmatpush1.msra.mxu0 0.0
    %5066 = vmatprep.subr.mxu0 0.0
    %5067 = vmatpush1.msra.mxu0 0.0
    %5068 = vmatprep.subr.mxu0 0.0
    %5069 = vmatpush1.msra.mxu0 0.0
    %5070 = vmatprep.subr.mxu0 0.0
    %5071 = vmatpush1.msra.mxu0 0.0
    %5072 = vmatprep.subr.mxu0 0.0
    %5073 = vmatpush1.msra.mxu0 0.0
    %5074 = vmatprep.subr.mxu0 0.0
    %5075 = vmatpush1.msra.mxu0 0.0
    %5076 = vmatprep.subr.mxu0 0.0
    %5077 = vmatpush1.msra.mxu0 0.0
    %5078 = vmatprep.subr.mxu0 0.0
    %5079 = vmatpush1.msra.mxu0 0.0
    %5080 = vmatprep.subr.mxu0 0.0
    %5081 = vmatpush1.msra.mxu0 0.0
    %5082 = vmatprep.subr.mxu0 0.0
    %5083 = vmatpush1.msra.mxu0 0.0
    %5084 = vmatprep.subr.mxu0 0.0
    %5085 = vmatpush1.msra.mxu0 0.0
    %5086 = vmatprep.subr.mxu0 0.0
    %5087 = vmatpush1.msra.mxu0 0.0
    %5088 = vmatprep.subr.mxu0 0.0
    %5089 = vmatpush1.msra.mxu0 0.0
    %5090 = vmatprep.subr.mxu0 0.0
    %5091 = vmatpush1.msra.mxu0 0.0
    %5092 = vmatprep.subr.mxu0 0.0
    %5093 = vmatpush1.msra.mxu0 0.0
    %5094 = vmatprep.mubr.f32.mxu0 0.0
    %5095 = vmatmul.mubr.f32.gmra.mrb[0].mxu0 %v3033
    %v5096 = vpop.f32.mrb[0].mxu0
    %v5097 = vadd.f32 %v5025, %v5096
    %v5098 = vpop.f32.mrb[0].mxu0
    %5099 = vdwg.mxu0
    %v5101 = vsel %vm478, %v4939, 0
    %v5104 = vsel %vm478, %v5018, 0
    %5106 = vmatprep.subr.mxu0 0.0
    %5107 = vmatpush1.xpose.msra.mxu0 %v5104
    %5108 = vmatprep.subr.mxu0 0.0
    %5109 = vmatpush1.xpose.msra.mxu0 0.0
    %5110 = vmatprep.subr.mxu0 0.0
    %5111 = vmatpush1.xpose.msra.mxu0 0.0
    %5112 = vmatprep.subr.mxu0 0.0
    %5113 = vmatpush1.xpose.msra.mxu0 0.0
    %5114 = vmatprep.subr.mxu0 0.0
    %5115 = vmatpush1.xpose.msra.mxu0 0.0
    %5116 = vmatprep.subr.mxu0 0.0
    %5117 = vmatpush1.xpose.msra.mxu0 0.0
    %5118 = vmatprep.subr.mxu0 0.0
    %5119 = vmatpush1.xpose.msra.mxu0 0.0
    %5120 = vmatprep.subr.mxu0 0.0
    %5121 = vmatpush1.xpose.msra.mxu0 0.0
    %5122 = vmatprep.subr.mxu0 0.0
    %5123 = vmatpush1.xpose.msra.mxu0 0.0
    %5124 = vmatprep.subr.mxu0 0.0
    %5125 = vmatpush1.xpose.msra.mxu0 0.0
    %5126 = vmatprep.subr.mxu0 0.0
    %5127 = vmatpush1.xpose.msra.mxu0 0.0
    %5128 = vmatprep.subr.mxu0 0.0
    %5129 = vmatpush1.xpose.msra.mxu0 0.0
    %5130 = vmatprep.subr.mxu0 0.0
    %5131 = vmatpush1.xpose.msra.mxu0 0.0
    %5132 = vmatprep.subr.mxu0 0.0
    %5133 = vmatpush1.xpose.msra.mxu0 0.0
    %5134 = vmatprep.subr.mxu0 0.0
    %5135 = vmatpush1.xpose.msra.mxu0 0.0
    %5136 = vmatprep.subr.mxu0 0.0
    %5137 = vmatpush1.xpose.msra.mxu0 0.0
    %5138 = vmatprep.subr.mxu0 0.0
    %5139 = vmatpush1.xpose.msra.mxu0 0.0
    %5140 = vmatprep.subr.mxu0 0.0
    %5141 = vmatpush1.xpose.msra.mxu0 0.0
    %5142 = vmatprep.subr.mxu0 0.0
    %5143 = vmatpush1.xpose.msra.mxu0 0.0
    %5144 = vmatprep.subr.mxu0 0.0
    %5145 = vmatpush1.xpose.msra.mxu0 0.0
    %5146 = vmatprep.subr.mxu0 0.0
    %5147 = vmatpush1.xpose.msra.mxu0 0.0
    %5148 = vmatprep.subr.mxu0 0.0
    %5149 = vmatpush1.xpose.msra.mxu0 0.0
    %5150 = vmatprep.subr.mxu0 0.0
    %5151 = vmatpush1.xpose.msra.mxu0 0.0
    %5152 = vmatprep.subr.mxu0 0.0
    %5153 = vmatpush1.xpose.msra.mxu0 0.0
    %5154 = vmatprep.subr.mxu0 0.0
    %5155 = vmatpush1.xpose.msra.mxu0 0.0
    %5156 = vmatprep.subr.mxu0 0.0
    %5157 = vmatpush1.xpose.msra.mxu0 0.0
    %5158 = vmatprep.subr.mxu0 0.0
    %5159 = vmatpush1.xpose.msra.mxu0 0.0
    %5160 = vmatprep.subr.mxu0 0.0
    %5161 = vmatpush1.xpose.msra.mxu0 0.0
    %5162 = vmatprep.subr.mxu0 0.0
    %5163 = vmatpush1.xpose.msra.mxu0 0.0
    %5164 = vmatprep.subr.mxu0 0.0
    %5165 = vmatpush1.xpose.msra.mxu0 0.0
    %5166 = vmatprep.subr.mxu0 0.0
    %5167 = vmatpush1.xpose.msra.mxu0 0.0
    %5168 = vmatprep.subr.mxu0 0.0
    %5169 = vmatpush1.xpose.msra.mxu0 0.0
    %5170 = vmatprep.mubr.f32.mxu0 0.0
    %5171 = vmatmul.mubr.f32.gmra.mrb[0].mxu0 %v5101
    %v5172 = vpop.f32.mrb[0].mxu0
    %v5173 = vadd.f32 0.0, %v5172
    %v5174 = vpop.f32.mrb[0].mxu0
    %5175 = vdwg.mxu0
    %v5176 = vmul.f32 %v5173, 0.5
    %v5177 = vsel %vm3264, %v5176, -inf
    %5178 = vmax.xlane.f32.xlu0 %v5177
    %v5179 = vpop.xlane.xlu0 %5178
    %v5180 = vsub.f32 %v5176, %v5179
    %v5181 = vmul.f32 %v5180, 1.442695
    %v5182 = vpow.pop %v5181
    %v5183 = vsel %vm3264, %v5182, 0.0
    %5184 = vadd.xlane.f32.xlu0 %v5183
    %v5185 = vpop.xlane.xlu0 %5184
    %v5186 = vrcp.pop %v5185
    %v5187 = vmul.f32 %v5182, %v5186
    %v5189 = vsel %vm3276, %v5187, 0
    %v5192 = vsel %vm3280, %v5097, 0
    %5194 = vmatprep.subr.mxu0 0.0
    %5195 = vmatpush1.msra.mxu0 %v5192
    %5196 = vmatprep.subr.mxu0 0.0
    %5197 = vmatpush1.msra.mxu0 0.0
    %5198 = vmatprep.subr.mxu0 0.0
    %5199 = vmatpush1.msra.mxu0 0.0
    %5200 = vmatprep.subr.mxu0 0.0
    %5201 = vmatpush1.msra.mxu0 0.0
    %5202 = vmatprep.subr.mxu0 0.0
    %5203 = vmatpush1.msra.mxu0 0.0
    %5204 = vmatprep.subr.mxu0 0.0
    %5205 = vmatpush1.msra.mxu0 0.0
    %5206 = vmatprep.subr.mxu0 0.0
    %5207 = vmatpush1.msra.mxu0 0.0
    %5208 = vmatprep.subr.mxu0 0.0
    %5209 = vmatpush1.msra.mxu0 0.0
    %5210 = vmatprep.subr.mxu0 0.0
    %5211 = vmatpush1.msra.mxu0 0.0
    %5212 = vmatprep.subr.mxu0 0.0
    %5213 = vmatpush1.msra.mxu0 0.0
    %5214 = vmatprep.subr.mxu0 0.0
    %5215 = vmatpush1.msra.mxu0 0.0
    %5216 = vmatprep.subr.mxu0 0.0
    %5217 = vmatpush1.msra.mxu0 0.0
    %5218 = vmatprep.subr.mxu0 0.0
    %5219 = vmatpush1.msra.mxu0 0.0
    %5220 = vmatprep.subr.mxu0 0.0
    %5221 = vmatpush1.msra.mxu0 0.0
    %5222 = vmatprep.subr.mxu0 0.0
    %5223 = vmatpush1.msra.mxu0 0.0
    %5224 = vmatprep.subr.mxu0 0.0
    %5225 = vmatpush1.msra.mxu0 0.0
    %5226 = vmatprep.subr.mxu0 0.0
    %5227 = vmatpush1.msra.mxu0 0.0
    %5228 = vmatprep.subr.mxu0 0.0
    %5229 = vmatpush1.msra.mxu0 0.0
    %5230 = vmatprep.subr.mxu0 0.0
    %5231 = vmatpush1.msra.mxu0 0.0
    %5232 = vmatprep.subr.mxu0 0.0
    %5233 = vmatpush1.msra.mxu0 0.0
    %5234 = vmatprep.subr.mxu0 0.0
    %5235 = vmatpush1.msra.mxu0 0.0
    %5236 = vmatprep.subr.mxu0 0.0
    %5237 = vmatpush1.msra.mxu0 0.0
    %5238 = vmatprep.subr.mxu0 0.0
    %5239 = vmatpush1.msra.mxu0 0.0
    %5240 = vmatprep.subr.mxu0 0.0
    %5241 = vmatpush1.msra.mxu0 0.0
    %5242 = vmatprep.subr.mxu0 0.0
    %5243 = vmatpush1.msra.mxu0 0.0
    %5244 = vmatprep.subr.mxu0 0.0
    %5245 = vmatpush1.msra.mxu0 0.0
    %5246 = vmatprep.subr.mxu0 0.0
    %5247 = vmatpush1.msra.mxu0 0.0
    %5248 = vmatprep.subr.mxu0 0.0
    %5249 = vmatpush1.msra.mxu0 0.0
    %5250 = vmatprep.subr.mxu0 0.0
    %5251 = vmatpush1.msra.mxu0 0.0
    %5252 = vmatprep.subr.mxu0 0.0
    %5253 = vmatpush1.msra.mxu0 0.0
    %5254 = vmatprep.subr.mxu0 0.0
    %5255 = vmatpush1.msra.mxu0 0.0
    %5256 = vmatprep.subr.mxu0 0.0
    %5257 = vmatpush1.msra.mxu0 0.0
    %5258 = vmatprep.mubr.f32.mxu0 0.0
    %5259 = vmatmul.mubr.f32.gmra.mrb[0].mxu0 %v5189
    %v5260 = vpop.f32.mrb[0].mxu0
    %v5261 = vadd.f32 0.0, %v5260
    %v5262 = vpop.f32.mrb[0].mxu0
    %5263 = vdwg.mxu0
    %v5265 = vsel %vm478, %v5261, 0
    %v5268 = vsel %vm101, %v476, 0
    %5270 = vmatprep.subr.mxu0 0.0
    %5271 = vmatpush1.msra.mxu0 %v5268
    %5272 = vmatprep.subr.mxu0 0.0
    %5273 = vmatpush1.msra.mxu0 0.0
    %5274 = vmatprep.subr.mxu0 0.0
    %5275 = vmatpush1.msra.mxu0 0.0
    %5276 = vmatprep.subr.mxu0 0.0
    %5277 = vmatpush1.msra.mxu0 0.0
    %5278 = vmatprep.subr.mxu0 0.0
    %5279 = vmatpush1.msra.mxu0 0.0
    %5280 = vmatprep.subr.mxu0 0.0
    %5281 = vmatpush1.msra.mxu0 0.0
    %5282 = vmatprep.subr.mxu0 0.0
    %5283 = vmatpush1.msra.mxu0 0.0
    %5284 = vmatprep.subr.mxu0 0.0
    %5285 = vmatpush1.msra.mxu0 0.0
    %5286 = vmatprep.subr.mxu0 0.0
    %5287 = vmatpush1.msra.mxu0 0.0
    %5288 = vmatprep.subr.mxu0 0.0
    %5289 = vmatpush1.msra.mxu0 0.0
    %5290 = vmatprep.subr.mxu0 0.0
    %5291 = vmatpush1.msra.mxu0 0.0
    %5292 = vmatprep.subr.mxu0 0.0
    %5293 = vmatpush1.msra.mxu0 0.0
    %5294 = vmatprep.subr.mxu0 0.0
    %5295 = vmatpush1.msra.mxu0 0.0
    %5296 = vmatprep.subr.mxu0 0.0
    %5297 = vmatpush1.msra.mxu0 0.0
    %5298 = vmatprep.subr.mxu0 0.0
    %5299 = vmatpush1.msra.mxu0 0.0
    %5300 = vmatprep.subr.mxu0 0.0
    %5301 = vmatpush1.msra.mxu0 0.0
    %5302 = vmatprep.subr.mxu0 0.0
    %5303 = vmatpush1.msra.mxu0 0.0
    %5304 = vmatprep.subr.mxu0 0.0
    %5305 = vmatpush1.msra.mxu0 0.0
    %5306 = vmatprep.subr.mxu0 0.0
    %5307 = vmatpush1.msra.mxu0 0.0
    %5308 = vmatprep.subr.mxu0 0.0
    %5309 = vmatpush1.msra.mxu0 0.0
    %5310 = vmatprep.subr.mxu0 0.0
    %5311 = vmatpush1.msra.mxu0 0.0
    %5312 = vmatprep.subr.mxu0 0.0
    %5313 = vmatpush1.msra.mxu0 0.0
    %5314 = vmatprep.subr.mxu0 0.0
    %5315 = vmatpush1.msra.mxu0 0.0
    %5316 = vmatprep.subr.mxu0 0.0
    %5317 = vmatpush1.msra.mxu0 0.0
    %5318 = vmatprep.subr.mxu0 0.0
    %5319 = vmatpush1.msra.mxu0 0.0
    %5320 = vmatprep.subr.mxu0 0.0
    %5321 = vmatpush1.msra.mxu0 0.0
    %5322 = vmatprep.subr.mxu0 0.0
    %5323 = vmatpush1.msra.mxu0 0.0
    %5324 = vmatprep.subr.mxu0 0.0
    %5325 = vmatpush1.msra.mxu0 0.0
    %5326 = vmatprep.subr.mxu0 0.0
    %5327 = vmatpush1.msra.mxu0 0.0
    %5328 = vmatprep.subr.mxu0 0.0
    %5329 = vmatpush1.msra.mxu0 0.0
    %5330 = vmatprep.subr.mxu0 0.0
    %5331 = vmatpush1.msra.mxu0 0.0
    %5332 = vmatprep.subr.mxu0 0.0
    %5333 = vmatpush1.msra.mxu0 0.0
    %5334 = vmatprep.mubr.f32.mxu0 0.0
    %5335 = vmatmul.mubr.f32.gmra.mrb[0].mxu0 %v5265
    %v5336 = vpop.f32.mrb[0].mxu0
    %v5337 = vadd.f32 0.0, %v5336
    %v5338 = vpop.f32.mrb[0].mxu0
    %5339 = vdwg.mxu0
    %v5340 = vadd.f32 %v4862, %v5337
    %v5342 = vlaneseq
    %v5343 = vshrl.u32 %v5342, 7
    %v5344 = vsub.s32 0, %v5343
    %v5345 = vrot.slane %v383, %v5344
    %v5347 = vadd.f32 %v5340, %v5345
    %v5349 = vsel %vm101, %v5347, 0
    %5351 = vmatprep.subr.mxu0 0.0
    %5352 = vmatpush1.msra.mxu0 %v5349
    %5353 = vmatprep.subr.mxu0 0.0
    %5354 = vmatpush1.msra.mxu0 0.0
    %5355 = vmatprep.subr.mxu0 0.0
    %5356 = vmatpush1.msra.mxu0 0.0
    %5357 = vmatprep.subr.mxu0 0.0
    %5358 = vmatpush1.msra.mxu0 0.0
    %5359 = vmatprep.subr.mxu0 0.0
    %5360 = vmatpush1.msra.mxu0 0.0
    %5361 = vmatprep.subr.mxu0 0.0
    %5362 = vmatpush1.msra.mxu0 0.0
    %5363 = vmatprep.subr.mxu0 0.0
    %5364 = vmatpush1.msra.mxu0 0.0
    %5365 = vmatprep.subr.mxu0 0.0
    %5366 = vmatpush1.msra.mxu0 0.0
    %5367 = vmatprep.subr.mxu0 0.0
    %5368 = vmatpush1.msra.mxu0 0.0
    %5369 = vmatprep.subr.mxu0 0.0
    %5370 = vmatpush1.msra.mxu0 0.0
    %5371 = vmatprep.subr.mxu0 0.0
    %5372 = vmatpush1.msra.mxu0 0.0
    %5373 = vmatprep.subr.mxu0 0.0
    %5374 = vmatpush1.msra.mxu0 0.0
    %5375 = vmatprep.subr.mxu0 0.0
    %5376 = vmatpush1.msra.mxu0 0.0
    %5377 = vmatprep.subr.mxu0 0.0
    %5378 = vmatpush1.msra.mxu0 0.0
    %5379 = vmatprep.subr.mxu0 0.0
    %5380 = vmatpush1.msra.mxu0 0.0
    %5381 = vmatprep.subr.mxu0 0.0
    %5382 = vmatpush1.msra.mxu0 0.0
    %5383 = vmatprep.subr.mxu0 0.0
    %5384 = vmatpush1.msra.mxu0 0.0
    %5385 = vmatprep.subr.mxu0 0.0
    %5386 = vmatpush1.msra.mxu0 0.0
    %5387 = vmatprep.subr.mxu0 0.0
    %5388 = vmatpush1.msra.mxu0 0.0
    %5389 = vmatprep.subr.mxu0 0.0
    %5390 = vmatpush1.msra.mxu0 0.0
    %5391 = vmatprep.subr.mxu0 0.0
    %5392 = vmatpush1.msra.mxu0 0.0
    %5393 = vmatprep.subr.mxu0 0.0
    %5394 = vmatpush1.msra.mxu0 0.0
    %5395 = vmatprep.subr.mxu0 0.0
    %5396 = vmatpush1.msra.mxu0 0.0
    %5397 = vmatprep.subr.mxu0 0.0
    %5398 = vmatpush1.msra.mxu0 0.0
    %5399 = vmatprep.subr.mxu0 0.0
    %5400 = vmatpush1.msra.mxu0 0.0
    %5401 = vmatprep.subr.mxu0 0.0
    %5402 = vmatpush1.msra.mxu0 0.0
    %5403 = vmatprep.subr.mxu0 0.0
    %5404 = vmatpush1.msra.mxu0 0.0
    %5405 = vmatprep.subr.mxu0 0.0
    %5406 = vmatpush1.msra.mxu0 0.0
    %5407 = vmatprep.subr.mxu0 0.0
    %5408 = vmatpush1.msra.mxu0 0.0
    %5409 = vmatprep.subr.mxu0 0.0
    %5410 = vmatpush1.msra.mxu0 0.0
    %5411 = vmatprep.subr.mxu0 0.0
    %5412 = vmatpush1.msra.mxu0 0.0
    %5413 = vmatprep.subr.mxu0 0.0
    %5414 = vmatpush1.msra.mxu0 0.0
    %5415 = vmatprep.mubr.f32.mxu0 0.0
    %5416 = vmatmul.mubr.f32.gmra.mrb[0].mxu0 %v480
    %v5417 = vpop.f32.mrb[0].mxu0
    %v5418 = vadd.f32 0.0, %v5417
    %v5419 = vpop.f32.mrb[0].mxu0
    %5420 = vdwg.mxu0
    %v5421 = vlaneseq
    %v5422 = vshrl.u32 %v5421, 7
    %v5423 = vsub.s32 0, %v5422
    %v5424 = vrot.slane %v5418, %v5423
    %v5425 = vmul.f32 %v70, %v5424
    %v5426 = vsub.f32 %v70, %v5424
    %v5427 = vand.u32 2147483647, %v5426
    %v5429 = vsel %vm94, %v5425, 0
    %5431 = vmatprep.subr.mxu0 0.0
    %5432 = vmatpush1.msra.mxu0 %v368
    %5433 = vmatprep.subr.mxu0 0.0
    %5434 = vmatpush1.msra.mxu0 %v369
    %5435 = vmatprep.subr.mxu0 0.0
    %5436 = vmatpush1.msra.mxu0 %v569
    %5437 = vmatprep.subr.mxu0 0.0
    %5438 = vmatpush1.msra.mxu0 0.0
    %5439 = vmatprep.subr.mxu0 0.0
    %5440 = vmatpush1.msra.mxu0 0.0
    %5441 = vmatprep.subr.mxu0 0.0
    %5442 = vmatpush1.msra.mxu0 0.0
    %5443 = vmatprep.subr.mxu0 0.0
    %5444 = vmatpush1.msra.mxu0 0.0
    %5445 = vmatprep.subr.mxu0 0.0
    %5446 = vmatpush1.msra.mxu0 0.0
    %5447 = vmatprep.subr.mxu0 0.0
    %5448 = vmatpush1.msra.mxu0 0.0
    %5449 = vmatprep.subr.mxu0 0.0
    %5450 = vmatpush1.msra.mxu0 0.0
    %5451 = vmatprep.subr.mxu0 0.0
    %5452 = vmatpush1.msra.mxu0 0.0
    %5453 = vmatprep.subr.mxu0 0.0
    %5454 = vmatpush1.msra.mxu0 0.0
    %5455 = vmatprep.subr.mxu0 0.0
    %5456 = vmatpush1.msra.mxu0 0.0
    %5457 = vmatprep.subr.mxu0 0.0
    %5458 = vmatpush1.msra.mxu0 0.0
    %5459 = vmatprep.subr.mxu0 0.0
    %5460 = vmatpush1.msra.mxu0 0.0
    %5461 = vmatprep.subr.mxu0 0.0
    %5462 = vmatpush1.msra.mxu0 0.0
    %5463 = vmatprep.subr.mxu0 0.0
    %5464 = vmatpush1.msra.mxu0 0.0
    %5465 = vmatprep.subr.mxu0 0.0
    %5466 = vmatpush1.msra.mxu0 0.0
    %5467 = vmatprep.subr.mxu0 0.0
    %5468 = vmatpush1.msra.mxu0 0.0
    %5469 = vmatprep.subr.mxu0 0.0
    %5470 = vmatpush1.msra.mxu0 0.0
    %5471 = vmatprep.subr.mxu0 0.0
    %5472 = vmatpush1.msra.mxu0 0.0
    %5473 = vmatprep.subr.mxu0 0.0
    %5474 = vmatpush1.msra.mxu0 0.0
    %5475 = vmatprep.subr.mxu0 0.0
    %5476 = vmatpush1.msra.mxu0 0.0
    %5477 = vmatprep.subr.mxu0 0.0
    %5478 = vmatpush1.msra.mxu0 0.0
    %5479 = vmatprep.subr.mxu0 0.0
    %5480 = vmatpush1.msra.mxu0 0.0
    %5481 = vmatprep.subr.mxu0 0.0
    %5482 = vmatpush1.msra.mxu0 0.0
    %5483 = vmatprep.subr.mxu0 0.0
    %5484 = vmatpush1.msra.mxu0 0.0
    %5485 = vmatprep.subr.mxu0 0.0
    %5486 = vmatpush1.msra.mxu0 0.0
    %5487 = vmatprep.subr.mxu0 0.0
    %5488 = vmatpush1.msra.mxu0 0.0
    %5489 = vmatprep.subr.mxu0 0.0
    %5490 = vmatpush1.msra.mxu0 0.0
    %5491 = vmatprep.subr.mxu0 0.0
    %5492 = vmatpush1.msra.mxu0 0.0
    %5493 = vmatprep.subr.mxu0 0.0
    %5494 = vmatpush1.msra.mxu0 0.0
    %5495 = vmatprep.mubr.f32.mxu0 0.0
    %5496 = vmatmul.mubr.f32.gmra.mrb[0].mxu0 %v5429
    %v5497 = vpop.f32.mrb[0].mxu0
    %v5498 = vadd.f32 0.0, %v5497
    %v5499 = vpop.f32.mrb[0].mxu0
    %5500 = vdwg.mxu0
    %5501 = vmatprep.subr.mxu0 0.0
    %5502 = vmatpush1.msra.mxu0 %v364
    %5503 = vmatprep.subr.mxu0 0.0
    %5504 = vmatpush1.msra.mxu0 %v365
    %5505 = vmatprep.subr.mxu0 0.0
    %5506 = vmatpush1.msra.mxu0 %v645
    %5507 = vmatprep.subr.mxu0 0.0
    %5508 = vmatpush1.msra.mxu0 0.0
    %5509 = vmatprep.subr.mxu0 0.0
    %5510 = vmatpush1.msra.mxu0 0.0
    %5511 = vmatprep.subr.mxu0 0.0
    %5512 = vmatpush1.msra.mxu0 0.0
    %5513 = vmatprep.subr.mxu0 0.0
    %5514 = vmatpush1.msra.mxu0 0.0
    %5515 = vmatprep.subr.mxu0 0.0
    %5516 = vmatpush1.msra.mxu0 0.0
    %5517 = vmatprep.subr.mxu0 0.0
    %5518 = vmatpush1.msra.mxu0 0.0
    %5519 = vmatprep.subr.mxu0 0.0
    %5520 = vmatpush1.msra.mxu0 0.0
    %5521 = vmatprep.subr.mxu0 0.0
    %5522 = vmatpush1.msra.mxu0 0.0
    %5523 = vmatprep.subr.mxu0 0.0
    %5524 = vmatpush1.msra.mxu0 0.0
    %5525 = vmatprep.subr.mxu0 0.0
    %5526 = vmatpush1.msra.mxu0 0.0
    %5527 = vmatprep.subr.mxu0 0.0
    %5528 = vmatpush1.msra.mxu0 0.0
    %5529 = vmatprep.subr.mxu0 0.0
    %5530 = vmatpush1.msra.mxu0 0.0
    %5531 = vmatprep.subr.mxu0 0.0
    %5532 = vmatpush1.msra.mxu0 0.0
    %5533 = vmatprep.subr.mxu0 0.0
    %5534 = vmatpush1.msra.mxu0 0.0
    %5535 = vmatprep.subr.mxu0 0.0
    %5536 = vmatpush1.msra.mxu0 0.0
    %5537 = vmatprep.subr.mxu0 0.0
    %5538 = vmatpush1.msra.mxu0 0.0
    %5539 = vmatprep.subr.mxu0 0.0
    %5540 = vmatpush1.msra.mxu0 0.0
    %5541 = vmatprep.subr.mxu0 0.0
    %5542 = vmatpush1.msra.mxu0 0.0
    %5543 = vmatprep.subr.mxu0 0.0
    %5544 = vmatpush1.msra.mxu0 0.0
    %5545 = vmatprep.subr.mxu0 0.0
    %5546 = vmatpush1.msra.mxu0 0.0
    %5547 = vmatprep.subr.mxu0 0.0
    %5548 = vmatpush1.msra.mxu0 0.0
    %5549 = vmatprep.subr.mxu0 0.0
    %5550 = vmatpush1.msra.mxu0 0.0
    %5551 = vmatprep.subr.mxu0 0.0
    %5552 = vmatpush1.msra.mxu0 0.0
    %5553 = vmatprep.subr.mxu0 0.0
    %5554 = vmatpush1.msra.mxu0 0.0
    %5555 = vmatprep.subr.mxu0 0.0
    %5556 = vmatpush1.msra.mxu0 0.0
    %5557 = vmatprep.subr.mxu0 0.0
    %5558 = vmatpush1.msra.mxu0 0.0
    %5559 = vmatprep.subr.mxu0 0.0
    %5560 = vmatpush1.msra.mxu0 0.0
    %5561 = vmatprep.subr.mxu0 0.0
    %5562 = vmatpush1.msra.mxu0 0.0
    %5563 = vmatprep.subr.mxu0 0.0
    %5564 = vmatpush1.msra.mxu0 0.0
    %5565 = vmatprep.mubr.f32.mxu0 0.0
    %5566 = vmatmul.mubr.f32.gmra.mrb[0].mxu0 %v642
    %v5567 = vpop.f32.mrb[0].mxu0
    %v5568 = vadd.f32 %v5498, %v5567
    %v5569 = vpop.f32.mrb[0].mxu0
    %5570 = vdwg.mxu0
    %v5571 = vadd.f32 %v5568, %v790
    %v5573 = vsel %vm94, %v5427, 0
    %5575 = vmatprep.subr.mxu0 0.0
    %5576 = vmatpush1.msra.mxu0 %v376
    %5577 = vmatprep.subr.mxu0 0.0
    %5578 = vmatpush1.msra.mxu0 %v377
    %5579 = vmatprep.subr.mxu0 0.0
    %5580 = vmatpush1.msra.mxu0 %v798
    %5581 = vmatprep.subr.mxu0 0.0
    %5582 = vmatpush1.msra.mxu0 0.0
    %5583 = vmatprep.subr.mxu0 0.0
    %5584 = vmatpush1.msra.mxu0 0.0
    %5585 = vmatprep.subr.mxu0 0.0
    %5586 = vmatpush1.msra.mxu0 0.0
    %5587 = vmatprep.subr.mxu0 0.0
    %5588 = vmatpush1.msra.mxu0 0.0
    %5589 = vmatprep.subr.mxu0 0.0
    %5590 = vmatpush1.msra.mxu0 0.0
    %5591 = vmatprep.subr.mxu0 0.0
    %5592 = vmatpush1.msra.mxu0 0.0
    %5593 = vmatprep.subr.mxu0 0.0
    %5594 = vmatpush1.msra.mxu0 0.0
    %5595 = vmatprep.subr.mxu0 0.0
    %5596 = vmatpush1.msra.mxu0 0.0
    %5597 = vmatprep.subr.mxu0 0.0
    %5598 = vmatpush1.msra.mxu0 0.0
    %5599 = vmatprep.subr.mxu0 0.0
    %5600 = vmatpush1.msra.mxu0 0.0
    %5601 = vmatprep.subr.mxu0 0.0
    %5602 = vmatpush1.msra.mxu0 0.0
    %5603 = vmatprep.subr.mxu0 0.0
    %5604 = vmatpush1.msra.mxu0 0.0
    %5605 = vmatprep.subr.mxu0 0.0
    %5606 = vmatpush1.msra.mxu0 0.0
    %5607 = vmatprep.subr.mxu0 0.0
    %5608 = vmatpush1.msra.mxu0 0.0
    %5609 = vmatprep.subr.mxu0 0.0
    %5610 = vmatpush1.msra.mxu0 0.0
    %5611 = vmatprep.subr.mxu0 0.0
    %5612 = vmatpush1.msra.mxu0 0.0
    %5613 = vmatprep.subr.mxu0 0.0
    %5614 = vmatpush1.msra.mxu0 0.0
    %5615 = vmatprep.subr.mxu0 0.0
    %5616 = vmatpush1.msra.mxu0 0.0
    %5617 = vmatprep.subr.mxu0 0.0
    %5618 = vmatpush1.msra.mxu0 0.0
    %5619 = vmatprep.subr.mxu0 0.0
    %5620 = vmatpush1.msra.mxu0 0.0
    %5621 = vmatprep.subr.mxu0 0.0
    %5622 = vmatpush1.msra.mxu0 0.0
    %5623 = vmatprep.subr.mxu0 0.0
    %5624 = vmatpush1.msra.mxu0 0.0
    %5625 = vmatprep.subr.mxu0 0.0
    %5626 = vmatpush1.msra.mxu0 0.0
    %5627 = vmatprep.subr.mxu0 0.0
    %5628 = vmatpush1.msra.mxu0 0.0
    %5629 = vmatprep.subr.mxu0 0.0
    %5630 = vmatpush1.msra.mxu0 0.0
    %5631 = vmatprep.subr.mxu0 0.0
    %5632 = vmatpush1.msra.mxu0 0.0
    %5633 = vmatprep.subr.mxu0 0.0
    %5634 = vmatpush1.msra.mxu0 0.0
    %5635 = vmatprep.subr.mxu0 0.0
    %5636 = vmatpush1.msra.mxu0 0.0
    %5637 = vmatprep.subr.mxu0 0.0
    %5638 = vmatpush1.msra.mxu0 0.0
    %5639 = vmatprep.mubr.f32.mxu0 0.0
    %5640 = vmatmul.mubr.f32.gmra.mrb[0].mxu0 %v5573
    %v5641 = vpop.f32.mrb[0].mxu0
    %v5642 = vadd.f32 0.0, %v5641
    %v5643 = vpop.f32.mrb[0].mxu0
    %5644 = vdwg.mxu0
    %v5645 = vadd.f32 %v5571, %v5642
    %v5646 = vadd.f32 %v5645, %v875
    %v5647 = vtanh.pop %v5646
    %v5649 = vsel %vm885, %v5647, 0
    %5651 = vmatprep.subr.mxu0 0.0
    %5652 = vmatpush1.msra.mxu0 %v380
    %5653 = vmatprep.subr.mxu0 0.0
    %5654 = vmatpush1.msra.mxu0 %v381
    %5655 = vmatprep.subr.mxu0 0.0
    %5656 = vmatpush1.msra.mxu0 0.0
    %5657 = vmatprep.subr.mxu0 0.0
    %5658 = vmatpush1.msra.mxu0 0.0
    %5659 = vmatprep.subr.mxu0 0.0
    %5660 = vmatpush1.msra.mxu0 0.0
    %5661 = vmatprep.subr.mxu0 0.0
    %5662 = vmatpush1.msra.mxu0 0.0
    %5663 = vmatprep.subr.mxu0 0.0
    %5664 = vmatpush1.msra.mxu0 0.0
    %5665 = vmatprep.subr.mxu0 0.0
    %5666 = vmatpush1.msra.mxu0 0.0
    %5667 = vmatprep.subr.mxu0 0.0
    %5668 = vmatpush1.msra.mxu0 0.0
    %5669 = vmatprep.subr.mxu0 0.0
    %5670 = vmatpush1.msra.mxu0 0.0
    %5671 = vmatprep.subr.mxu0 0.0
    %5672 = vmatpush1.msra.mxu0 0.0
    %5673 = vmatprep.subr.mxu0 0.0
    %5674 = vmatpush1.msra.mxu0 0.0
    %5675 = vmatprep.subr.mxu0 0.0
    %5676 = vmatpush1.msra.mxu0 0.0
    %5677 = vmatprep.subr.mxu0 0.0
    %5678 = vmatpush1.msra.mxu0 0.0
    %5679 = vmatprep.subr.mxu0 0.0
    %5680 = vmatpush1.msra.mxu0 0.0
    %5681 = vmatprep.subr.mxu0 0.0
    %5682 = vmatpush1.msra.mxu0 0.0
    %5683 = vmatprep.subr.mxu0 0.0
    %5684 = vmatpush1.msra.mxu0 0.0
    %5685 = vmatprep.subr.mxu0 0.0
    %5686 = vmatpush1.msra.mxu0 0.0
    %5687 = vmatprep.subr.mxu0 0.0
    %5688 = vmatpush1.msra.mxu0 0.0
    %5689 = vmatprep.subr.mxu0 0.0
    %5690 = vmatpush1.msra.mxu0 0.0
    %5691 = vmatprep.subr.mxu0 0.0
    %5692 = vmatpush1.msra.mxu0 0.0
    %5693 = vmatprep.subr.mxu0 0.0
    %5694 = vmatpush1.msra.mxu0 0.0
    %5695 = vmatprep.subr.mxu0 0.0
    %5696 = vmatpush1.msra.mxu0 0.0
    %5697 = vmatprep.subr.mxu0 0.0
    %5698 = vmatpush1.msra.mxu0 0.0
    %5699 = vmatprep.subr.mxu0 0.0
    %5700 = vmatpush1.msra.mxu0 0.0
    %5701 = vmatprep.subr.mxu0 0.0
    %5702 = vmatpush1.msra.mxu0 0.0
    %5703 = vmatprep.subr.mxu0 0.0
    %5704 = vmatpush1.msra.mxu0 0.0
    %5705 = vmatprep.subr.mxu0 0.0
    %5706 = vmatpush1.msra.mxu0 0.0
    %5707 = vmatprep.subr.mxu0 0.0
    %5708 = vmatpush1.msra.mxu0 0.0
    %5709 = vmatprep.subr.mxu0 0.0
    %5710 = vmatpush1.msra.mxu0 0.0
    %5711 = vmatprep.subr.mxu0 0.0
    %5712 = vmatpush1.msra.mxu0 0.0
    %5713 = vmatprep.subr.mxu0 0.0
    %5714 = vmatpush1.msra.mxu0 0.0
    %5715 = vmatprep.mubr.f32.mxu0 0.0
    %5716 = vmatmul.mubr.f32.gmra.mrb[0].mxu0 %v5649
    %v5717 = vpop.f32.mrb[0].mxu0
    %v5718 = vadd.f32 %v883, %v5717
    %v5719 = vpop.f32.mrb[0].mxu0
    %5720 = vdwg.mxu0
    %v5721 = vxor.u32 %v5718, 2147483648
    %v5722 = vmul.f32 %v5721, 1.442695
    %v5723 = vpow.pop %v5722
    %v5724 = vadd.f32 %v5723, 1.0
    %v5725 = vrcp.pop %v5724
    %v5726 = vmul.f32 1.0, %v5725
    %5727 = vmatprep.subr.mxu0 0.0
    %5728 = vmatpush1.msra.mxu0 %v348
    %5729 = vmatprep.subr.mxu0 0.0
    %5730 = vmatpush1.msra.mxu0 %v349
    %5731 = vmatprep.subr.mxu0 0.0
    %5732 = vmatpush1.msra.mxu0 %v975
    %5733 = vmatprep.subr.mxu0 0.0
    %5734 = vmatpush1.msra.mxu0 0.0
    %5735 = vmatprep.subr.mxu0 0.0
    %5736 = vmatpush1.msra.mxu0 0.0
    %5737 = vmatprep.subr.mxu0 0.0
    %5738 = vmatpush1.msra.mxu0 0.0
    %5739 = vmatprep.subr.mxu0 0.0
    %5740 = vmatpush1.msra.mxu0 0.0
    %5741 = vmatprep.subr.mxu0 0.0
    %5742 = vmatpush1.msra.mxu0 0.0
    %5743 = vmatprep.subr.mxu0 0.0
    %5744 = vmatpush1.msra.mxu0 0.0
    %5745 = vmatprep.subr.mxu0 0.0
    %5746 = vmatpush1.msra.mxu0 0.0
    %5747 = vmatprep.subr.mxu0 0.0
    %5748 = vmatpush1.msra.mxu0 0.0
    %5749 = vmatprep.subr.mxu0 0.0
    %5750 = vmatpush1.msra.mxu0 0.0
    %5751 = vmatprep.subr.mxu0 0.0
    %5752 = vmatpush1.msra.mxu0 0.0
    %5753 = vmatprep.subr.mxu0 0.0
    %5754 = vmatpush1.msra.mxu0 0.0
    %5755 = vmatprep.subr.mxu0 0.0
    %5756 = vmatpush1.msra.mxu0 0.0
    %5757 = vmatprep.subr.mxu0 0.0
    %5758 = vmatpush1.msra.mxu0 0.0
    %5759 = vmatprep.subr.mxu0 0.0
    %5760 = vmatpush1.msra.mxu0 0.0
    %5761 = vmatprep.subr.mxu0 0.0
    %5762 = vmatpush1.msra.mxu0 0.0
    %5763 = vmatprep.subr.mxu0 0.0
    %5764 = vmatpush1.msra.mxu0 0.0
    %5765 = vmatprep.subr.mxu0 0.0
    %5766 = vmatpush1.msra.mxu0 0.0
    %5767 = vmatprep.subr.mxu0 0.0
    %5768 = vmatpush1.msra.mxu0 0.0
    %5769 = vmatprep.subr.mxu0 0.0
    %5770 = vmatpush1.msra.mxu0 0.0
    %5771 = vmatprep.subr.mxu0 0.0
    %5772 = vmatpush1.msra.mxu0 0.0
    %5773 = vmatprep.subr.mxu0 0.0
    %5774 = vmatpush1.msra.mxu0 0.0
    %5775 = vmatprep.subr.mxu0 0.0
    %5776 = vmatpush1.msra.mxu0 0.0
    %5777 = vmatprep.subr.mxu0 0.0
    %5778 = vmatpush1.msra.mxu0 0.0
    %5779 = vmatprep.subr.mxu0 0.0
    %5780 = vmatpush1.msra.mxu0 0.0
    %5781 = vmatprep.subr.mxu0 0.0
    %5782 = vmatpush1.msra.mxu0 0.0
    %5783 = vmatprep.subr.mxu0 0.0
    %5784 = vmatpush1.msra.mxu0 0.0
    %5785 = vmatprep.subr.mxu0 0.0
    %5786 = vmatpush1.msra.mxu0 0.0
    %5787 = vmatprep.subr.mxu0 0.0
    %5788 = vmatpush1.msra.mxu0 0.0
    %5789 = vmatprep.subr.mxu0 0.0
    %5790 = vmatpush1.msra.mxu0 0.0
    %5791 = vmatprep.mubr.f32.mxu0 0.0
    %5792 = vmatmul.mubr.f32.gmra.mrb[0].mxu0 %v3033
    %v5793 = vpop.f32.mrb[0].mxu0
    %v5794 = vadd.f32 %v969, %v5793
    %v5795 = vpop.f32.mrb[0].mxu0
    %5796 = vdwg.mxu0
    %5797 = vmatprep.subr.mxu0 0.0
    %5798 = vmatpush1.msra.mxu0 %v352
    %5799 = vmatprep.subr.mxu0 0.0
    %5800 = vmatpush1.msra.mxu0 %v353
    %5801 = vmatprep.subr.mxu0 0.0
    %5802 = vmatpush1.msra.mxu0 %v1054
    %5803 = vmatprep.subr.mxu0 0.0
    %5804 = vmatpush1.msra.mxu0 0.0
    %5805 = vmatprep.subr.mxu0 0.0
    %5806 = vmatpush1.msra.mxu0 0.0
    %5807 = vmatprep.subr.mxu0 0.0
    %5808 = vmatpush1.msra.mxu0 0.0
    %5809 = vmatprep.subr.mxu0 0.0
    %5810 = vmatpush1.msra.mxu0 0.0
    %5811 = vmatprep.subr.mxu0 0.0
    %5812 = vmatpush1.msra.mxu0 0.0
    %5813 = vmatprep.subr.mxu0 0.0
    %5814 = vmatpush1.msra.mxu0 0.0
    %5815 = vmatprep.subr.mxu0 0.0
    %5816 = vmatpush1.msra.mxu0 0.0
    %5817 = vmatprep.subr.mxu0 0.0
    %5818 = vmatpush1.msra.mxu0 0.0
    %5819 = vmatprep.subr.mxu0 0.0
    %5820 = vmatpush1.msra.mxu0 0.0
    %5821 = vmatprep.subr.mxu0 0.0
    %5822 = vmatpush1.msra.mxu0 0.0
    %5823 = vmatprep.subr.mxu0 0.0
    %5824 = vmatpush1.msra.mxu0 0.0
    %5825 = vmatprep.subr.mxu0 0.0
    %5826 = vmatpush1.msra.mxu0 0.0
    %5827 = vmatprep.subr.mxu0 0.0
    %5828 = vmatpush1.msra.mxu0 0.0
    %5829 = vmatprep.subr.mxu0 0.0
    %5830 = vmatpush1.msra.mxu0 0.0
    %5831 = vmatprep.subr.mxu0 0.0
    %5832 = vmatpush1.msra.mxu0 0.0
    %5833 = vmatprep.subr.mxu0 0.0
    %5834 = vmatpush1.msra.mxu0 0.0
    %5835 = vmatprep.subr.mxu0 0.0
    %5836 = vmatpush1.msra.mxu0 0.0
    %5837 = vmatprep.subr.mxu0 0.0
    %5838 = vmatpush1.msra.mxu0 0.0
    %5839 = vmatprep.subr.mxu0 0.0
    %5840 = vmatpush1.msra.mxu0 0.0
    %5841 = vmatprep.subr.mxu0 0.0
    %5842 = vmatpush1.msra.mxu0 0.0
    %5843 = vmatprep.subr.mxu0 0.0
    %5844 = vmatpush1.msra.mxu0 0.0
    %5845 = vmatprep.subr.mxu0 0.0
    %5846 = vmatpush1.msra.mxu0 0.0
    %5847 = vmatprep.subr.mxu0 0.0
    %5848 = vmatpush1.msra.mxu0 0.0
    %5849 = vmatprep.subr.mxu0 0.0
    %5850 = vmatpush1.msra.mxu0 0.0
    %5851 = vmatprep.subr.mxu0 0.0
    %5852 = vmatpush1.msra.mxu0 0.0
    %5853 = vmatprep.subr.mxu0 0.0
    %5854 = vmatpush1.msra.mxu0 0.0
    %5855 = vmatprep.subr.mxu0 0.0
    %5856 = vmatpush1.msra.mxu0 0.0
    %5857 = vmatprep.subr.mxu0 0.0
    %5858 = vmatpush1.msra.mxu0 0.0
    %5859 = vmatprep.subr.mxu0 0.0
    %5860 = vmatpush1.msra.mxu0 0.0
    %5861 = vmatprep.mubr.f32.mxu0 0.0
    %5862 = vmatmul.mubr.f32.gmra.mrb[0].mxu0 %v3033
    %v5863 = vpop.f32.mrb[0].mxu0
    %v5864 = vadd.f32 %v1051, %v5863
    %v5865 = vpop.f32.mrb[0].mxu0
    %5866 = vdwg.mxu0
    %5867 = vmatprep.subr.mxu0 0.0
    %5868 = vmatpush1.msra.mxu0 %v356
    %5869 = vmatprep.subr.mxu0 0.0
    %5870 = vmatpush1.msra.mxu0 %v357
    %5871 = vmatprep.subr.mxu0 0.0
    %5872 = vmatpush1.msra.mxu0 %v1133
    %5873 = vmatprep.subr.mxu0 0.0
    %5874 = vmatpush1.msra.mxu0 0.0
    %5875 = vmatprep.subr.mxu0 0.0
    %5876 = vmatpush1.msra.mxu0 0.0
    %5877 = vmatprep.subr.mxu0 0.0
    %5878 = vmatpush1.msra.mxu0 0.0
    %5879 = vmatprep.subr.mxu0 0.0
    %5880 = vmatpush1.msra.mxu0 0.0
    %5881 = vmatprep.subr.mxu0 0.0
    %5882 = vmatpush1.msra.mxu0 0.0
    %5883 = vmatprep.subr.mxu0 0.0
    %5884 = vmatpush1.msra.mxu0 0.0
    %5885 = vmatprep.subr.mxu0 0.0
    %5886 = vmatpush1.msra.mxu0 0.0
    %5887 = vmatprep.subr.mxu0 0.0
    %5888 = vmatpush1.msra.mxu0 0.0
    %5889 = vmatprep.subr.mxu0 0.0
    %5890 = vmatpush1.msra.mxu0 0.0
    %5891 = vmatprep.subr.mxu0 0.0
    %5892 = vmatpush1.msra.mxu0 0.0
    %5893 = vmatprep.subr.mxu0 0.0
    %5894 = vmatpush1.msra.mxu0 0.0
    %5895 = vmatprep.subr.mxu0 0.0
    %5896 = vmatpush1.msra.mxu0 0.0
    %5897 = vmatprep.subr.mxu0 0.0
    %5898 = vmatpush1.msra.mxu0 0.0
    %5899 = vmatprep.subr.mxu0 0.0
    %5900 = vmatpush1.msra.mxu0 0.0
    %5901 = vmatprep.subr.mxu0 0.0
    %5902 = vmatpush1.msra.mxu0 0.0
    %5903 = vmatprep.subr.mxu0 0.0
    %5904 = vmatpush1.msra.mxu0 0.0
    %5905 = vmatprep.subr.mxu0 0.0
    %5906 = vmatpush1.msra.mxu0 0.0
    %5907 = vmatprep.subr.mxu0 0.0
    %5908 = vmatpush1.msra.mxu0 0.0
    %5909 = vmatprep.subr.mxu0 0.0
    %5910 = vmatpush1.msra.mxu0 0.0
    %5911 = vmatprep.subr.mxu0 0.0
    %5912 = vmatpush1.msra.mxu0 0.0
    %5913 = vmatprep.subr.mxu0 0.0
    %5914 = vmatpush1.msra.mxu0 0.0
    %5915 = vmatprep.subr.mxu0 0.0
    %5916 = vmatpush1.msra.mxu0 0.0
    %5917 = vmatprep.subr.mxu0 0.0
    %5918 = vmatpush1.msra.mxu0 0.0
    %5919 = vmatprep.subr.mxu0 0.0
    %5920 = vmatpush1.msra.mxu0 0.0
    %5921 = vmatprep.subr.mxu0 0.0
    %5922 = vmatpush1.msra.mxu0 0.0
    %5923 = vmatprep.subr.mxu0 0.0
    %5924 = vmatpush1.msra.mxu0 0.0
    %5925 = vmatprep.subr.mxu0 0.0
    %5926 = vmatpush1.msra.mxu0 0.0
    %5927 = vmatprep.subr.mxu0 0.0
    %5928 = vmatpush1.msra.mxu0 0.0
    %5929 = vmatprep.subr.mxu0 0.0
    %5930 = vmatpush1.msra.mxu0 0.0
    %5931 = vmatprep.mubr.f32.mxu0 0.0
    %5932 = vmatmul.mubr.f32.gmra.mrb[0].mxu0 %v3033
    %v5933 = vpop.f32.mrb[0].mxu0
    %v5934 = vadd.f32 %v1130, %v5933
    %v5935 = vpop.f32.mrb[0].mxu0
    %5936 = vdwg.mxu0
    %v5937 = vadd.f32 %v172, %v5794
    %v5938 = vxor.u32 %v5937, 2147483648
    %v5939 = vmul.f32 %v5938, 1.442695
    %v5940 = vpow.pop %v5939
    %v5941 = vadd.f32 %v5940, 1.0
    %v5942 = vrcp.pop %v5941
    %v5943 = vmul.f32 1.0, %v5942
    %v5944 = vadd.f32 %v256, %v5864
    %v5945 = vxor.u32 %v5944, 2147483648
    %v5946 = vmul.f32 %v5945, 1.442695
    %v5947 = vpow.pop %v5946
    %v5948 = vadd.f32 %v5947, 1.0
    %v5949 = vrcp.pop %v5948
    %v5950 = vmul.f32 1.0, %v5949
    %v5951 = vmul.f32 %v5943, %v5934
    %v5952 = vadd.f32 %v340, %v5951
    %v5953 = vtanh.pop %v5952
    %v5954 = vsub.f32 1.0, %v5950
    %v5955 = vmul.f32 %v5954, %v5953
    %v5956 = vmul.f32 %v5950, %v2944
    %v5957 = vadd.f32 %v5955, %v5956
    %v5959 = vsel %vm94, %v5957, 0
    %5961 = vmatprep.subr.mxu0 0.0
    %5962 = vmatpush1.msra.mxu0 %v348
    %5963 = vmatprep.subr.mxu0 0.0
    %5964 = vmatpush1.msra.mxu0 %v349
    %5965 = vmatprep.subr.mxu0 0.0
    %5966 = vmatpush1.msra.mxu0 %v975
    %5967 = vmatprep.subr.mxu0 0.0
    %5968 = vmatpush1.msra.mxu0 0.0
    %5969 = vmatprep.subr.mxu0 0.0
    %5970 = vmatpush1.msra.mxu0 0.0
    %5971 = vmatprep.subr.mxu0 0.0
    %5972 = vmatpush1.msra.mxu0 0.0
    %5973 = vmatprep.subr.mxu0 0.0
    %5974 = vmatpush1.msra.mxu0 0.0
    %5975 = vmatprep.subr.mxu0 0.0
    %5976 = vmatpush1.msra.mxu0 0.0
    %5977 = vmatprep.subr.mxu0 0.0
    %5978 = vmatpush1.msra.mxu0 0.0
    %5979 = vmatprep.subr.mxu0 0.0
    %5980 = vmatpush1.msra.mxu0 0.0
    %5981 = vmatprep.subr.mxu0 0.0
    %5982 = vmatpush1.msra.mxu0 0.0
    %5983 = vmatprep.subr.mxu0 0.0
    %5984 = vmatpush1.msra.mxu0 0.0
    %5985 = vmatprep.subr.mxu0 0.0
    %5986 = vmatpush1.msra.mxu0 0.0
    %5987 = vmatprep.subr.mxu0 0.0
    %5988 = vmatpush1.msra.mxu0 0.0
    %5989 = vmatprep.subr.mxu0 0.0
    %5990 = vmatpush1.msra.mxu0 0.0
    %5991 = vmatprep.subr.mxu0 0.0
    %5992 = vmatpush1.msra.mxu0 0.0
    %5993 = vmatprep.subr.mxu0 0.0
    %5994 = vmatpush1.msra.mxu0 0.0
    %5995 = vmatprep.subr.mxu0 0.0
    %5996 = vmatpush1.msra.mxu0 0.0
    %5997 = vmatprep.subr.mxu0 0.0
    %5998 = vmatpush1.msra.mxu0 0.0
    %5999 = vmatprep.subr.mxu0 0.0
    %6000 = vmatpush1.msra.mxu0 0.0
    %6001 = vmatprep.subr.mxu0 0.0
    %6002 = vmatpush1.msra.mxu0 0.0
    %6003 = vmatprep.subr.mxu0 0.0
    %6004 = vmatpush1.msra.mxu0 0.0
    %6005 = vmatprep.subr.mxu0 0.0
    %6006 = vmatpush1.msra.mxu0 0.0
    %6007 = vmatprep.subr.mxu0 0.0
    %6008 = vmatpush1.msra.mxu0 0.0
    %6009 = vmatprep.subr.mxu0 0.0
    %6010 = vmatpush1.msra.mxu0 0.0
    %6011 = vmatprep.subr.mxu0 0.0
    %6012 = vmatpush1.msra.mxu0 0.0
    %6013 = vmatprep.subr.mxu0 0.0
    %6014 = vmatpush1.msra.mxu0 0.0
    %6015 = vmatprep.subr.mxu0 0.0
    %6016 = vmatpush1.msra.mxu0 0.0
    %6017 = vmatprep.subr.mxu0 0.0
    %6018 = vmatpush1.msra.mxu0 0.0
    %6019 = vmatprep.subr.mxu0 0.0
    %6020 = vmatpush1.msra.mxu0 0.0
    %6021 = vmatprep.subr.mxu0 0.0
    %6022 = vmatpush1.msra.mxu0 0.0
    %6023 = vmatprep.subr.mxu0 0.0
    %6024 = vmatpush1.msra.mxu0 0.0
    %6025 = vmatprep.mubr.f32.mxu0 0.0
    %6026 = vmatmul.mubr.f32.gmra.mrb[0].mxu0 %v5959
    %v6027 = vpop.f32.mrb[0].mxu0
    %v6028 = vadd.f32 %v969, %v6027
    %v6029 = vpop.f32.mrb[0].mxu0
    %6030 = vdwg.mxu0
    %6031 = vmatprep.subr.mxu0 0.0
    %6032 = vmatpush1.msra.mxu0 %v352
    %6033 = vmatprep.subr.mxu0 0.0
    %6034 = vmatpush1.msra.mxu0 %v353
    %6035 = vmatprep.subr.mxu0 0.0
    %6036 = vmatpush1.msra.mxu0 %v1054
    %6037 = vmatprep.subr.mxu0 0.0
    %6038 = vmatpush1.msra.mxu0 0.0
    %6039 = vmatprep.subr.mxu0 0.0
    %6040 = vmatpush1.msra.mxu0 0.0
    %6041 = vmatprep.subr.mxu0 0.0
    %6042 = vmatpush1.msra.mxu0 0.0
    %6043 = vmatprep.subr.mxu0 0.0
    %6044 = vmatpush1.msra.mxu0 0.0
    %6045 = vmatprep.subr.mxu0 0.0
    %6046 = vmatpush1.msra.mxu0 0.0
    %6047 = vmatprep.subr.mxu0 0.0
    %6048 = vmatpush1.msra.mxu0 0.0
    %6049 = vmatprep.subr.mxu0 0.0
    %6050 = vmatpush1.msra.mxu0 0.0
    %6051 = vmatprep.subr.mxu0 0.0
    %6052 = vmatpush1.msra.mxu0 0.0
    %6053 = vmatprep.subr.mxu0 0.0
    %6054 = vmatpush1.msra.mxu0 0.0
    %6055 = vmatprep.subr.mxu0 0.0
    %6056 = vmatpush1.msra.mxu0 0.0
    %6057 = vmatprep.subr.mxu0 0.0
    %6058 = vmatpush1.msra.mxu0 0.0
    %6059 = vmatprep.subr.mxu0 0.0
    %6060 = vmatpush1.msra.mxu0 0.0
    %6061 = vmatprep.subr.mxu0 0.0
    %6062 = vmatpush1.msra.mxu0 0.0
    %6063 = vmatprep.subr.mxu0 0.0
    %6064 = vmatpush1.msra.mxu0 0.0
    %6065 = vmatprep.subr.mxu0 0.0
    %6066 = vmatpush1.msra.mxu0 0.0
    %6067 = vmatprep.subr.mxu0 0.0
    %6068 = vmatpush1.msra.mxu0 0.0
    %6069 = vmatprep.subr.mxu0 0.0
    %6070 = vmatpush1.msra.mxu0 0.0
    %6071 = vmatprep.subr.mxu0 0.0
    %6072 = vmatpush1.msra.mxu0 0.0
    %6073 = vmatprep.subr.mxu0 0.0
    %6074 = vmatpush1.msra.mxu0 0.0
    %6075 = vmatprep.subr.mxu0 0.0
    %6076 = vmatpush1.msra.mxu0 0.0
    %6077 = vmatprep.subr.mxu0 0.0
    %6078 = vmatpush1.msra.mxu0 0.0
    %6079 = vmatprep.subr.mxu0 0.0
    %6080 = vmatpush1.msra.mxu0 0.0
    %6081 = vmatprep.subr.mxu0 0.0
    %6082 = vmatpush1.msra.mxu0 0.0
    %6083 = vmatprep.subr.mxu0 0.0
    %6084 = vmatpush1.msra.mxu0 0.0
    %6085 = vmatprep.subr.mxu0 0.0
    %6086 = vmatpush1.msra.mxu0 0.0
    %6087 = vmatprep.subr.mxu0 0.0
    %6088 = vmatpush1.msra.mxu0 0.0
    %6089 = vmatprep.subr.mxu0 0.0
    %6090 = vmatpush1.msra.mxu0 0.0
    %6091 = vmatprep.subr.mxu0 0.0
    %6092 = vmatpush1.msra.mxu0 0.0
    %6093 = vmatprep.subr.mxu0 0.0
    %6094 = vmatpush1.msra.mxu0 0.0
    %6095 = vmatprep.mubr.f32.mxu0 0.0
    %6096 = vmatmul.mubr.f32.gmra.mrb[0].mxu0 %v5959
    %v6097 = vpop.f32.mrb[0].mxu0
    %v6098 = vadd.f32 %v1051, %v6097
    %v6099 = vpop.f32.mrb[0].mxu0
    %6100 = vdwg.mxu0
    %6101 = vmatprep.subr.mxu0 0.0
    %6102 = vmatpush1.msra.mxu0 %v356
    %6103 = vmatprep.subr.mxu0 0.0
    %6104 = vmatpush1.msra.mxu0 %v357
    %6105 = vmatprep.subr.mxu0 0.0
    %6106 = vmatpush1.msra.mxu0 %v1133
    %6107 = vmatprep.subr.mxu0 0.0
    %6108 = vmatpush1.msra.mxu0 0.0
    %6109 = vmatprep.subr.mxu0 0.0
    %6110 = vmatpush1.msra.mxu0 0.0
    %6111 = vmatprep.subr.mxu0 0.0
    %6112 = vmatpush1.msra.mxu0 0.0
    %6113 = vmatprep.subr.mxu0 0.0
    %6114 = vmatpush1.msra.mxu0 0.0
    %6115 = vmatprep.subr.mxu0 0.0
    %6116 = vmatpush1.msra.mxu0 0.0
    %6117 = vmatprep.subr.mxu0 0.0
    %6118 = vmatpush1.msra.mxu0 0.0
    %6119 = vmatprep.subr.mxu0 0.0
    %6120 = vmatpush1.msra.mxu0 0.0
    %6121 = vmatprep.subr.mxu0 0.0
    %6122 = vmatpush1.msra.mxu0 0.0
    %6123 = vmatprep.subr.mxu0 0.0
    %6124 = vmatpush1.msra.mxu0 0.0
    %6125 = vmatprep.subr.mxu0 0.0
    %6126 = vmatpush1.msra.mxu0 0.0
    %6127 = vmatprep.subr.mxu0 0.0
    %6128 = vmatpush1.msra.mxu0 0.0
    %6129 = vmatprep.subr.mxu0 0.0
    %6130 = vmatpush1.msra.mxu0 0.0
    %6131 = vmatprep.subr.mxu0 0.0
    %6132 = vmatpush1.msra.mxu0 0.0
    %6133 = vmatprep.subr.mxu0 0.0
    %6134 = vmatpush1.msra.mxu0 0.0
    %6135 = vmatprep.subr.mxu0 0.0
    %6136 = vmatpush1.msra.mxu0 0.0
    %6137 = vmatprep.subr.mxu0 0.0
    %6138 = vmatpush1.msra.mxu0 0.0
    %6139 = vmatprep.subr.mxu0 0.0
    %6140 = vmatpush1.msra.mxu0 0.0
    %6141 = vmatprep.subr.mxu0 0.0
    %6142 = vmatpush1.msra.mxu0 0.0
    %6143 = vmatprep.subr.mxu0 0.0
    %6144 = vmatpush1.msra.mxu0 0.0
    %6145 = vmatprep.subr.mxu0 0.0
    %6146 = vmatpush1.msra.mxu0 0.0
    %6147 = vmatprep.subr.mxu0 0.0
    %6148 = vmatpush1.msra.mxu0 0.0
    %6149 = vmatprep.subr.mxu0 0.0
    %6150 = vmatpush1.msra.mxu0 0.0
    %6151 = vmatprep.subr.mxu0 0.0
    %6152 = vmatpush1.msra.mxu0 0.0
    %6153 = vmatprep.subr.mxu0 0.0
    %6154 = vmatpush1.msra.mxu0 0.0
    %6155 = vmatprep.subr.mxu0 0.0
    %6156 = vmatpush1.msra.mxu0 0.0
    %6157 = vmatprep.subr.mxu0 0.0
    %6158 = vmatpush1.msra.mxu0 0.0
    %6159 = vmatprep.subr.mxu0 0.0
    %6160 = vmatpush1.msra.mxu0 0.0
    %6161 = vmatprep.subr.mxu0 0.0
    %6162 = vmatpush1.msra.mxu0 0.0
    %6163 = vmatprep.subr.mxu0 0.0
    %6164 = vmatpush1.msra.mxu0 0.0
    %6165 = vmatprep.mubr.f32.mxu0 0.0
    %6166 = vmatmul.mubr.f32.gmra.mrb[0].mxu0 %v5959
    %v6167 = vpop.f32.mrb[0].mxu0
    %v6168 = vadd.f32 %v1130, %v6167
    %v6169 = vpop.f32.mrb[0].mxu0
    %6170 = vdwg.mxu0
    %v6172 = vrot.slane %v6028, 6
    %v6174 = vadd.f32 %v172, %v6172
    %v6175 = vxor.u32 %v6174, 2147483648
    %v6176 = vmul.f32 %v6175, 1.442695
    %v6177 = vpow.pop %v6176
    %v6178 = vadd.f32 %v6177, 1.0
    %v6179 = vrcp.pop %v6178
    %v6180 = vmul.f32 1.0, %v6179
    %v6182 = vrot.slane %v6098, 6
    %v6184 = vadd.f32 %v256, %v6182
    %v6185 = vxor.u32 %v6184, 2147483648
    %v6186 = vmul.f32 %v6185, 1.442695
    %v6187 = vpow.pop %v6186
    %v6188 = vadd.f32 %v6187, 1.0
    %v6189 = vrcp.pop %v6188
    %v6190 = vmul.f32 1.0, %v6189
    %v6192 = vrot.slane %v6168, 6
    %v6194 = vmul.f32 %v6180, %v6192
    %v6195 = vadd.f32 %v340, %v6194
    %v6196 = vtanh.pop %v6195
    %v6197 = vsub.f32 1.0, %v6190
    %v6198 = vmul.f32 %v6197, %v6196
    %v6199 = vrot.slane %v5957, 6
    %v6201 = vmul.f32 %v6190, %v6199
    %v6202 = vadd.f32 %v6198, %v6201
    %v6204 = vrot.slane %v6202, 2
    %v6205 = vsel %vm94, %v6204, 0
    %6207 = vmatprep.subr.mxu0 0.0
    %6208 = vmatpush1.msra.mxu0 %v348
    %6209 = vmatprep.subr.mxu0 0.0
    %6210 = vmatpush1.msra.mxu0 %v349
    %6211 = vmatprep.subr.mxu0 0.0
    %6212 = vmatpush1.msra.mxu0 %v975
    %6213 = vmatprep.subr.mxu0 0.0
    %6214 = vmatpush1.msra.mxu0 0.0
    %6215 = vmatprep.subr.mxu0 0.0
    %6216 = vmatpush1.msra.mxu0 0.0
    %6217 = vmatprep.subr.mxu0 0.0
    %6218 = vmatpush1.msra.mxu0 0.0
    %6219 = vmatprep.subr.mxu0 0.0
    %6220 = vmatpush1.msra.mxu0 0.0
    %6221 = vmatprep.subr.mxu0 0.0
    %6222 = vmatpush1.msra.mxu0 0.0
    %6223 = vmatprep.subr.mxu0 0.0
    %6224 = vmatpush1.msra.mxu0 0.0
    %6225 = vmatprep.subr.mxu0 0.0
    %6226 = vmatpush1.msra.mxu0 0.0
    %6227 = vmatprep.subr.mxu0 0.0
    %6228 = vmatpush1.msra.mxu0 0.0
    %6229 = vmatprep.subr.mxu0 0.0
    %6230 = vmatpush1.msra.mxu0 0.0
    %6231 = vmatprep.subr.mxu0 0.0
    %6232 = vmatpush1.msra.mxu0 0.0
    %6233 = vmatprep.subr.mxu0 0.0
    %6234 = vmatpush1.msra.mxu0 0.0
    %6235 = vmatprep.subr.mxu0 0.0
    %6236 = vmatpush1.msra.mxu0 0.0
    %6237 = vmatprep.subr.mxu0 0.0
    %6238 = vmatpush1.msra.mxu0 0.0
    %6239 = vmatprep.subr.mxu0 0.0
    %6240 = vmatpush1.msra.mxu0 0.0
    %6241 = vmatprep.subr.mxu0 0.0
    %6242 = vmatpush1.msra.mxu0 0.0
    %6243 = vmatprep.subr.mxu0 0.0
    %6244 = vmatpush1.msra.mxu0 0.0
    %6245 = vmatprep.subr.mxu0 0.0
    %6246 = vmatpush1.msra.mxu0 0.0
    %6247 = vmatprep.subr.mxu0 0.0
    %6248 = vmatpush1.msra.mxu0 0.0
    %6249 = vmatprep.subr.mxu0 0.0
    %6250 = vmatpush1.msra.mxu0 0.0
    %6251 = vmatprep.subr.mxu0 0.0
    %6252 = vmatpush1.msra.mxu0 0.0
    %6253 = vmatprep.subr.mxu0 0.0
    %6254 = vmatpush1.msra.mxu0 0.0
    %6255 = vmatprep.subr.mxu0 0.0
    %6256 = vmatpush1.msra.mxu0 0.0
    %6257 = vmatprep.subr.mxu0 0.0
    %6258 = vmatpush1.msra.mxu0 0.0
    %6259 = vmatprep.subr.mxu0 0.0
    %6260 = vmatpush1.msra.mxu0 0.0
    %6261 = vmatprep.subr.mxu0 0.0
    %6262 = vmatpush1.msra.mxu0 0.0
    %6263 = vmatprep.subr.mxu0 0.0
    %6264 = vmatpush1.msra.mxu0 0.0
    %6265 = vmatprep.subr.mxu0 0.0
    %6266 = vmatpush1.msra.mxu0 0.0
    %6267 = vmatprep.subr.mxu0 0.0
    %6268 = vmatpush1.msra.mxu0 0.0
    %6269 = vmatprep.subr.mxu0 0.0
    %6270 = vmatpush1.msra.mxu0 0.0
    %6271 = vmatprep.mubr.f32.mxu0 0.0
    %6272 = vmatmul.mubr.f32.gmra.mrb[0].mxu0 %v6205
    %v6273 = vpop.f32.mrb[0].mxu0
    %v6274 = vadd.f32 %v969, %v6273
    %v6275 = vpop.f32.mrb[0].mxu0
    %6276 = vdwg.mxu0
    %6277 = vmatprep.subr.mxu0 0.0
    %6278 = vmatpush1.msra.mxu0 %v352
    %6279 = vmatprep.subr.mxu0 0.0
    %6280 = vmatpush1.msra.mxu0 %v353
    %6281 = vmatprep.subr.mxu0 0.0
    %6282 = vmatpush1.msra.mxu0 %v1054
    %6283 = vmatprep.subr.mxu0 0.0
    %6284 = vmatpush1.msra.mxu0 0.0
    %6285 = vmatprep.subr.mxu0 0.0
    %6286 = vmatpush1.msra.mxu0 0.0
    %6287 = vmatprep.subr.mxu0 0.0
    %6288 = vmatpush1.msra.mxu0 0.0
    %6289 = vmatprep.subr.mxu0 0.0
    %6290 = vmatpush1.msra.mxu0 0.0
    %6291 = vmatprep.subr.mxu0 0.0
    %6292 = vmatpush1.msra.mxu0 0.0
    %6293 = vmatprep.subr.mxu0 0.0
    %6294 = vmatpush1.msra.mxu0 0.0
    %6295 = vmatprep.subr.mxu0 0.0
    %6296 = vmatpush1.msra.mxu0 0.0
    %6297 = vmatprep.subr.mxu0 0.0
    %6298 = vmatpush1.msra.mxu0 0.0
    %6299 = vmatprep.subr.mxu0 0.0
    %6300 = vmatpush1.msra.mxu0 0.0
    %6301 = vmatprep.subr.mxu0 0.0
    %6302 = vmatpush1.msra.mxu0 0.0
    %6303 = vmatprep.subr.mxu0 0.0
    %6304 = vmatpush1.msra.mxu0 0.0
    %6305 = vmatprep.subr.mxu0 0.0
    %6306 = vmatpush1.msra.mxu0 0.0
    %6307 = vmatprep.subr.mxu0 0.0
    %6308 = vmatpush1.msra.mxu0 0.0
    %6309 = vmatprep.subr.mxu0 0.0
    %6310 = vmatpush1.msra.mxu0 0.0
    %6311 = vmatprep.subr.mxu0 0.0
    %6312 = vmatpush1.msra.mxu0 0.0
    %6313 = vmatprep.subr.mxu0 0.0
    %6314 = vmatpush1.msra.mxu0 0.0
    %6315 = vmatprep.subr.mxu0 0.0
    %6316 = vmatpush1.msra.mxu0 0.0
    %6317 = vmatprep.subr.mxu0 0.0
    %6318 = vmatpush1.msra.mxu0 0.0
    %6319 = vmatprep.subr.mxu0 0.0
    %6320 = vmatpush1.msra.mxu0 0.0
    %6321 = vmatprep.subr.mxu0 0.0
    %6322 = vmatpush1.msra.mxu0 0.0
    %6323 = vmatprep.subr.mxu0 0.0
    %6324 = vmatpush1.msra.mxu0 0.0
    %6325 = vmatprep.subr.mxu0 0.0
    %6326 = vmatpush1.msra.mxu0 0.0
    %6327 = vmatprep.subr.mxu0 0.0
    %6328 = vmatpush1.msra.mxu0 0.0
    %6329 = vmatprep.subr.mxu0 0.0
    %6330 = vmatpush1.msra.mxu0 0.0
    %6331 = vmatprep.subr.mxu0 0.0
    %6332 = vmatpush1.msra.mxu0 0.0
    %6333 = vmatprep.subr.mxu0 0.0
    %6334 = vmatpush1.msra.mxu0 0.0
    %6335 = vmatprep.subr.mxu0 0.0
    %6336 = vmatpush1.msra.mxu0 0.0
    %6337 = vmatprep.subr.mxu0 0.0
    %6338 = vmatpush1.msra.mxu0 0.0
    %6339 = vmatprep.subr.mxu0 0.0
    %6340 = vmatpush1.msra.mxu0 0.0
    %6341 = vmatprep.mubr.f32.mxu0 0.0
    %6342 = vmatmul.mubr.f32.gmra.mrb[0].mxu0 %v6205
    %v6343 = vpop.f32.mrb[0].mxu0
    %v6344 = vadd.f32 %v1051, %v6343
    %v6345 = vpop.f32.mrb[0].mxu0
    %6346 = vdwg.mxu0
    %6347 = vmatprep.subr.mxu0 0.0
    %6348 = vmatpush1.msra.mxu0 %v356
    %6349 = vmatprep.subr.mxu0 0.0
    %6350 = vmatpush1.msra.mxu0 %v357
    %6351 = vmatprep.subr.mxu0 0.0
    %6352 = vmatpush1.msra.mxu0 %v1133
    %6353 = vmatprep.subr.mxu0 0.0
    %6354 = vmatpush1.msra.mxu0 0.0
    %6355 = vmatprep.subr.mxu0 0.0
    %6356 = vmatpush1.msra.mxu0 0.0
    %6357 = vmatprep.subr.mxu0 0.0
    %6358 = vmatpush1.msra.mxu0 0.0
    %6359 = vmatprep.subr.mxu0 0.0
    %6360 = vmatpush1.msra.mxu0 0.0
    %6361 = vmatprep.subr.mxu0 0.0
    %6362 = vmatpush1.msra.mxu0 0.0
    %6363 = vmatprep.subr.mxu0 0.0
    %6364 = vmatpush1.msra.mxu0 0.0
    %6365 = vmatprep.subr.mxu0 0.0
    %6366 = vmatpush1.msra.mxu0 0.0
    %6367 = vmatprep.subr.mxu0 0.0
    %6368 = vmatpush1.msra.mxu0 0.0
    %6369 = vmatprep.subr.mxu0 0.0
    %6370 = vmatpush1.msra.mxu0 0.0
    %6371 = vmatprep.subr.mxu0 0.0
    %6372 = vmatpush1.msra.mxu0 0.0
    %6373 = vmatprep.subr.mxu0 0.0
    %6374 = vmatpush1.msra.mxu0 0.0
    %6375 = vmatprep.subr.mxu0 0.0
    %6376 = vmatpush1.msra.mxu0 0.0
    %6377 = vmatprep.subr.mxu0 0.0
    %6378 = vmatpush1.msra.mxu0 0.0
    %6379 = vmatprep.subr.mxu0 0.0
    %6380 = vmatpush1.msra.mxu0 0.0
    %6381 = vmatprep.subr.mxu0 0.0
    %6382 = vmatpush1.msra.mxu0 0.0
    %6383 = vmatprep.subr.mxu0 0.0
    %6384 = vmatpush1.msra.mxu0 0.0
    %6385 = vmatprep.subr.mxu0 0.0
    %6386 = vmatpush1.msra.mxu0 0.0
    %6387 = vmatprep.subr.mxu0 0.0
    %6388 = vmatpush1.msra.mxu0 0.0
    %6389 = vmatprep.subr.mxu0 0.0
    %6390 = vmatpush1.msra.mxu0 0.0
    %6391 = vmatprep.subr.mxu0 0.0
    %6392 = vmatpush1.msra.mxu0 0.0
    %6393 = vmatprep.subr.mxu0 0.0
    %6394 = vmatpush1.msra.mxu0 0.0
    %6395 = vmatprep.subr.mxu0 0.0
    %6396 = vmatpush1.msra.mxu0 0.0
    %6397 = vmatprep.subr.mxu0 0.0
    %6398 = vmatpush1.msra.mxu0 0.0
    %6399 = vmatprep.subr.mxu0 0.0
    %6400 = vmatpush1.msra.mxu0 0.0
    %6401 = vmatprep.subr.mxu0 0.0
    %6402 = vmatpush1.msra.mxu0 0.0
    %6403 = vmatprep.subr.mxu0 0.0
    %6404 = vmatpush1.msra.mxu0 0.0
    %6405 = vmatprep.subr.mxu0 0.0
    %6406 = vmatpush1.msra.mxu0 0.0
    %6407 = vmatprep.subr.mxu0 0.0
    %6408 = vmatpush1.msra.mxu0 0.0
    %6409 = vmatprep.subr.mxu0 0.0
    %6410 = vmatpush1.msra.mxu0 0.0
    %6411 = vmatprep.mubr.f32.mxu0 0.0
    %6412 = vmatmul.mubr.f32.gmra.mrb[0].mxu0 %v6205
    %v6413 = vpop.f32.mrb[0].mxu0
    %v6414 = vadd.f32 %v1130, %v6413
    %v6415 = vpop.f32.mrb[0].mxu0
    %6416 = vdwg.mxu0
    %v6418 = vrot.slane %v6274, 4
    %v6420 = vadd.f32 %v172, %v6418
    %v6421 = vxor.u32 %v6420, 2147483648
    %v6422 = vmul.f32 %v6421, 1.442695
    %v6423 = vpow.pop %v6422
    %v6424 = vadd.f32 %v6423, 1.0
    %v6425 = vrcp.pop %v6424
    %v6426 = vmul.f32 1.0, %v6425
    %v6428 = vrot.slane %v6344, 4
    %v6430 = vadd.f32 %v256, %v6428
    %v6431 = vxor.u32 %v6430, 2147483648
    %v6432 = vmul.f32 %v6431, 1.442695
    %v6433 = vpow.pop %v6432
    %v6434 = vadd.f32 %v6433, 1.0
    %v6435 = vrcp.pop %v6434
    %v6436 = vmul.f32 1.0, %v6435
    %v6438 = vrot.slane %v6414, 4
    %v6440 = vmul.f32 %v6426, %v6438
    %v6441 = vadd.f32 %v340, %v6440
    %v6442 = vtanh.pop %v6441
    %v6443 = vsub.f32 1.0, %v6436
    %v6444 = vmul.f32 %v6443, %v6442
    %v6445 = vrot.slane %v6202, 6
    %v6447 = vmul.f32 %v6436, %v6445
    %v6448 = vadd.f32 %v6444, %v6447
    %v6450 = vrot.slane %v6448, 4
    %v6451 = vsel %vm94, %v6450, 0
    %6453 = vmatprep.subr.mxu0 0.0
    %6454 = vmatpush1.msra.mxu0 %v348
    %6455 = vmatprep.subr.mxu0 0.0
    %6456 = vmatpush1.msra.mxu0 %v349
    %6457 = vmatprep.subr.mxu0 0.0
    %6458 = vmatpush1.msra.mxu0 %v975
    %6459 = vmatprep.subr.mxu0 0.0
    %6460 = vmatpush1.msra.mxu0 0.0
    %6461 = vmatprep.subr.mxu0 0.0
    %6462 = vmatpush1.msra.mxu0 0.0
    %6463 = vmatprep.subr.mxu0 0.0
    %6464 = vmatpush1.msra.mxu0 0.0
    %6465 = vmatprep.subr.mxu0 0.0
    %6466 = vmatpush1.msra.mxu0 0.0
    %6467 = vmatprep.subr.mxu0 0.0
    %6468 = vmatpush1.msra.mxu0 0.0
    %6469 = vmatprep.subr.mxu0 0.0
    %6470 = vmatpush1.msra.mxu0 0.0
    %6471 = vmatprep.subr.mxu0 0.0
    %6472 = vmatpush1.msra.mxu0 0.0
    %6473 = vmatprep.subr.mxu0 0.0
    %6474 = vmatpush1.msra.mxu0 0.0
    %6475 = vmatprep.subr.mxu0 0.0
    %6476 = vmatpush1.msra.mxu0 0.0
    %6477 = vmatprep.subr.mxu0 0.0
    %6478 = vmatpush1.msra.mxu0 0.0
    %6479 = vmatprep.subr.mxu0 0.0
    %6480 = vmatpush1.msra.mxu0 0.0
    %6481 = vmatprep.subr.mxu0 0.0
    %6482 = vmatpush1.msra.mxu0 0.0
    %6483 = vmatprep.subr.mxu0 0.0
    %6484 = vmatpush1.msra.mxu0 0.0
    %6485 = vmatprep.subr.mxu0 0.0
    %6486 = vmatpush1.msra.mxu0 0.0
    %6487 = vmatprep.subr.mxu0 0.0
    %6488 = vmatpush1.msra.mxu0 0.0
    %6489 = vmatprep.subr.mxu0 0.0
    %6490 = vmatpush1.msra.mxu0 0.0
    %6491 = vmatprep.subr.mxu0 0.0
    %6492 = vmatpush1.msra.mxu0 0.0
    %6493 = vmatprep.subr.mxu0 0.0
    %6494 = vmatpush1.msra.mxu0 0.0
    %6495 = vmatprep.subr.mxu0 0.0
    %6496 = vmatpush1.msra.mxu0 0.0
    %6497 = vmatprep.subr.mxu0 0.0
    %6498 = vmatpush1.msra.mxu0 0.0
    %6499 = vmatprep.subr.mxu0 0.0
    %6500 = vmatpush1.msra.mxu0 0.0
    %6501 = vmatprep.subr.mxu0 0.0
    %6502 = vmatpush1.msra.mxu0 0.0
    %6503 = vmatprep.subr.mxu0 0.0
    %6504 = vmatpush1.msra.mxu0 0.0
    %6505 = vmatprep.subr.mxu0 0.0
    %6506 = vmatpush1.msra.mxu0 0.0
    %6507 = vmatprep.subr.mxu0 0.0
    %6508 = vmatpush1.msra.mxu0 0.0
    %6509 = vmatprep.subr.mxu0 0.0
    %6510 = vmatpush1.msra.mxu0 0.0
    %6511 = vmatprep.subr.mxu0 0.0
    %6512 = vmatpush1.msra.mxu0 0.0
    %6513 = vmatprep.subr.mxu0 0.0
    %6514 = vmatpush1.msra.mxu0 0.0
    %6515 = vmatprep.subr.mxu0 0.0
    %6516 = vmatpush1.msra.mxu0 0.0
    %6517 = vmatprep.mubr.f32.mxu0 0.0
    %6518 = vmatmul.mubr.f32.gmra.mrb[0].mxu0 %v6451
    %v6519 = vpop.f32.mrb[0].mxu0
    %v6520 = vadd.f32 %v969, %v6519
    %v6521 = vpop.f32.mrb[0].mxu0
    %6522 = vdwg.mxu0
    %6523 = vmatprep.subr.mxu0 0.0
    %6524 = vmatpush1.msra.mxu0 %v352
    %6525 = vmatprep.subr.mxu0 0.0
    %6526 = vmatpush1.msra.mxu0 %v353
    %6527 = vmatprep.subr.mxu0 0.0
    %6528 = vmatpush1.msra.mxu0 %v1054
    %6529 = vmatprep.subr.mxu0 0.0
    %6530 = vmatpush1.msra.mxu0 0.0
    %6531 = vmatprep.subr.mxu0 0.0
    %6532 = vmatpush1.msra.mxu0 0.0
    %6533 = vmatprep.subr.mxu0 0.0
    %6534 = vmatpush1.msra.mxu0 0.0
    %6535 = vmatprep.subr.mxu0 0.0
    %6536 = vmatpush1.msra.mxu0 0.0
    %6537 = vmatprep.subr.mxu0 0.0
    %6538 = vmatpush1.msra.mxu0 0.0
    %6539 = vmatprep.subr.mxu0 0.0
    %6540 = vmatpush1.msra.mxu0 0.0
    %6541 = vmatprep.subr.mxu0 0.0
    %6542 = vmatpush1.msra.mxu0 0.0
    %6543 = vmatprep.subr.mxu0 0.0
    %6544 = vmatpush1.msra.mxu0 0.0
    %6545 = vmatprep.subr.mxu0 0.0
    %6546 = vmatpush1.msra.mxu0 0.0
    %6547 = vmatprep.subr.mxu0 0.0
    %6548 = vmatpush1.msra.mxu0 0.0
    %6549 = vmatprep.subr.mxu0 0.0
    %6550 = vmatpush1.msra.mxu0 0.0
    %6551 = vmatprep.subr.mxu0 0.0
    %6552 = vmatpush1.msra.mxu0 0.0
    %6553 = vmatprep.subr.mxu0 0.0
    %6554 = vmatpush1.msra.mxu0 0.0
    %6555 = vmatprep.subr.mxu0 0.0
    %6556 = vmatpush1.msra.mxu0 0.0
    %6557 = vmatprep.subr.mxu0 0.0
    %6558 = vmatpush1.msra.mxu0 0.0
    %6559 = vmatprep.subr.mxu0 0.0
    %6560 = vmatpush1.msra.mxu0 0.0
    %6561 = vmatprep.subr.mxu0 0.0
    %6562 = vmatpush1.msra.mxu0 0.0
    %6563 = vmatprep.subr.mxu0 0.0
    %6564 = vmatpush1.msra.mxu0 0.0
    %6565 = vmatprep.subr.mxu0 0.0
    %6566 = vmatpush1.msra.mxu0 0.0
    %6567 = vmatprep.subr.mxu0 0.0
    %6568 = vmatpush1.msra.mxu0 0.0
    %6569 = vmatprep.subr.mxu0 0.0
    %6570 = vmatpush1.msra.mxu0 0.0
    %6571 = vmatprep.subr.mxu0 0.0
    %6572 = vmatpush1.msra.mxu0 0.0
    %6573 = vmatprep.subr.mxu0 0.0
    %6574 = vmatpush1.msra.mxu0 0.0
    %6575 = vmatprep.subr.mxu0 0.0
    %6576 = vmatpush1.msra.mxu0 0.0
    %6577 = vmatprep.subr.mxu0 0.0
    %6578 = vmatpush1.msra.mxu0 0.0
    %6579 = vmatprep.subr.mxu0 0.0
    %6580 = vmatpush1.msra.mxu0 0.0
    %6581 = vmatprep.subr.mxu0 0.0
    %6582 = vmatpush1.msra.mxu0 0.0
    %6583 = vmatprep.subr.mxu0 0.0
    %6584 = vmatpush1.msra.mxu0 0.0
    %6585 = vmatprep.subr.mxu0 0.0
    %6586 = vmatpush1.msra.mxu0 0.0
    %6587 = vmatprep.mubr.f32.mxu0 0.0
    %6588 = vmatmul.mubr.f32.gmra.mrb[0].mxu0 %v6451
    %v6589 = vpop.f32.mrb[0].mxu0
    %v6590 = vadd.f32 %v1051, %v6589
    %v6591 = vpop.f32.mrb[0].mxu0
    %6592 = vdwg.mxu0
    %6593 = vmatprep.subr.mxu0 0.0
    %6594 = vmatpush1.msra.mxu0 %v356
    %6595 = vmatprep.subr.mxu0 0.0
    %6596 = vmatpush1.msra.mxu0 %v357
    %6597 = vmatprep.subr.mxu0 0.0
    %6598 = vmatpush1.msra.mxu0 %v1133
    %6599 = vmatprep.subr.mxu0 0.0
    %6600 = vmatpush1.msra.mxu0 0.0
    %6601 = vmatprep.subr.mxu0 0.0
    %6602 = vmatpush1.msra.mxu0 0.0
    %6603 = vmatprep.subr.mxu0 0.0
    %6604 = vmatpush1.msra.mxu0 0.0
    %6605 = vmatprep.subr.mxu0 0.0
    %6606 = vmatpush1.msra.mxu0 0.0
    %6607 = vmatprep.subr.mxu0 0.0
    %6608 = vmatpush1.msra.mxu0 0.0
    %6609 = vmatprep.subr.mxu0 0.0
    %6610 = vmatpush1.msra.mxu0 0.0
    %6611 = vmatprep.subr.mxu0 0.0
    %6612 = vmatpush1.msra.mxu0 0.0
    %6613 = vmatprep.subr.mxu0 0.0
    %6614 = vmatpush1.msra.mxu0 0.0
    %6615 = vmatprep.subr.mxu0 0.0
    %6616 = vmatpush1.msra.mxu0 0.0
    %6617 = vmatprep.subr.mxu0 0.0
    %6618 = vmatpush1.msra.mxu0 0.0
    %6619 = vmatprep.subr.mxu0 0.0
    %6620 = vmatpush1.msra.mxu0 0.0
    %6621 = vmatprep.subr.mxu0 0.0
    %6622 = vmatpush1.msra.mxu0 0.0
    %6623 = vmatprep.subr.mxu0 0.0
    %6624 = vmatpush1.msra.mxu0 0.0
    %6625 = vmatprep.subr.mxu0 0.0
    %6626 = vmatpush1.msra.mxu0 0.0
    %6627 = vmatprep.subr.mxu0 0.0
    %6628 = vmatpush1.msra.mxu0 0.0
    %6629 = vmatprep.subr.mxu0 0.0
    %6630 = vmatpush1.msra.mxu0 0.0
    %6631 = vmatprep.subr.mxu0 0.0
    %6632 = vmatpush1.msra.mxu0 0.0
    %6633 = vmatprep.subr.mxu0 0.0
    %6634 = vmatpush1.msra.mxu0 0.0
    %6635 = vmatprep.subr.mxu0 0.0
    %6636 = vmatpush1.msra.mxu0 0.0
    %6637 = vmatprep.subr.mxu0 0.0
    %6638 = vmatpush1.msra.mxu0 0.0
    %6639 = vmatprep.subr.mxu0 0.0
    %6640 = vmatpush1.msra.mxu0 0.0
    %6641 = vmatprep.subr.mxu0 0.0
    %6642 = vmatpush1.msra.mxu0 0.0
    %6643 = vmatprep.subr.mxu0 0.0
    %6644 = vmatpush1.msra.mxu0 0.0
    %6645 = vmatprep.subr.mxu0 0.0
    %6646 = vmatpush1.msra.mxu0 0.0
    %6647 = vmatprep.subr.mxu0 0.0
    %6648 = vmatpush1.msra.mxu0 0.0
    %6649 = vmatprep.subr.mxu0 0.0
    %6650 = vmatpush1.msra.mxu0 0.0
    %6651 = vmatprep.subr.mxu0 0.0
    %6652 = vmatpush1.msra.mxu0 0.0
    %6653 = vmatprep.subr.mxu0 0.0
    %6654 = vmatpush1.msra.mxu0 0.0
    %6655 = vmatprep.subr.mxu0 0.0
    %6656 = vmatpush1.msra.mxu0 0.0
    %6657 = vmatprep.mubr.f32.mxu0 0.0
    %6658 = vmatmul.mubr.f32.gmra.mrb[0].mxu0 %v6451
    %v6659 = vpop.f32.mrb[0].mxu0
    %v6660 = vadd.f32 %v1130, %v6659
    %v6661 = vpop.f32.mrb[0].mxu0
    %6662 = vdwg.mxu0
    %v6664 = vrot.slane %v6520, 2
    %v6666 = vadd.f32 %v172, %v6664
    %v6667 = vxor.u32 %v6666, 2147483648
    %v6668 = vmul.f32 %v6667, 1.442695
    %v6669 = vpow.pop %v6668
    %v6670 = vadd.f32 %v6669, 1.0
    %v6671 = vrcp.pop %v6670
    %v6672 = vmul.f32 1.0, %v6671
    %v6674 = vrot.slane %v6590, 2
    %v6676 = vadd.f32 %v256, %v6674
    %v6677 = vxor.u32 %v6676, 2147483648
    %v6678 = vmul.f32 %v6677, 1.442695
    %v6679 = vpow.pop %v6678
    %v6680 = vadd.f32 %v6679, 1.0
    %v6681 = vrcp.pop %v6680
    %v6682 = vmul.f32 1.0, %v6681
    %v6684 = vrot.slane %v6660, 2
    %v6686 = vmul.f32 %v6672, %v6684
    %v6687 = vadd.f32 %v340, %v6686
    %v6688 = vtanh.pop %v6687
    %v6689 = vsub.f32 1.0, %v6682
    %v6690 = vmul.f32 %v6689, %v6688
    %v6691 = vrot.slane %v6448, 6
    %v6693 = vmul.f32 %v6682, %v6691
    %v6694 = vadd.f32 %v6690, %v6693
    %v6696 = vrot.slane %v6694, 6
    %v6697 = vsel %vm94, %v6696, 0
    %6699 = vmatprep.subr.mxu0 0.0
    %6700 = vmatpush1.msra.mxu0 %v348
    %6701 = vmatprep.subr.mxu0 0.0
    %6702 = vmatpush1.msra.mxu0 %v349
    %6703 = vmatprep.subr.mxu0 0.0
    %6704 = vmatpush1.msra.mxu0 %v975
    %6705 = vmatprep.subr.mxu0 0.0
    %6706 = vmatpush1.msra.mxu0 0.0
    %6707 = vmatprep.subr.mxu0 0.0
    %6708 = vmatpush1.msra.mxu0 0.0
    %6709 = vmatprep.subr.mxu0 0.0
    %6710 = vmatpush1.msra.mxu0 0.0
    %6711 = vmatprep.subr.mxu0 0.0
    %6712 = vmatpush1.msra.mxu0 0.0
    %6713 = vmatprep.subr.mxu0 0.0
    %6714 = vmatpush1.msra.mxu0 0.0
    %6715 = vmatprep.subr.mxu0 0.0
    %6716 = vmatpush1.msra.mxu0 0.0
    %6717 = vmatprep.subr.mxu0 0.0
    %6718 = vmatpush1.msra.mxu0 0.0
    %6719 = vmatprep.subr.mxu0 0.0
    %6720 = vmatpush1.msra.mxu0 0.0
    %6721 = vmatprep.subr.mxu0 0.0
    %6722 = vmatpush1.msra.mxu0 0.0
    %6723 = vmatprep.subr.mxu0 0.0
    %6724 = vmatpush1.msra.mxu0 0.0
    %6725 = vmatprep.subr.mxu0 0.0
    %6726 = vmatpush1.msra.mxu0 0.0
    %6727 = vmatprep.subr.mxu0 0.0
    %6728 = vmatpush1.msra.mxu0 0.0
    %6729 = vmatprep.subr.mxu0 0.0
    %6730 = vmatpush1.msra.mxu0 0.0
    %6731 = vmatprep.subr.mxu0 0.0
    %6732 = vmatpush1.msra.mxu0 0.0
    %6733 = vmatprep.subr.mxu0 0.0
    %6734 = vmatpush1.msra.mxu0 0.0
    %6735 = vmatprep.subr.mxu0 0.0
    %6736 = vmatpush1.msra.mxu0 0.0
    %6737 = vmatprep.subr.mxu0 0.0
    %6738 = vmatpush1.msra.mxu0 0.0
    %6739 = vmatprep.subr.mxu0 0.0
    %6740 = vmatpush1.msra.mxu0 0.0
    %6741 = vmatprep.subr.mxu0 0.0
    %6742 = vmatpush1.msra.mxu0 0.0
    %6743 = vmatprep.subr.mxu0 0.0
    %6744 = vmatpush1.msra.mxu0 0.0
    %6745 = vmatprep.subr.mxu0 0.0
    %6746 = vmatpush1.msra.mxu0 0.0
    %6747 = vmatprep.subr.mxu0 0.0
    %6748 = vmatpush1.msra.mxu0 0.0
    %6749 = vmatprep.subr.mxu0 0.0
    %6750 = vmatpush1.msra.mxu0 0.0
    %6751 = vmatprep.subr.mxu0 0.0
    %6752 = vmatpush1.msra.mxu0 0.0
    %6753 = vmatprep.subr.mxu0 0.0
    %6754 = vmatpush1.msra.mxu0 0.0
    %6755 = vmatprep.subr.mxu0 0.0
    %6756 = vmatpush1.msra.mxu0 0.0
    %6757 = vmatprep.subr.mxu0 0.0
    %6758 = vmatpush1.msra.mxu0 0.0
    %6759 = vmatprep.subr.mxu0 0.0
    %6760 = vmatpush1.msra.mxu0 0.0
    %6761 = vmatprep.subr.mxu0 0.0
    %6762 = vmatpush1.msra.mxu0 0.0
    %6763 = vmatprep.mubr.f32.mxu0 0.0
    %6764 = vmatmul.mubr.f32.gmra.mrb[0].mxu0 %v6697
    %v6765 = vpop.f32.mrb[0].mxu0
    %v6766 = vadd.f32 %v969, %v6765
    %v6767 = vpop.f32.mrb[0].mxu0
    %6768 = vdwg.mxu0
    %6769 = vmatprep.subr.mxu0 0.0
    %6770 = vmatpush1.msra.mxu0 %v352
    %6771 = vmatprep.subr.mxu0 0.0
    %6772 = vmatpush1.msra.mxu0 %v353
    %6773 = vmatprep.subr.mxu0 0.0
    %6774 = vmatpush1.msra.mxu0 %v1054
    %6775 = vmatprep.subr.mxu0 0.0
    %6776 = vmatpush1.msra.mxu0 0.0
    %6777 = vmatprep.subr.mxu0 0.0
    %6778 = vmatpush1.msra.mxu0 0.0
    %6779 = vmatprep.subr.mxu0 0.0
    %6780 = vmatpush1.msra.mxu0 0.0
    %6781 = vmatprep.subr.mxu0 0.0
    %6782 = vmatpush1.msra.mxu0 0.0
    %6783 = vmatprep.subr.mxu0 0.0
    %6784 = vmatpush1.msra.mxu0 0.0
    %6785 = vmatprep.subr.mxu0 0.0
    %6786 = vmatpush1.msra.mxu0 0.0
    %6787 = vmatprep.subr.mxu0 0.0
    %6788 = vmatpush1.msra.mxu0 0.0
    %6789 = vmatprep.subr.mxu0 0.0
    %6790 = vmatpush1.msra.mxu0 0.0
    %6791 = vmatprep.subr.mxu0 0.0
    %6792 = vmatpush1.msra.mxu0 0.0
    %6793 = vmatprep.subr.mxu0 0.0
    %6794 = vmatpush1.msra.mxu0 0.0
    %6795 = vmatprep.subr.mxu0 0.0
    %6796 = vmatpush1.msra.mxu0 0.0
    %6797 = vmatprep.subr.mxu0 0.0
    %6798 = vmatpush1.msra.mxu0 0.0
    %6799 = vmatprep.subr.mxu0 0.0
    %6800 = vmatpush1.msra.mxu0 0.0
    %6801 = vmatprep.subr.mxu0 0.0
    %6802 = vmatpush1.msra.mxu0 0.0
    %6803 = vmatprep.subr.mxu0 0.0
    %6804 = vmatpush1.msra.mxu0 0.0
    %6805 = vmatprep.subr.mxu0 0.0
    %6806 = vmatpush1.msra.mxu0 0.0
    %6807 = vmatprep.subr.mxu0 0.0
    %6808 = vmatpush1.msra.mxu0 0.0
    %6809 = vmatprep.subr.mxu0 0.0
    %6810 = vmatpush1.msra.mxu0 0.0
    %6811 = vmatprep.subr.mxu0 0.0
    %6812 = vmatpush1.msra.mxu0 0.0
    %6813 = vmatprep.subr.mxu0 0.0
    %6814 = vmatpush1.msra.mxu0 0.0
    %6815 = vmatprep.subr.mxu0 0.0
    %6816 = vmatpush1.msra.mxu0 0.0
    %6817 = vmatprep.subr.mxu0 0.0
    %6818 = vmatpush1.msra.mxu0 0.0
    %6819 = vmatprep.subr.mxu0 0.0
    %6820 = vmatpush1.msra.mxu0 0.0
    %6821 = vmatprep.subr.mxu0 0.0
    %6822 = vmatpush1.msra.mxu0 0.0
    %6823 = vmatprep.subr.mxu0 0.0
    %6824 = vmatpush1.msra.mxu0 0.0
    %6825 = vmatprep.subr.mxu0 0.0
    %6826 = vmatpush1.msra.mxu0 0.0
    %6827 = vmatprep.subr.mxu0 0.0
    %6828 = vmatpush1.msra.mxu0 0.0
    %6829 = vmatprep.subr.mxu0 0.0
    %6830 = vmatpush1.msra.mxu0 0.0
    %6831 = vmatprep.subr.mxu0 0.0
    %6832 = vmatpush1.msra.mxu0 0.0
    %6833 = vmatprep.mubr.f32.mxu0 0.0
    %6834 = vmatmul.mubr.f32.gmra.mrb[0].mxu0 %v6697
    %v6835 = vpop.f32.mrb[0].mxu0
    %v6836 = vadd.f32 %v1051, %v6835
    %v6837 = vpop.f32.mrb[0].mxu0
    %6838 = vdwg.mxu0
    %6839 = vmatprep.subr.mxu0 0.0
    %6840 = vmatpush1.msra.mxu0 %v356
    %6841 = vmatprep.subr.mxu0 0.0
    %6842 = vmatpush1.msra.mxu0 %v357
    %6843 = vmatprep.subr.mxu0 0.0
    %6844 = vmatpush1.msra.mxu0 %v1133
    %6845 = vmatprep.subr.mxu0 0.0
    %6846 = vmatpush1.msra.mxu0 0.0
    %6847 = vmatprep.subr.mxu0 0.0
    %6848 = vmatpush1.msra.mxu0 0.0
    %6849 = vmatprep.subr.mxu0 0.0
    %6850 = vmatpush1.msra.mxu0 0.0
    %6851 = vmatprep.subr.mxu0 0.0
    %6852 = vmatpush1.msra.mxu0 0.0
    %6853 = vmatprep.subr.mxu0 0.0
    %6854 = vmatpush1.msra.mxu0 0.0
    %6855 = vmatprep.subr.mxu0 0.0
    %6856 = vmatpush1.msra.mxu0 0.0
    %6857 = vmatprep.subr.mxu0 0.0
    %6858 = vmatpush1.msra.mxu0 0.0
    %6859 = vmatprep.subr.mxu0 0.0
    %6860 = vmatpush1.msra.mxu0 0.0
    %6861 = vmatprep.subr.mxu0 0.0
    %6862 = vmatpush1.msra.mxu0 0.0
    %6863 = vmatprep.subr.mxu0 0.0
    %6864 = vmatpush1.msra.mxu0 0.0
    %6865 = vmatprep.subr.mxu0 0.0
    %6866 = vmatpush1.msra.mxu0 0.0
    %6867 = vmatprep.subr.mxu0 0.0
    %6868 = vmatpush1.msra.mxu0 0.0
    %6869 = vmatprep.subr.mxu0 0.0
    %6870 = vmatpush1.msra.mxu0 0.0
    %6871 = vmatprep.subr.mxu0 0.0
    %6872 = vmatpush1.msra.mxu0 0.0
    %6873 = vmatprep.subr.mxu0 0.0
    %6874 = vmatpush1.msra.mxu0 0.0
    %6875 = vmatprep.subr.mxu0 0.0
    %6876 = vmatpush1.msra.mxu0 0.0
    %6877 = vmatprep.subr.mxu0 0.0
    %6878 = vmatpush1.msra.mxu0 0.0
    %6879 = vmatprep.subr.mxu0 0.0
    %6880 = vmatpush1.msra.mxu0 0.0
    %6881 = vmatprep.subr.mxu0 0.0
    %6882 = vmatpush1.msra.mxu0 0.0
    %6883 = vmatprep.subr.mxu0 0.0
    %6884 = vmatpush1.msra.mxu0 0.0
    %6885 = vmatprep.subr.mxu0 0.0
    %6886 = vmatpush1.msra.mxu0 0.0
    %6887 = vmatprep.subr.mxu0 0.0
    %6888 = vmatpush1.msra.mxu0 0.0
    %6889 = vmatprep.subr.mxu0 0.0
    %6890 = vmatpush1.msra.mxu0 0.0
    %6891 = vmatprep.subr.mxu0 0.0
    %6892 = vmatpush1.msra.mxu0 0.0
    %6893 = vmatprep.subr.mxu0 0.0
    %6894 = vmatpush1.msra.mxu0 0.0
    %6895 = vmatprep.subr.mxu0 0.0
    %6896 = vmatpush1.msra.mxu0 0.0
    %6897 = vmatprep.subr.mxu0 0.0
    %6898 = vmatpush1.msra.mxu0 0.0
    %6899 = vmatprep.subr.mxu0 0.0
    %6900 = vmatpush1.msra.mxu0 0.0
    %6901 = vmatprep.subr.mxu0 0.0
    %6902 = vmatpush1.msra.mxu0 0.0
    %6903 = vmatprep.mubr.f32.mxu0 0.0
    %6904 = vmatmul.mubr.f32.gmra.mrb[0].mxu0 %v6697
    %v6905 = vpop.f32.mrb[0].mxu0
    %v6906 = vadd.f32 %v1130, %v6905
    %v6907 = vpop.f32.mrb[0].mxu0
    %6908 = vdwg.mxu0
    %v6909 = vadd.f32 %v177, %v6766
    %v6910 = vxor.u32 %v6909, 2147483648
    %v6911 = vmul.f32 %v6910, 1.442695
    %v6912 = vpow.pop %v6911
    %v6913 = vadd.f32 %v6912, 1.0
    %v6914 = vrcp.pop %v6913
    %v6915 = vmul.f32 1.0, %v6914
    %v6916 = vadd.f32 %v261, %v6836
    %v6917 = vxor.u32 %v6916, 2147483648
    %v6918 = vmul.f32 %v6917, 1.442695
    %v6919 = vpow.pop %v6918
    %v6920 = vadd.f32 %v6919, 1.0
    %v6921 = vrcp.pop %v6920
    %v6922 = vmul.f32 1.0, %v6921
    %v6923 = vmul.f32 %v6915, %v6906
    %v6924 = vadd.f32 %v345, %v6923
    %v6925 = vtanh.pop %v6924
    %v6926 = vsub.f32 1.0, %v6922
    %v6927 = vmul.f32 %v6926, %v6925
    %v6929 = vmul.f32 %v6922, %v6696
    %v6930 = vadd.f32 %v6927, %v6929
    %v6932 = vsel %vm94, %v6930, 0
    %6934 = vmatprep.subr.mxu0 0.0
    %6935 = vmatpush1.msra.mxu0 %v348
    %6936 = vmatprep.subr.mxu0 0.0
    %6937 = vmatpush1.msra.mxu0 %v349
    %6938 = vmatprep.subr.mxu0 0.0
    %6939 = vmatpush1.msra.mxu0 %v975
    %6940 = vmatprep.subr.mxu0 0.0
    %6941 = vmatpush1.msra.mxu0 0.0
    %6942 = vmatprep.subr.mxu0 0.0
    %6943 = vmatpush1.msra.mxu0 0.0
    %6944 = vmatprep.subr.mxu0 0.0
    %6945 = vmatpush1.msra.mxu0 0.0
    %6946 = vmatprep.subr.mxu0 0.0
    %6947 = vmatpush1.msra.mxu0 0.0
    %6948 = vmatprep.subr.mxu0 0.0
    %6949 = vmatpush1.msra.mxu0 0.0
    %6950 = vmatprep.subr.mxu0 0.0
    %6951 = vmatpush1.msra.mxu0 0.0
    %6952 = vmatprep.subr.mxu0 0.0
    %6953 = vmatpush1.msra.mxu0 0.0
    %6954 = vmatprep.subr.mxu0 0.0
    %6955 = vmatpush1.msra.mxu0 0.0
    %6956 = vmatprep.subr.mxu0 0.0
    %6957 = vmatpush1.msra.mxu0 0.0
    %6958 = vmatprep.subr.mxu0 0.0
    %6959 = vmatpush1.msra.mxu0 0.0
    %6960 = vmatprep.subr.mxu0 0.0
    %6961 = vmatpush1.msra.mxu0 0.0
    %6962 = vmatprep.subr.mxu0 0.0
    %6963 = vmatpush1.msra.mxu0 0.0
    %6964 = vmatprep.subr.mxu0 0.0
    %6965 = vmatpush1.msra.mxu0 0.0
    %6966 = vmatprep.subr.mxu0 0.0
    %6967 = vmatpush1.msra.mxu0 0.0
    %6968 = vmatprep.subr.mxu0 0.0
    %6969 = vmatpush1.msra.mxu0 0.0
    %6970 = vmatprep.subr.mxu0 0.0
    %6971 = vmatpush1.msra.mxu0 0.0
    %6972 = vmatprep.subr.mxu0 0.0
    %6973 = vmatpush1.msra.mxu0 0.0
    %6974 = vmatprep.subr.mxu0 0.0
    %6975 = vmatpush1.msra.mxu0 0.0
    %6976 = vmatprep.subr.mxu0 0.0
    %6977 = vmatpush1.msra.mxu0 0.0
    %6978 = vmatprep.subr.mxu0 0.0
    %6979 = vmatpush1.msra.mxu0 0.0
    %6980 = vmatprep.subr.mxu0 0.0
    %6981 = vmatpush1.msra.mxu0 0.0
    %6982 = vmatprep.subr.mxu0 0.0
    %6983 = vmatpush1.msra.mxu0 0.0
    %6984 = vmatprep.subr.mxu0 0.0
    %6985 = vmatpush1.msra.mxu0 0.0
    %6986 = vmatprep.subr.mxu0 0.0
    %6987 = vmatpush1.msra.mxu0 0.0
    %6988 = vmatprep.subr.mxu0 0.0
    %6989 = vmatpush1.msra.mxu0 0.0
    %6990 = vmatprep.subr.mxu0 0.0
    %6991 = vmatpush1.msra.mxu0 0.0
    %6992 = vmatprep.subr.mxu0 0.0
    %6993 = vmatpush1.msra.mxu0 0.0
    %6994 = vmatprep.subr.mxu0 0.0
    %6995 = vmatpush1.msra.mxu0 0.0
    %6996 = vmatprep.subr.mxu0 0.0
    %6997 = vmatpush1.msra.mxu0 0.0
    %6998 = vmatprep.mubr.f32.mxu0 0.0
    %6999 = vmatmul.mubr.f32.gmra.mrb[0].mxu0 %v6932
    %v7000 = vpop.f32.mrb[0].mxu0
    %v7001 = vadd.f32 %v969, %v7000
    %v7002 = vpop.f32.mrb[0].mxu0
    %7003 = vdwg.mxu0
    %7004 = vmatprep.subr.mxu0 0.0
    %7005 = vmatpush1.msra.mxu0 %v352
    %7006 = vmatprep.subr.mxu0 0.0
    %7007 = vmatpush1.msra.mxu0 %v353
    %7008 = vmatprep.subr.mxu0 0.0
    %7009 = vmatpush1.msra.mxu0 %v1054
    %7010 = vmatprep.subr.mxu0 0.0
    %7011 = vmatpush1.msra.mxu0 0.0
    %7012 = vmatprep.subr.mxu0 0.0
    %7013 = vmatpush1.msra.mxu0 0.0
    %7014 = vmatprep.subr.mxu0 0.0
    %7015 = vmatpush1.msra.mxu0 0.0
    %7016 = vmatprep.subr.mxu0 0.0
    %7017 = vmatpush1.msra.mxu0 0.0
    %7018 = vmatprep.subr.mxu0 0.0
    %7019 = vmatpush1.msra.mxu0 0.0
    %7020 = vmatprep.subr.mxu0 0.0
    %7021 = vmatpush1.msra.mxu0 0.0
    %7022 = vmatprep.subr.mxu0 0.0
    %7023 = vmatpush1.msra.mxu0 0.0
    %7024 = vmatprep.subr.mxu0 0.0
    %7025 = vmatpush1.msra.mxu0 0.0
    %7026 = vmatprep.subr.mxu0 0.0
    %7027 = vmatpush1.msra.mxu0 0.0
    %7028 = vmatprep.subr.mxu0 0.0
    %7029 = vmatpush1.msra.mxu0 0.0
    %7030 = vmatprep.subr.mxu0 0.0
    %7031 = vmatpush1.msra.mxu0 0.0
    %7032 = vmatprep.subr.mxu0 0.0
    %7033 = vmatpush1.msra.mxu0 0.0
    %7034 = vmatprep.subr.mxu0 0.0
    %7035 = vmatpush1.msra.mxu0 0.0
    %7036 = vmatprep.subr.mxu0 0.0
    %7037 = vmatpush1.msra.mxu0 0.0
    %7038 = vmatprep.subr.mxu0 0.0
    %7039 = vmatpush1.msra.mxu0 0.0
    %7040 = vmatprep.subr.mxu0 0.0
    %7041 = vmatpush1.msra.mxu0 0.0
    %7042 = vmatprep.subr.mxu0 0.0
    %7043 = vmatpush1.msra.mxu0 0.0
    %7044 = vmatprep.subr.mxu0 0.0
    %7045 = vmatpush1.msra.mxu0 0.0
    %7046 = vmatprep.subr.mxu0 0.0
    %7047 = vmatpush1.msra.mxu0 0.0
    %7048 = vmatprep.subr.mxu0 0.0
    %7049 = vmatpush1.msra.mxu0 0.0
    %7050 = vmatprep.subr.mxu0 0.0
    %7051 = vmatpush1.msra.mxu0 0.0
    %7052 = vmatprep.subr.mxu0 0.0
    %7053 = vmatpush1.msra.mxu0 0.0
    %7054 = vmatprep.subr.mxu0 0.0
    %7055 = vmatpush1.msra.mxu0 0.0
    %7056 = vmatprep.subr.mxu0 0.0
    %7057 = vmatpush1.msra.mxu0 0.0
    %7058 = vmatprep.subr.mxu0 0.0
    %7059 = vmatpush1.msra.mxu0 0.0
    %7060 = vmatprep.subr.mxu0 0.0
    %7061 = vmatpush1.msra.mxu0 0.0
    %7062 = vmatprep.subr.mxu0 0.0
    %7063 = vmatpush1.msra.mxu0 0.0
    %7064 = vmatprep.subr.mxu0 0.0
    %7065 = vmatpush1.msra.mxu0 0.0
    %7066 = vmatprep.subr.mxu0 0.0
    %7067 = vmatpush1.msra.mxu0 0.0
    %7068 = vmatprep.mubr.f32.mxu0 0.0
    %7069 = vmatmul.mubr.f32.gmra.mrb[0].mxu0 %v6932
    %v7070 = vpop.f32.mrb[0].mxu0
    %v7071 = vadd.f32 %v1051, %v7070
    %v7072 = vpop.f32.mrb[0].mxu0
    %7073 = vdwg.mxu0
    %7074 = vmatprep.subr.mxu0 0.0
    %7075 = vmatpush1.msra.mxu0 %v356
    %7076 = vmatprep.subr.mxu0 0.0
    %7077 = vmatpush1.msra.mxu0 %v357
    %7078 = vmatprep.subr.mxu0 0.0
    %7079 = vmatpush1.msra.mxu0 %v1133
    %7080 = vmatprep.subr.mxu0 0.0
    %7081 = vmatpush1.msra.mxu0 0.0
    %7082 = vmatprep.subr.mxu0 0.0
    %7083 = vmatpush1.msra.mxu0 0.0
    %7084 = vmatprep.subr.mxu0 0.0
    %7085 = vmatpush1.msra.mxu0 0.0
    %7086 = vmatprep.subr.mxu0 0.0
    %7087 = vmatpush1.msra.mxu0 0.0
    %7088 = vmatprep.subr.mxu0 0.0
    %7089 = vmatpush1.msra.mxu0 0.0
    %7090 = vmatprep.subr.mxu0 0.0
    %7091 = vmatpush1.msra.mxu0 0.0
    %7092 = vmatprep.subr.mxu0 0.0
    %7093 = vmatpush1.msra.mxu0 0.0
    %7094 = vmatprep.subr.mxu0 0.0
    %7095 = vmatpush1.msra.mxu0 0.0
    %7096 = vmatprep.subr.mxu0 0.0
    %7097 = vmatpush1.msra.mxu0 0.0
    %7098 = vmatprep.subr.mxu0 0.0
    %7099 = vmatpush1.msra.mxu0 0.0
    %7100 = vmatprep.subr.mxu0 0.0
    %7101 = vmatpush1.msra.mxu0 0.0
    %7102 = vmatprep.subr.mxu0 0.0
    %7103 = vmatpush1.msra.mxu0 0.0
    %7104 = vmatprep.subr.mxu0 0.0
    %7105 = vmatpush1.msra.mxu0 0.0
    %7106 = vmatprep.subr.mxu0 0.0
    %7107 = vmatpush1.msra.mxu0 0.0
    %7108 = vmatprep.subr.mxu0 0.0
    %7109 = vmatpush1.msra.mxu0 0.0
    %7110 = vmatprep.subr.mxu0 0.0
    %7111 = vmatpush1.msra.mxu0 0.0
    %7112 = vmatprep.subr.mxu0 0.0
    %7113 = vmatpush1.msra.mxu0 0.0
    %7114 = vmatprep.subr.mxu0 0.0
    %7115 = vmatpush1.msra.mxu0 0.0
    %7116 = vmatprep.subr.mxu0 0.0
    %7117 = vmatpush1.msra.mxu0 0.0
    %7118 = vmatprep.subr.mxu0 0.0
    %7119 = vmatpush1.msra.mxu0 0.0
    %7120 = vmatprep.subr.mxu0 0.0
    %7121 = vmatpush1.msra.mxu0 0.0
    %7122 = vmatprep.subr.mxu0 0.0
    %7123 = vmatpush1.msra.mxu0 0.0
    %7124 = vmatprep.subr.mxu0 0.0
    %7125 = vmatpush1.msra.mxu0 0.0
    %7126 = vmatprep.subr.mxu0 0.0
    %7127 = vmatpush1.msra.mxu0 0.0
    %7128 = vmatprep.subr.mxu0 0.0
    %7129 = vmatpush1.msra.mxu0 0.0
    %7130 = vmatprep.subr.mxu0 0.0
    %7131 = vmatpush1.msra.mxu0 0.0
    %7132 = vmatprep.subr.mxu0 0.0
    %7133 = vmatpush1.msra.mxu0 0.0
    %7134 = vmatprep.subr.mxu0 0.0
    %7135 = vmatpush1.msra.mxu0 0.0
    %7136 = vmatprep.subr.mxu0 0.0
    %7137 = vmatpush1.msra.mxu0 0.0
    %7138 = vmatprep.mubr.f32.mxu0 0.0
    %7139 = vmatmul.mubr.f32.gmra.mrb[0].mxu0 %v6932
    %v7140 = vpop.f32.mrb[0].mxu0
    %v7141 = vadd.f32 %v1130, %v7140
    %v7142 = vpop.f32.mrb[0].mxu0
    %7143 = vdwg.mxu0
    %v7145 = vrot.slane %v7001, 6
    %v7147 = vadd.f32 %v177, %v7145
    %v7148 = vxor.u32 %v7147, 2147483648
    %v7149 = vmul.f32 %v7148, 1.442695
    %v7150 = vpow.pop %v7149
    %v7151 = vadd.f32 %v7150, 1.0
    %v7152 = vrcp.pop %v7151
    %v7153 = vmul.f32 1.0, %v7152
    %v7155 = vrot.slane %v7071, 6
    %v7157 = vadd.f32 %v261, %v7155
    %v7158 = vxor.u32 %v7157, 2147483648
    %v7159 = vmul.f32 %v7158, 1.442695
    %v7160 = vpow.pop %v7159
    %v7161 = vadd.f32 %v7160, 1.0
    %v7162 = vrcp.pop %v7161
    %v7163 = vmul.f32 1.0, %v7162
    %v7165 = vrot.slane %v7141, 6
    %v7167 = vmul.f32 %v7153, %v7165
    %v7168 = vadd.f32 %v345, %v7167
    %v7169 = vtanh.pop %v7168
    %v7170 = vsub.f32 1.0, %v7163
    %v7171 = vmul.f32 %v7170, %v7169
    %v7172 = vrot.slane %v6930, 6
    %v7174 = vmul.f32 %v7163, %v7172
    %v7175 = vadd.f32 %v7171, %v7174
    %v7177 = vrot.slane %v7175, 2
    %v7178 = vsel %vm94, %v7177, 0
    %7180 = vmatprep.subr.mxu0 0.0
    %7181 = vmatpush1.msra.mxu0 %v348
    %7182 = vmatprep.subr.mxu0 0.0
    %7183 = vmatpush1.msra.mxu0 %v349
    %7184 = vmatprep.subr.mxu0 0.0
    %7185 = vmatpush1.msra.mxu0 %v975
    %7186 = vmatprep.subr.mxu0 0.0
    %7187 = vmatpush1.msra.mxu0 0.0
    %7188 = vmatprep.subr.mxu0 0.0
    %7189 = vmatpush1.msra.mxu0 0.0
    %7190 = vmatprep.subr.mxu0 0.0
    %7191 = vmatpush1.msra.mxu0 0.0
    %7192 = vmatprep.subr.mxu0 0.0
    %7193 = vmatpush1.msra.mxu0 0.0
    %7194 = vmatprep.subr.mxu0 0.0
    %7195 = vmatpush1.msra.mxu0 0.0
    %7196 = vmatprep.subr.mxu0 0.0
    %7197 = vmatpush1.msra.mxu0 0.0
    %7198 = vmatprep.subr.mxu0 0.0
    %7199 = vmatpush1.msra.mxu0 0.0
    %7200 = vmatprep.subr.mxu0 0.0
    %7201 = vmatpush1.msra.mxu0 0.0
    %7202 = vmatprep.subr.mxu0 0.0
    %7203 = vmatpush1.msra.mxu0 0.0
    %7204 = vmatprep.subr.mxu0 0.0
    %7205 = vmatpush1.msra.mxu0 0.0
    %7206 = vmatprep.subr.mxu0 0.0
    %7207 = vmatpush1.msra.mxu0 0.0
    %7208 = vmatprep.subr.mxu0 0.0
    %7209 = vmatpush1.msra.mxu0 0.0
    %7210 = vmatprep.subr.mxu0 0.0
    %7211 = vmatpush1.msra.mxu0 0.0
    %7212 = vmatprep.subr.mxu0 0.0
    %7213 = vmatpush1.msra.mxu0 0.0
    %7214 = vmatprep.subr.mxu0 0.0
    %7215 = vmatpush1.msra.mxu0 0.0
    %7216 = vmatprep.subr.mxu0 0.0
    %7217 = vmatpush1.msra.mxu0 0.0
    %7218 = vmatprep.subr.mxu0 0.0
    %7219 = vmatpush1.msra.mxu0 0.0
    %7220 = vmatprep.subr.mxu0 0.0
    %7221 = vmatpush1.msra.mxu0 0.0
    %7222 = vmatprep.subr.mxu0 0.0
    %7223 = vmatpush1.msra.mxu0 0.0
    %7224 = vmatprep.subr.mxu0 0.0
    %7225 = vmatpush1.msra.mxu0 0.0
    %7226 = vmatprep.subr.mxu0 0.0
    %7227 = vmatpush1.msra.mxu0 0.0
    %7228 = vmatprep.subr.mxu0 0.0
    %7229 = vmatpush1.msra.mxu0 0.0
    %7230 = vmatprep.subr.mxu0 0.0
    %7231 = vmatpush1.msra.mxu0 0.0
    %7232 = vmatprep.subr.mxu0 0.0
    %7233 = vmatpush1.msra.mxu0 0.0
    %7234 = vmatprep.subr.mxu0 0.0
    %7235 = vmatpush1.msra.mxu0 0.0
    %7236 = vmatprep.subr.mxu0 0.0
    %7237 = vmatpush1.msra.mxu0 0.0
    %7238 = vmatprep.subr.mxu0 0.0
    %7239 = vmatpush1.msra.mxu0 0.0
    %7240 = vmatprep.subr.mxu0 0.0
    %7241 = vmatpush1.msra.mxu0 0.0
    %7242 = vmatprep.subr.mxu0 0.0
    %7243 = vmatpush1.msra.mxu0 0.0
    %7244 = vmatprep.mubr.f32.mxu0 0.0
    %7245 = vmatmul.mubr.f32.gmra.mrb[0].mxu0 %v7178
    %v7246 = vpop.f32.mrb[0].mxu0
    %v7247 = vadd.f32 %v969, %v7246
    %v7248 = vpop.f32.mrb[0].mxu0
    %7249 = vdwg.mxu0
    %7250 = vmatprep.subr.mxu0 0.0
    %7251 = vmatpush1.msra.mxu0 %v352
    %7252 = vmatprep.subr.mxu0 0.0
    %7253 = vmatpush1.msra.mxu0 %v353
    %7254 = vmatprep.subr.mxu0 0.0
    %7255 = vmatpush1.msra.mxu0 %v1054
    %7256 = vmatprep.subr.mxu0 0.0
    %7257 = vmatpush1.msra.mxu0 0.0
    %7258 = vmatprep.subr.mxu0 0.0
    %7259 = vmatpush1.msra.mxu0 0.0
    %7260 = vmatprep.subr.mxu0 0.0
    %7261 = vmatpush1.msra.mxu0 0.0
    %7262 = vmatprep.subr.mxu0 0.0
    %7263 = vmatpush1.msra.mxu0 0.0
    %7264 = vmatprep.subr.mxu0 0.0
    %7265 = vmatpush1.msra.mxu0 0.0
    %7266 = vmatprep.subr.mxu0 0.0
    %7267 = vmatpush1.msra.mxu0 0.0
    %7268 = vmatprep.subr.mxu0 0.0
    %7269 = vmatpush1.msra.mxu0 0.0
    %7270 = vmatprep.subr.mxu0 0.0
    %7271 = vmatpush1.msra.mxu0 0.0
    %7272 = vmatprep.subr.mxu0 0.0
    %7273 = vmatpush1.msra.mxu0 0.0
    %7274 = vmatprep.subr.mxu0 0.0
    %7275 = vmatpush1.msra.mxu0 0.0
    %7276 = vmatprep.subr.mxu0 0.0
    %7277 = vmatpush1.msra.mxu0 0.0
    %7278 = vmatprep.subr.mxu0 0.0
    %7279 = vmatpush1.msra.mxu0 0.0
    %7280 = vmatprep.subr.mxu0 0.0
    %7281 = vmatpush1.msra.mxu0 0.0
    %7282 = vmatprep.subr.mxu0 0.0
    %7283 = vmatpush1.msra.mxu0 0.0
    %7284 = vmatprep.subr.mxu0 0.0
    %7285 = vmatpush1.msra.mxu0 0.0
    %7286 = vmatprep.subr.mxu0 0.0
    %7287 = vmatpush1.msra.mxu0 0.0
    %7288 = vmatprep.subr.mxu0 0.0
    %7289 = vmatpush1.msra.mxu0 0.0
    %7290 = vmatprep.subr.mxu0 0.0
    %7291 = vmatpush1.msra.mxu0 0.0
    %7292 = vmatprep.subr.mxu0 0.0
    %7293 = vmatpush1.msra.mxu0 0.0
    %7294 = vmatprep.subr.mxu0 0.0
    %7295 = vmatpush1.msra.mxu0 0.0
    %7296 = vmatprep.subr.mxu0 0.0
    %7297 = vmatpush1.msra.mxu0 0.0
    %7298 = vmatprep.subr.mxu0 0.0
    %7299 = vmatpush1.msra.mxu0 0.0
    %7300 = vmatprep.subr.mxu0 0.0
    %7301 = vmatpush1.msra.mxu0 0.0
    %7302 = vmatprep.subr.mxu0 0.0
    %7303 = vmatpush1.msra.mxu0 0.0
    %7304 = vmatprep.subr.mxu0 0.0
    %7305 = vmatpush1.msra.mxu0 0.0
    %7306 = vmatprep.subr.mxu0 0.0
    %7307 = vmatpush1.msra.mxu0 0.0
    %7308 = vmatprep.subr.mxu0 0.0
    %7309 = vmatpush1.msra.mxu0 0.0
    %7310 = vmatprep.subr.mxu0 0.0
    %7311 = vmatpush1.msra.mxu0 0.0
    %7312 = vmatprep.subr.mxu0 0.0
    %7313 = vmatpush1.msra.mxu0 0.0
    %7314 = vmatprep.mubr.f32.mxu0 0.0
    %7315 = vmatmul.mubr.f32.gmra.mrb[0].mxu0 %v7178
    %v7316 = vpop.f32.mrb[0].mxu0
    %v7317 = vadd.f32 %v1051, %v7316
    %v7318 = vpop.f32.mrb[0].mxu0
    %7319 = vdwg.mxu0
    %7320 = vmatprep.subr.mxu0 0.0
    %7321 = vmatpush1.msra.mxu0 %v356
    %7322 = vmatprep.subr.mxu0 0.0
    %7323 = vmatpush1.msra.mxu0 %v357
    %7324 = vmatprep.subr.mxu0 0.0
    %7325 = vmatpush1.msra.mxu0 %v1133
    %7326 = vmatprep.subr.mxu0 0.0
    %7327 = vmatpush1.msra.mxu0 0.0
    %7328 = vmatprep.subr.mxu0 0.0
    %7329 = vmatpush1.msra.mxu0 0.0
    %7330 = vmatprep.subr.mxu0 0.0
    %7331 = vmatpush1.msra.mxu0 0.0
    %7332 = vmatprep.subr.mxu0 0.0
    %7333 = vmatpush1.msra.mxu0 0.0
    %7334 = vmatprep.subr.mxu0 0.0
    %7335 = vmatpush1.msra.mxu0 0.0
    %7336 = vmatprep.subr.mxu0 0.0
    %7337 = vmatpush1.msra.mxu0 0.0
    %7338 = vmatprep.subr.mxu0 0.0
    %7339 = vmatpush1.msra.mxu0 0.0
    %7340 = vmatprep.subr.mxu0 0.0
    %7341 = vmatpush1.msra.mxu0 0.0
    %7342 = vmatprep.subr.mxu0 0.0
    %7343 = vmatpush1.msra.mxu0 0.0
    %7344 = vmatprep.subr.mxu0 0.0
    %7345 = vmatpush1.msra.mxu0 0.0
    %7346 = vmatprep.subr.mxu0 0.0
    %7347 = vmatpush1.msra.mxu0 0.0
    %7348 = vmatprep.subr.mxu0 0.0
    %7349 = vmatpush1.msra.mxu0 0.0
    %7350 = vmatprep.subr.mxu0 0.0
    %7351 = vmatpush1.msra.mxu0 0.0
    %7352 = vmatprep.subr.mxu0 0.0
    %7353 = vmatpush1.msra.mxu0 0.0
    %7354 = vmatprep.subr.mxu0 0.0
    %7355 = vmatpush1.msra.mxu0 0.0
    %7356 = vmatprep.subr.mxu0 0.0
    %7357 = vmatpush1.msra.mxu0 0.0
    %7358 = vmatprep.subr.mxu0 0.0
    %7359 = vmatpush1.msra.mxu0 0.0
    %7360 = vmatprep.subr.mxu0 0.0
    %7361 = vmatpush1.msra.mxu0 0.0
    %7362 = vmatprep.subr.mxu0 0.0
    %7363 = vmatpush1.msra.mxu0 0.0
    %7364 = vmatprep.subr.mxu0 0.0
    %7365 = vmatpush1.msra.mxu0 0.0
    %7366 = vmatprep.subr.mxu0 0.0
    %7367 = vmatpush1.msra.mxu0 0.0
    %7368 = vmatprep.subr.mxu0 0.0
    %7369 = vmatpush1.msra.mxu0 0.0
    %7370 = vmatprep.subr.mxu0 0.0
    %7371 = vmatpush1.msra.mxu0 0.0
    %7372 = vmatprep.subr.mxu0 0.0
    %7373 = vmatpush1.msra.mxu0 0.0
    %7374 = vmatprep.subr.mxu0 0.0
    %7375 = vmatpush1.msra.mxu0 0.0
    %7376 = vmatprep.subr.mxu0 0.0
    %7377 = vmatpush1.msra.mxu0 0.0
    %7378 = vmatprep.subr.mxu0 0.0
    %7379 = vmatpush1.msra.mxu0 0.0
    %7380 = vmatprep.subr.mxu0 0.0
    %7381 = vmatpush1.msra.mxu0 0.0
    %7382 = vmatprep.subr.mxu0 0.0
    %7383 = vmatpush1.msra.mxu0 0.0
    %7384 = vmatprep.mubr.f32.mxu0 0.0
    %7385 = vmatmul.mubr.f32.gmra.mrb[0].mxu0 %v7178
    %v7386 = vpop.f32.mrb[0].mxu0
    %v7387 = vadd.f32 %v1130, %v7386
    %v7388 = vpop.f32.mrb[0].mxu0
    %7389 = vdwg.mxu0
    %v7391 = vrot.slane %v7247, 4
    %v7393 = vadd.f32 %v177, %v7391
    %v7394 = vxor.u32 %v7393, 2147483648
    %v7395 = vmul.f32 %v7394, 1.442695
    %v7396 = vpow.pop %v7395
    %v7397 = vadd.f32 %v7396, 1.0
    %v7398 = vrcp.pop %v7397
    %v7399 = vmul.f32 1.0, %v7398
    %v7401 = vrot.slane %v7317, 4
    %v7403 = vadd.f32 %v261, %v7401
    %v7404 = vxor.u32 %v7403, 2147483648
    %v7405 = vmul.f32 %v7404, 1.442695
    %v7406 = vpow.pop %v7405
    %v7407 = vadd.f32 %v7406, 1.0
    %v7408 = vrcp.pop %v7407
    %v7409 = vmul.f32 1.0, %v7408
    %v7411 = vrot.slane %v7387, 4
    %v7413 = vmul.f32 %v7399, %v7411
    %v7414 = vadd.f32 %v345, %v7413
    %v7415 = vtanh.pop %v7414
    %v7416 = vsub.f32 1.0, %v7409
    %v7417 = vmul.f32 %v7416, %v7415
    %v7418 = vrot.slane %v7175, 6
    %v7420 = vmul.f32 %v7409, %v7418
    %v7421 = vadd.f32 %v7417, %v7420
    %v7423 = vrot.slane %v7421, 4
    %v7424 = vsel %vm94, %v7423, 0
    %7426 = vmatprep.subr.mxu0 0.0
    %7427 = vmatpush1.msra.mxu0 %v348
    %7428 = vmatprep.subr.mxu0 0.0
    %7429 = vmatpush1.msra.mxu0 %v349
    %7430 = vmatprep.subr.mxu0 0.0
    %7431 = vmatpush1.msra.mxu0 %v975
    %7432 = vmatprep.subr.mxu0 0.0
    %7433 = vmatpush1.msra.mxu0 0.0
    %7434 = vmatprep.subr.mxu0 0.0
    %7435 = vmatpush1.msra.mxu0 0.0
    %7436 = vmatprep.subr.mxu0 0.0
    %7437 = vmatpush1.msra.mxu0 0.0
    %7438 = vmatprep.subr.mxu0 0.0
    %7439 = vmatpush1.msra.mxu0 0.0
    %7440 = vmatprep.subr.mxu0 0.0
    %7441 = vmatpush1.msra.mxu0 0.0
    %7442 = vmatprep.subr.mxu0 0.0
    %7443 = vmatpush1.msra.mxu0 0.0
    %7444 = vmatprep.subr.mxu0 0.0
    %7445 = vmatpush1.msra.mxu0 0.0
    %7446 = vmatprep.subr.mxu0 0.0
    %7447 = vmatpush1.msra.mxu0 0.0
    %7448 = vmatprep.subr.mxu0 0.0
    %7449 = vmatpush1.msra.mxu0 0.0
    %7450 = vmatprep.subr.mxu0 0.0
    %7451 = vmatpush1.msra.mxu0 0.0
    %7452 = vmatprep.subr.mxu0 0.0
    %7453 = vmatpush1.msra.mxu0 0.0
    %7454 = vmatprep.subr.mxu0 0.0
    %7455 = vmatpush1.msra.mxu0 0.0
    %7456 = vmatprep.subr.mxu0 0.0
    %7457 = vmatpush1.msra.mxu0 0.0
    %7458 = vmatprep.subr.mxu0 0.0
    %7459 = vmatpush1.msra.mxu0 0.0
    %7460 = vmatprep.subr.mxu0 0.0
    %7461 = vmatpush1.msra.mxu0 0.0
    %7462 = vmatprep.subr.mxu0 0.0
    %7463 = vmatpush1.msra.mxu0 0.0
    %7464 = vmatprep.subr.mxu0 0.0
    %7465 = vmatpush1.msra.mxu0 0.0
    %7466 = vmatprep.subr.mxu0 0.0
    %7467 = vmatpush1.msra.mxu0 0.0
    %7468 = vmatprep.subr.mxu0 0.0
    %7469 = vmatpush1.msra.mxu0 0.0
    %7470 = vmatprep.subr.mxu0 0.0
    %7471 = vmatpush1.msra.mxu0 0.0
    %7472 = vmatprep.subr.mxu0 0.0
    %7473 = vmatpush1.msra.mxu0 0.0
    %7474 = vmatprep.subr.mxu0 0.0
    %7475 = vmatpush1.msra.mxu0 0.0
    %7476 = vmatprep.subr.mxu0 0.0
    %7477 = vmatpush1.msra.mxu0 0.0
    %7478 = vmatprep.subr.mxu0 0.0
    %7479 = vmatpush1.msra.mxu0 0.0
    %7480 = vmatprep.subr.mxu0 0.0
    %7481 = vmatpush1.msra.mxu0 0.0
    %7482 = vmatprep.subr.mxu0 0.0
    %7483 = vmatpush1.msra.mxu0 0.0
    %7484 = vmatprep.subr.mxu0 0.0
    %7485 = vmatpush1.msra.mxu0 0.0
    %7486 = vmatprep.subr.mxu0 0.0
    %7487 = vmatpush1.msra.mxu0 0.0
    %7488 = vmatprep.subr.mxu0 0.0
    %7489 = vmatpush1.msra.mxu0 0.0
    %7490 = vmatprep.mubr.f32.mxu0 0.0
    %7491 = vmatmul.mubr.f32.gmra.mrb[0].mxu0 %v7424
    %v7492 = vpop.f32.mrb[0].mxu0
    %v7493 = vadd.f32 %v969, %v7492
    %v7494 = vpop.f32.mrb[0].mxu0
    %7495 = vdwg.mxu0
    %7496 = vmatprep.subr.mxu0 0.0
    %7497 = vmatpush1.msra.mxu0 %v352
    %7498 = vmatprep.subr.mxu0 0.0
    %7499 = vmatpush1.msra.mxu0 %v353
    %7500 = vmatprep.subr.mxu0 0.0
    %7501 = vmatpush1.msra.mxu0 %v1054
    %7502 = vmatprep.subr.mxu0 0.0
    %7503 = vmatpush1.msra.mxu0 0.0
    %7504 = vmatprep.subr.mxu0 0.0
    %7505 = vmatpush1.msra.mxu0 0.0
    %7506 = vmatprep.subr.mxu0 0.0
    %7507 = vmatpush1.msra.mxu0 0.0
    %7508 = vmatprep.subr.mxu0 0.0
    %7509 = vmatpush1.msra.mxu0 0.0
    %7510 = vmatprep.subr.mxu0 0.0
    %7511 = vmatpush1.msra.mxu0 0.0
    %7512 = vmatprep.subr.mxu0 0.0
    %7513 = vmatpush1.msra.mxu0 0.0
    %7514 = vmatprep.subr.mxu0 0.0
    %7515 = vmatpush1.msra.mxu0 0.0
    %7516 = vmatprep.subr.mxu0 0.0
    %7517 = vmatpush1.msra.mxu0 0.0
    %7518 = vmatprep.subr.mxu0 0.0
    %7519 = vmatpush1.msra.mxu0 0.0
    %7520 = vmatprep.subr.mxu0 0.0
    %7521 = vmatpush1.msra.mxu0 0.0
    %7522 = vmatprep.subr.mxu0 0.0
    %7523 = vmatpush1.msra.mxu0 0.0
    %7524 = vmatprep.subr.mxu0 0.0
    %7525 = vmatpush1.msra.mxu0 0.0
    %7526 = vmatprep.subr.mxu0 0.0
    %7527 = vmatpush1.msra.mxu0 0.0
    %7528 = vmatprep.subr.mxu0 0.0
    %7529 = vmatpush1.msra.mxu0 0.0
    %7530 = vmatprep.subr.mxu0 0.0
    %7531 = vmatpush1.msra.mxu0 0.0
    %7532 = vmatprep.subr.mxu0 0.0
    %7533 = vmatpush1.msra.mxu0 0.0
    %7534 = vmatprep.subr.mxu0 0.0
    %7535 = vmatpush1.msra.mxu0 0.0
    %7536 = vmatprep.subr.mxu0 0.0
    %7537 = vmatpush1.msra.mxu0 0.0
    %7538 = vmatprep.subr.mxu0 0.0
    %7539 = vmatpush1.msra.mxu0 0.0
    %7540 = vmatprep.subr.mxu0 0.0
    %7541 = vmatpush1.msra.mxu0 0.0
    %7542 = vmatprep.subr.mxu0 0.0
    %7543 = vmatpush1.msra.mxu0 0.0
    %7544 = vmatprep.subr.mxu0 0.0
    %7545 = vmatpush1.msra.mxu0 0.0
    %7546 = vmatprep.subr.mxu0 0.0
    %7547 = vmatpush1.msra.mxu0 0.0
    %7548 = vmatprep.subr.mxu0 0.0
    %7549 = vmatpush1.msra.mxu0 0.0
    %7550 = vmatprep.subr.mxu0 0.0
    %7551 = vmatpush1.msra.mxu0 0.0
    %7552 = vmatprep.subr.mxu0 0.0
    %7553 = vmatpush1.msra.mxu0 0.0
    %7554 = vmatprep.subr.mxu0 0.0
    %7555 = vmatpush1.msra.mxu0 0.0
    %7556 = vmatprep.subr.mxu0 0.0
    %7557 = vmatpush1.msra.mxu0 0.0
    %7558 = vmatprep.subr.mxu0 0.0
    %7559 = vmatpush1.msra.mxu0 0.0
    %7560 = vmatprep.mubr.f32.mxu0 0.0
    %7561 = vmatmul.mubr.f32.gmra.mrb[0].mxu0 %v7424
    %v7562 = vpop.f32.mrb[0].mxu0
    %v7563 = vadd.f32 %v1051, %v7562
    %v7564 = vpop.f32.mrb[0].mxu0
    %7565 = vdwg.mxu0
    %7566 = vmatprep.subr.mxu0 0.0
    %7567 = vmatpush1.msra.mxu0 %v356
    %7568 = vmatprep.subr.mxu0 0.0
    %7569 = vmatpush1.msra.mxu0 %v357
    %7570 = vmatprep.subr.mxu0 0.0
    %7571 = vmatpush1.msra.mxu0 %v1133
    %7572 = vmatprep.subr.mxu0 0.0
    %7573 = vmatpush1.msra.mxu0 0.0
    %7574 = vmatprep.subr.mxu0 0.0
    %7575 = vmatpush1.msra.mxu0 0.0
    %7576 = vmatprep.subr.mxu0 0.0
    %7577 = vmatpush1.msra.mxu0 0.0
    %7578 = vmatprep.subr.mxu0 0.0
    %7579 = vmatpush1.msra.mxu0 0.0
    %7580 = vmatprep.subr.mxu0 0.0
    %7581 = vmatpush1.msra.mxu0 0.0
    %7582 = vmatprep.subr.mxu0 0.0
    %7583 = vmatpush1.msra.mxu0 0.0
    %7584 = vmatprep.subr.mxu0 0.0
    %7585 = vmatpush1.msra.mxu0 0.0
    %7586 = vmatprep.subr.mxu0 0.0
    %7587 = vmatpush1.msra.mxu0 0.0
    %7588 = vmatprep.subr.mxu0 0.0
    %7589 = vmatpush1.msra.mxu0 0.0
    %7590 = vmatprep.subr.mxu0 0.0
    %7591 = vmatpush1.msra.mxu0 0.0
    %7592 = vmatprep.subr.mxu0 0.0
    %7593 = vmatpush1.msra.mxu0 0.0
    %7594 = vmatprep.subr.mxu0 0.0
    %7595 = vmatpush1.msra.mxu0 0.0
    %7596 = vmatprep.subr.mxu0 0.0
    %7597 = vmatpush1.msra.mxu0 0.0
    %7598 = vmatprep.subr.mxu0 0.0
    %7599 = vmatpush1.msra.mxu0 0.0
    %7600 = vmatprep.subr.mxu0 0.0
    %7601 = vmatpush1.msra.mxu0 0.0
    %7602 = vmatprep.subr.mxu0 0.0
    %7603 = vmatpush1.msra.mxu0 0.0
    %7604 = vmatprep.subr.mxu0 0.0
    %7605 = vmatpush1.msra.mxu0 0.0
    %7606 = vmatprep.subr.mxu0 0.0
    %7607 = vmatpush1.msra.mxu0 0.0
    %7608 = vmatprep.subr.mxu0 0.0
    %7609 = vmatpush1.msra.mxu0 0.0
    %7610 = vmatprep.subr.mxu0 0.0
    %7611 = vmatpush1.msra.mxu0 0.0
    %7612 = vmatprep.subr.mxu0 0.0
    %7613 = vmatpush1.msra.mxu0 0.0
    %7614 = vmatprep.subr.mxu0 0.0
    %7615 = vmatpush1.msra.mxu0 0.0
    %7616 = vmatprep.subr.mxu0 0.0
    %7617 = vmatpush1.msra.mxu0 0.0
    %7618 = vmatprep.subr.mxu0 0.0
    %7619 = vmatpush1.msra.mxu0 0.0
    %7620 = vmatprep.subr.mxu0 0.0
    %7621 = vmatpush1.msra.mxu0 0.0
    %7622 = vmatprep.subr.mxu0 0.0
    %7623 = vmatpush1.msra.mxu0 0.0
    %7624 = vmatprep.subr.mxu0 0.0
    %7625 = vmatpush1.msra.mxu0 0.0
    %7626 = vmatprep.subr.mxu0 0.0
    %7627 = vmatpush1.msra.mxu0 0.0
    %7628 = vmatprep.subr.mxu0 0.0
    %7629 = vmatpush1.msra.mxu0 0.0
    %7630 = vmatprep.mubr.f32.mxu0 0.0
    %7631 = vmatmul.mubr.f32.gmra.mrb[0].mxu0 %v7424
    %v7632 = vpop.f32.mrb[0].mxu0
    %v7633 = vadd.f32 %v1130, %v7632
    %v7634 = vpop.f32.mrb[0].mxu0
    %7635 = vdwg.mxu0
    %v7637 = vrot.slane %v7493, 2
    %v7639 = vadd.f32 %v177, %v7637
    %v7640 = vxor.u32 %v7639, 2147483648
    %v7641 = vmul.f32 %v7640, 1.442695
    %v7642 = vpow.pop %v7641
    %v7643 = vadd.f32 %v7642, 1.0
    %v7644 = vrcp.pop %v7643
    %v7645 = vmul.f32 1.0, %v7644
    %v7647 = vrot.slane %v7563, 2
    %v7649 = vadd.f32 %v261, %v7647
    %v7650 = vxor.u32 %v7649, 2147483648
    %v7651 = vmul.f32 %v7650, 1.442695
    %v7652 = vpow.pop %v7651
    %v7653 = vadd.f32 %v7652, 1.0
    %v7654 = vrcp.pop %v7653
    %v7655 = vmul.f32 1.0, %v7654
    %v7657 = vrot.slane %v7633, 2
    %v7659 = vmul.f32 %v7645, %v7657
    %v7660 = vadd.f32 %v345, %v7659
    %v7661 = vtanh.pop %v7660
    %v7662 = vsub.f32 1.0, %v7655
    %v7663 = vmul.f32 %v7662, %v7661
    %v7664 = vrot.slane %v7421, 6
    %v7666 = vmul.f32 %v7655, %v7664
    %v7667 = vadd.f32 %v7663, %v7666
    %7669 = vset.pattern.permute.xlu0 0
    %7670 = vperm.xlu0 %7669, %v5726
    %v7671 = vpop.permute.xlu0 %7670
    %v7674 = vrot.slane %v7667, 6
    %v7676 = vmul.f32 %v7671, %v7674
    %v7677 = vsub.f32 1.0, %v5726
    %7679 = vset.pattern.permute.xlu0 0
    %7680 = vperm.xlu0 %7679, %v7677
    %v7681 = vpop.permute.xlu0 %7680
    %v7683 = vmul.f32 %v7681, %v2944
    %v7684 = vadd.f32 %v7676, %v7683
    %v7685 = vsel %vm94, %v5347, 0
    %7687 = vmatprep.subr.mxu0 0.0
    %7688 = vmatpush1.msra.mxu0 %v384
    %7689 = vmatprep.subr.mxu0 0.0
    %7690 = vmatpush1.msra.mxu0 %v385
    %7691 = vmatprep.subr.mxu0 0.0
    %7692 = vmatpush1.msra.mxu0 %v2954
    %7693 = vmatprep.subr.mxu0 0.0
    %7694 = vmatpush1.msra.mxu0 0.0
    %7695 = vmatprep.subr.mxu0 0.0
    %7696 = vmatpush1.msra.mxu0 0.0
    %7697 = vmatprep.subr.mxu0 0.0
    %7698 = vmatpush1.msra.mxu0 0.0
    %7699 = vmatprep.subr.mxu0 0.0
    %7700 = vmatpush1.msra.mxu0 0.0
    %7701 = vmatprep.subr.mxu0 0.0
    %7702 = vmatpush1.msra.mxu0 0.0
    %7703 = vmatprep.subr.mxu0 0.0
    %7704 = vmatpush1.msra.mxu0 0.0
    %7705 = vmatprep.subr.mxu0 0.0
    %7706 = vmatpush1.msra.mxu0 0.0
    %7707 = vmatprep.subr.mxu0 0.0
    %7708 = vmatpush1.msra.mxu0 0.0
    %7709 = vmatprep.subr.mxu0 0.0
    %7710 = vmatpush1.msra.mxu0 0.0
    %7711 = vmatprep.subr.mxu0 0.0
    %7712 = vmatpush1.msra.mxu0 0.0
    %7713 = vmatprep.subr.mxu0 0.0
    %7714 = vmatpush1.msra.mxu0 0.0
    %7715 = vmatprep.subr.mxu0 0.0
    %7716 = vmatpush1.msra.mxu0 0.0
    %7717 = vmatprep.subr.mxu0 0.0
    %7718 = vmatpush1.msra.mxu0 0.0
    %7719 = vmatprep.subr.mxu0 0.0
    %7720 = vmatpush1.msra.mxu0 0.0
    %7721 = vmatprep.subr.mxu0 0.0
    %7722 = vmatpush1.msra.mxu0 0.0
    %7723 = vmatprep.subr.mxu0 0.0
    %7724 = vmatpush1.msra.mxu0 0.0
    %7725 = vmatprep.subr.mxu0 0.0
    %7726 = vmatpush1.msra.mxu0 0.0
    %7727 = vmatprep.subr.mxu0 0.0
    %7728 = vmatpush1.msra.mxu0 0.0
    %7729 = vmatprep.subr.mxu0 0.0
    %7730 = vmatpush1.msra.mxu0 0.0
    %7731 = vmatprep.subr.mxu0 0.0
    %7732 = vmatpush1.msra.mxu0 0.0
    %7733 = vmatprep.subr.mxu0 0.0
    %7734 = vmatpush1.msra.mxu0 0.0
    %7735 = vmatprep.subr.mxu0 0.0
    %7736 = vmatpush1.msra.mxu0 0.0
    %7737 = vmatprep.subr.mxu0 0.0
    %7738 = vmatpush1.msra.mxu0 0.0
    %7739 = vmatprep.subr.mxu0 0.0
    %7740 = vmatpush1.msra.mxu0 0.0
    %7741 = vmatprep.subr.mxu0 0.0
    %7742 = vmatpush1.msra.mxu0 0.0
    %7743 = vmatprep.subr.mxu0 0.0
    %7744 = vmatpush1.msra.mxu0 0.0
    %7745 = vmatprep.subr.mxu0 0.0
    %7746 = vmatpush1.msra.mxu0 0.0
    %7747 = vmatprep.subr.mxu0 0.0
    %7748 = vmatpush1.msra.mxu0 0.0
    %7749 = vmatprep.subr.mxu0 0.0
    %7750 = vmatpush1.msra.mxu0 0.0
    %7751 = vmatprep.mubr.f32.mxu0 0.0
    %7752 = vmatmul.mubr.f32.gmra.mrb[0].mxu0 %v7685
    %v7753 = vpop.f32.mrb[0].mxu0
    %v7754 = vadd.f32 %v2949, %v7753
    %v7755 = vpop.f32.mrb[0].mxu0
    %7756 = vdwg.mxu0
    %v7758 = vsel %vm94, %v7684, 0
    %7760 = vmatprep.subr.mxu0 0.0
    %7761 = vmatpush1.msra.mxu0 %v403
    %7762 = vmatprep.subr.mxu0 0.0
    %7763 = vmatpush1.msra.mxu0 %v404
    %7764 = vmatprep.subr.mxu0 0.0
    %7765 = vmatpush1.msra.mxu0 %v3036
    %7766 = vmatprep.subr.mxu0 0.0
    %7767 = vmatpush1.msra.mxu0 0.0
    %7768 = vmatprep.subr.mxu0 0.0
    %7769 = vmatpush1.msra.mxu0 0.0
    %7770 = vmatprep.subr.mxu0 0.0
    %7771 = vmatpush1.msra.mxu0 0.0
    %7772 = vmatprep.subr.mxu0 0.0
    %7773 = vmatpush1.msra.mxu0 0.0
    %7774 = vmatprep.subr.mxu0 0.0
    %7775 = vmatpush1.msra.mxu0 0.0
    %7776 = vmatprep.subr.mxu0 0.0
    %7777 = vmatpush1.msra.mxu0 0.0
    %7778 = vmatprep.subr.mxu0 0.0
    %7779 = vmatpush1.msra.mxu0 0.0
    %7780 = vmatprep.subr.mxu0 0.0
    %7781 = vmatpush1.msra.mxu0 0.0
    %7782 = vmatprep.subr.mxu0 0.0
    %7783 = vmatpush1.msra.mxu0 0.0
    %7784 = vmatprep.subr.mxu0 0.0
    %7785 = vmatpush1.msra.mxu0 0.0
    %7786 = vmatprep.subr.mxu0 0.0
    %7787 = vmatpush1.msra.mxu0 0.0
    %7788 = vmatprep.subr.mxu0 0.0
    %7789 = vmatpush1.msra.mxu0 0.0
    %7790 = vmatprep.subr.mxu0 0.0
    %7791 = vmatpush1.msra.mxu0 0.0
    %7792 = vmatprep.subr.mxu0 0.0
    %7793 = vmatpush1.msra.mxu0 0.0
    %7794 = vmatprep.subr.mxu0 0.0
    %7795 = vmatpush1.msra.mxu0 0.0
    %7796 = vmatprep.subr.mxu0 0.0
    %7797 = vmatpush1.msra.mxu0 0.0
    %7798 = vmatprep.subr.mxu0 0.0
    %7799 = vmatpush1.msra.mxu0 0.0
    %7800 = vmatprep.subr.mxu0 0.0
    %7801 = vmatpush1.msra.mxu0 0.0
    %7802 = vmatprep.subr.mxu0 0.0
    %7803 = vmatpush1.msra.mxu0 0.0
    %7804 = vmatprep.subr.mxu0 0.0
    %7805 = vmatpush1.msra.mxu0 0.0
    %7806 = vmatprep.subr.mxu0 0.0
    %7807 = vmatpush1.msra.mxu0 0.0
    %7808 = vmatprep.subr.mxu0 0.0
    %7809 = vmatpush1.msra.mxu0 0.0
    %7810 = vmatprep.subr.mxu0 0.0
    %7811 = vmatpush1.msra.mxu0 0.0
    %7812 = vmatprep.subr.mxu0 0.0
    %7813 = vmatpush1.msra.mxu0 0.0
    %7814 = vmatprep.subr.mxu0 0.0
    %7815 = vmatpush1.msra.mxu0 0.0
    %7816 = vmatprep.subr.mxu0 0.0
    %7817 = vmatpush1.msra.mxu0 0.0
    %7818 = vmatprep.subr.mxu0 0.0
    %7819 = vmatpush1.msra.mxu0 0.0
    %7820 = vmatprep.subr.mxu0 0.0
    %7821 = vmatpush1.msra.mxu0 0.0
    %7822 = vmatprep.subr.mxu0 0.0
    %7823 = vmatpush1.msra.mxu0 0.0
    %7824 = vmatprep.mubr.f32.mxu0 0.0
    %7825 = vmatmul.mubr.f32.gmra.mrb[0].mxu0 %v7758
    %v7826 = vpop.f32.mrb[0].mxu0
    %v7827 = vadd.f32 %v3030, %v7826
    %v7828 = vpop.f32.mrb[0].mxu0
    %7829 = vdwg.mxu0
    %7830 = vmatprep.subr.mxu0 0.0
    %7831 = vmatpush1.msra.mxu0 %v422
    %7832 = vmatprep.subr.mxu0 0.0
    %7833 = vmatpush1.msra.mxu0 %v423
    %7834 = vmatprep.subr.mxu0 0.0
    %7835 = vmatpush1.msra.mxu0 %v3115
    %7836 = vmatprep.subr.mxu0 0.0
    %7837 = vmatpush1.msra.mxu0 0.0
    %7838 = vmatprep.subr.mxu0 0.0
    %7839 = vmatpush1.msra.mxu0 0.0
    %7840 = vmatprep.subr.mxu0 0.0
    %7841 = vmatpush1.msra.mxu0 0.0
    %7842 = vmatprep.subr.mxu0 0.0
    %7843 = vmatpush1.msra.mxu0 0.0
    %7844 = vmatprep.subr.mxu0 0.0
    %7845 = vmatpush1.msra.mxu0 0.0
    %7846 = vmatprep.subr.mxu0 0.0
    %7847 = vmatpush1.msra.mxu0 0.0
    %7848 = vmatprep.subr.mxu0 0.0
    %7849 = vmatpush1.msra.mxu0 0.0
    %7850 = vmatprep.subr.mxu0 0.0
    %7851 = vmatpush1.msra.mxu0 0.0
    %7852 = vmatprep.subr.mxu0 0.0
    %7853 = vmatpush1.msra.mxu0 0.0
    %7854 = vmatprep.subr.mxu0 0.0
    %7855 = vmatpush1.msra.mxu0 0.0
    %7856 = vmatprep.subr.mxu0 0.0
    %7857 = vmatpush1.msra.mxu0 0.0
    %7858 = vmatprep.subr.mxu0 0.0
    %7859 = vmatpush1.msra.mxu0 0.0
    %7860 = vmatprep.subr.mxu0 0.0
    %7861 = vmatpush1.msra.mxu0 0.0
    %7862 = vmatprep.subr.mxu0 0.0
    %7863 = vmatpush1.msra.mxu0 0.0
    %7864 = vmatprep.subr.mxu0 0.0
    %7865 = vmatpush1.msra.mxu0 0.0
    %7866 = vmatprep.subr.mxu0 0.0
    %7867 = vmatpush1.msra.mxu0 0.0
    %7868 = vmatprep.subr.mxu0 0.0
    %7869 = vmatpush1.msra.mxu0 0.0
    %7870 = vmatprep.subr.mxu0 0.0
    %7871 = vmatpush1.msra.mxu0 0.0
    %7872 = vmatprep.subr.mxu0 0.0
    %7873 = vmatpush1.msra.mxu0 0.0
    %7874 = vmatprep.subr.mxu0 0.0
    %7875 = vmatpush1.msra.mxu0 0.0
    %7876 = vmatprep.subr.mxu0 0.0
    %7877 = vmatpush1.msra.mxu0 0.0
    %7878 = vmatprep.subr.mxu0 0.0
    %7879 = vmatpush1.msra.mxu0 0.0
    %7880 = vmatprep.subr.mxu0 0.0
    %7881 = vmatpush1.msra.mxu0 0.0
    %7882 = vmatprep.subr.mxu0 0.0
    %7883 = vmatpush1.msra.mxu0 0.0
    %7884 = vmatprep.subr.mxu0 0.0
    %7885 = vmatpush1.msra.mxu0 0.0
    %7886 = vmatprep.subr.mxu0 0.0
    %7887 = vmatpush1.msra.mxu0 0.0
    %7888 = vmatprep.subr.mxu0 0.0
    %7889 = vmatpush1.msra.mxu0 0.0
    %7890 = vmatprep.subr.mxu0 0.0
    %7891 = vmatpush1.msra.mxu0 0.0
    %7892 = vmatprep.subr.mxu0 0.0
    %7893 = vmatpush1.msra.mxu0 0.0
    %7894 = vmatprep.mubr.f32.mxu0 0.0
    %7895 = vmatmul.mubr.f32.gmra.mrb[0].mxu0 %v7758
    %v7896 = vpop.f32.mrb[0].mxu0
    %v7897 = vadd.f32 %v3112, %v7896
    %v7898 = vpop.f32.mrb[0].mxu0
    %7899 = vdwg.mxu0
    %v7901 = vsel %vm478, %v7754, 0
    %v7904 = vsel %vm478, %v7827, 0
    %7906 = vmatprep.subr.mxu0 0.0
    %7907 = vmatpush1.xpose.msra.mxu0 %v7904
    %7908 = vmatprep.subr.mxu0 0.0
    %7909 = vmatpush1.xpose.msra.mxu0 0.0
    %7910 = vmatprep.subr.mxu0 0.0
    %7911 = vmatpush1.xpose.msra.mxu0 0.0
    %7912 = vmatprep.subr.mxu0 0.0
    %7913 = vmatpush1.xpose.msra.mxu0 0.0
    %7914 = vmatprep.subr.mxu0 0.0
    %7915 = vmatpush1.xpose.msra.mxu0 0.0
    %7916 = vmatprep.subr.mxu0 0.0
    %7917 = vmatpush1.xpose.msra.mxu0 0.0
    %7918 = vmatprep.subr.mxu0 0.0
    %7919 = vmatpush1.xpose.msra.mxu0 0.0
    %7920 = vmatprep.subr.mxu0 0.0
    %7921 = vmatpush1.xpose.msra.mxu0 0.0
    %7922 = vmatprep.subr.mxu0 0.0
    %7923 = vmatpush1.xpose.msra.mxu0 0.0
    %7924 = vmatprep.subr.mxu0 0.0
    %7925 = vmatpush1.xpose.msra.mxu0 0.0
    %7926 = vmatprep.subr.mxu0 0.0
    %7927 = vmatpush1.xpose.msra.mxu0 0.0
    %7928 = vmatprep.subr.mxu0 0.0
    %7929 = vmatpush1.xpose.msra.mxu0 0.0
    %7930 = vmatprep.subr.mxu0 0.0
    %7931 = vmatpush1.xpose.msra.mxu0 0.0
    %7932 = vmatprep.subr.mxu0 0.0
    %7933 = vmatpush1.xpose.msra.mxu0 0.0
    %7934 = vmatprep.subr.mxu0 0.0
    %7935 = vmatpush1.xpose.msra.mxu0 0.0
    %7936 = vmatprep.subr.mxu0 0.0
    %7937 = vmatpush1.xpose.msra.mxu0 0.0
    %7938 = vmatprep.subr.mxu0 0.0
    %7939 = vmatpush1.xpose.msra.mxu0 0.0
    %7940 = vmatprep.subr.mxu0 0.0
    %7941 = vmatpush1.xpose.msra.mxu0 0.0
    %7942 = vmatprep.subr.mxu0 0.0
    %7943 = vmatpush1.xpose.msra.mxu0 0.0
    %7944 = vmatprep.subr.mxu0 0.0
    %7945 = vmatpush1.xpose.msra.mxu0 0.0
    %7946 = vmatprep.subr.mxu0 0.0
    %7947 = vmatpush1.xpose.msra.mxu0 0.0
    %7948 = vmatprep.subr.mxu0 0.0
    %7949 = vmatpush1.xpose.msra.mxu0 0.0
    %7950 = vmatprep.subr.mxu0 0.0
    %7951 = vmatpush1.xpose.msra.mxu0 0.0
    %7952 = vmatprep.subr.mxu0 0.0
    %7953 = vmatpush1.xpose.msra.mxu0 0.0
    %7954 = vmatprep.subr.mxu0 0.0
    %7955 = vmatpush1.xpose.msra.mxu0 0.0
    %7956 = vmatprep.subr.mxu0 0.0
    %7957 = vmatpush1.xpose.msra.mxu0 0.0
    %7958 = vmatprep.subr.mxu0 0.0
    %7959 = vmatpush1.xpose.msra.mxu0 0.0
    %7960 = vmatprep.subr.mxu0 0.0
    %7961 = vmatpush1.xpose.msra.mxu0 0.0
    %7962 = vmatprep.subr.mxu0 0.0
    %7963 = vmatpush1.xpose.msra.mxu0 0.0
    %7964 = vmatprep.subr.mxu0 0.0
    %7965 = vmatpush1.xpose.msra.mxu0 0.0
    %7966 = vmatprep.subr.mxu0 0.0
    %7967 = vmatpush1.xpose.msra.mxu0 0.0
    %7968 = vmatprep.subr.mxu0 0.0
    %7969 = vmatpush1.xpose.msra.mxu0 0.0
    %7970 = vmatprep.mubr.f32.mxu0 0.0
    %7971 = vmatmul.mubr.f32.gmra.mrb[0].mxu0 %v7901
    %v7972 = vpop.f32.mrb[0].mxu0
    %v7973 = vadd.f32 0.0, %v7972
    %v7974 = vpop.f32.mrb[0].mxu0
    %7975 = vdwg.mxu0
    %v7976 = vmul.f32 %v7973, 0.5
    %v7977 = vsel %vm3264, %v7976, -inf
    %7978 = vmax.xlane.f32.xlu0 %v7977
    %v7979 = vpop.xlane.xlu0 %7978
    %v7980 = vsub.f32 %v7976, %v7979
    %v7981 = vmul.f32 %v7980, 1.442695
    %v7982 = vpow.pop %v7981
    %v7983 = vsel %vm3264, %v7982, 0.0
    %7984 = vadd.xlane.f32.xlu0 %v7983
    %v7985 = vpop.xlane.xlu0 %7984
    %v7986 = vrcp.pop %v7985
    %v7987 = vmul.f32 %v7982, %v7986
    %v7989 = vsel %vm3276, %v7987, 0
    %v7992 = vsel %vm3280, %v7897, 0
    %7994 = vmatprep.subr.mxu0 0.0
    %7995 = vmatpush1.msra.mxu0 %v7992
    %7996 = vmatprep.subr.mxu0 0.0
    %7997 = vmatpush1.msra.mxu0 0.0
    %7998 = vmatprep.subr.mxu0 0.0
    %7999 = vmatpush1.msra.mxu0 0.0
    %8000 = vmatprep.subr.mxu0 0.0
    %8001 = vmatpush1.msra.mxu0 0.0
    %8002 = vmatprep.subr.mxu0 0.0
    %8003 = vmatpush1.msra.mxu0 0.0
    %8004 = vmatprep.subr.mxu0 0.0
    %8005 = vmatpush1.msra.mxu0 0.0
    %8006 = vmatprep.subr.mxu0 0.0
    %8007 = vmatpush1.msra.mxu0 0.0
    %8008 = vmatprep.subr.mxu0 0.0
    %8009 = vmatpush1.msra.mxu0 0.0
    %8010 = vmatprep.subr.mxu0 0.0
    %8011 = vmatpush1.msra.mxu0 0.0
    %8012 = vmatprep.subr.mxu0 0.0
    %8013 = vmatpush1.msra.mxu0 0.0
    %8014 = vmatprep.subr.mxu0 0.0
    %8015 = vmatpush1.msra.mxu0 0.0
    %8016 = vmatprep.subr.mxu0 0.0
    %8017 = vmatpush1.msra.mxu0 0.0
    %8018 = vmatprep.subr.mxu0 0.0
    %8019 = vmatpush1.msra.mxu0 0.0
    %8020 = vmatprep.subr.mxu0 0.0
    %8021 = vmatpush1.msra.mxu0 0.0
    %8022 = vmatprep.subr.mxu0 0.0
    %8023 = vmatpush1.msra.mxu0 0.0
    %8024 = vmatprep.subr.mxu0 0.0
    %8025 = vmatpush1.msra.mxu0 0.0
    %8026 = vmatprep.subr.mxu0 0.0
    %8027 = vmatpush1.msra.mxu0 0.0
    %8028 = vmatprep.subr.mxu0 0.0
    %8029 = vmatpush1.msra.mxu0 0.0
    %8030 = vmatprep.subr.mxu0 0.0
    %8031 = vmatpush1.msra.mxu0 0.0
    %8032 = vmatprep.subr.mxu0 0.0
    %8033 = vmatpush1.msra.mxu0 0.0
    %8034 = vmatprep.subr.mxu0 0.0
    %8035 = vmatpush1.msra.mxu0 0.0
    %8036 = vmatprep.subr.mxu0 0.0
    %8037 = vmatpush1.msra.mxu0 0.0
    %8038 = vmatprep.subr.mxu0 0.0
    %8039 = vmatpush1.msra.mxu0 0.0
    %8040 = vmatprep.subr.mxu0 0.0
    %8041 = vmatpush1.msra.mxu0 0.0
    %8042 = vmatprep.subr.mxu0 0.0
    %8043 = vmatpush1.msra.mxu0 0.0
    %8044 = vmatprep.subr.mxu0 0.0
    %8045 = vmatpush1.msra.mxu0 0.0
    %8046 = vmatprep.subr.mxu0 0.0
    %8047 = vmatpush1.msra.mxu0 0.0
    %8048 = vmatprep.subr.mxu0 0.0
    %8049 = vmatpush1.msra.mxu0 0.0
    %8050 = vmatprep.subr.mxu0 0.0
    %8051 = vmatpush1.msra.mxu0 0.0
    %8052 = vmatprep.subr.mxu0 0.0
    %8053 = vmatpush1.msra.mxu0 0.0
    %8054 = vmatprep.subr.mxu0 0.0
    %8055 = vmatpush1.msra.mxu0 0.0
    %8056 = vmatprep.subr.mxu0 0.0
    %8057 = vmatpush1.msra.mxu0 0.0
    %8058 = vmatprep.mubr.f32.mxu0 0.0
    %8059 = vmatmul.mubr.f32.gmra.mrb[0].mxu0 %v7989
    %v8060 = vpop.f32.mrb[0].mxu0
    %v8061 = vadd.f32 0.0, %v8060
    %v8062 = vpop.f32.mrb[0].mxu0
    %8063 = vdwg.mxu0
    %8064 = vmatprep.subr.mxu0 0.0
    %8065 = vmatpush1.msra.mxu0 %v388
    %8066 = vmatprep.subr.mxu0 0.0
    %8067 = vmatpush1.msra.mxu0 %v389
    %8068 = vmatprep.subr.mxu0 0.0
    %8069 = vmatpush1.msra.mxu0 %v3361
    %8070 = vmatprep.subr.mxu0 0.0
    %8071 = vmatpush1.msra.mxu0 0.0
    %8072 = vmatprep.subr.mxu0 0.0
    %8073 = vmatpush1.msra.mxu0 0.0
    %8074 = vmatprep.subr.mxu0 0.0
    %8075 = vmatpush1.msra.mxu0 0.0
    %8076 = vmatprep.subr.mxu0 0.0
    %8077 = vmatpush1.msra.mxu0 0.0
    %8078 = vmatprep.subr.mxu0 0.0
    %8079 = vmatpush1.msra.mxu0 0.0
    %8080 = vmatprep.subr.mxu0 0.0
    %8081 = vmatpush1.msra.mxu0 0.0
    %8082 = vmatprep.subr.mxu0 0.0
    %8083 = vmatpush1.msra.mxu0 0.0
    %8084 = vmatprep.subr.mxu0 0.0
    %8085 = vmatpush1.msra.mxu0 0.0
    %8086 = vmatprep.subr.mxu0 0.0
    %8087 = vmatpush1.msra.mxu0 0.0
    %8088 = vmatprep.subr.mxu0 0.0
    %8089 = vmatpush1.msra.mxu0 0.0
    %8090 = vmatprep.subr.mxu0 0.0
    %8091 = vmatpush1.msra.mxu0 0.0
    %8092 = vmatprep.subr.mxu0 0.0
    %8093 = vmatpush1.msra.mxu0 0.0
    %8094 = vmatprep.subr.mxu0 0.0
    %8095 = vmatpush1.msra.mxu0 0.0
    %8096 = vmatprep.subr.mxu0 0.0
    %8097 = vmatpush1.msra.mxu0 0.0
    %8098 = vmatprep.subr.mxu0 0.0
    %8099 = vmatpush1.msra.mxu0 0.0
    %8100 = vmatprep.subr.mxu0 0.0
    %8101 = vmatpush1.msra.mxu0 0.0
    %8102 = vmatprep.subr.mxu0 0.0
    %8103 = vmatpush1.msra.mxu0 0.0
    %8104 = vmatprep.subr.mxu0 0.0
    %8105 = vmatpush1.msra.mxu0 0.0
    %8106 = vmatprep.subr.mxu0 0.0
    %8107 = vmatpush1.msra.mxu0 0.0
    %8108 = vmatprep.subr.mxu0 0.0
    %8109 = vmatpush1.msra.mxu0 0.0
    %8110 = vmatprep.subr.mxu0 0.0
    %8111 = vmatpush1.msra.mxu0 0.0
    %8112 = vmatprep.subr.mxu0 0.0
    %8113 = vmatpush1.msra.mxu0 0.0
    %8114 = vmatprep.subr.mxu0 0.0
    %8115 = vmatpush1.msra.mxu0 0.0
    %8116 = vmatprep.subr.mxu0 0.0
    %8117 = vmatpush1.msra.mxu0 0.0
    %8118 = vmatprep.subr.mxu0 0.0
    %8119 = vmatpush1.msra.mxu0 0.0
    %8120 = vmatprep.subr.mxu0 0.0
    %8121 = vmatpush1.msra.mxu0 0.0
    %8122 = vmatprep.subr.mxu0 0.0
    %8123 = vmatpush1.msra.mxu0 0.0
    %8124 = vmatprep.subr.mxu0 0.0
    %8125 = vmatpush1.msra.mxu0 0.0
    %8126 = vmatprep.subr.mxu0 0.0
    %8127 = vmatpush1.msra.mxu0 0.0
    %8128 = vmatprep.mubr.f32.mxu0 0.0
    %8129 = vmatmul.mubr.f32.gmra.mrb[0].mxu0 %v7685
    %v8130 = vpop.f32.mrb[0].mxu0
    %v8131 = vadd.f32 %v3358, %v8130
    %v8132 = vpop.f32.mrb[0].mxu0
    %8133 = vdwg.mxu0
    %8134 = vmatprep.subr.mxu0 0.0
    %8135 = vmatpush1.msra.mxu0 %v407
    %8136 = vmatprep.subr.mxu0 0.0
    %8137 = vmatpush1.msra.mxu0 %v408
    %8138 = vmatprep.subr.mxu0 0.0
    %8139 = vmatpush1.msra.mxu0 %v3440
    %8140 = vmatprep.subr.mxu0 0.0
    %8141 = vmatpush1.msra.mxu0 0.0
    %8142 = vmatprep.subr.mxu0 0.0
    %8143 = vmatpush1.msra.mxu0 0.0
    %8144 = vmatprep.subr.mxu0 0.0
    %8145 = vmatpush1.msra.mxu0 0.0
    %8146 = vmatprep.subr.mxu0 0.0
    %8147 = vmatpush1.msra.mxu0 0.0
    %8148 = vmatprep.subr.mxu0 0.0
    %8149 = vmatpush1.msra.mxu0 0.0
    %8150 = vmatprep.subr.mxu0 0.0
    %8151 = vmatpush1.msra.mxu0 0.0
    %8152 = vmatprep.subr.mxu0 0.0
    %8153 = vmatpush1.msra.mxu0 0.0
    %8154 = vmatprep.subr.mxu0 0.0
    %8155 = vmatpush1.msra.mxu0 0.0
    %8156 = vmatprep.subr.mxu0 0.0
    %8157 = vmatpush1.msra.mxu0 0.0
    %8158 = vmatprep.subr.mxu0 0.0
    %8159 = vmatpush1.msra.mxu0 0.0
    %8160 = vmatprep.subr.mxu0 0.0
    %8161 = vmatpush1.msra.mxu0 0.0
    %8162 = vmatprep.subr.mxu0 0.0
    %8163 = vmatpush1.msra.mxu0 0.0
    %8164 = vmatprep.subr.mxu0 0.0
    %8165 = vmatpush1.msra.mxu0 0.0
    %8166 = vmatprep.subr.mxu0 0.0
    %8167 = vmatpush1.msra.mxu0 0.0
    %8168 = vmatprep.subr.mxu0 0.0
    %8169 = vmatpush1.msra.mxu0 0.0
    %8170 = vmatprep.subr.mxu0 0.0
    %8171 = vmatpush1.msra.mxu0 0.0
    %8172 = vmatprep.subr.mxu0 0.0
    %8173 = vmatpush1.msra.mxu0 0.0
    %8174 = vmatprep.subr.mxu0 0.0
    %8175 = vmatpush1.msra.mxu0 0.0
    %8176 = vmatprep.subr.mxu0 0.0
    %8177 = vmatpush1.msra.mxu0 0.0
    %8178 = vmatprep.subr.mxu0 0.0
    %8179 = vmatpush1.msra.mxu0 0.0
    %8180 = vmatprep.subr.mxu0 0.0
    %8181 = vmatpush1.msra.mxu0 0.0
    %8182 = vmatprep.subr.mxu0 0.0
    %8183 = vmatpush1.msra.mxu0 0.0
    %8184 = vmatprep.subr.mxu0 0.0
    %8185 = vmatpush1.msra.mxu0 0.0
    %8186 = vmatprep.subr.mxu0 0.0
    %8187 = vmatpush1.msra.mxu0 0.0
    %8188 = vmatprep.subr.mxu0 0.0
    %8189 = vmatpush1.msra.mxu0 0.0
    %8190 = vmatprep.subr.mxu0 0.0
    %8191 = vmatpush1.msra.mxu0 0.0
    %8192 = vmatprep.subr.mxu0 0.0
    %8193 = vmatpush1.msra.mxu0 0.0
    %8194 = vmatprep.subr.mxu0 0.0
    %8195 = vmatpush1.msra.mxu0 0.0
    %8196 = vmatprep.subr.mxu0 0.0
    %8197 = vmatpush1.msra.mxu0 0.0
    %8198 = vmatprep.mubr.f32.mxu0 0.0
    %8199 = vmatmul.mubr.f32.gmra.mrb[0].mxu0 %v7758
    %v8200 = vpop.f32.mrb[0].mxu0
    %v8201 = vadd.f32 %v3437, %v8200
    %v8202 = vpop.f32.mrb[0].mxu0
    %8203 = vdwg.mxu0
    %8204 = vmatprep.subr.mxu0 0.0
    %8205 = vmatpush1.msra.mxu0 %v426
    %8206 = vmatprep.subr.mxu0 0.0
    %8207 = vmatpush1.msra.mxu0 %v427
    %8208 = vmatprep.subr.mxu0 0.0
    %8209 = vmatpush1.msra.mxu0 %v3519
    %8210 = vmatprep.subr.mxu0 0.0
    %8211 = vmatpush1.msra.mxu0 0.0
    %8212 = vmatprep.subr.mxu0 0.0
    %8213 = vmatpush1.msra.mxu0 0.0
    %8214 = vmatprep.subr.mxu0 0.0
    %8215 = vmatpush1.msra.mxu0 0.0
    %8216 = vmatprep.subr.mxu0 0.0
    %8217 = vmatpush1.msra.mxu0 0.0
    %8218 = vmatprep.subr.mxu0 0.0
    %8219 = vmatpush1.msra.mxu0 0.0
    %8220 = vmatprep.subr.mxu0 0.0
    %8221 = vmatpush1.msra.mxu0 0.0
    %8222 = vmatprep.subr.mxu0 0.0
    %8223 = vmatpush1.msra.mxu0 0.0
    %8224 = vmatprep.subr.mxu0 0.0
    %8225 = vmatpush1.msra.mxu0 0.0
    %8226 = vmatprep.subr.mxu0 0.0
    %8227 = vmatpush1.msra.mxu0 0.0
    %8228 = vmatprep.subr.mxu0 0.0
    %8229 = vmatpush1.msra.mxu0 0.0
    %8230 = vmatprep.subr.mxu0 0.0
    %8231 = vmatpush1.msra.mxu0 0.0
    %8232 = vmatprep.subr.mxu0 0.0
    %8233 = vmatpush1.msra.mxu0 0.0
    %8234 = vmatprep.subr.mxu0 0.0
    %8235 = vmatpush1.msra.mxu0 0.0
    %8236 = vmatprep.subr.mxu0 0.0
    %8237 = vmatpush1.msra.mxu0 0.0
    %8238 = vmatprep.subr.mxu0 0.0
    %8239 = vmatpush1.msra.mxu0 0.0
    %8240 = vmatprep.subr.mxu0 0.0
    %8241 = vmatpush1.msra.mxu0 0.0
    %8242 = vmatprep.subr.mxu0 0.0
    %8243 = vmatpush1.msra.mxu0 0.0
    %8244 = vmatprep.subr.mxu0 0.0
    %8245 = vmatpush1.msra.mxu0 0.0
    %8246 = vmatprep.subr.mxu0 0.0
    %8247 = vmatpush1.msra.mxu0 0.0
    %8248 = vmatprep.subr.mxu0 0.0
    %8249 = vmatpush1.msra.mxu0 0.0
    %8250 = vmatprep.subr.mxu0 0.0
    %8251 = vmatpush1.msra.mxu0 0.0
    %8252 = vmatprep.subr.mxu0 0.0
    %8253 = vmatpush1.msra.mxu0 0.0
    %8254 = vmatprep.subr.mxu0 0.0
    %8255 = vmatpush1.msra.mxu0 0.0
    %8256 = vmatprep.subr.mxu0 0.0
    %8257 = vmatpush1.msra.mxu0 0.0
    %8258 = vmatprep.subr.mxu0 0.0
    %8259 = vmatpush1.msra.mxu0 0.0
    %8260 = vmatprep.subr.mxu0 0.0
    %8261 = vmatpush1.msra.mxu0 0.0
    %8262 = vmatprep.subr.mxu0 0.0
    %8263 = vmatpush1.msra.mxu0 0.0
    %8264 = vmatprep.subr.mxu0 0.0
    %8265 = vmatpush1.msra.mxu0 0.0
    %8266 = vmatprep.subr.mxu0 0.0
    %8267 = vmatpush1.msra.mxu0 0.0
    %8268 = vmatprep.mubr.f32.mxu0 0.0
    %8269 = vmatmul.mubr.f32.gmra.mrb[0].mxu0 %v7758
    %v8270 = vpop.f32.mrb[0].mxu0
    %v8271 = vadd.f32 %v3516, %v8270
    %v8272 = vpop.f32.mrb[0].mxu0
    %8273 = vdwg.mxu0
    %v8275 = vsel %vm478, %v8131, 0
    %v8278 = vsel %vm478, %v8201, 0
    %8280 = vmatprep.subr.mxu0 0.0
    %8281 = vmatpush1.xpose.msra.mxu0 %v8278
    %8282 = vmatprep.subr.mxu0 0.0
    %8283 = vmatpush1.xpose.msra.mxu0 0.0
    %8284 = vmatprep.subr.mxu0 0.0
    %8285 = vmatpush1.xpose.msra.mxu0 0.0
    %8286 = vmatprep.subr.mxu0 0.0
    %8287 = vmatpush1.xpose.msra.mxu0 0.0
    %8288 = vmatprep.subr.mxu0 0.0
    %8289 = vmatpush1.xpose.msra.mxu0 0.0
    %8290 = vmatprep.subr.mxu0 0.0
    %8291 = vmatpush1.xpose.msra.mxu0 0.0
    %8292 = vmatprep.subr.mxu0 0.0
    %8293 = vmatpush1.xpose.msra.mxu0 0.0
    %8294 = vmatprep.subr.mxu0 0.0
    %8295 = vmatpush1.xpose.msra.mxu0 0.0
    %8296 = vmatprep.subr.mxu0 0.0
    %8297 = vmatpush1.xpose.msra.mxu0 0.0
    %8298 = vmatprep.subr.mxu0 0.0
    %8299 = vmatpush1.xpose.msra.mxu0 0.0
    %8300 = vmatprep.subr.mxu0 0.0
    %8301 = vmatpush1.xpose.msra.mxu0 0.0
    %8302 = vmatprep.subr.mxu0 0.0
    %8303 = vmatpush1.xpose.msra.mxu0 0.0
    %8304 = vmatprep.subr.mxu0 0.0
    %8305 = vmatpush1.xpose.msra.mxu0 0.0
    %8306 = vmatprep.subr.mxu0 0.0
    %8307 = vmatpush1.xpose.msra.mxu0 0.0
    %8308 = vmatprep.subr.mxu0 0.0
    %8309 = vmatpush1.xpose.msra.mxu0 0.0
    %8310 = vmatprep.subr.mxu0 0.0
    %8311 = vmatpush1.xpose.msra.mxu0 0.0
    %8312 = vmatprep.subr.mxu0 0.0
    %8313 = vmatpush1.xpose.msra.mxu0 0.0
    %8314 = vmatprep.subr.mxu0 0.0
    %8315 = vmatpush1.xpose.msra.mxu0 0.0
    %8316 = vmatprep.subr.mxu0 0.0
    %8317 = vmatpush1.xpose.msra.mxu0 0.0
    %8318 = vmatprep.subr.mxu0 0.0
    %8319 = vmatpush1.xpose.msra.mxu0 0.0
    %8320 = vmatprep.subr.mxu0 0.0
    %8321 = vmatpush1.xpose.msra.mxu0 0.0
    %8322 = vmatprep.subr.mxu0 0.0
    %8323 = vmatpush1.xpose.msra.mxu0 0.0
    %8324 = vmatprep.subr.mxu0 0.0
    %8325 = vmatpush1.xpose.msra.mxu0 0.0
    %8326 = vmatprep.subr.mxu0 0.0
    %8327 = vmatpush1.xpose.msra.mxu0 0.0
    %8328 = vmatprep.subr.mxu0 0.0
    %8329 = vmatpush1.xpose.msra.mxu0 0.0
    %8330 = vmatprep.subr.mxu0 0.0
    %8331 = vmatpush1.xpose.msra.mxu0 0.0
    %8332 = vmatprep.subr.mxu0 0.0
    %8333 = vmatpush1.xpose.msra.mxu0 0.0
    %8334 = vmatprep.subr.mxu0 0.0
    %8335 = vmatpush1.xpose.msra.mxu0 0.0
    %8336 = vmatprep.subr.mxu0 0.0
    %8337 = vmatpush1.xpose.msra.mxu0 0.0
    %8338 = vmatprep.subr.mxu0 0.0
    %8339 = vmatpush1.xpose.msra.mxu0 0.0
    %8340 = vmatprep.subr.mxu0 0.0
    %8341 = vmatpush1.xpose.msra.mxu0 0.0
    %8342 = vmatprep.subr.mxu0 0.0
    %8343 = vmatpush1.xpose.msra.mxu0 0.0
    %8344 = vmatprep.mubr.f32.mxu0 0.0
    %8345 = vmatmul.mubr.f32.gmra.mrb[0].mxu0 %v8275
    %v8346 = vpop.f32.mrb[0].mxu0
    %v8347 = vadd.f32 0.0, %v8346
    %v8348 = vpop.f32.mrb[0].mxu0
    %8349 = vdwg.mxu0
    %v8350 = vmul.f32 %v8347, 0.5
    %v8351 = vsel %vm3264, %v8350, -inf
    %8352 = vmax.xlane.f32.xlu0 %v8351
    %v8353 = vpop.xlane.xlu0 %8352
    %v8354 = vsub.f32 %v8350, %v8353
    %v8355 = vmul.f32 %v8354, 1.442695
    %v8356 = vpow.pop %v8355
    %v8357 = vsel %vm3264, %v8356, 0.0
    %8358 = vadd.xlane.f32.xlu0 %v8357
    %v8359 = vpop.xlane.xlu0 %8358
    %v8360 = vrcp.pop %v8359
    %v8361 = vmul.f32 %v8356, %v8360
    %v8363 = vsel %vm3276, %v8361, 0
    %v8366 = vsel %vm3280, %v8271, 0
    %8368 = vmatprep.subr.mxu0 0.0
    %8369 = vmatpush1.msra.mxu0 %v8366
    %8370 = vmatprep.subr.mxu0 0.0
    %8371 = vmatpush1.msra.mxu0 0.0
    %8372 = vmatprep.subr.mxu0 0.0
    %8373 = vmatpush1.msra.mxu0 0.0
    %8374 = vmatprep.subr.mxu0 0.0
    %8375 = vmatpush1.msra.mxu0 0.0
    %8376 = vmatprep.subr.mxu0 0.0
    %8377 = vmatpush1.msra.mxu0 0.0
    %8378 = vmatprep.subr.mxu0 0.0
    %8379 = vmatpush1.msra.mxu0 0.0
    %8380 = vmatprep.subr.mxu0 0.0
    %8381 = vmatpush1.msra.mxu0 0.0
    %8382 = vmatprep.subr.mxu0 0.0
    %8383 = vmatpush1.msra.mxu0 0.0
    %8384 = vmatprep.subr.mxu0 0.0
    %8385 = vmatpush1.msra.mxu0 0.0
    %8386 = vmatprep.subr.mxu0 0.0
    %8387 = vmatpush1.msra.mxu0 0.0
    %8388 = vmatprep.subr.mxu0 0.0
    %8389 = vmatpush1.msra.mxu0 0.0
    %8390 = vmatprep.subr.mxu0 0.0
    %8391 = vmatpush1.msra.mxu0 0.0
    %8392 = vmatprep.subr.mxu0 0.0
    %8393 = vmatpush1.msra.mxu0 0.0
    %8394 = vmatprep.subr.mxu0 0.0
    %8395 = vmatpush1.msra.mxu0 0.0
    %8396 = vmatprep.subr.mxu0 0.0
    %8397 = vmatpush1.msra.mxu0 0.0
    %8398 = vmatprep.subr.mxu0 0.0
    %8399 = vmatpush1.msra.mxu0 0.0
    %8400 = vmatprep.subr.mxu0 0.0
    %8401 = vmatpush1.msra.mxu0 0.0
    %8402 = vmatprep.subr.mxu0 0.0
    %8403 = vmatpush1.msra.mxu0 0.0
    %8404 = vmatprep.subr.mxu0 0.0
    %8405 = vmatpush1.msra.mxu0 0.0
    %8406 = vmatprep.subr.mxu0 0.0
    %8407 = vmatpush1.msra.mxu0 0.0
    %8408 = vmatprep.subr.mxu0 0.0
    %8409 = vmatpush1.msra.mxu0 0.0
    %8410 = vmatprep.subr.mxu0 0.0
    %8411 = vmatpush1.msra.mxu0 0.0
    %8412 = vmatprep.subr.mxu0 0.0
    %8413 = vmatpush1.msra.mxu0 0.0
    %8414 = vmatprep.subr.mxu0 0.0
    %8415 = vmatpush1.msra.mxu0 0.0
    %8416 = vmatprep.subr.mxu0 0.0
    %8417 = vmatpush1.msra.mxu0 0.0
    %8418 = vmatprep.subr.mxu0 0.0
    %8419 = vmatpush1.msra.mxu0 0.0
    %8420 = vmatprep.subr.mxu0 0.0
    %8421 = vmatpush1.msra.mxu0 0.0
    %8422 = vmatprep.subr.mxu0 0.0
    %8423 = vmatpush1.msra.mxu0 0.0
    %8424 = vmatprep.subr.mxu0 0.0
    %8425 = vmatpush1.msra.mxu0 0.0
    %8426 = vmatprep.subr.mxu0 0.0
    %8427 = vmatpush1.msra.mxu0 0.0
    %8428 = vmatprep.subr.mxu0 0.0
    %8429 = vmatpush1.msra.mxu0 0.0
    %8430 = vmatprep.subr.mxu0 0.0
    %8431 = vmatpush1.msra.mxu0 0.0
    %8432 = vmatprep.mubr.f32.mxu0 0.0
    %8433 = vmatmul.mubr.f32.gmra.mrb[0].mxu0 %v8363
    %v8434 = vpop.f32.mrb[0].mxu0
    %v8435 = vadd.f32 0.0, %v8434
    %v8436 = vpop.f32.mrb[0].mxu0
    %8437 = vdwg.mxu0
    %v8439 = vsel %vm478, %v8435, 0
    %8441 = vmatprep.subr.mxu0 0.0
    %8442 = vmatpush1.msra.mxu0 %v3759
    %8443 = vmatprep.subr.mxu0 0.0
    %8444 = vmatpush1.msra.mxu0 0.0
    %8445 = vmatprep.subr.mxu0 0.0
    %8446 = vmatpush1.msra.mxu0 0.0
    %8447 = vmatprep.subr.mxu0 0.0
    %8448 = vmatpush1.msra.mxu0 0.0
    %8449 = vmatprep.subr.mxu0 0.0
    %8450 = vmatpush1.msra.mxu0 0.0
    %8451 = vmatprep.subr.mxu0 0.0
    %8452 = vmatpush1.msra.mxu0 0.0
    %8453 = vmatprep.subr.mxu0 0.0
    %8454 = vmatpush1.msra.mxu0 0.0
    %8455 = vmatprep.subr.mxu0 0.0
    %8456 = vmatpush1.msra.mxu0 0.0
    %8457 = vmatprep.subr.mxu0 0.0
    %8458 = vmatpush1.msra.mxu0 0.0
    %8459 = vmatprep.subr.mxu0 0.0
    %8460 = vmatpush1.msra.mxu0 0.0
    %8461 = vmatprep.subr.mxu0 0.0
    %8462 = vmatpush1.msra.mxu0 0.0
    %8463 = vmatprep.subr.mxu0 0.0
    %8464 = vmatpush1.msra.mxu0 0.0
    %8465 = vmatprep.subr.mxu0 0.0
    %8466 = vmatpush1.msra.mxu0 0.0
    %8467 = vmatprep.subr.mxu0 0.0
    %8468 = vmatpush1.msra.mxu0 0.0
    %8469 = vmatprep.subr.mxu0 0.0
    %8470 = vmatpush1.msra.mxu0 0.0
    %8471 = vmatprep.subr.mxu0 0.0
    %8472 = vmatpush1.msra.mxu0 0.0
    %8473 = vmatprep.subr.mxu0 0.0
    %8474 = vmatpush1.msra.mxu0 0.0
    %8475 = vmatprep.subr.mxu0 0.0
    %8476 = vmatpush1.msra.mxu0 0.0
    %8477 = vmatprep.subr.mxu0 0.0
    %8478 = vmatpush1.msra.mxu0 0.0
    %8479 = vmatprep.subr.mxu0 0.0
    %8480 = vmatpush1.msra.mxu0 0.0
    %8481 = vmatprep.subr.mxu0 0.0
    %8482 = vmatpush1.msra.mxu0 0.0
    %8483 = vmatprep.subr.mxu0 0.0
    %8484 = vmatpush1.msra.mxu0 0.0
    %8485 = vmatprep.subr.mxu0 0.0
    %8486 = vmatpush1.msra.mxu0 0.0
    %8487 = vmatprep.subr.mxu0 0.0
    %8488 = vmatpush1.msra.mxu0 0.0
    %8489 = vmatprep.subr.mxu0 0.0
    %8490 = vmatpush1.msra.mxu0 0.0
    %8491 = vmatprep.subr.mxu0 0.0
    %8492 = vmatpush1.msra.mxu0 0.0
    %8493 = vmatprep.subr.mxu0 0.0
    %8494 = vmatpush1.msra.mxu0 0.0
    %8495 = vmatprep.subr.mxu0 0.0
    %8496 = vmatpush1.msra.mxu0 0.0
    %8497 = vmatprep.subr.mxu0 0.0
    %8498 = vmatpush1.msra.mxu0 0.0
    %8499 = vmatprep.subr.mxu0 0.0
    %8500 = vmatpush1.msra.mxu0 0.0
    %8501 = vmatprep.subr.mxu0 0.0
    %8502 = vmatpush1.msra.mxu0 0.0
    %8503 = vmatprep.subr.mxu0 0.0
    %8504 = vmatpush1.msra.mxu0 0.0
    %8505 = vmatprep.mubr.f32.mxu0 0.0
    %8506 = vmatmul.mubr.f32.gmra.mrb[0].mxu0 %v8439
    %v8507 = vpop.f32.mrb[0].mxu0
    %v8508 = vadd.f32 0.0, %v8507
    %v8509 = vpop.f32.mrb[0].mxu0
    %8510 = vdwg.mxu0
    %v8512 = vsel %vm478, %v8061, 0
    %8514 = vmatprep.subr.mxu0 0.0
    %8515 = vmatpush1.msra.mxu0 %v3835
    %8516 = vmatprep.subr.mxu0 0.0
    %8517 = vmatpush1.msra.mxu0 0.0
    %8518 = vmatprep.subr.mxu0 0.0
    %8519 = vmatpush1.msra.mxu0 0.0
    %8520 = vmatprep.subr.mxu0 0.0
    %8521 = vmatpush1.msra.mxu0 0.0
    %8522 = vmatprep.subr.mxu0 0.0
    %8523 = vmatpush1.msra.mxu0 0.0
    %8524 = vmatprep.subr.mxu0 0.0
    %8525 = vmatpush1.msra.mxu0 0.0
    %8526 = vmatprep.subr.mxu0 0.0
    %8527 = vmatpush1.msra.mxu0 0.0
    %8528 = vmatprep.subr.mxu0 0.0
    %8529 = vmatpush1.msra.mxu0 0.0
    %8530 = vmatprep.subr.mxu0 0.0
    %8531 = vmatpush1.msra.mxu0 0.0
    %8532 = vmatprep.subr.mxu0 0.0
    %8533 = vmatpush1.msra.mxu0 0.0
    %8534 = vmatprep.subr.mxu0 0.0
    %8535 = vmatpush1.msra.mxu0 0.0
    %8536 = vmatprep.subr.mxu0 0.0
    %8537 = vmatpush1.msra.mxu0 0.0
    %8538 = vmatprep.subr.mxu0 0.0
    %8539 = vmatpush1.msra.mxu0 0.0
    %8540 = vmatprep.subr.mxu0 0.0
    %8541 = vmatpush1.msra.mxu0 0.0
    %8542 = vmatprep.subr.mxu0 0.0
    %8543 = vmatpush1.msra.mxu0 0.0
    %8544 = vmatprep.subr.mxu0 0.0
    %8545 = vmatpush1.msra.mxu0 0.0
    %8546 = vmatprep.subr.mxu0 0.0
    %8547 = vmatpush1.msra.mxu0 0.0
    %8548 = vmatprep.subr.mxu0 0.0
    %8549 = vmatpush1.msra.mxu0 0.0
    %8550 = vmatprep.subr.mxu0 0.0
    %8551 = vmatpush1.msra.mxu0 0.0
    %8552 = vmatprep.subr.mxu0 0.0
    %8553 = vmatpush1.msra.mxu0 0.0
    %8554 = vmatprep.subr.mxu0 0.0
    %8555 = vmatpush1.msra.mxu0 0.0
    %8556 = vmatprep.subr.mxu0 0.0
    %8557 = vmatpush1.msra.mxu0 0.0
    %8558 = vmatprep.subr.mxu0 0.0
    %8559 = vmatpush1.msra.mxu0 0.0
    %8560 = vmatprep.subr.mxu0 0.0
    %8561 = vmatpush1.msra.mxu0 0.0
    %8562 = vmatprep.subr.mxu0 0.0
    %8563 = vmatpush1.msra.mxu0 0.0
    %8564 = vmatprep.subr.mxu0 0.0
    %8565 = vmatpush1.msra.mxu0 0.0
    %8566 = vmatprep.subr.mxu0 0.0
    %8567 = vmatpush1.msra.mxu0 0.0
    %8568 = vmatprep.subr.mxu0 0.0
    %8569 = vmatpush1.msra.mxu0 0.0
    %8570 = vmatprep.subr.mxu0 0.0
    %8571 = vmatpush1.msra.mxu0 0.0
    %8572 = vmatprep.subr.mxu0 0.0
    %8573 = vmatpush1.msra.mxu0 0.0
    %8574 = vmatprep.subr.mxu0 0.0
    %8575 = vmatpush1.msra.mxu0 0.0
    %8576 = vmatprep.subr.mxu0 0.0
    %8577 = vmatpush1.msra.mxu0 0.0
    %8578 = vmatprep.mubr.f32.mxu0 0.0
    %8579 = vmatmul.mubr.f32.gmra.mrb[0].mxu0 %v8512
    %v8580 = vpop.f32.mrb[0].mxu0
    %v8581 = vadd.f32 %v8508, %v8580
    %v8582 = vpop.f32.mrb[0].mxu0
    %8583 = vdwg.mxu0
    %8584 = vmatprep.subr.mxu0 0.0
    %8585 = vmatpush1.msra.mxu0 %v392
    %8586 = vmatprep.subr.mxu0 0.0
    %8587 = vmatpush1.msra.mxu0 %v393
    %8588 = vmatprep.subr.mxu0 0.0
    %8589 = vmatpush1.msra.mxu0 %v3914
    %8590 = vmatprep.subr.mxu0 0.0
    %8591 = vmatpush1.msra.mxu0 0.0
    %8592 = vmatprep.subr.mxu0 0.0
    %8593 = vmatpush1.msra.mxu0 0.0
    %8594 = vmatprep.subr.mxu0 0.0
    %8595 = vmatpush1.msra.mxu0 0.0
    %8596 = vmatprep.subr.mxu0 0.0
    %8597 = vmatpush1.msra.mxu0 0.0
    %8598 = vmatprep.subr.mxu0 0.0
    %8599 = vmatpush1.msra.mxu0 0.0
    %8600 = vmatprep.subr.mxu0 0.0
    %8601 = vmatpush1.msra.mxu0 0.0
    %8602 = vmatprep.subr.mxu0 0.0
    %8603 = vmatpush1.msra.mxu0 0.0
    %8604 = vmatprep.subr.mxu0 0.0
    %8605 = vmatpush1.msra.mxu0 0.0
    %8606 = vmatprep.subr.mxu0 0.0
    %8607 = vmatpush1.msra.mxu0 0.0
    %8608 = vmatprep.subr.mxu0 0.0
    %8609 = vmatpush1.msra.mxu0 0.0
    %8610 = vmatprep.subr.mxu0 0.0
    %8611 = vmatpush1.msra.mxu0 0.0
    %8612 = vmatprep.subr.mxu0 0.0
    %8613 = vmatpush1.msra.mxu0 0.0
    %8614 = vmatprep.subr.mxu0 0.0
    %8615 = vmatpush1.msra.mxu0 0.0
    %8616 = vmatprep.subr.mxu0 0.0
    %8617 = vmatpush1.msra.mxu0 0.0
    %8618 = vmatprep.subr.mxu0 0.0
    %8619 = vmatpush1.msra.mxu0 0.0
    %8620 = vmatprep.subr.mxu0 0.0
    %8621 = vmatpush1.msra.mxu0 0.0
    %8622 = vmatprep.subr.mxu0 0.0
    %8623 = vmatpush1.msra.mxu0 0.0
    %8624 = vmatprep.subr.mxu0 0.0
    %8625 = vmatpush1.msra.mxu0 0.0
    %8626 = vmatprep.subr.mxu0 0.0
    %8627 = vmatpush1.msra.mxu0 0.0
    %8628 = vmatprep.subr.mxu0 0.0
    %8629 = vmatpush1.msra.mxu0 0.0
    %8630 = vmatprep.subr.mxu0 0.0
    %8631 = vmatpush1.msra.mxu0 0.0
    %8632 = vmatprep.subr.mxu0 0.0
    %8633 = vmatpush1.msra.mxu0 0.0
    %8634 = vmatprep.subr.mxu0 0.0
    %8635 = vmatpush1.msra.mxu0 0.0
    %8636 = vmatprep.subr.mxu0 0.0
    %8637 = vmatpush1.msra.mxu0 0.0
    %8638 = vmatprep.subr.mxu0 0.0
    %8639 = vmatpush1.msra.mxu0 0.0
    %8640 = vmatprep.subr.mxu0 0.0
    %8641 = vmatpush1.msra.mxu0 0.0
    %8642 = vmatprep.subr.mxu0 0.0
    %8643 = vmatpush1.msra.mxu0 0.0
    %8644 = vmatprep.subr.mxu0 0.0
    %8645 = vmatpush1.msra.mxu0 0.0
    %8646 = vmatprep.subr.mxu0 0.0
    %8647 = vmatpush1.msra.mxu0 0.0
    %8648 = vmatprep.mubr.f32.mxu0 0.0
    %8649 = vmatmul.mubr.f32.gmra.mrb[0].mxu0 %v7685
    %v8650 = vpop.f32.mrb[0].mxu0
    %v8651 = vadd.f32 %v3911, %v8650
    %v8652 = vpop.f32.mrb[0].mxu0
    %8653 = vdwg.mxu0
    %8654 = vmatprep.subr.mxu0 0.0
    %8655 = vmatpush1.msra.mxu0 %v411
    %8656 = vmatprep.subr.mxu0 0.0
    %8657 = vmatpush1.msra.mxu0 %v412
    %8658 = vmatprep.subr.mxu0 0.0
    %8659 = vmatpush1.msra.mxu0 %v3993
    %8660 = vmatprep.subr.mxu0 0.0
    %8661 = vmatpush1.msra.mxu0 0.0
    %8662 = vmatprep.subr.mxu0 0.0
    %8663 = vmatpush1.msra.mxu0 0.0
    %8664 = vmatprep.subr.mxu0 0.0
    %8665 = vmatpush1.msra.mxu0 0.0
    %8666 = vmatprep.subr.mxu0 0.0
    %8667 = vmatpush1.msra.mxu0 0.0
    %8668 = vmatprep.subr.mxu0 0.0
    %8669 = vmatpush1.msra.mxu0 0.0
    %8670 = vmatprep.subr.mxu0 0.0
    %8671 = vmatpush1.msra.mxu0 0.0
    %8672 = vmatprep.subr.mxu0 0.0
    %8673 = vmatpush1.msra.mxu0 0.0
    %8674 = vmatprep.subr.mxu0 0.0
    %8675 = vmatpush1.msra.mxu0 0.0
    %8676 = vmatprep.subr.mxu0 0.0
    %8677 = vmatpush1.msra.mxu0 0.0
    %8678 = vmatprep.subr.mxu0 0.0
    %8679 = vmatpush1.msra.mxu0 0.0
    %8680 = vmatprep.subr.mxu0 0.0
    %8681 = vmatpush1.msra.mxu0 0.0
    %8682 = vmatprep.subr.mxu0 0.0
    %8683 = vmatpush1.msra.mxu0 0.0
    %8684 = vmatprep.subr.mxu0 0.0
    %8685 = vmatpush1.msra.mxu0 0.0
    %8686 = vmatprep.subr.mxu0 0.0
    %8687 = vmatpush1.msra.mxu0 0.0
    %8688 = vmatprep.subr.mxu0 0.0
    %8689 = vmatpush1.msra.mxu0 0.0
    %8690 = vmatprep.subr.mxu0 0.0
    %8691 = vmatpush1.msra.mxu0 0.0
    %8692 = vmatprep.subr.mxu0 0.0
    %8693 = vmatpush1.msra.mxu0 0.0
    %8694 = vmatprep.subr.mxu0 0.0
    %8695 = vmatpush1.msra.mxu0 0.0
    %8696 = vmatprep.subr.mxu0 0.0
    %8697 = vmatpush1.msra.mxu0 0.0
    %8698 = vmatprep.subr.mxu0 0.0
    %8699 = vmatpush1.msra.mxu0 0.0
    %8700 = vmatprep.subr.mxu0 0.0
    %8701 = vmatpush1.msra.mxu0 0.0
    %8702 = vmatprep.subr.mxu0 0.0
    %8703 = vmatpush1.msra.mxu0 0.0
    %8704 = vmatprep.subr.mxu0 0.0
    %8705 = vmatpush1.msra.mxu0 0.0
    %8706 = vmatprep.subr.mxu0 0.0
    %8707 = vmatpush1.msra.mxu0 0.0
    %8708 = vmatprep.subr.mxu0 0.0
    %8709 = vmatpush1.msra.mxu0 0.0
    %8710 = vmatprep.subr.mxu0 0.0
    %8711 = vmatpush1.msra.mxu0 0.0
    %8712 = vmatprep.subr.mxu0 0.0
    %8713 = vmatpush1.msra.mxu0 0.0
    %8714 = vmatprep.subr.mxu0 0.0
    %8715 = vmatpush1.msra.mxu0 0.0
    %8716 = vmatprep.subr.mxu0 0.0
    %8717 = vmatpush1.msra.mxu0 0.0
    %8718 = vmatprep.mubr.f32.mxu0 0.0
    %8719 = vmatmul.mubr.f32.gmra.mrb[0].mxu0 %v7758
    %v8720 = vpop.f32.mrb[0].mxu0
    %v8721 = vadd.f32 %v3990, %v8720
    %v8722 = vpop.f32.mrb[0].mxu0
    %8723 = vdwg.mxu0
    %8724 = vmatprep.subr.mxu0 0.0
    %8725 = vmatpush1.msra.mxu0 %v430
    %8726 = vmatprep.subr.mxu0 0.0
    %8727 = vmatpush1.msra.mxu0 %v431
    %8728 = vmatprep.subr.mxu0 0.0
    %8729 = vmatpush1.msra.mxu0 %v4072
    %8730 = vmatprep.subr.mxu0 0.0
    %8731 = vmatpush1.msra.mxu0 0.0
    %8732 = vmatprep.subr.mxu0 0.0
    %8733 = vmatpush1.msra.mxu0 0.0
    %8734 = vmatprep.subr.mxu0 0.0
    %8735 = vmatpush1.msra.mxu0 0.0
    %8736 = vmatprep.subr.mxu0 0.0
    %8737 = vmatpush1.msra.mxu0 0.0
    %8738 = vmatprep.subr.mxu0 0.0
    %8739 = vmatpush1.msra.mxu0 0.0
    %8740 = vmatprep.subr.mxu0 0.0
    %8741 = vmatpush1.msra.mxu0 0.0
    %8742 = vmatprep.subr.mxu0 0.0
    %8743 = vmatpush1.msra.mxu0 0.0
    %8744 = vmatprep.subr.mxu0 0.0
    %8745 = vmatpush1.msra.mxu0 0.0
    %8746 = vmatprep.subr.mxu0 0.0
    %8747 = vmatpush1.msra.mxu0 0.0
    %8748 = vmatprep.subr.mxu0 0.0
    %8749 = vmatpush1.msra.mxu0 0.0
    %8750 = vmatprep.subr.mxu0 0.0
    %8751 = vmatpush1.msra.mxu0 0.0
    %8752 = vmatprep.subr.mxu0 0.0
    %8753 = vmatpush1.msra.mxu0 0.0
    %8754 = vmatprep.subr.mxu0 0.0
    %8755 = vmatpush1.msra.mxu0 0.0
    %8756 = vmatprep.subr.mxu0 0.0
    %8757 = vmatpush1.msra.mxu0 0.0
    %8758 = vmatprep.subr.mxu0 0.0
    %8759 = vmatpush1.msra.mxu0 0.0
    %8760 = vmatprep.subr.mxu0 0.0
    %8761 = vmatpush1.msra.mxu0 0.0
    %8762 = vmatprep.subr.mxu0 0.0
    %8763 = vmatpush1.msra.mxu0 0.0
    %8764 = vmatprep.subr.mxu0 0.0
    %8765 = vmatpush1.msra.mxu0 0.0
    %8766 = vmatprep.subr.mxu0 0.0
    %8767 = vmatpush1.msra.mxu0 0.0
    %8768 = vmatprep.subr.mxu0 0.0
    %8769 = vmatpush1.msra.mxu0 0.0
    %8770 = vmatprep.subr.mxu0 0.0
    %8771 = vmatpush1.msra.mxu0 0.0
    %8772 = vmatprep.subr.mxu0 0.0
    %8773 = vmatpush1.msra.mxu0 0.0
    %8774 = vmatprep.subr.mxu0 0.0
    %8775 = vmatpush1.msra.mxu0 0.0
    %8776 = vmatprep.subr.mxu0 0.0
    %8777 = vmatpush1.msra.mxu0 0.0
    %8778 = vmatprep.subr.mxu0 0.0
    %8779 = vmatpush1.msra.mxu0 0.0
    %8780 = vmatprep.subr.mxu0 0.0
    %8781 = vmatpush1.msra.mxu0 0.0
    %8782 = vmatprep.subr.mxu0 0.0
    %8783 = vmatpush1.msra.mxu0 0.0
    %8784 = vmatprep.subr.mxu0 0.0
    %8785 = vmatpush1.msra.mxu0 0.0
    %8786 = vmatprep.subr.mxu0 0.0
    %8787 = vmatpush1.msra.mxu0 0.0
    %8788 = vmatprep.mubr.f32.mxu0 0.0
    %8789 = vmatmul.mubr.f32.gmra.mrb[0].mxu0 %v7758
    %v8790 = vpop.f32.mrb[0].mxu0
    %v8791 = vadd.f32 %v4069, %v8790
    %v8792 = vpop.f32.mrb[0].mxu0
    %8793 = vdwg.mxu0
    %v8795 = vsel %vm478, %v8651, 0
    %v8798 = vsel %vm478, %v8721, 0
    %8800 = vmatprep.subr.mxu0 0.0
    %8801 = vmatpush1.xpose.msra.mxu0 %v8798
    %8802 = vmatprep.subr.mxu0 0.0
    %8803 = vmatpush1.xpose.msra.mxu0 0.0
    %8804 = vmatprep.subr.mxu0 0.0
    %8805 = vmatpush1.xpose.msra.mxu0 0.0
    %8806 = vmatprep.subr.mxu0 0.0
    %8807 = vmatpush1.xpose.msra.mxu0 0.0
    %8808 = vmatprep.subr.mxu0 0.0
    %8809 = vmatpush1.xpose.msra.mxu0 0.0
    %8810 = vmatprep.subr.mxu0 0.0
    %8811 = vmatpush1.xpose.msra.mxu0 0.0
    %8812 = vmatprep.subr.mxu0 0.0
    %8813 = vmatpush1.xpose.msra.mxu0 0.0
    %8814 = vmatprep.subr.mxu0 0.0
    %8815 = vmatpush1.xpose.msra.mxu0 0.0
    %8816 = vmatprep.subr.mxu0 0.0
    %8817 = vmatpush1.xpose.msra.mxu0 0.0
    %8818 = vmatprep.subr.mxu0 0.0
    %8819 = vmatpush1.xpose.msra.mxu0 0.0
    %8820 = vmatprep.subr.mxu0 0.0
    %8821 = vmatpush1.xpose.msra.mxu0 0.0
    %8822 = vmatprep.subr.mxu0 0.0
    %8823 = vmatpush1.xpose.msra.mxu0 0.0
    %8824 = vmatprep.subr.mxu0 0.0
    %8825 = vmatpush1.xpose.msra.mxu0 0.0
    %8826 = vmatprep.subr.mxu0 0.0
    %8827 = vmatpush1.xpose.msra.mxu0 0.0
    %8828 = vmatprep.subr.mxu0 0.0
    %8829 = vmatpush1.xpose.msra.mxu0 0.0
    %8830 = vmatprep.subr.mxu0 0.0
    %8831 = vmatpush1.xpose.msra.mxu0 0.0
    %8832 = vmatprep.subr.mxu0 0.0
    %8833 = vmatpush1.xpose.msra.mxu0 0.0
    %8834 = vmatprep.subr.mxu0 0.0
    %8835 = vmatpush1.xpose.msra.mxu0 0.0
    %8836 = vmatprep.subr.mxu0 0.0
    %8837 = vmatpush1.xpose.msra.mxu0 0.0
    %8838 = vmatprep.subr.mxu0 0.0
    %8839 = vmatpush1.xpose.msra.mxu0 0.0
    %8840 = vmatprep.subr.mxu0 0.0
    %8841 = vmatpush1.xpose.msra.mxu0 0.0
    %8842 = vmatprep.subr.mxu0 0.0
    %8843 = vmatpush1.xpose.msra.mxu0 0.0
    %8844 = vmatprep.subr.mxu0 0.0
    %8845 = vmatpush1.xpose.msra.mxu0 0.0
    %8846 = vmatprep.subr.mxu0 0.0
    %8847 = vmatpush1.xpose.msra.mxu0 0.0
    %8848 = vmatprep.subr.mxu0 0.0
    %8849 = vmatpush1.xpose.msra.mxu0 0.0
    %8850 = vmatprep.subr.mxu0 0.0
    %8851 = vmatpush1.xpose.msra.mxu0 0.0
    %8852 = vmatprep.subr.mxu0 0.0
    %8853 = vmatpush1.xpose.msra.mxu0 0.0
    %8854 = vmatprep.subr.mxu0 0.0
    %8855 = vmatpush1.xpose.msra.mxu0 0.0
    %8856 = vmatprep.subr.mxu0 0.0
    %8857 = vmatpush1.xpose.msra.mxu0 0.0
    %8858 = vmatprep.subr.mxu0 0.0
    %8859 = vmatpush1.xpose.msra.mxu0 0.0
    %8860 = vmatprep.subr.mxu0 0.0
    %8861 = vmatpush1.xpose.msra.mxu0 0.0
    %8862 = vmatprep.subr.mxu0 0.0
    %8863 = vmatpush1.xpose.msra.mxu0 0.0
    %8864 = vmatprep.mubr.f32.mxu0 0.0
    %8865 = vmatmul.mubr.f32.gmra.mrb[0].mxu0 %v8795
    %v8866 = vpop.f32.mrb[0].mxu0
    %v8867 = vadd.f32 0.0, %v8866
    %v8868 = vpop.f32.mrb[0].mxu0
    %8869 = vdwg.mxu0
    %v8870 = vmul.f32 %v8867, 0.5
    %v8871 = vsel %vm3264, %v8870, -inf
    %8872 = vmax.xlane.f32.xlu0 %v8871
    %v8873 = vpop.xlane.xlu0 %8872
    %v8874 = vsub.f32 %v8870, %v8873
    %v8875 = vmul.f32 %v8874, 1.442695
    %v8876 = vpow.pop %v8875
    %v8877 = vsel %vm3264, %v8876, 0.0
    %8878 = vadd.xlane.f32.xlu0 %v8877
    %v8879 = vpop.xlane.xlu0 %8878
    %v8880 = vrcp.pop %v8879
    %v8881 = vmul.f32 %v8876, %v8880
    %v8883 = vsel %vm3276, %v8881, 0
    %v8886 = vsel %vm3280, %v8791, 0
    %8888 = vmatprep.subr.mxu0 0.0
    %8889 = vmatpush1.msra.mxu0 %v8886
    %8890 = vmatprep.subr.mxu0 0.0
    %8891 = vmatpush1.msra.mxu0 0.0
    %8892 = vmatprep.subr.mxu0 0.0
    %8893 = vmatpush1.msra.mxu0 0.0
    %8894 = vmatprep.subr.mxu0 0.0
    %8895 = vmatpush1.msra.mxu0 0.0
    %8896 = vmatprep.subr.mxu0 0.0
    %8897 = vmatpush1.msra.mxu0 0.0
    %8898 = vmatprep.subr.mxu0 0.0
    %8899 = vmatpush1.msra.mxu0 0.0
    %8900 = vmatprep.subr.mxu0 0.0
    %8901 = vmatpush1.msra.mxu0 0.0
    %8902 = vmatprep.subr.mxu0 0.0
    %8903 = vmatpush1.msra.mxu0 0.0
    %8904 = vmatprep.subr.mxu0 0.0
    %8905 = vmatpush1.msra.mxu0 0.0
    %8906 = vmatprep.subr.mxu0 0.0
    %8907 = vmatpush1.msra.mxu0 0.0
    %8908 = vmatprep.subr.mxu0 0.0
    %8909 = vmatpush1.msra.mxu0 0.0
    %8910 = vmatprep.subr.mxu0 0.0
    %8911 = vmatpush1.msra.mxu0 0.0
    %8912 = vmatprep.subr.mxu0 0.0
    %8913 = vmatpush1.msra.mxu0 0.0
    %8914 = vmatprep.subr.mxu0 0.0
    %8915 = vmatpush1.msra.mxu0 0.0
    %8916 = vmatprep.subr.mxu0 0.0
    %8917 = vmatpush1.msra.mxu0 0.0
    %8918 = vmatprep.subr.mxu0 0.0
    %8919 = vmatpush1.msra.mxu0 0.0
    %8920 = vmatprep.subr.mxu0 0.0
    %8921 = vmatpush1.msra.mxu0 0.0
    %8922 = vmatprep.subr.mxu0 0.0
    %8923 = vmatpush1.msra.mxu0 0.0
    %8924 = vmatprep.subr.mxu0 0.0
    %8925 = vmatpush1.msra.mxu0 0.0
    %8926 = vmatprep.subr.mxu0 0.0
    %8927 = vmatpush1.msra.mxu0 0.0
    %8928 = vmatprep.subr.mxu0 0.0
    %8929 = vmatpush1.msra.mxu0 0.0
    %8930 = vmatprep.subr.mxu0 0.0
    %8931 = vmatpush1.msra.mxu0 0.0
    %8932 = vmatprep.subr.mxu0 0.0
    %8933 = vmatpush1.msra.mxu0 0.0
    %8934 = vmatprep.subr.mxu0 0.0
    %8935 = vmatpush1.msra.mxu0 0.0
    %8936 = vmatprep.subr.mxu0 0.0
    %8937 = vmatpush1.msra.mxu0 0.0
    %8938 = vmatprep.subr.mxu0 0.0
    %8939 = vmatpush1.msra.mxu0 0.0
    %8940 = vmatprep.subr.mxu0 0.0
    %8941 = vmatpush1.msra.mxu0 0.0
    %8942 = vmatprep.subr.mxu0 0.0
    %8943 = vmatpush1.msra.mxu0 0.0
    %8944 = vmatprep.subr.mxu0 0.0
    %8945 = vmatpush1.msra.mxu0 0.0
    %8946 = vmatprep.subr.mxu0 0.0
    %8947 = vmatpush1.msra.mxu0 0.0
    %8948 = vmatprep.subr.mxu0 0.0
    %8949 = vmatpush1.msra.mxu0 0.0
    %8950 = vmatprep.subr.mxu0 0.0
    %8951 = vmatpush1.msra.mxu0 0.0
    %8952 = vmatprep.mubr.f32.mxu0 0.0
    %8953 = vmatmul.mubr.f32.gmra.mrb[0].mxu0 %v8883
    %v8954 = vpop.f32.mrb[0].mxu0
    %v8955 = vadd.f32 0.0, %v8954
    %v8956 = vpop.f32.mrb[0].mxu0
    %8957 = vdwg.mxu0
    %v8959 = vsel %vm478, %v8955, 0
    %8961 = vmatprep.subr.mxu0 0.0
    %8962 = vmatpush1.msra.mxu0 %v4312
    %8963 = vmatprep.subr.mxu0 0.0
    %8964 = vmatpush1.msra.mxu0 0.0
    %8965 = vmatprep.subr.mxu0 0.0
    %8966 = vmatpush1.msra.mxu0 0.0
    %8967 = vmatprep.subr.mxu0 0.0
    %8968 = vmatpush1.msra.mxu0 0.0
    %8969 = vmatprep.subr.mxu0 0.0
    %8970 = vmatpush1.msra.mxu0 0.0
    %8971 = vmatprep.subr.mxu0 0.0
    %8972 = vmatpush1.msra.mxu0 0.0
    %8973 = vmatprep.subr.mxu0 0.0
    %8974 = vmatpush1.msra.mxu0 0.0
    %8975 = vmatprep.subr.mxu0 0.0
    %8976 = vmatpush1.msra.mxu0 0.0
    %8977 = vmatprep.subr.mxu0 0.0
    %8978 = vmatpush1.msra.mxu0 0.0
    %8979 = vmatprep.subr.mxu0 0.0
    %8980 = vmatpush1.msra.mxu0 0.0
    %8981 = vmatprep.subr.mxu0 0.0
    %8982 = vmatpush1.msra.mxu0 0.0
    %8983 = vmatprep.subr.mxu0 0.0
    %8984 = vmatpush1.msra.mxu0 0.0
    %8985 = vmatprep.subr.mxu0 0.0
    %8986 = vmatpush1.msra.mxu0 0.0
    %8987 = vmatprep.subr.mxu0 0.0
    %8988 = vmatpush1.msra.mxu0 0.0
    %8989 = vmatprep.subr.mxu0 0.0
    %8990 = vmatpush1.msra.mxu0 0.0
    %8991 = vmatprep.subr.mxu0 0.0
    %8992 = vmatpush1.msra.mxu0 0.0
    %8993 = vmatprep.subr.mxu0 0.0
    %8994 = vmatpush1.msra.mxu0 0.0
    %8995 = vmatprep.subr.mxu0 0.0
    %8996 = vmatpush1.msra.mxu0 0.0
    %8997 = vmatprep.subr.mxu0 0.0
    %8998 = vmatpush1.msra.mxu0 0.0
    %8999 = vmatprep.subr.mxu0 0.0
    %9000 = vmatpush1.msra.mxu0 0.0
    %9001 = vmatprep.subr.mxu0 0.0
    %9002 = vmatpush1.msra.mxu0 0.0
    %9003 = vmatprep.subr.mxu0 0.0
    %9004 = vmatpush1.msra.mxu0 0.0
    %9005 = vmatprep.subr.mxu0 0.0
    %9006 = vmatpush1.msra.mxu0 0.0
    %9007 = vmatprep.subr.mxu0 0.0
    %9008 = vmatpush1.msra.mxu0 0.0
    %9009 = vmatprep.subr.mxu0 0.0
    %9010 = vmatpush1.msra.mxu0 0.0
    %9011 = vmatprep.subr.mxu0 0.0
    %9012 = vmatpush1.msra.mxu0 0.0
    %9013 = vmatprep.subr.mxu0 0.0
    %9014 = vmatpush1.msra.mxu0 0.0
    %9015 = vmatprep.subr.mxu0 0.0
    %9016 = vmatpush1.msra.mxu0 0.0
    %9017 = vmatprep.subr.mxu0 0.0
    %9018 = vmatpush1.msra.mxu0 0.0
    %9019 = vmatprep.subr.mxu0 0.0
    %9020 = vmatpush1.msra.mxu0 0.0
    %9021 = vmatprep.subr.mxu0 0.0
    %9022 = vmatpush1.msra.mxu0 0.0
    %9023 = vmatprep.subr.mxu0 0.0
    %9024 = vmatpush1.msra.mxu0 0.0
    %9025 = vmatprep.mubr.f32.mxu0 0.0
    %9026 = vmatmul.mubr.f32.gmra.mrb[0].mxu0 %v8959
    %v9027 = vpop.f32.mrb[0].mxu0
    %v9028 = vadd.f32 0.0, %v9027
    %v9029 = vpop.f32.mrb[0].mxu0
    %9030 = vdwg.mxu0
    %v9031 = vadd.f32 %v8581, %v9028
    %9032 = vmatprep.subr.mxu0 0.0
    %9033 = vmatpush1.msra.mxu0 %v396
    %9034 = vmatprep.subr.mxu0 0.0
    %9035 = vmatpush1.msra.mxu0 %v397
    %9036 = vmatprep.subr.mxu0 0.0
    %9037 = vmatpush1.msra.mxu0 %v4392
    %9038 = vmatprep.subr.mxu0 0.0
    %9039 = vmatpush1.msra.mxu0 0.0
    %9040 = vmatprep.subr.mxu0 0.0
    %9041 = vmatpush1.msra.mxu0 0.0
    %9042 = vmatprep.subr.mxu0 0.0
    %9043 = vmatpush1.msra.mxu0 0.0
    %9044 = vmatprep.subr.mxu0 0.0
    %9045 = vmatpush1.msra.mxu0 0.0
    %9046 = vmatprep.subr.mxu0 0.0
    %9047 = vmatpush1.msra.mxu0 0.0
    %9048 = vmatprep.subr.mxu0 0.0
    %9049 = vmatpush1.msra.mxu0 0.0
    %9050 = vmatprep.subr.mxu0 0.0
    %9051 = vmatpush1.msra.mxu0 0.0
    %9052 = vmatprep.subr.mxu0 0.0
    %9053 = vmatpush1.msra.mxu0 0.0
    %9054 = vmatprep.subr.mxu0 0.0
    %9055 = vmatpush1.msra.mxu0 0.0
    %9056 = vmatprep.subr.mxu0 0.0
    %9057 = vmatpush1.msra.mxu0 0.0
    %9058 = vmatprep.subr.mxu0 0.0
    %9059 = vmatpush1.msra.mxu0 0.0
    %9060 = vmatprep.subr.mxu0 0.0
    %9061 = vmatpush1.msra.mxu0 0.0
    %9062 = vmatprep.subr.mxu0 0.0
    %9063 = vmatpush1.msra.mxu0 0.0
    %9064 = vmatprep.subr.mxu0 0.0
    %9065 = vmatpush1.msra.mxu0 0.0
    %9066 = vmatprep.subr.mxu0 0.0
    %9067 = vmatpush1.msra.mxu0 0.0
    %9068 = vmatprep.subr.mxu0 0.0
    %9069 = vmatpush1.msra.mxu0 0.0
    %9070 = vmatprep.subr.mxu0 0.0
    %9071 = vmatpush1.msra.mxu0 0.0
    %9072 = vmatprep.subr.mxu0 0.0
    %9073 = vmatpush1.msra.mxu0 0.0
    %9074 = vmatprep.subr.mxu0 0.0
    %9075 = vmatpush1.msra.mxu0 0.0
    %9076 = vmatprep.subr.mxu0 0.0
    %9077 = vmatpush1.msra.mxu0 0.0
    %9078 = vmatprep.subr.mxu0 0.0
    %9079 = vmatpush1.msra.mxu0 0.0
    %9080 = vmatprep.subr.mxu0 0.0
    %9081 = vmatpush1.msra.mxu0 0.0
    %9082 = vmatprep.subr.mxu0 0.0
    %9083 = vmatpush1.msra.mxu0 0.0
    %9084 = vmatprep.subr.mxu0 0.0
    %9085 = vmatpush1.msra.mxu0 0.0
    %9086 = vmatprep.subr.mxu0 0.0
    %9087 = vmatpush1.msra.mxu0 0.0
    %9088 = vmatprep.subr.mxu0 0.0
    %9089 = vmatpush1.msra.mxu0 0.0
    %9090 = vmatprep.subr.mxu0 0.0
    %9091 = vmatpush1.msra.mxu0 0.0
    %9092 = vmatprep.subr.mxu0 0.0
    %9093 = vmatpush1.msra.mxu0 0.0
    %9094 = vmatprep.subr.mxu0 0.0
    %9095 = vmatpush1.msra.mxu0 0.0
    %9096 = vmatprep.mubr.f32.mxu0 0.0
    %9097 = vmatmul.mubr.f32.gmra.mrb[0].mxu0 %v7685
    %v9098 = vpop.f32.mrb[0].mxu0
    %v9099 = vadd.f32 %v4389, %v9098
    %v9100 = vpop.f32.mrb[0].mxu0
    %9101 = vdwg.mxu0
    %9102 = vmatprep.subr.mxu0 0.0
    %9103 = vmatpush1.msra.mxu0 %v415
    %9104 = vmatprep.subr.mxu0 0.0
    %9105 = vmatpush1.msra.mxu0 %v416
    %9106 = vmatprep.subr.mxu0 0.0
    %9107 = vmatpush1.msra.mxu0 %v4471
    %9108 = vmatprep.subr.mxu0 0.0
    %9109 = vmatpush1.msra.mxu0 0.0
    %9110 = vmatprep.subr.mxu0 0.0
    %9111 = vmatpush1.msra.mxu0 0.0
    %9112 = vmatprep.subr.mxu0 0.0
    %9113 = vmatpush1.msra.mxu0 0.0
    %9114 = vmatprep.subr.mxu0 0.0
    %9115 = vmatpush1.msra.mxu0 0.0
    %9116 = vmatprep.subr.mxu0 0.0
    %9117 = vmatpush1.msra.mxu0 0.0
    %9118 = vmatprep.subr.mxu0 0.0
    %9119 = vmatpush1.msra.mxu0 0.0
    %9120 = vmatprep.subr.mxu0 0.0
    %9121 = vmatpush1.msra.mxu0 0.0
    %9122 = vmatprep.subr.mxu0 0.0
    %9123 = vmatpush1.msra.mxu0 0.0
    %9124 = vmatprep.subr.mxu0 0.0
    %9125 = vmatpush1.msra.mxu0 0.0
    %9126 = vmatprep.subr.mxu0 0.0
    %9127 = vmatpush1.msra.mxu0 0.0
    %9128 = vmatprep.subr.mxu0 0.0
    %9129 = vmatpush1.msra.mxu0 0.0
    %9130 = vmatprep.subr.mxu0 0.0
    %9131 = vmatpush1.msra.mxu0 0.0
    %9132 = vmatprep.subr.mxu0 0.0
    %9133 = vmatpush1.msra.mxu0 0.0
    %9134 = vmatprep.subr.mxu0 0.0
    %9135 = vmatpush1.msra.mxu0 0.0
    %9136 = vmatprep.subr.mxu0 0.0
    %9137 = vmatpush1.msra.mxu0 0.0
    %9138 = vmatprep.subr.mxu0 0.0
    %9139 = vmatpush1.msra.mxu0 0.0
    %9140 = vmatprep.subr.mxu0 0.0
    %9141 = vmatpush1.msra.mxu0 0.0
    %9142 = vmatprep.subr.mxu0 0.0
    %9143 = vmatpush1.msra.mxu0 0.0
    %9144 = vmatprep.subr.mxu0 0.0
    %9145 = vmatpush1.msra.mxu0 0.0
    %9146 = vmatprep.subr.mxu0 0.0
    %9147 = vmatpush1.msra.mxu0 0.0
    %9148 = vmatprep.subr.mxu0 0.0
    %9149 = vmatpush1.msra.mxu0 0.0
    %9150 = vmatprep.subr.mxu0 0.0
    %9151 = vmatpush1.msra.mxu0 0.0
    %9152 = vmatprep.subr.mxu0 0.0
    %9153 = vmatpush1.msra.mxu0 0.0
    %9154 = vmatprep.subr.mxu0 0.0
    %9155 = vmatpush1.msra.mxu0 0.0
    %9156 = vmatprep.subr.mxu0 0.0
    %9157 = vmatpush1.msra.mxu0 0.0
    %9158 = vmatprep.subr.mxu0 0.0
    %9159 = vmatpush1.msra.mxu0 0.0
    %9160 = vmatprep.subr.mxu0 0.0
    %9161 = vmatpush1.msra.mxu0 0.0
    %9162 = vmatprep.subr.mxu0 0.0
    %9163 = vmatpush1.msra.mxu0 0.0
    %9164 = vmatprep.subr.mxu0 0.0
    %9165 = vmatpush1.msra.mxu0 0.0
    %9166 = vmatprep.mubr.f32.mxu0 0.0
    %9167 = vmatmul.mubr.f32.gmra.mrb[0].mxu0 %v7758
    %v9168 = vpop.f32.mrb[0].mxu0
    %v9169 = vadd.f32 %v4468, %v9168
    %v9170 = vpop.f32.mrb[0].mxu0
    %9171 = vdwg.mxu0
    %9172 = vmatprep.subr.mxu0 0.0
    %9173 = vmatpush1.msra.mxu0 %v434
    %9174 = vmatprep.subr.mxu0 0.0
    %9175 = vmatpush1.msra.mxu0 %v435
    %9176 = vmatprep.subr.mxu0 0.0
    %9177 = vmatpush1.msra.mxu0 %v4550
    %9178 = vmatprep.subr.mxu0 0.0
    %9179 = vmatpush1.msra.mxu0 0.0
    %9180 = vmatprep.subr.mxu0 0.0
    %9181 = vmatpush1.msra.mxu0 0.0
    %9182 = vmatprep.subr.mxu0 0.0
    %9183 = vmatpush1.msra.mxu0 0.0
    %9184 = vmatprep.subr.mxu0 0.0
    %9185 = vmatpush1.msra.mxu0 0.0
    %9186 = vmatprep.subr.mxu0 0.0
    %9187 = vmatpush1.msra.mxu0 0.0
    %9188 = vmatprep.subr.mxu0 0.0
    %9189 = vmatpush1.msra.mxu0 0.0
    %9190 = vmatprep.subr.mxu0 0.0
    %9191 = vmatpush1.msra.mxu0 0.0
    %9192 = vmatprep.subr.mxu0 0.0
    %9193 = vmatpush1.msra.mxu0 0.0
    %9194 = vmatprep.subr.mxu0 0.0
    %9195 = vmatpush1.msra.mxu0 0.0
    %9196 = vmatprep.subr.mxu0 0.0
    %9197 = vmatpush1.msra.mxu0 0.0
    %9198 = vmatprep.subr.mxu0 0.0
    %9199 = vmatpush1.msra.mxu0 0.0
    %9200 = vmatprep.subr.mxu0 0.0
    %9201 = vmatpush1.msra.mxu0 0.0
    %9202 = vmatprep.subr.mxu0 0.0
    %9203 = vmatpush1.msra.mxu0 0.0
    %9204 = vmatprep.subr.mxu0 0.0
    %9205 = vmatpush1.msra.mxu0 0.0
    %9206 = vmatprep.subr.mxu0 0.0
    %9207 = vmatpush1.msra.mxu0 0.0
    %9208 = vmatprep.subr.mxu0 0.0
    %9209 = vmatpush1.msra.mxu0 0.0
    %9210 = vmatprep.subr.mxu0 0.0
    %9211 = vmatpush1.msra.mxu0 0.0
    %9212 = vmatprep.subr.mxu0 0.0
    %9213 = vmatpush1.msra.mxu0 0.0
    %9214 = vmatprep.subr.mxu0 0.0
    %9215 = vmatpush1.msra.mxu0 0.0
    %9216 = vmatprep.subr.mxu0 0.0
    %9217 = vmatpush1.msra.mxu0 0.0
    %9218 = vmatprep.subr.mxu0 0.0
    %9219 = vmatpush1.msra.mxu0 0.0
    %9220 = vmatprep.subr.mxu0 0.0
    %9221 = vmatpush1.msra.mxu0 0.0
    %9222 = vmatprep.subr.mxu0 0.0
    %9223 = vmatpush1.msra.mxu0 0.0
    %9224 = vmatprep.subr.mxu0 0.0
    %9225 = vmatpush1.msra.mxu0 0.0
    %9226 = vmatprep.subr.mxu0 0.0
    %9227 = vmatpush1.msra.mxu0 0.0
    %9228 = vmatprep.subr.mxu0 0.0
    %9229 = vmatpush1.msra.mxu0 0.0
    %9230 = vmatprep.subr.mxu0 0.0
    %9231 = vmatpush1.msra.mxu0 0.0
    %9232 = vmatprep.subr.mxu0 0.0
    %9233 = vmatpush1.msra.mxu0 0.0
    %9234 = vmatprep.subr.mxu0 0.0
    %9235 = vmatpush1.msra.mxu0 0.0
    %9236 = vmatprep.mubr.f32.mxu0 0.0
    %9237 = vmatmul.mubr.f32.gmra.mrb[0].mxu0 %v7758
    %v9238 = vpop.f32.mrb[0].mxu0
    %v9239 = vadd.f32 %v4547, %v9238
    %v9240 = vpop.f32.mrb[0].mxu0
    %9241 = vdwg.mxu0
    %v9243 = vsel %vm478, %v9099, 0
    %v9246 = vsel %vm478, %v9169, 0
    %9248 = vmatprep.subr.mxu0 0.0
    %9249 = vmatpush1.xpose.msra.mxu0 %v9246
    %9250 = vmatprep.subr.mxu0 0.0
    %9251 = vmatpush1.xpose.msra.mxu0 0.0
    %9252 = vmatprep.subr.mxu0 0.0
    %9253 = vmatpush1.xpose.msra.mxu0 0.0
    %9254 = vmatprep.subr.mxu0 0.0
    %9255 = vmatpush1.xpose.msra.mxu0 0.0
    %9256 = vmatprep.subr.mxu0 0.0
    %9257 = vmatpush1.xpose.msra.mxu0 0.0
    %9258 = vmatprep.subr.mxu0 0.0
    %9259 = vmatpush1.xpose.msra.mxu0 0.0
    %9260 = vmatprep.subr.mxu0 0.0
    %9261 = vmatpush1.xpose.msra.mxu0 0.0
    %9262 = vmatprep.subr.mxu0 0.0
    %9263 = vmatpush1.xpose.msra.mxu0 0.0
    %9264 = vmatprep.subr.mxu0 0.0
    %9265 = vmatpush1.xpose.msra.mxu0 0.0
    %9266 = vmatprep.subr.mxu0 0.0
    %9267 = vmatpush1.xpose.msra.mxu0 0.0
    %9268 = vmatprep.subr.mxu0 0.0
    %9269 = vmatpush1.xpose.msra.mxu0 0.0
    %9270 = vmatprep.subr.mxu0 0.0
    %9271 = vmatpush1.xpose.msra.mxu0 0.0
    %9272 = vmatprep.subr.mxu0 0.0
    %9273 = vmatpush1.xpose.msra.mxu0 0.0
    %9274 = vmatprep.subr.mxu0 0.0
    %9275 = vmatpush1.xpose.msra.mxu0 0.0
    %9276 = vmatprep.subr.mxu0 0.0
    %9277 = vmatpush1.xpose.msra.mxu0 0.0
    %9278 = vmatprep.subr.mxu0 0.0
    %9279 = vmatpush1.xpose.msra.mxu0 0.0
    %9280 = vmatprep.subr.mxu0 0.0
    %9281 = vmatpush1.xpose.msra.mxu0 0.0
    %9282 = vmatprep.subr.mxu0 0.0
    %9283 = vmatpush1.xpose.msra.mxu0 0.0
    %9284 = vmatprep.subr.mxu0 0.0
    %9285 = vmatpush1.xpose.msra.mxu0 0.0
    %9286 = vmatprep.subr.mxu0 0.0
    %9287 = vmatpush1.xpose.msra.mxu0 0.0
    %9288 = vmatprep.subr.mxu0 0.0
    %9289 = vmatpush1.xpose.msra.mxu0 0.0
    %9290 = vmatprep.subr.mxu0 0.0
    %9291 = vmatpush1.xpose.msra.mxu0 0.0
    %9292 = vmatprep.subr.mxu0 0.0
    %9293 = vmatpush1.xpose.msra.mxu0 0.0
    %9294 = vmatprep.subr.mxu0 0.0
    %9295 = vmatpush1.xpose.msra.mxu0 0.0
    %9296 = vmatprep.subr.mxu0 0.0
    %9297 = vmatpush1.xpose.msra.mxu0 0.0
    %9298 = vmatprep.subr.mxu0 0.0
    %9299 = vmatpush1.xpose.msra.mxu0 0.0
    %9300 = vmatprep.subr.mxu0 0.0
    %9301 = vmatpush1.xpose.msra.mxu0 0.0
    %9302 = vmatprep.subr.mxu0 0.0
    %9303 = vmatpush1.xpose.msra.mxu0 0.0
    %9304 = vmatprep.subr.mxu0 0.0
    %9305 = vmatpush1.xpose.msra.mxu0 0.0
    %9306 = vmatprep.subr.mxu0 0.0
    %9307 = vmatpush1.xpose.msra.mxu0 0.0
    %9308 = vmatprep.subr.mxu0 0.0
    %9309 = vmatpush1.xpose.msra.mxu0 0.0
    %9310 = vmatprep.subr.mxu0 0.0
    %9311 = vmatpush1.xpose.msra.mxu0 0.0
    %9312 = vmatprep.mubr.f32.mxu0 0.0
    %9313 = vmatmul.mubr.f32.gmra.mrb[0].mxu0 %v9243
    %v9314 = vpop.f32.mrb[0].mxu0
    %v9315 = vadd.f32 0.0, %v9314
    %v9316 = vpop.f32.mrb[0].mxu0
    %9317 = vdwg.mxu0
    %v9318 = vmul.f32 %v9315, 0.5
    %v9319 = vsel %vm3264, %v9318, -inf
    %9320 = vmax.xlane.f32.xlu0 %v9319
    %v9321 = vpop.xlane.xlu0 %9320
    %v9322 = vsub.f32 %v9318, %v9321
    %v9323 = vmul.f32 %v9322, 1.442695
    %v9324 = vpow.pop %v9323
    %v9325 = vsel %vm3264, %v9324, 0.0
    %9326 = vadd.xlane.f32.xlu0 %v9325
    %v9327 = vpop.xlane.xlu0 %9326
    %v9328 = vrcp.pop %v9327
    %v9329 = vmul.f32 %v9324, %v9328
    %v9331 = vsel %vm3276, %v9329, 0
    %v9334 = vsel %vm3280, %v9239, 0
    %9336 = vmatprep.subr.mxu0 0.0
    %9337 = vmatpush1.msra.mxu0 %v9334
    %9338 = vmatprep.subr.mxu0 0.0
    %9339 = vmatpush1.msra.mxu0 0.0
    %9340 = vmatprep.subr.mxu0 0.0
    %9341 = vmatpush1.msra.mxu0 0.0
    %9342 = vmatprep.subr.mxu0 0.0
    %9343 = vmatpush1.msra.mxu0 0.0
    %9344 = vmatprep.subr.mxu0 0.0
    %9345 = vmatpush1.msra.mxu0 0.0
    %9346 = vmatprep.subr.mxu0 0.0
    %9347 = vmatpush1.msra.mxu0 0.0
    %9348 = vmatprep.subr.mxu0 0.0
    %9349 = vmatpush1.msra.mxu0 0.0
    %9350 = vmatprep.subr.mxu0 0.0
    %9351 = vmatpush1.msra.mxu0 0.0
    %9352 = vmatprep.subr.mxu0 0.0
    %9353 = vmatpush1.msra.mxu0 0.0
    %9354 = vmatprep.subr.mxu0 0.0
    %9355 = vmatpush1.msra.mxu0 0.0
    %9356 = vmatprep.subr.mxu0 0.0
    %9357 = vmatpush1.msra.mxu0 0.0
    %9358 = vmatprep.subr.mxu0 0.0
    %9359 = vmatpush1.msra.mxu0 0.0
    %9360 = vmatprep.subr.mxu0 0.0
    %9361 = vmatpush1.msra.mxu0 0.0
    %9362 = vmatprep.subr.mxu0 0.0
    %9363 = vmatpush1.msra.mxu0 0.0
    %9364 = vmatprep.subr.mxu0 0.0
    %9365 = vmatpush1.msra.mxu0 0.0
    %9366 = vmatprep.subr.mxu0 0.0
    %9367 = vmatpush1.msra.mxu0 0.0
    %9368 = vmatprep.subr.mxu0 0.0
    %9369 = vmatpush1.msra.mxu0 0.0
    %9370 = vmatprep.subr.mxu0 0.0
    %9371 = vmatpush1.msra.mxu0 0.0
    %9372 = vmatprep.subr.mxu0 0.0
    %9373 = vmatpush1.msra.mxu0 0.0
    %9374 = vmatprep.subr.mxu0 0.0
    %9375 = vmatpush1.msra.mxu0 0.0
    %9376 = vmatprep.subr.mxu0 0.0
    %9377 = vmatpush1.msra.mxu0 0.0
    %9378 = vmatprep.subr.mxu0 0.0
    %9379 = vmatpush1.msra.mxu0 0.0
    %9380 = vmatprep.subr.mxu0 0.0
    %9381 = vmatpush1.msra.mxu0 0.0
    %9382 = vmatprep.subr.mxu0 0.0
    %9383 = vmatpush1.msra.mxu0 0.0
    %9384 = vmatprep.subr.mxu0 0.0
    %9385 = vmatpush1.msra.mxu0 0.0
    %9386 = vmatprep.subr.mxu0 0.0
    %9387 = vmatpush1.msra.mxu0 0.0
    %9388 = vmatprep.subr.mxu0 0.0
    %9389 = vmatpush1.msra.mxu0 0.0
    %9390 = vmatprep.subr.mxu0 0.0
    %9391 = vmatpush1.msra.mxu0 0.0
    %9392 = vmatprep.subr.mxu0 0.0
    %9393 = vmatpush1.msra.mxu0 0.0
    %9394 = vmatprep.subr.mxu0 0.0
    %9395 = vmatpush1.msra.mxu0 0.0
    %9396 = vmatprep.subr.mxu0 0.0
    %9397 = vmatpush1.msra.mxu0 0.0
    %9398 = vmatprep.subr.mxu0 0.0
    %9399 = vmatpush1.msra.mxu0 0.0
    %9400 = vmatprep.mubr.f32.mxu0 0.0
    %9401 = vmatmul.mubr.f32.gmra.mrb[0].mxu0 %v9331
    %v9402 = vpop.f32.mrb[0].mxu0
    %v9403 = vadd.f32 0.0, %v9402
    %v9404 = vpop.f32.mrb[0].mxu0
    %9405 = vdwg.mxu0
    %v9407 = vsel %vm478, %v9403, 0
    %9409 = vmatprep.subr.mxu0 0.0
    %9410 = vmatpush1.msra.mxu0 %v4790
    %9411 = vmatprep.subr.mxu0 0.0
    %9412 = vmatpush1.msra.mxu0 0.0
    %9413 = vmatprep.subr.mxu0 0.0
    %9414 = vmatpush1.msra.mxu0 0.0
    %9415 = vmatprep.subr.mxu0 0.0
    %9416 = vmatpush1.msra.mxu0 0.0
    %9417 = vmatprep.subr.mxu0 0.0
    %9418 = vmatpush1.msra.mxu0 0.0
    %9419 = vmatprep.subr.mxu0 0.0
    %9420 = vmatpush1.msra.mxu0 0.0
    %9421 = vmatprep.subr.mxu0 0.0
    %9422 = vmatpush1.msra.mxu0 0.0
    %9423 = vmatprep.subr.mxu0 0.0
    %9424 = vmatpush1.msra.mxu0 0.0
    %9425 = vmatprep.subr.mxu0 0.0
    %9426 = vmatpush1.msra.mxu0 0.0
    %9427 = vmatprep.subr.mxu0 0.0
    %9428 = vmatpush1.msra.mxu0 0.0
    %9429 = vmatprep.subr.mxu0 0.0
    %9430 = vmatpush1.msra.mxu0 0.0
    %9431 = vmatprep.subr.mxu0 0.0
    %9432 = vmatpush1.msra.mxu0 0.0
    %9433 = vmatprep.subr.mxu0 0.0
    %9434 = vmatpush1.msra.mxu0 0.0
    %9435 = vmatprep.subr.mxu0 0.0
    %9436 = vmatpush1.msra.mxu0 0.0
    %9437 = vmatprep.subr.mxu0 0.0
    %9438 = vmatpush1.msra.mxu0 0.0
    %9439 = vmatprep.subr.mxu0 0.0
    %9440 = vmatpush1.msra.mxu0 0.0
    %9441 = vmatprep.subr.mxu0 0.0
    %9442 = vmatpush1.msra.mxu0 0.0
    %9443 = vmatprep.subr.mxu0 0.0
    %9444 = vmatpush1.msra.mxu0 0.0
    %9445 = vmatprep.subr.mxu0 0.0
    %9446 = vmatpush1.msra.mxu0 0.0
    %9447 = vmatprep.subr.mxu0 0.0
    %9448 = vmatpush1.msra.mxu0 0.0
    %9449 = vmatprep.subr.mxu0 0.0
    %9450 = vmatpush1.msra.mxu0 0.0
    %9451 = vmatprep.subr.mxu0 0.0
    %9452 = vmatpush1.msra.mxu0 0.0
    %9453 = vmatprep.subr.mxu0 0.0
    %9454 = vmatpush1.msra.mxu0 0.0
    %9455 = vmatprep.subr.mxu0 0.0
    %9456 = vmatpush1.msra.mxu0 0.0
    %9457 = vmatprep.subr.mxu0 0.0
    %9458 = vmatpush1.msra.mxu0 0.0
    %9459 = vmatprep.subr.mxu0 0.0
    %9460 = vmatpush1.msra.mxu0 0.0
    %9461 = vmatprep.subr.mxu0 0.0
    %9462 = vmatpush1.msra.mxu0 0.0
    %9463 = vmatprep.subr.mxu0 0.0
    %9464 = vmatpush1.msra.mxu0 0.0
    %9465 = vmatprep.subr.mxu0 0.0
    %9466 = vmatpush1.msra.mxu0 0.0
    %9467 = vmatprep.subr.mxu0 0.0
    %9468 = vmatpush1.msra.mxu0 0.0
    %9469 = vmatprep.subr.mxu0 0.0
    %9470 = vmatpush1.msra.mxu0 0.0
    %9471 = vmatprep.subr.mxu0 0.0
    %9472 = vmatpush1.msra.mxu0 0.0
    %9473 = vmatprep.mubr.f32.mxu0 0.0
    %9474 = vmatmul.mubr.f32.gmra.mrb[0].mxu0 %v9407
    %v9475 = vpop.f32.mrb[0].mxu0
    %v9476 = vadd.f32 0.0, %v9475
    %v9477 = vpop.f32.mrb[0].mxu0
    %9478 = vdwg.mxu0
    %v9479 = vadd.f32 %v9031, %v9476
    %9480 = vmatprep.subr.mxu0 0.0
    %9481 = vmatpush1.msra.mxu0 %v400
    %9482 = vmatprep.subr.mxu0 0.0
    %9483 = vmatpush1.msra.mxu0 %v401
    %9484 = vmatprep.subr.mxu0 0.0
    %9485 = vmatpush1.msra.mxu0 %v4870
    %9486 = vmatprep.subr.mxu0 0.0
    %9487 = vmatpush1.msra.mxu0 0.0
    %9488 = vmatprep.subr.mxu0 0.0
    %9489 = vmatpush1.msra.mxu0 0.0
    %9490 = vmatprep.subr.mxu0 0.0
    %9491 = vmatpush1.msra.mxu0 0.0
    %9492 = vmatprep.subr.mxu0 0.0
    %9493 = vmatpush1.msra.mxu0 0.0
    %9494 = vmatprep.subr.mxu0 0.0
    %9495 = vmatpush1.msra.mxu0 0.0
    %9496 = vmatprep.subr.mxu0 0.0
    %9497 = vmatpush1.msra.mxu0 0.0
    %9498 = vmatprep.subr.mxu0 0.0
    %9499 = vmatpush1.msra.mxu0 0.0
    %9500 = vmatprep.subr.mxu0 0.0
    %9501 = vmatpush1.msra.mxu0 0.0
    %9502 = vmatprep.subr.mxu0 0.0
    %9503 = vmatpush1.msra.mxu0 0.0
    %9504 = vmatprep.subr.mxu0 0.0
    %9505 = vmatpush1.msra.mxu0 0.0
    %9506 = vmatprep.subr.mxu0 0.0
    %9507 = vmatpush1.msra.mxu0 0.0
    %9508 = vmatprep.subr.mxu0 0.0
    %9509 = vmatpush1.msra.mxu0 0.0
    %9510 = vmatprep.subr.mxu0 0.0
    %9511 = vmatpush1.msra.mxu0 0.0
    %9512 = vmatprep.subr.mxu0 0.0
    %9513 = vmatpush1.msra.mxu0 0.0
    %9514 = vmatprep.subr.mxu0 0.0
    %9515 = vmatpush1.msra.mxu0 0.0
    %9516 = vmatprep.subr.mxu0 0.0
    %9517 = vmatpush1.msra.mxu0 0.0
    %9518 = vmatprep.subr.mxu0 0.0
    %9519 = vmatpush1.msra.mxu0 0.0
    %9520 = vmatprep.subr.mxu0 0.0
    %9521 = vmatpush1.msra.mxu0 0.0
    %9522 = vmatprep.subr.mxu0 0.0
    %9523 = vmatpush1.msra.mxu0 0.0
    %9524 = vmatprep.subr.mxu0 0.0
    %9525 = vmatpush1.msra.mxu0 0.0
    %9526 = vmatprep.subr.mxu0 0.0
    %9527 = vmatpush1.msra.mxu0 0.0
    %9528 = vmatprep.subr.mxu0 0.0
    %9529 = vmatpush1.msra.mxu0 0.0
    %9530 = vmatprep.subr.mxu0 0.0
    %9531 = vmatpush1.msra.mxu0 0.0
    %9532 = vmatprep.subr.mxu0 0.0
    %9533 = vmatpush1.msra.mxu0 0.0
    %9534 = vmatprep.subr.mxu0 0.0
    %9535 = vmatpush1.msra.mxu0 0.0
    %9536 = vmatprep.subr.mxu0 0.0
    %9537 = vmatpush1.msra.mxu0 0.0
    %9538 = vmatprep.subr.mxu0 0.0
    %9539 = vmatpush1.msra.mxu0 0.0
    %9540 = vmatprep.subr.mxu0 0.0
    %9541 = vmatpush1.msra.mxu0 0.0
    %9542 = vmatprep.subr.mxu0 0.0
    %9543 = vmatpush1.msra.mxu0 0.0
    %9544 = vmatprep.mubr.f32.mxu0 0.0
    %9545 = vmatmul.mubr.f32.gmra.mrb[0].mxu0 %v7685
    %v9546 = vpop.f32.mrb[0].mxu0
    %v9547 = vadd.f32 %v4867, %v9546
    %v9548 = vpop.f32.mrb[0].mxu0
    %9549 = vdwg.mxu0
    %9550 = vmatprep.subr.mxu0 0.0
    %9551 = vmatpush1.msra.mxu0 %v419
    %9552 = vmatprep.subr.mxu0 0.0
    %9553 = vmatpush1.msra.mxu0 %v420
    %9554 = vmatprep.subr.mxu0 0.0
    %9555 = vmatpush1.msra.mxu0 %v4949
    %9556 = vmatprep.subr.mxu0 0.0
    %9557 = vmatpush1.msra.mxu0 0.0
    %9558 = vmatprep.subr.mxu0 0.0
    %9559 = vmatpush1.msra.mxu0 0.0
    %9560 = vmatprep.subr.mxu0 0.0
    %9561 = vmatpush1.msra.mxu0 0.0
    %9562 = vmatprep.subr.mxu0 0.0
    %9563 = vmatpush1.msra.mxu0 0.0
    %9564 = vmatprep.subr.mxu0 0.0
    %9565 = vmatpush1.msra.mxu0 0.0
    %9566 = vmatprep.subr.mxu0 0.0
    %9567 = vmatpush1.msra.mxu0 0.0
    %9568 = vmatprep.subr.mxu0 0.0
    %9569 = vmatpush1.msra.mxu0 0.0
    %9570 = vmatprep.subr.mxu0 0.0
    %9571 = vmatpush1.msra.mxu0 0.0
    %9572 = vmatprep.subr.mxu0 0.0
    %9573 = vmatpush1.msra.mxu0 0.0
    %9574 = vmatprep.subr.mxu0 0.0
    %9575 = vmatpush1.msra.mxu0 0.0
    %9576 = vmatprep.subr.mxu0 0.0
    %9577 = vmatpush1.msra.mxu0 0.0
    %9578 = vmatprep.subr.mxu0 0.0
    %9579 = vmatpush1.msra.mxu0 0.0
    %9580 = vmatprep.subr.mxu0 0.0
    %9581 = vmatpush1.msra.mxu0 0.0
    %9582 = vmatprep.subr.mxu0 0.0
    %9583 = vmatpush1.msra.mxu0 0.0
    %9584 = vmatprep.subr.mxu0 0.0
    %9585 = vmatpush1.msra.mxu0 0.0
    %9586 = vmatprep.subr.mxu0 0.0
    %9587 = vmatpush1.msra.mxu0 0.0
    %9588 = vmatprep.subr.mxu0 0.0
    %9589 = vmatpush1.msra.mxu0 0.0
    %9590 = vmatprep.subr.mxu0 0.0
    %9591 = vmatpush1.msra.mxu0 0.0
    %9592 = vmatprep.subr.mxu0 0.0
    %9593 = vmatpush1.msra.mxu0 0.0
    %9594 = vmatprep.subr.mxu0 0.0
    %9595 = vmatpush1.msra.mxu0 0.0
    %9596 = vmatprep.subr.mxu0 0.0
    %9597 = vmatpush1.msra.mxu0 0.0
    %9598 = vmatprep.subr.mxu0 0.0
    %9599 = vmatpush1.msra.mxu0 0.0
    %9600 = vmatprep.subr.mxu0 0.0
    %9601 = vmatpush1.msra.mxu0 0.0
    %9602 = vmatprep.subr.mxu0 0.0
    %9603 = vmatpush1.msra.mxu0 0.0
    %9604 = vmatprep.subr.mxu0 0.0
    %9605 = vmatpush1.msra.mxu0 0.0
    %9606 = vmatprep.subr.mxu0 0.0
    %9607 = vmatpush1.msra.mxu0 0.0
    %9608 = vmatprep.subr.mxu0 0.0
    %9609 = vmatpush1.msra.mxu0 0.0
    %9610 = vmatprep.subr.mxu0 0.0
    %9611 = vmatpush1.msra.mxu0 0.0
    %9612 = vmatprep.subr.mxu0 0.0
    %9613 = vmatpush1.msra.mxu0 0.0
    %9614 = vmatprep.mubr.f32.mxu0 0.0
    %9615 = vmatmul.mubr.f32.gmra.mrb[0].mxu0 %v7758
    %v9616 = vpop.f32.mrb[0].mxu0
    %v9617 = vadd.f32 %v4946, %v9616
    %v9618 = vpop.f32.mrb[0].mxu0
    %9619 = vdwg.mxu0
    %9620 = vmatprep.subr.mxu0 0.0
    %9621 = vmatpush1.msra.mxu0 %v438
    %9622 = vmatprep.subr.mxu0 0.0
    %9623 = vmatpush1.msra.mxu0 %v439
    %9624 = vmatprep.subr.mxu0 0.0
    %9625 = vmatpush1.msra.mxu0 %v5028
    %9626 = vmatprep.subr.mxu0 0.0
    %9627 = vmatpush1.msra.mxu0 0.0
    %9628 = vmatprep.subr.mxu0 0.0
    %9629 = vmatpush1.msra.mxu0 0.0
    %9630 = vmatprep.subr.mxu0 0.0
    %9631 = vmatpush1.msra.mxu0 0.0
    %9632 = vmatprep.subr.mxu0 0.0
    %9633 = vmatpush1.msra.mxu0 0.0
    %9634 = vmatprep.subr.mxu0 0.0
    %9635 = vmatpush1.msra.mxu0 0.0
    %9636 = vmatprep.subr.mxu0 0.0
    %9637 = vmatpush1.msra.mxu0 0.0
    %9638 = vmatprep.subr.mxu0 0.0
    %9639 = vmatpush1.msra.mxu0 0.0
    %9640 = vmatprep.subr.mxu0 0.0
    %9641 = vmatpush1.msra.mxu0 0.0
    %9642 = vmatprep.subr.mxu0 0.0
    %9643 = vmatpush1.msra.mxu0 0.0
    %9644 = vmatprep.subr.mxu0 0.0
    %9645 = vmatpush1.msra.mxu0 0.0
    %9646 = vmatprep.subr.mxu0 0.0
    %9647 = vmatpush1.msra.mxu0 0.0
    %9648 = vmatprep.subr.mxu0 0.0
    %9649 = vmatpush1.msra.mxu0 0.0
    %9650 = vmatprep.subr.mxu0 0.0
    %9651 = vmatpush1.msra.mxu0 0.0
    %9652 = vmatprep.subr.mxu0 0.0
    %9653 = vmatpush1.msra.mxu0 0.0
    %9654 = vmatprep.subr.mxu0 0.0
    %9655 = vmatpush1.msra.mxu0 0.0
    %9656 = vmatprep.subr.mxu0 0.0
    %9657 = vmatpush1.msra.mxu0 0.0
    %9658 = vmatprep.subr.mxu0 0.0
    %9659 = vmatpush1.msra.mxu0 0.0
    %9660 = vmatprep.subr.mxu0 0.0
    %9661 = vmatpush1.msra.mxu0 0.0
    %9662 = vmatprep.subr.mxu0 0.0
    %9663 = vmatpush1.msra.mxu0 0.0
    %9664 = vmatprep.subr.mxu0 0.0
    %9665 = vmatpush1.msra.mxu0 0.0
    %9666 = vmatprep.subr.mxu0 0.0
    %9667 = vmatpush1.msra.mxu0 0.0
    %9668 = vmatprep.subr.mxu0 0.0
    %9669 = vmatpush1.msra.mxu0 0.0
    %9670 = vmatprep.subr.mxu0 0.0
    %9671 = vmatpush1.msra.mxu0 0.0
    %9672 = vmatprep.subr.mxu0 0.0
    %9673 = vmatpush1.msra.mxu0 0.0
    %9674 = vmatprep.subr.mxu0 0.0
    %9675 = vmatpush1.msra.mxu0 0.0
    %9676 = vmatprep.subr.mxu0 0.0
    %9677 = vmatpush1.msra.mxu0 0.0
    %9678 = vmatprep.subr.mxu0 0.0
    %9679 = vmatpush1.msra.mxu0 0.0
    %9680 = vmatprep.subr.mxu0 0.0
    %9681 = vmatpush1.msra.mxu0 0.0
    %9682 = vmatprep.subr.mxu0 0.0
    %9683 = vmatpush1.msra.mxu0 0.0
    %9684 = vmatprep.mubr.f32.mxu0 0.0
    %9685 = vmatmul.mubr.f32.gmra.mrb[0].mxu0 %v7758
    %v9686 = vpop.f32.mrb[0].mxu0
    %v9687 = vadd.f32 %v5025, %v9686
    %v9688 = vpop.f32.mrb[0].mxu0
    %9689 = vdwg.mxu0
    %v9691 = vsel %vm478, %v9547, 0
    %v9694 = vsel %vm478, %v9617, 0
    %9696 = vmatprep.subr.mxu0 0.0
    %9697 = vmatpush1.xpose.msra.mxu0 %v9694
    %9698 = vmatprep.subr.mxu0 0.0
    %9699 = vmatpush1.xpose.msra.mxu0 0.0
    %9700 = vmatprep.subr.mxu0 0.0
    %9701 = vmatpush1.xpose.msra.mxu0 0.0
    %9702 = vmatprep.subr.mxu0 0.0
    %9703 = vmatpush1.xpose.msra.mxu0 0.0
    %9704 = vmatprep.subr.mxu0 0.0
    %9705 = vmatpush1.xpose.msra.mxu0 0.0
    %9706 = vmatprep.subr.mxu0 0.0
    %9707 = vmatpush1.xpose.msra.mxu0 0.0
    %9708 = vmatprep.subr.mxu0 0.0
    %9709 = vmatpush1.xpose.msra.mxu0 0.0
    %9710 = vmatprep.subr.mxu0 0.0
    %9711 = vmatpush1.xpose.msra.mxu0 0.0
    %9712 = vmatprep.subr.mxu0 0.0
    %9713 = vmatpush1.xpose.msra.mxu0 0.0
    %9714 = vmatprep.subr.mxu0 0.0
    %9715 = vmatpush1.xpose.msra.mxu0 0.0
    %9716 = vmatprep.subr.mxu0 0.0
    %9717 = vmatpush1.xpose.msra.mxu0 0.0
    %9718 = vmatprep.subr.mxu0 0.0
    %9719 = vmatpush1.xpose.msra.mxu0 0.0
    %9720 = vmatprep.subr.mxu0 0.0
    %9721 = vmatpush1.xpose.msra.mxu0 0.0
    %9722 = vmatprep.subr.mxu0 0.0
    %9723 = vmatpush1.xpose.msra.mxu0 0.0
    %9724 = vmatprep.subr.mxu0 0.0
    %9725 = vmatpush1.xpose.msra.mxu0 0.0
    %9726 = vmatprep.subr.mxu0 0.0
    %9727 = vmatpush1.xpose.msra.mxu0 0.0
    %9728 = vmatprep.subr.mxu0 0.0
    %9729 = vmatpush1.xpose.msra.mxu0 0.0
    %9730 = vmatprep.subr.mxu0 0.0
    %9731 = vmatpush1.xpose.msra.mxu0 0.0
    %9732 = vmatprep.subr.mxu0 0.0
    %9733 = vmatpush1.xpose.msra.mxu0 0.0
    %9734 = vmatprep.subr.mxu0 0.0
    %9735 = vmatpush1.xpose.msra.mxu0 0.0
    %9736 = vmatprep.subr.mxu0 0.0
    %9737 = vmatpush1.xpose.msra.mxu0 0.0
    %9738 = vmatprep.subr.mxu0 0.0
    %9739 = vmatpush1.xpose.msra.mxu0 0.0
    %9740 = vmatprep.subr.mxu0 0.0
    %9741 = vmatpush1.xpose.msra.mxu0 0.0
    %9742 = vmatprep.subr.mxu0 0.0
    %9743 = vmatpush1.xpose.msra.mxu0 0.0
    %9744 = vmatprep.subr.mxu0 0.0
    %9745 = vmatpush1.xpose.msra.mxu0 0.0
    %9746 = vmatprep.subr.mxu0 0.0
    %9747 = vmatpush1.xpose.msra.mxu0 0.0
    %9748 = vmatprep.subr.mxu0 0.0
    %9749 = vmatpush1.xpose.msra.mxu0 0.0
    %9750 = vmatprep.subr.mxu0 0.0
    %9751 = vmatpush1.xpose.msra.mxu0 0.0
    %9752 = vmatprep.subr.mxu0 0.0
    %9753 = vmatpush1.xpose.msra.mxu0 0.0
    %9754 = vmatprep.subr.mxu0 0.0
    %9755 = vmatpush1.xpose.msra.mxu0 0.0
    %9756 = vmatprep.subr.mxu0 0.0
    %9757 = vmatpush1.xpose.msra.mxu0 0.0
    %9758 = vmatprep.subr.mxu0 0.0
    %9759 = vmatpush1.xpose.msra.mxu0 0.0
    %9760 = vmatprep.mubr.f32.mxu0 0.0
    %9761 = vmatmul.mubr.f32.gmra.mrb[0].mxu0 %v9691
    %v9762 = vpop.f32.mrb[0].mxu0
    %v9763 = vadd.f32 0.0, %v9762
    %v9764 = vpop.f32.mrb[0].mxu0
    %9765 = vdwg.mxu0
    %v9766 = vmul.f32 %v9763, 0.5
    %v9767 = vsel %vm3264, %v9766, -inf
    %9768 = vmax.xlane.f32.xlu0 %v9767
    %v9769 = vpop.xlane.xlu0 %9768
    %v9770 = vsub.f32 %v9766, %v9769
    %v9771 = vmul.f32 %v9770, 1.442695
    %v9772 = vpow.pop %v9771
    %v9773 = vsel %vm3264, %v9772, 0.0
    %9774 = vadd.xlane.f32.xlu0 %v9773
    %v9775 = vpop.xlane.xlu0 %9774
    %v9776 = vrcp.pop %v9775
    %v9777 = vmul.f32 %v9772, %v9776
    %v9779 = vsel %vm3276, %v9777, 0
    %v9782 = vsel %vm3280, %v9687, 0
    %9784 = vmatprep.subr.mxu0 0.0
    %9785 = vmatpush1.msra.mxu0 %v9782
    %9786 = vmatprep.subr.mxu0 0.0
    %9787 = vmatpush1.msra.mxu0 0.0
    %9788 = vmatprep.subr.mxu0 0.0
    %9789 = vmatpush1.msra.mxu0 0.0
    %9790 = vmatprep.subr.mxu0 0.0
    %9791 = vmatpush1.msra.mxu0 0.0
    %9792 = vmatprep.subr.mxu0 0.0
    %9793 = vmatpush1.msra.mxu0 0.0
    %9794 = vmatprep.subr.mxu0 0.0
    %9795 = vmatpush1.msra.mxu0 0.0
    %9796 = vmatprep.subr.mxu0 0.0
    %9797 = vmatpush1.msra.mxu0 0.0
    %9798 = vmatprep.subr.mxu0 0.0
    %9799 = vmatpush1.msra.mxu0 0.0
    %9800 = vmatprep.subr.mxu0 0.0
    %9801 = vmatpush1.msra.mxu0 0.0
    %9802 = vmatprep.subr.mxu0 0.0
    %9803 = vmatpush1.msra.mxu0 0.0
    %9804 = vmatprep.subr.mxu0 0.0
    %9805 = vmatpush1.msra.mxu0 0.0
    %9806 = vmatprep.subr.mxu0 0.0
    %9807 = vmatpush1.msra.mxu0 0.0
    %9808 = vmatprep.subr.mxu0 0.0
    %9809 = vmatpush1.msra.mxu0 0.0
    %9810 = vmatprep.subr.mxu0 0.0
    %9811 = vmatpush1.msra.mxu0 0.0
    %9812 = vmatprep.subr.mxu0 0.0
    %9813 = vmatpush1.msra.mxu0 0.0
    %9814 = vmatprep.subr.mxu0 0.0
    %9815 = vmatpush1.msra.mxu0 0.0
    %9816 = vmatprep.subr.mxu0 0.0
    %9817 = vmatpush1.msra.mxu0 0.0
    %9818 = vmatprep.subr.mxu0 0.0
    %9819 = vmatpush1.msra.mxu0 0.0
    %9820 = vmatprep.subr.mxu0 0.0
    %9821 = vmatpush1.msra.mxu0 0.0
    %9822 = vmatprep.subr.mxu0 0.0
    %9823 = vmatpush1.msra.mxu0 0.0
    %9824 = vmatprep.subr.mxu0 0.0
    %9825 = vmatpush1.msra.mxu0 0.0
    %9826 = vmatprep.subr.mxu0 0.0
    %9827 = vmatpush1.msra.mxu0 0.0
    %9828 = vmatprep.subr.mxu0 0.0
    %9829 = vmatpush1.msra.mxu0 0.0
    %9830 = vmatprep.subr.mxu0 0.0
    %9831 = vmatpush1.msra.mxu0 0.0
    %9832 = vmatprep.subr.mxu0 0.0
    %9833 = vmatpush1.msra.mxu0 0.0
    %9834 = vmatprep.subr.mxu0 0.0
    %9835 = vmatpush1.msra.mxu0 0.0
    %9836 = vmatprep.subr.mxu0 0.0
    %9837 = vmatpush1.msra.mxu0 0.0
    %9838 = vmatprep.subr.mxu0 0.0
    %9839 = vmatpush1.msra.mxu0 0.0
    %9840 = vmatprep.subr.mxu0 0.0
    %9841 = vmatpush1.msra.mxu0 0.0
    %9842 = vmatprep.subr.mxu0 0.0
    %9843 = vmatpush1.msra.mxu0 0.0
    %9844 = vmatprep.subr.mxu0 0.0
    %9845 = vmatpush1.msra.mxu0 0.0
    %9846 = vmatprep.subr.mxu0 0.0
    %9847 = vmatpush1.msra.mxu0 0.0
    %9848 = vmatprep.mubr.f32.mxu0 0.0
    %9849 = vmatmul.mubr.f32.gmra.mrb[0].mxu0 %v9779
    %v9850 = vpop.f32.mrb[0].mxu0
    %v9851 = vadd.f32 0.0, %v9850
    %v9852 = vpop.f32.mrb[0].mxu0
    %9853 = vdwg.mxu0
    %v9855 = vsel %vm478, %v9851, 0
    %9857 = vmatprep.subr.mxu0 0.0
    %9858 = vmatpush1.msra.mxu0 %v5268
    %9859 = vmatprep.subr.mxu0 0.0
    %9860 = vmatpush1.msra.mxu0 0.0
    %9861 = vmatprep.subr.mxu0 0.0
    %9862 = vmatpush1.msra.mxu0 0.0
    %9863 = vmatprep.subr.mxu0 0.0
    %9864 = vmatpush1.msra.mxu0 0.0
    %9865 = vmatprep.subr.mxu0 0.0
    %9866 = vmatpush1.msra.mxu0 0.0
    %9867 = vmatprep.subr.mxu0 0.0
    %9868 = vmatpush1.msra.mxu0 0.0
    %9869 = vmatprep.subr.mxu0 0.0
    %9870 = vmatpush1.msra.mxu0 0.0
    %9871 = vmatprep.subr.mxu0 0.0
    %9872 = vmatpush1.msra.mxu0 0.0
    %9873 = vmatprep.subr.mxu0 0.0
    %9874 = vmatpush1.msra.mxu0 0.0
    %9875 = vmatprep.subr.mxu0 0.0
    %9876 = vmatpush1.msra.mxu0 0.0
    %9877 = vmatprep.subr.mxu0 0.0
    %9878 = vmatpush1.msra.mxu0 0.0
    %9879 = vmatprep.subr.mxu0 0.0
    %9880 = vmatpush1.msra.mxu0 0.0
    %9881 = vmatprep.subr.mxu0 0.0
    %9882 = vmatpush1.msra.mxu0 0.0
    %9883 = vmatprep.subr.mxu0 0.0
    %9884 = vmatpush1.msra.mxu0 0.0
    %9885 = vmatprep.subr.mxu0 0.0
    %9886 = vmatpush1.msra.mxu0 0.0
    %9887 = vmatprep.subr.mxu0 0.0
    %9888 = vmatpush1.msra.mxu0 0.0
    %9889 = vmatprep.subr.mxu0 0.0
    %9890 = vmatpush1.msra.mxu0 0.0
    %9891 = vmatprep.subr.mxu0 0.0
    %9892 = vmatpush1.msra.mxu0 0.0
    %9893 = vmatprep.subr.mxu0 0.0
    %9894 = vmatpush1.msra.mxu0 0.0
    %9895 = vmatprep.subr.mxu0 0.0
    %9896 = vmatpush1.msra.mxu0 0.0
    %9897 = vmatprep.subr.mxu0 0.0
    %9898 = vmatpush1.msra.mxu0 0.0
    %9899 = vmatprep.subr.mxu0 0.0
    %9900 = vmatpush1.msra.mxu0 0.0
    %9901 = vmatprep.subr.mxu0 0.0
    %9902 = vmatpush1.msra.mxu0 0.0
    %9903 = vmatprep.subr.mxu0 0.0
    %9904 = vmatpush1.msra.mxu0 0.0
    %9905 = vmatprep.subr.mxu0 0.0
    %9906 = vmatpush1.msra.mxu0 0.0
    %9907 = vmatprep.subr.mxu0 0.0
    %9908 = vmatpush1.msra.mxu0 0.0
    %9909 = vmatprep.subr.mxu0 0.0
    %9910 = vmatpush1.msra.mxu0 0.0
    %9911 = vmatprep.subr.mxu0 0.0
    %9912 = vmatpush1.msra.mxu0 0.0
    %9913 = vmatprep.subr.mxu0 0.0
    %9914 = vmatpush1.msra.mxu0 0.0
    %9915 = vmatprep.subr.mxu0 0.0
    %9916 = vmatpush1.msra.mxu0 0.0
    %9917 = vmatprep.subr.mxu0 0.0
    %9918 = vmatpush1.msra.mxu0 0.0
    %9919 = vmatprep.subr.mxu0 0.0
    %9920 = vmatpush1.msra.mxu0 0.0
    %9921 = vmatprep.mubr.f32.mxu0 0.0
    %9922 = vmatmul.mubr.f32.gmra.mrb[0].mxu0 %v9855
    %v9923 = vpop.f32.mrb[0].mxu0
    %v9924 = vadd.f32 0.0, %v9923
    %v9925 = vpop.f32.mrb[0].mxu0
    %9926 = vdwg.mxu0
    %v9927 = vadd.f32 %v9479, %v9924
    %v9928 = vadd.f32 %v9927, %v5345
    %vm9929 = vcmask 158720
    %9930 = vst.msk [vmem:[#allocation3] sm:$0xf] %vm9929, %v9928
    // Predicated region
    $region82: #{episode_forward.1} parent=1 // pred_check
      _
    $region83: #{episode_forward.1} parent=1 // pred_check_branch
      %9932 = sbr.rel (0) target = $region85
    $region84: #{episode_forward.1} parent=1 // pred_region
      %s9934 = ssub.s32 64, 64
      %9935 = vsyncadd [#allocation4], %s9934
      %s9937 = sshll.u32 [#allocation3], 4
      %s9938 = int_to_ptr.vmem [resolvable:$true] %s9937
      %9940 = dma.vmem_to_hbm [thread:$0]  %s9938, 64, %s20, [#allocation4]
    $region85: #{episode_forward.1} parent=1 // pred_fallthru
      _
    // Predicated region
    $region86: #{episode_forward.1} parent=1 // pred_check
      _
    $region87: #{episode_forward.1} parent=1 // pred_check_branch
      %9942 = sbr.rel (0) target = $region89
    $region88: #{episode_forward.1} parent=1 // pred_region
      %9943 = dma.done [#allocation4], 64
    $region89: #{episode_forward.1} parent=1 // pred_fallthru
      _
    %9944 = vsyncpa [#allocation4], 1

</llo_original>
